<compile_context>
chip_gen: v5e
topology: v5e:2x2
jax: 0.10.0
libtpu: 0.0.40
codegen_flags: <defaults>
</compile_context>

<pallas_src>
import functools

import jax
import jax.numpy as jnp
from jax.experimental import pallas as pl
from jax.experimental.pallas import tpu as pltpu

BN_EPS = 1e-3                       # BatchNorm2d(eps=0.001) in the PyTorch module
VMEM_LIMIT = 32 * 1024 * 1024       # safely under v7x's 64 MiB physical VMEM

MODEL_CFG = dict(
    LAYER_NUMS=[1, 1],
    LAYER_STRIDES=[1, 2],
    NUM_FILTERS=[32, 64],
    UPSAMPLE_STRIDES=[1, 2],
    NUM_UPSAMPLE_FILTERS=[64, 64],
)
INPUT_CHANNELS = 32


# ---------------------------------------------------------------------------
# Pallas kernels
# ---------------------------------------------------------------------------
def _accum_3x3_taps(xp, w_ref, H, W, Cin, Cout):
    """Sum of 9 shifted-tap MXU matmuls == 3x3 stride-1 conv (f32 accumulation)."""
    acc = jnp.zeros((H * W, Cout), jnp.float32)
    for t in range(9):                              # static unroll
        di, dj = divmod(t, 3)
        tap = xp[di:di + H, dj:dj + W, :].reshape(H * W, Cin).astype(jnp.bfloat16)
        acc = acc + jnp.dot(tap, w_ref[t], preferred_element_type=jnp.float32)
    return acc


def _conv3x3_bn_kernel(xp_ref, w_ref, s_ref, b_ref, o_ref, *, relu):
    """3x3 stride-1 conv + folded BN (+ optional ReLU) for one batch element."""
    H, W, Cout = o_ref.shape[1], o_ref.shape[2], o_ref.shape[3]
    Cin = xp_ref.shape[3]
    xp = xp_ref[0]                                  # (H+2, W+2, Cin) f32
    y = _accum_3x3_taps(xp, w_ref, H, W, Cin, Cout)
    y = y * s_ref[...] + b_ref[...]
    if relu:
        y = jnp.maximum(y, 0.0)
    o_ref[0] = y.reshape(H, W, Cout).astype(o_ref.dtype)


def _conv3x3_bn_add_relu_kernel(xp_ref, w_ref, s_ref, b_ref, res_ref, o_ref):
    """Fused BasicBlock tail: conv2(3x3) + BN + residual add + ReLU."""
    H, W, Cout = o_ref.shape[1], o_ref.shape[2], o_ref.shape[3]
    Cin = xp_ref.shape[3]
    xp = xp_ref[0]
    y = _accum_3x3_taps(xp, w_ref, H, W, Cin, Cout)
    y = y * s_ref[...] + b_ref[...] + res_ref[0].reshape(H * W, Cout)
    o_ref[0] = jnp.maximum(y, 0.0).reshape(H, W, Cout).astype(o_ref.dtype)


def _matmul_bn_kernel(x_ref, w_ref, s_ref, b_ref, o_ref, *, relu):
    """(rows, K) @ (K, N) + folded BN (+ optional ReLU). bf16 MXU inputs, f32 accumulate."""
    x = x_ref[0].astype(jnp.bfloat16)
    y = jnp.dot(x, w_ref[...], preferred_element_type=jnp.float32)
    y = y * s_ref[...] + b_ref[...]
    if relu:
        y = jnp.maximum(y, 0.0)
    o_ref[0] = y.astype(o_ref.dtype)


# ---------------------------------------------------------------------------
# pallas_call wrappers
# ---------------------------------------------------------------------------
def _compiler_params(semantics):
    return pltpu.CompilerParams(dimension_semantics=semantics,
                                vmem_limit_bytes=VMEM_LIMIT)


def conv3x3_bn_act(x_nhwc, w_taps, scale, bias, *, relu, residual=None):
    bs, H, W, Cin = x_nhwc.shape
    Cout = w_taps.shape[2]
    xp = jnp.pad(x_nhwc, ((0, 0), (1, 1), (1, 1), (0, 0)))
    in_specs = [
        pl.BlockSpec((1, H + 2, W + 2, Cin), lambda b: (b, 0, 0, 0)),
        pl.BlockSpec((9, Cin, Cout), lambda b: (0, 0, 0)),
        pl.BlockSpec((1, Cout), lambda b: (0, 0)),
        pl.BlockSpec((1, Cout), lambda b: (0, 0)),
    ]
    out_spec = pl.BlockSpec((1, H, W, Cout), lambda b: (b, 0, 0, 0))
    out_shape = jax.ShapeDtypeStruct((bs, H, W, Cout), jnp.float32)
    if residual is None:
        kern = functools.partial(_conv3x3_bn_kernel, relu=relu)
        args = (xp, w_taps, scale, bias)
    else:
        kern = _conv3x3_bn_add_relu_kernel
        in_specs = in_specs + [pl.BlockSpec((1, H, W, Cout), lambda b: (b, 0, 0, 0))]
        args = (xp, w_taps, scale, bias, residual)
    # TODO(synk): for production BEV sizes, tile H with a 1-row halo instead of one
    #             whole-image block per batch element.
    return pl.pallas_call(
        kern, out_shape=out_shape, grid=(bs,),
        in_specs=in_specs, out_specs=out_spec,
        compiler_params=_compiler_params(("parallel",)),
    )(*args)


def _row_tile(M):
    for tm in (1024, 512, 256, 128):
        if M >= tm and M % tm == 0:
            return tm
    return M


def matmul_bn_act(x3d, w_mat, scale, bias, *, relu):
    bs, M, K = x3d.shape
    N = w_mat.shape[1]
    TM = _row_tile(M)
    return pl.pallas_call(
        functools.partial(_matmul_bn_kernel, relu=relu),
        out_shape=jax.ShapeDtypeStruct((bs, M, N), jnp.float32),
        grid=(bs, M // TM),
        in_specs=[
            pl.BlockSpec((1, TM, K), lambda b, m: (b, m, 0)),
            pl.BlockSpec((K, N), lambda b, m: (0, 0)),
            pl.BlockSpec((1, N), lambda b, m: (0, 0)),
            pl.BlockSpec((1, N), lambda b, m: (0, 0)),
        ],
        out_specs=pl.BlockSpec((1, TM, N), lambda b, m: (b, m, 0)),
        compiler_params=_compiler_params(("parallel", "parallel")),
    )(x3d, w_mat, scale, bias)


# ---------------------------------------------------------------------------
# Module composition (BasicBlock / deblock / backbone) on top of the kernels
# ---------------------------------------------------------------------------
def _strided_taps(x_nhwc, stride):
    """im2col only for the (rare) strided first conv of a level -> one deep-K matmul."""
    bs, H, W, C = x_nhwc.shape
    Ho, Wo = H // stride, W // stride
    xp = jnp.pad(x_nhwc, ((0, 0), (1, 1), (1, 1), (0, 0)))
    taps = [xp[:, di:di + stride * Ho:stride, dj:dj + stride * Wo:stride, :]
            for di in range(3) for dj in range(3)]
    return jnp.concatenate(taps, axis=-1).reshape(bs, Ho * Wo, 9 * C)


def run_basic_block(x_nhwc, fp):
    bs, H, W, Cin = x_nhwc.shape
    stride = fp['stride']
    Ho, Wo = H // stride, W // stride
    # conv1 + bn1 + relu
    if stride == 1:
        out1 = conv3x3_bn_act(x_nhwc, fp['w1_taps'], fp['s1'], fp['b1'], relu=True)
    else:
        cout = fp['w1_mat'].shape[1]
        out1 = matmul_bn_act(_strided_taps(x_nhwc, stride), fp['w1_mat'],
                             fp['s1'], fp['b1'], relu=True).reshape(bs, Ho, Wo, cout)
    # identity path (1x1 conv + BN when downsample=True, else passthrough)
    if fp['downsample']:
        cout = fp['wd_mat'].shape[1]
        xd = x_nhwc[:, ::stride, ::stride, :].reshape(bs, Ho * Wo, Cin)
        ident = matmul_bn_act(xd, fp['wd_mat'], fp['sd'], fp['bd'],
                              relu=False).reshape(bs, Ho, Wo, cout)
    else:
        ident = x_nhwc
    # conv2 + bn2 + residual add + relu fused into one kernel
    return conv3x3_bn_act(out1, fp['w2_taps'], fp['s2'], fp['b2'],
                          relu=True, residual=ident)


def run_deblock(x_nhwc, fp):
    """ConvTranspose2d(k=s, stride=s) + BN + ReLU == per-phase 1x1 matmul + depth-to-space."""
    bs, H, W, Cin = x_nhwc.shape
    s, cout = fp['stride'], fp['cout']
    y = matmul_bn_act(x_nhwc.reshape(bs, H * W, Cin), fp['w_mat'],
                      fp['scale'], fp['bias'], relu=True)
    y = y.reshape(bs, H, W, s, s, cout)
    return jnp.transpose(y, (0, 1, 3, 2, 4, 5)).reshape(bs, H * s, W * s, cout)


def pallas_backbone_forward(x_nchw, folded):
    """BaseBEVResBackbone.forward: spatial_features -> spatial_features_2d."""
    x = jnp.transpose(x_nchw, (0, 2, 3, 1))            # NCHW -> NHWC (channels in lanes)
    ups = []
    for level_blocks, deblock in zip(folded['blocks'], folded['deblocks']):
        for fp in level_blocks:
            x = run_basic_block(x, fp)
        ups.append(run_deblock(x, deblock))
    out = jnp.concatenate(ups, axis=-1) if len(ups) > 1 else ups[0]
    # TODO(synk): optional trailing deblock (len(UPSAMPLE_STRIDES) > num_levels) not exercised.
    return jnp.transpose(out, (0, 3, 1, 2))            # back to NCHW


# ---------------------------------------------------------------------------
# Deterministic parameter construction + BN/layout folding
# ---------------------------------------------------------------------------
def _bn_params(key, c):
    k1, k2, k3, k4 = jax.random.split(key, 4)
    gamma = 0.8 + 0.4 * jax.random.uniform(k1, (c,), jnp.float32)
    beta = 0.1 * jax.random.normal(k2, (c,), jnp.float32)
    mean = 0.1 * jax.random.normal(k3, (c,), jnp.float32)
    var = 0.5 + jax.random.uniform(k4, (c,), jnp.float32)
    return (gamma, beta, mean, var)


def _conv_weight(key, cout, cin, kh, kw):
    std = (2.0 / (cin * kh * kw)) ** 0.5
    w = std * jax.random.normal(key, (cout, cin, kh, kw), jnp.float32)
    # round-trip through bf16 so the bf16 MXU kernels and f32 reference share exact weights
    return w.astype(jnp.bfloat16).astype(jnp.float32)


def make_block_params(key, cin, cout, stride, downsample):
    ks = jax.random.split(key, 6)
    p = dict(stride=stride, downsample=downsample,
             w1=_conv_weight(ks[0], cout, cin, 3, 3), bn1=_bn_params(ks[1], cout),
             w2=_conv_weight(ks[2], cout, cout, 3, 3), bn2=_bn_params(ks[3], cout))
    if downsample:
        p['wd'] = _conv_weight(ks[4], cout, cin, 1, 1)[:, :, 0, 0]
        p['bnd'] = _bn_params(ks[5], cout)
    return p


def make_deblock_params(key, cin, cout, stride):
    k1, k2 = jax.random.split(key)
    std = (2.0 / cin) ** 0.5
    w = std * jax.random.normal(k1, (cin, cout, stride, stride), jnp.float32)
    return dict(stride=stride, w=w.astype(jnp.bfloat16).astype(jnp.float32),
                bn=_bn_params(k2, cout))


def build_params(key, cfg, input_channels):
    layer_nums, strides = cfg['LAYER_NUMS'], cfg['LAYER_STRIDES']
    filters = cfg['NUM_FILTERS']
    up_strides, up_filters = cfg['UPSAMPLE_STRIDES'], cfg['NUM_UPSAMPLE_FILTERS']
    c_in_list = [input_channels, *filters[:-1]]
    blocks, deblocks = [], []
    for idx in range(len(layer_nums)):
        key, k0 = jax.random.split(key)
        level = [make_block_params(k0, c_in_list[idx], filters[idx], strides[idx], True)]
        for _ in range(layer_nums[idx]):
            key, kb = jax.random.split(key)
            level.append(make_block_params(kb, filters[idx], filters[idx], 1, False))
        blocks.append(level)
        key, kd = jax.random.split(key)
        deblocks.append(make_deblock_params(kd, filters[idx], up_filters[idx], up_strides[idx]))
    return dict(blocks=blocks, deblocks=deblocks)


def _fold_bn(bn):
    gamma, beta, mean, var = bn
    scale = gamma / jnp.sqrt(var + BN_EPS)
    return scale.reshape(1, -1), (beta - mean * scale).reshape(1, -1)


def fold_block(rp):
    cout, cin = rp['w1'].shape[0], rp['w1'].shape[1]
    s1, b1 = _fold_bn(rp['bn1'])
    s2, b2 = _fold_bn(rp['bn2'])
    w1_taps = jnp.transpose(rp['w1'], (2, 3, 1, 0)).reshape(9, cin, cout)   # (tap, in, out)
    w2_taps = jnp.transpose(rp['w2'], (2, 3, 1, 0)).reshape(9, cout, cout)
    fp = dict(stride=rp['stride'], downsample=rp['downsample'],
              s1=s1, b1=b1, s2=s2, b2=b2, w2_taps=w2_taps.astype(jnp.bfloat16))
    if rp['stride'] == 1:
        fp['w1_taps'] = w1_taps.astype(jnp.bfloat16)
    else:
        fp['w1_mat'] = w1_taps.reshape(9 * cin, cout).astype(jnp.bfloat16)  # deep-K matmul
    if rp['downsample']:
        sd, bd = _fold_bn(rp['bnd'])
        fp.update(sd=sd, bd=bd, wd_mat=rp['wd'].T.astype(jnp.bfloat16))
    return fp


def fold_deblock(rp):
    s = rp['stride']
    cin, cout = rp['w'].shape[0], rp['w'].shape[1]
    scale, bias = _fold_bn(rp['bn'])
    # columns ordered (phase_k, phase_l, cout) -> lane-dense s*s*cout output
    w_mat = jnp.transpose(rp['w'], (0, 2, 3, 1)).reshape(cin, s * s * cout)
    return dict(stride=s, cout=cout, w_mat=w_mat.astype(jnp.bfloat16),
                scale=jnp.tile(scale, (1, s * s)), bias=jnp.tile(bias, (1, s * s)))


def fold_params(raw):
    return dict(blocks=[[fold_block(bp) for bp in lvl] for lvl in raw['blocks']],
                deblocks=[fold_deblock(dp) for dp in raw['deblocks']])


# ---------------------------------------------------------------------------
# Pure-JAX reference (NCHW, mirrors the PyTorch forward, eval-mode BN) for validation
# ---------------------------------------------------------------------------
def _conv_ref(x, w, stride, pad):
    return jax.lax.conv_general_dilated(
        x, w, window_strides=(stride, stride), padding=((pad, pad), (pad, pad)),
        dimension_numbers=('NCHW', 'OIHW', 'NCHW'),
        precision=jax.lax.Precision.HIGHEST)


def _bn_ref(x, bn):
    gamma, beta, mean, var = bn
    scale = gamma / jnp.sqrt(var + BN_EPS)
    return x * scale[None, :, None, None] + (beta - mean * scale)[None, :, None, None]


def basic_block_ref(x, rp):
    s = rp['stride']
    out = jax.nn.relu(_bn_ref(_conv_ref(x, rp['w1'], s, 1), rp['bn1']))
    out = _bn_ref(_conv_ref(out, rp['w2'], 1, 1), rp['bn2'])
    if rp['downsample']:
        ident = _bn_ref(_conv_ref(x, rp['wd'][:, :, None, None], s, 0), rp['bnd'])
    else:
        ident = x
    return jax.nn.relu(out + ident)


def deblock_ref(x, rp):
    # ConvTranspose2d with kernel == stride (non-overlapping): explicit scatter form.
    y = jnp.einsum('nihw,iokl->nohkwl', x, rp['w'],
                   precision=jax.lax.Precision.HIGHEST)
    n, o, h, k, w, l = y.shape
    return jax.nn.relu(_bn_ref(y.reshape(n, o, h * k, w * l), rp['bn']))


def reference_backbone_forward(x_nchw, raw):
    x = x_nchw
    ups = []
    for level_blocks, deblock in zip(raw['blocks'], raw['deblocks']):
        for rp in level_blocks:
            x = basic_block_ref(x, rp)
        ups.append(deblock_ref(x, deblock))
    return jnp.concatenate(ups, axis=1) if len(ups) > 1 else ups[0]


if __name__ == "__main__":
    key = jax.random.PRNGKey(0)
    kx, kp = jax.random.split(key)
    bs, C, H, W = 2, INPUT_CHANNELS, 16, 16
    x = jax.random.normal(kx, (bs, C, H, W), jnp.float32)

    raw = build_params(kp, MODEL_CFG, C)
    folded = fold_params(raw)

    out = jax.block_until_ready(
        jax.jit(lambda inp: pallas_backbone_forward(inp, folded))(x))
    ref = jax.block_until_ready(reference_backbone_forward(x, raw))

    c_out = sum(MODEL_CFG['NUM_UPSAMPLE_FILTERS'])
    assert out.shape == ref.shape == (bs, c_out, H, W)
    max_err = float(jnp.max(jnp.abs(out - ref)))
    tol = 1e-2 + 2e-2 * float(jnp.max(jnp.abs(ref)))
    assert max_err < tol, f"mismatch vs reference: max abs err {max_err} (tol {tol})"
    print("KERNEL_OK")
</pallas_src>

<mosaic_0001>
module attributes {stable_mosaic.version = 11 : i64} {
  func.func @_conv3x3_bn_kernel(%arg0: i32, %arg1: memref<1x18x18x32xf32, #tpu.memory_space<vmem>>, %arg2: memref<9x32x32xbf16, #tpu.memory_space<vmem>>, %arg3: memref<1x32xf32, #tpu.memory_space<vmem>>, %arg4: memref<1x32xf32, #tpu.memory_space<vmem>>, %arg5: memref<1x16x16x32xf32, #tpu.memory_space<vmem>>) attributes {dimension_semantics = [#tpu.dimension_semantics<parallel>], iteration_bounds = array<i64: 2>, scalar_prefetch = 0 : i64, scratch_operands = 0 : i64, tpu.core_type = #tpu.core_type<tc>, window_params = [{transform_indices = @transform_0, window_bounds = array<i64: 1, 18, 18, 32>}, {pipeline_mode = #tpu.pipeline_mode<synchronous>, transform_indices = @transform_1, window_bounds = array<i64: 9, 32, 32>}, {pipeline_mode = #tpu.pipeline_mode<synchronous>, transform_indices = @transform_2, window_bounds = array<i64: 1, 32>}, {pipeline_mode = #tpu.pipeline_mode<synchronous>, transform_indices = @transform_3, window_bounds = array<i64: 1, 32>}, {transform_indices = @transform_4, window_bounds = array<i64: 1, 16, 16, 32>}]} {
    %c0 = arith.constant 0 : index
    %c0_0 = arith.constant 0 : index
    %c0_1 = arith.constant 0 : index
    %c0_2 = arith.constant 0 : index
    %0 = vector.load %arg1[%c0, %c0_0, %c0_1, %c0_2] : memref<1x18x18x32xf32, #tpu.memory_space<vmem>>, vector<1x18x18x32xf32>
    %1 = vector.shape_cast %0 : vector<1x18x18x32xf32> to vector<18x18x32xf32>
    %cst = arith.constant 0.000000e+00 : f32
    %2 = vector.broadcast %cst : f32 to vector<256x32xf32>
    %3 = vector.extract_strided_slice %1 {offsets = [0, 0, 0], sizes = [16, 16, 32], strides = [1, 1, 1]} : vector<18x18x32xf32> to vector<16x16x32xf32>
    %4 = vector.shape_cast %3 : vector<16x16x32xf32> to vector<256x32xf32>
    %5 = arith.truncf %4 : vector<256x32xf32> to vector<256x32xbf16>
    %c0_3 = arith.constant 0 : index
    %c0_4 = arith.constant 0 : index
    %c0_5 = arith.constant 0 : index
    %6 = vector.load %arg2[%c0_3, %c0_4, %c0_5] : memref<9x32x32xbf16, #tpu.memory_space<vmem>>, vector<1x32x32xbf16>
    %7 = vector.shape_cast %6 : vector<1x32x32xbf16> to vector<32x32xbf16>
    %cst_6 = arith.constant dense<0.000000e+00> : vector<256x32xf32>
    %8 = tpu.matmul %5, %7, %cst_6 {dimension_numbers = #tpu.dot_dimension_numbers<[1], [0], [0], [1], [0, 0, 1, 1], [], []>} : vector<256x32xbf16>, vector<32x32xbf16>, vector<256x32xf32> -> vector<256x32xf32>
    %9 = arith.addf %2, %8 : vector<256x32xf32>
    %10 = vector.extract_strided_slice %1 {offsets = [0, 1, 0], sizes = [16, 16, 32], strides = [1, 1, 1]} : vector<18x18x32xf32> to vector<16x16x32xf32>
    %11 = vector.shape_cast %10 : vector<16x16x32xf32> to vector<256x32xf32>
    %12 = arith.truncf %11 : vector<256x32xf32> to vector<256x32xbf16>
    %c1 = arith.constant 1 : index
    %c0_7 = arith.constant 0 : index
    %c0_8 = arith.constant 0 : index
    %13 = vector.load %arg2[%c1, %c0_7, %c0_8] : memref<9x32x32xbf16, #tpu.memory_space<vmem>>, vector<1x32x32xbf16>
    %14 = vector.shape_cast %13 : vector<1x32x32xbf16> to vector<32x32xbf16>
    %cst_9 = arith.constant dense<0.000000e+00> : vector<256x32xf32>
    %15 = tpu.matmul %12, %14, %cst_9 {dimension_numbers = #tpu.dot_dimension_numbers<[1], [0], [0], [1], [0, 0, 1, 1], [], []>} : vector<256x32xbf16>, vector<32x32xbf16>, vector<256x32xf32> -> vector<256x32xf32>
    %16 = arith.addf %9, %15 : vector<256x32xf32>
    %17 = vector.extract_strided_slice %1 {offsets = [0, 2, 0], sizes = [16, 16, 32], strides = [1, 1, 1]} : vector<18x18x32xf32> to vector<16x16x32xf32>
    %18 = vector.shape_cast %17 : vector<16x16x32xf32> to vector<256x32xf32>
    %19 = arith.truncf %18 : vector<256x32xf32> to vector<256x32xbf16>
    %c2 = arith.constant 2 : index
    %c0_10 = arith.constant 0 : index
    %c0_11 = arith.constant 0 : index
    %20 = vector.load %arg2[%c2, %c0_10, %c0_11] : memref<9x32x32xbf16, #tpu.memory_space<vmem>>, vector<1x32x32xbf16>
    %21 = vector.shape_cast %20 : vector<1x32x32xbf16> to vector<32x32xbf16>
    %cst_12 = arith.constant dense<0.000000e+00> : vector<256x32xf32>
    %22 = tpu.matmul %19, %21, %cst_12 {dimension_numbers = #tpu.dot_dimension_numbers<[1], [0], [0], [1], [0, 0, 1, 1], [], []>} : vector<256x32xbf16>, vector<32x32xbf16>, vector<256x32xf32> -> vector<256x32xf32>
    %23 = arith.addf %16, %22 : vector<256x32xf32>
    %24 = vector.extract_strided_slice %1 {offsets = [1, 0, 0], sizes = [16, 16, 32], strides = [1, 1, 1]} : vector<18x18x32xf32> to vector<16x16x32xf32>
    %25 = vector.shape_cast %24 : vector<16x16x32xf32> to vector<256x32xf32>
    %26 = arith.truncf %25 : vector<256x32xf32> to vector<256x32xbf16>
    %c3 = arith.constant 3 : index
    %c0_13 = arith.constant 0 : index
    %c0_14 = arith.constant 0 : index
    %27 = vector.load %arg2[%c3, %c0_13, %c0_14] : memref<9x32x32xbf16, #tpu.memory_space<vmem>>, vector<1x32x32xbf16>
    %28 = vector.shape_cast %27 : vector<1x32x32xbf16> to vector<32x32xbf16>
    %cst_15 = arith.constant dense<0.000000e+00> : vector<256x32xf32>
    %29 = tpu.matmul %26, %28, %cst_15 {dimension_numbers = #tpu.dot_dimension_numbers<[1], [0], [0], [1], [0, 0, 1, 1], [], []>} : vector<256x32xbf16>, vector<32x32xbf16>, vector<256x32xf32> -> vector<256x32xf32>
    %30 = arith.addf %23, %29 : vector<256x32xf32>
    %31 = vector.extract_strided_slice %1 {offsets = [1, 1, 0], sizes = [16, 16, 32], strides = [1, 1, 1]} : vector<18x18x32xf32> to vector<16x16x32xf32>
    %32 = vector.shape_cast %31 : vector<16x16x32xf32> to vector<256x32xf32>
    %33 = arith.truncf %32 : vector<256x32xf32> to vector<256x32xbf16>
    %c4 = arith.constant 4 : index
    %c0_16 = arith.constant 0 : index
    %c0_17 = arith.constant 0 : index
    %34 = vector.load %arg2[%c4, %c0_16, %c0_17] : memref<9x32x32xbf16, #tpu.memory_space<vmem>>, vector<1x32x32xbf16>
    %35 = vector.shape_cast %34 : vector<1x32x32xbf16> to vector<32x32xbf16>
    %cst_18 = arith.constant dense<0.000000e+00> : vector<256x32xf32>
    %36 = tpu.matmul %33, %35, %cst_18 {dimension_numbers = #tpu.dot_dimension_numbers<[1], [0], [0], [1], [0, 0, 1, 1], [], []>} : vector<256x32xbf16>, vector<32x32xbf16>, vector<256x32xf32> -> vector<256x32xf32>
    %37 = arith.addf %30, %36 : vector<256x32xf32>
    %38 = vector.extract_strided_slice %1 {offsets = [1, 2, 0], sizes = [16, 16, 32], strides = [1, 1, 1]} : vector<18x18x32xf32> to vector<16x16x32xf32>
    %39 = vector.shape_cast %38 : vector<16x16x32xf32> to vector<256x32xf32>
    %40 = arith.truncf %39 : vector<256x32xf32> to vector<256x32xbf16>
    %c5 = arith.constant 5 : index
    %c0_19 = arith.constant 0 : index
    %c0_20 = arith.constant 0 : index
    %41 = vector.load %arg2[%c5, %c0_19, %c0_20] : memref<9x32x32xbf16, #tpu.memory_space<vmem>>, vector<1x32x32xbf16>
    %42 = vector.shape_cast %41 : vector<1x32x32xbf16> to vector<32x32xbf16>
    %cst_21 = arith.constant dense<0.000000e+00> : vector<256x32xf32>
    %43 = tpu.matmul %40, %42, %cst_21 {dimension_numbers = #tpu.dot_dimension_numbers<[1], [0], [0], [1], [0, 0, 1, 1], [], []>} : vector<256x32xbf16>, vector<32x32xbf16>, vector<256x32xf32> -> vector<256x32xf32>
    %44 = arith.addf %37, %43 : vector<256x32xf32>
    %45 = vector.extract_strided_slice %1 {offsets = [2, 0, 0], sizes = [16, 16, 32], strides = [1, 1, 1]} : vector<18x18x32xf32> to vector<16x16x32xf32>
    %46 = vector.shape_cast %45 : vector<16x16x32xf32> to vector<256x32xf32>
    %47 = arith.truncf %46 : vector<256x32xf32> to vector<256x32xbf16>
    %c6 = arith.constant 6 : index
    %c0_22 = arith.constant 0 : index
    %c0_23 = arith.constant 0 : index
    %48 = vector.load %arg2[%c6, %c0_22, %c0_23] : memref<9x32x32xbf16, #tpu.memory_space<vmem>>, vector<1x32x32xbf16>
    %49 = vector.shape_cast %48 : vector<1x32x32xbf16> to vector<32x32xbf16>
    %cst_24 = arith.constant dense<0.000000e+00> : vector<256x32xf32>
    %50 = tpu.matmul %47, %49, %cst_24 {dimension_numbers = #tpu.dot_dimension_numbers<[1], [0], [0], [1], [0, 0, 1, 1], [], []>} : vector<256x32xbf16>, vector<32x32xbf16>, vector<256x32xf32> -> vector<256x32xf32>
    %51 = arith.addf %44, %50 : vector<256x32xf32>
    %52 = vector.extract_strided_slice %1 {offsets = [2, 1, 0], sizes = [16, 16, 32], strides = [1, 1, 1]} : vector<18x18x32xf32> to vector<16x16x32xf32>
    %53 = vector.shape_cast %52 : vector<16x16x32xf32> to vector<256x32xf32>
    %54 = arith.truncf %53 : vector<256x32xf32> to vector<256x32xbf16>
    %c7 = arith.constant 7 : index
    %c0_25 = arith.constant 0 : index
    %c0_26 = arith.constant 0 : index
    %55 = vector.load %arg2[%c7, %c0_25, %c0_26] : memref<9x32x32xbf16, #tpu.memory_space<vmem>>, vector<1x32x32xbf16>
    %56 = vector.shape_cast %55 : vector<1x32x32xbf16> to vector<32x32xbf16>
    %cst_27 = arith.constant dense<0.000000e+00> : vector<256x32xf32>
    %57 = tpu.matmul %54, %56, %cst_27 {dimension_numbers = #tpu.dot_dimension_numbers<[1], [0], [0], [1], [0, 0, 1, 1], [], []>} : vector<256x32xbf16>, vector<32x32xbf16>, vector<256x32xf32> -> vector<256x32xf32>
    %58 = arith.addf %51, %57 : vector<256x32xf32>
    %59 = vector.extract_strided_slice %1 {offsets = [2, 2, 0], sizes = [16, 16, 32], strides = [1, 1, 1]} : vector<18x18x32xf32> to vector<16x16x32xf32>
    %60 = vector.shape_cast %59 : vector<16x16x32xf32> to vector<256x32xf32>
    %61 = arith.truncf %60 : vector<256x32xf32> to vector<256x32xbf16>
    %c8 = arith.constant 8 : index
    %c0_28 = arith.constant 0 : index
    %c0_29 = arith.constant 0 : index
    %62 = vector.load %arg2[%c8, %c0_28, %c0_29] : memref<9x32x32xbf16, #tpu.memory_space<vmem>>, vector<1x32x32xbf16>
    %63 = vector.shape_cast %62 : vector<1x32x32xbf16> to vector<32x32xbf16>
    %cst_30 = arith.constant dense<0.000000e+00> : vector<256x32xf32>
    %64 = tpu.matmul %61, %63, %cst_30 {dimension_numbers = #tpu.dot_dimension_numbers<[1], [0], [0], [1], [0, 0, 1, 1], [], []>} : vector<256x32xbf16>, vector<32x32xbf16>, vector<256x32xf32> -> vector<256x32xf32>
    %65 = arith.addf %58, %64 : vector<256x32xf32>
    %c0_31 = arith.constant 0 : index
    %c0_32 = arith.constant 0 : index
    %66 = vector.load %arg3[%c0_31, %c0_32] : memref<1x32xf32, #tpu.memory_space<vmem>>, vector<1x32xf32>
    %67 = vector.broadcast %66 : vector<1x32xf32> to vector<256x32xf32>
    %68 = arith.mulf %65, %67 : vector<256x32xf32>
    %c0_33 = arith.constant 0 : index
    %c0_34 = arith.constant 0 : index
    %69 = vector.load %arg4[%c0_33, %c0_34] : memref<1x32xf32, #tpu.memory_space<vmem>>, vector<1x32xf32>
    %70 = vector.broadcast %69 : vector<1x32xf32> to vector<256x32xf32>
    %71 = arith.addf %68, %70 : vector<256x32xf32>
    %cst_35 = arith.constant 0.000000e+00 : f32
    %72 = vector.broadcast %cst_35 : f32 to vector<256x32xf32>
    %73 = arith.maximumf %71, %72 : vector<256x32xf32>
    %74 = vector.shape_cast %73 : vector<256x32xf32> to vector<16x16x32xf32>
    %c0_36 = arith.constant 0 : index
    %c0_37 = arith.constant 0 : index
    %c0_38 = arith.constant 0 : index
    %c0_39 = arith.constant 0 : index
    %75 = vector.load %arg5[%c0_36, %c0_37, %c0_38, %c0_39] : memref<1x16x16x32xf32, #tpu.memory_space<vmem>>, vector<1x16x16x32xf32>
    %76 = vector.shape_cast %75 : vector<1x16x16x32xf32> to vector<16x16x32xf32>
    %77 = vector.shape_cast %74 : vector<16x16x32xf32> to vector<1x16x16x32xf32>
    tpu.vector_store %arg5[%c0_36, %c0_37, %c0_38, %c0_39], %77 {strides = array<i32>} : memref<1x16x16x32xf32, #tpu.memory_space<vmem>>, vector<1x16x16x32xf32>,
    return
  }
  func.func @transform_0(%arg0: i32) -> (i32, i32, i32, i32) {
    %c0_i32 = arith.constant 0 : i32
    %c0_i32_0 = arith.constant 0 : i32
    %c0_i32_1 = arith.constant 0 : i32
    %c0_i32_2 = arith.constant 0 : i32
    return %arg0, %c0_i32, %c0_i32_0, %c0_i32_1 : i32, i32, i32, i32
  }
  func.func @transform_1(%arg0: i32) -> (i32, i32, i32) {
    %c0_i32 = arith.constant 0 : i32
    %c0_i32_0 = arith.constant 0 : i32
    %c0_i32_1 = arith.constant 0 : i32
    %c0_i32_2 = arith.constant 0 : i32
    return %c0_i32, %c0_i32_0, %c0_i32_1 : i32, i32, i32
  }
  func.func @transform_2(%arg0: i32) -> (i32, i32) {
    %c0_i32 = arith.constant 0 : i32
    %c0_i32_0 = arith.constant 0 : i32
    %c0_i32_1 = arith.constant 0 : i32
    return %c0_i32, %c0_i32_0 : i32, i32
  }
  func.func @transform_3(%arg0: i32) -> (i32, i32) {
    %c0_i32 = arith.constant 0 : i32
    %c0_i32_0 = arith.constant 0 : i32
    %c0_i32_1 = arith.constant 0 : i32
    return %c0_i32, %c0_i32_0 : i32, i32
  }
  func.func @transform_4(%arg0: i32) -> (i32, i32, i32, i32) {
    %c0_i32 = arith.constant 0 : i32
    %c0_i32_0 = arith.constant 0 : i32
    %c0_i32_1 = arith.constant 0 : i32
    %c0_i32_2 = arith.constant 0 : i32
    return %arg0, %c0_i32, %c0_i32_0, %c0_i32_1 : i32, i32, i32, i32
  }
}

module attributes {stable_mosaic.version = 11 : i64} {
  func.func @_matmul_bn_kernel(%arg0: i32, %arg1: i32, %arg2: memref<1x256x32xf32, #tpu.memory_space<vmem>>, %arg3: memref<32x32xbf16, #tpu.memory_space<vmem>>, %arg4: memref<1x32xf32, #tpu.memory_space<vmem>>, %arg5: memref<1x32xf32, #tpu.memory_space<vmem>>, %arg6: memref<1x256x32xf32, #tpu.memory_space<vmem>>) attributes {dimension_semantics = [#tpu.dimension_semantics<parallel>, #tpu.dimension_semantics<parallel>], iteration_bounds = array<i64: 2, 1>, scalar_prefetch = 0 : i64, scratch_operands = 0 : i64, tpu.core_type = #tpu.core_type<tc>, window_params = [{transform_indices = @transform_0, window_bounds = array<i64: 1, 256, 32>}, {pipeline_mode = #tpu.pipeline_mode<synchronous>, transform_indices = @transform_1, window_bounds = array<i64: 32, 32>}, {pipeline_mode = #tpu.pipeline_mode<synchronous>, transform_indices = @transform_2, window_bounds = array<i64: 1, 32>}, {pipeline_mode = #tpu.pipeline_mode<synchronous>, transform_indices = @transform_3, window_bounds = array<i64: 1, 32>}, {transform_indices = @transform_4, window_bounds = array<i64: 1, 256, 32>}]} {
    %c0 = arith.constant 0 : index
    %c0_0 = arith.constant 0 : index
    %c0_1 = arith.constant 0 : index
    %0 = vector.load %arg2[%c0, %c0_0, %c0_1] : memref<1x256x32xf32, #tpu.memory_space<vmem>>, vector<1x256x32xf32>
    %1 = vector.shape_cast %0 : vector<1x256x32xf32> to vector<256x32xf32>
    %2 = arith.truncf %1 : vector<256x32xf32> to vector<256x32xbf16>
    %c0_2 = arith.constant 0 : index
    %c0_3 = arith.constant 0 : index
    %3 = vector.load %arg3[%c0_2, %c0_3] : memref<32x32xbf16, #tpu.memory_space<vmem>>, vector<32x32xbf16>
    %cst = arith.constant dense<0.000000e+00> : vector<256x32xf32>
    %4 = tpu.matmul %2, %3, %cst {dimension_numbers = #tpu.dot_dimension_numbers<[1], [0], [0], [1], [0, 0, 1, 1], [], []>} : vector<256x32xbf16>, vector<32x32xbf16>, vector<256x32xf32> -> vector<256x32xf32>
    %c0_4 = arith.constant 0 : index
    %c0_5 = arith.constant 0 : index
    %5 = vector.load %arg4[%c0_4, %c0_5] : memref<1x32xf32, #tpu.memory_space<vmem>>, vector<1x32xf32>
    %6 = vector.broadcast %5 : vector<1x32xf32> to vector<256x32xf32>
    %7 = arith.mulf %4, %6 : vector<256x32xf32>
    %c0_6 = arith.constant 0 : index
    %c0_7 = arith.constant 0 : index
    %8 = vector.load %arg5[%c0_6, %c0_7] : memref<1x32xf32, #tpu.memory_space<vmem>>, vector<1x32xf32>
    %9 = vector.broadcast %8 : vector<1x32xf32> to vector<256x32xf32>
    %10 = arith.addf %7, %9 : vector<256x32xf32>
    %c0_8 = arith.constant 0 : index
    %c0_9 = arith.constant 0 : index
    %c0_10 = arith.constant 0 : index
    %11 = vector.load %arg6[%c0_8, %c0_9, %c0_10] : memref<1x256x32xf32, #tpu.memory_space<vmem>>, vector<1x256x32xf32>
    %12 = vector.shape_cast %11 : vector<1x256x32xf32> to vector<256x32xf32>
    %13 = vector.shape_cast %10 : vector<256x32xf32> to vector<1x256x32xf32>
    tpu.vector_store %arg6[%c0_8, %c0_9, %c0_10], %13 {strides = array<i32>} : memref<1x256x32xf32, #tpu.memory_space<vmem>>, vector<1x256x32xf32>,
    return
  }
  func.func @transform_0(%arg0: i32, %arg1: i32) -> (i32, i32, i32) {
    %c0_i32 = arith.constant 0 : i32
    %c0_i32_0 = arith.constant 0 : i32
    return %arg0, %arg1, %c0_i32 : i32, i32, i32
  }
  func.func @transform_1(%arg0: i32, %arg1: i32) -> (i32, i32) {
    %c0_i32 = arith.constant 0 : i32
    %c0_i32_0 = arith.constant 0 : i32
    %c0_i32_1 = arith.constant 0 : i32
    return %c0_i32, %c0_i32_0 : i32, i32
  }
  func.func @transform_2(%arg0: i32, %arg1: i32) -> (i32, i32) {
    %c0_i32 = arith.constant 0 : i32
    %c0_i32_0 = arith.constant 0 : i32
    %c0_i32_1 = arith.constant 0 : i32
    return %c0_i32, %c0_i32_0 : i32, i32
  }
  func.func @transform_3(%arg0: i32, %arg1: i32) -> (i32, i32) {
    %c0_i32 = arith.constant 0 : i32
    %c0_i32_0 = arith.constant 0 : i32
    %c0_i32_1 = arith.constant 0 : i32
    return %c0_i32, %c0_i32_0 : i32, i32
  }
  func.func @transform_4(%arg0: i32, %arg1: i32) -> (i32, i32, i32) {
    %c0_i32 = arith.constant 0 : i32
    %c0_i32_0 = arith.constant 0 : i32
    return %arg0, %arg1, %c0_i32 : i32, i32, i32
  }
}

module attributes {stable_mosaic.version = 11 : i64} {
  func.func @_conv3x3_bn_add_relu_kernel(%arg0: i32, %arg1: memref<1x18x18x32xf32, #tpu.memory_space<vmem>>, %arg2: memref<9x32x32xbf16, #tpu.memory_space<vmem>>, %arg3: memref<1x32xf32, #tpu.memory_space<vmem>>, %arg4: memref<1x32xf32, #tpu.memory_space<vmem>>, %arg5: memref<1x16x16x32xf32, #tpu.memory_space<vmem>>, %arg6: memref<1x16x16x32xf32, #tpu.memory_space<vmem>>) attributes {dimension_semantics = [#tpu.dimension_semantics<parallel>], iteration_bounds = array<i64: 2>, scalar_prefetch = 0 : i64, scratch_operands = 0 : i64, tpu.core_type = #tpu.core_type<tc>, window_params = [{transform_indices = @transform_0, window_bounds = array<i64: 1, 18, 18, 32>}, {pipeline_mode = #tpu.pipeline_mode<synchronous>, transform_indices = @transform_1, window_bounds = array<i64: 9, 32, 32>}, {pipeline_mode = #tpu.pipeline_mode<synchronous>, transform_indices = @transform_2, window_bounds = array<i64: 1, 32>}, {pipeline_mode = #tpu.pipeline_mode<synchronous>, transform_indices = @transform_3, window_bounds = array<i64: 1, 32>}, {transform_indices = @transform_4, window_bounds = array<i64: 1, 16, 16, 32>}, {transform_indices = @transform_5, window_bounds = array<i64: 1, 16, 16, 32>}]} {
    %c0 = arith.constant 0 : index
    %c0_0 = arith.constant 0 : index
    %c0_1 = arith.constant 0 : index
    %c0_2 = arith.constant 0 : index
    %0 = vector.load %arg1[%c0, %c0_0, %c0_1, %c0_2] : memref<1x18x18x32xf32, #tpu.memory_space<vmem>>, vector<1x18x18x32xf32>
    %1 = vector.shape_cast %0 : vector<1x18x18x32xf32> to vector<18x18x32xf32>
    %cst = arith.constant 0.000000e+00 : f32
    %2 = vector.broadcast %cst : f32 to vector<256x32xf32>
    %3 = vector.extract_strided_slice %1 {offsets = [0, 0, 0], sizes = [16, 16, 32], strides = [1, 1, 1]} : vector<18x18x32xf32> to vector<16x16x32xf32>
    %4 = vector.shape_cast %3 : vector<16x16x32xf32> to vector<256x32xf32>
    %5 = arith.truncf %4 : vector<256x32xf32> to vector<256x32xbf16>
    %c0_3 = arith.constant 0 : index
    %c0_4 = arith.constant 0 : index
    %c0_5 = arith.constant 0 : index
    %6 = vector.load %arg2[%c0_3, %c0_4, %c0_5] : memref<9x32x32xbf16, #tpu.memory_space<vmem>>, vector<1x32x32xbf16>
    %7 = vector.shape_cast %6 : vector<1x32x32xbf16> to vector<32x32xbf16>
    %cst_6 = arith.constant dense<0.000000e+00> : vector<256x32xf32>
    %8 = tpu.matmul %5, %7, %cst_6 {dimension_numbers = #tpu.dot_dimension_numbers<[1], [0], [0], [1], [0, 0, 1, 1], [], []>} : vector<256x32xbf16>, vector<32x32xbf16>, vector<256x32xf32> -> vector<256x32xf32>
    %9 = arith.addf %2, %8 : vector<256x32xf32>
    %10 = vector.extract_strided_slice %1 {offsets = [0, 1, 0], sizes = [16, 16, 32], strides = [1, 1, 1]} : vector<18x18x32xf32> to vector<16x16x32xf32>
    %11 = vector.shape_cast %10 : vector<16x16x32xf32> to vector<256x32xf32>
    %12 = arith.truncf %11 : vector<256x32xf32> to vector<256x32xbf16>
    %c1 = arith.constant 1 : index
    %c0_7 = arith.constant 0 : index
    %c0_8 = arith.constant 0 : index
    %13 = vector.load %arg2[%c1, %c0_7, %c0_8] : memref<9x32x32xbf16, #tpu.memory_space<vmem>>, vector<1x32x32xbf16>
    %14 = vector.shape_cast %13 : vector<1x32x32xbf16> to vector<32x32xbf16>
    %cst_9 = arith.constant dense<0.000000e+00> : vector<256x32xf32>
    %15 = tpu.matmul %12, %14, %cst_9 {dimension_numbers = #tpu.dot_dimension_numbers<[1], [0], [0], [1], [0, 0, 1, 1], [], []>} : vector<256x32xbf16>, vector<32x32xbf16>, vector<256x32xf32> -> vector<256x32xf32>
    %16 = arith.addf %9, %15 : vector<256x32xf32>
    %17 = vector.extract_strided_slice %1 {offsets = [0, 2, 0], sizes = [16, 16, 32], strides = [1, 1, 1]} : vector<18x18x32xf32> to vector<16x16x32xf32>
    %18 = vector.shape_cast %17 : vector<16x16x32xf32> to vector<256x32xf32>
    %19 = arith.truncf %18 : vector<256x32xf32> to vector<256x32xbf16>
    %c2 = arith.constant 2 : index
    %c0_10 = arith.constant 0 : index
    %c0_11 = arith.constant 0 : index
    %20 = vector.load %arg2[%c2, %c0_10, %c0_11] : memref<9x32x32xbf16, #tpu.memory_space<vmem>>, vector<1x32x32xbf16>
    %21 = vector.shape_cast %20 : vector<1x32x32xbf16> to vector<32x32xbf16>
    %cst_12 = arith.constant dense<0.000000e+00> : vector<256x32xf32>
    %22 = tpu.matmul %19, %21, %cst_12 {dimension_numbers = #tpu.dot_dimension_numbers<[1], [0], [0], [1], [0, 0, 1, 1], [], []>} : vector<256x32xbf16>, vector<32x32xbf16>, vector<256x32xf32> -> vector<256x32xf32>
    %23 = arith.addf %16, %22 : vector<256x32xf32>
    %24 = vector.extract_strided_slice %1 {offsets = [1, 0, 0], sizes = [16, 16, 32], strides = [1, 1, 1]} : vector<18x18x32xf32> to vector<16x16x32xf32>
    %25 = vector.shape_cast %24 : vector<16x16x32xf32> to vector<256x32xf32>
    %26 = arith.truncf %25 : vector<256x32xf32> to vector<256x32xbf16>
    %c3 = arith.constant 3 : index
    %c0_13 = arith.constant 0 : index
    %c0_14 = arith.constant 0 : index
    %27 = vector.load %arg2[%c3, %c0_13, %c0_14] : memref<9x32x32xbf16, #tpu.memory_space<vmem>>, vector<1x32x32xbf16>
    %28 = vector.shape_cast %27 : vector<1x32x32xbf16> to vector<32x32xbf16>
    %cst_15 = arith.constant dense<0.000000e+00> : vector<256x32xf32>
    %29 = tpu.matmul %26, %28, %cst_15 {dimension_numbers = #tpu.dot_dimension_numbers<[1], [0], [0], [1], [0, 0, 1, 1], [], []>} : vector<256x32xbf16>, vector<32x32xbf16>, vector<256x32xf32> -> vector<256x32xf32>
    %30 = arith.addf %23, %29 : vector<256x32xf32>
    %31 = vector.extract_strided_slice %1 {offsets = [1, 1, 0], sizes = [16, 16, 32], strides = [1, 1, 1]} : vector<18x18x32xf32> to vector<16x16x32xf32>
    %32 = vector.shape_cast %31 : vector<16x16x32xf32> to vector<256x32xf32>
    %33 = arith.truncf %32 : vector<256x32xf32> to vector<256x32xbf16>
    %c4 = arith.constant 4 : index
    %c0_16 = arith.constant 0 : index
    %c0_17 = arith.constant 0 : index
    %34 = vector.load %arg2[%c4, %c0_16, %c0_17] : memref<9x32x32xbf16, #tpu.memory_space<vmem>>, vector<1x32x32xbf16>
    %35 = vector.shape_cast %34 : vector<1x32x32xbf16> to vector<32x32xbf16>
    %cst_18 = arith.constant dense<0.000000e+00> : vector<256x32xf32>
    %36 = tpu.matmul %33, %35, %cst_18 {dimension_numbers = #tpu.dot_dimension_numbers<[1], [0], [0], [1], [0, 0, 1, 1], [], []>} : vector<256x32xbf16>, vector<32x32xbf16>, vector<256x32xf32> -> vector<256x32xf32>
    %37 = arith.addf %30, %36 : vector<256x32xf32>
    %38 = vector.extract_strided_slice %1 {offsets = [1, 2, 0], sizes = [16, 16, 32], strides = [1, 1, 1]} : vector<18x18x32xf32> to vector<16x16x32xf32>
    %39 = vector.shape_cast %38 : vector<16x16x32xf32> to vector<256x32xf32>
    %40 = arith.truncf %39 : vector<256x32xf32> to vector<256x32xbf16>
    %c5 = arith.constant 5 : index
    %c0_19 = arith.constant 0 : index
    %c0_20 = arith.constant 0 : index
    %41 = vector.load %arg2[%c5, %c0_19, %c0_20] : memref<9x32x32xbf16, #tpu.memory_space<vmem>>, vector<1x32x32xbf16>
    %42 = vector.shape_cast %41 : vector<1x32x32xbf16> to vector<32x32xbf16>
    %cst_21 = arith.constant dense<0.000000e+00> : vector<256x32xf32>
    %43 = tpu.matmul %40, %42, %cst_21 {dimension_numbers = #tpu.dot_dimension_numbers<[1], [0], [0], [1], [0, 0, 1, 1], [], []>} : vector<256x32xbf16>, vector<32x32xbf16>, vector<256x32xf32> -> vector<256x32xf32>
    %44 = arith.addf %37, %43 : vector<256x32xf32>
    %45 = vector.extract_strided_slice %1 {offsets = [2, 0, 0], sizes = [16, 16, 32], strides = [1, 1, 1]} : vector<18x18x32xf32> to vector<16x16x32xf32>
    %46 = vector.shape_cast %45 : vector<16x16x32xf32> to vector<256x32xf32>
    %47 = arith.truncf %46 : vector<256x32xf32> to vector<256x32xbf16>
    %c6 = arith.constant 6 : index
    %c0_22 = arith.constant 0 : index
    %c0_23 = arith.constant 0 : index
    %48 = vector.load %arg2[%c6, %c0_22, %c0_23] : memref<9x32x32xbf16, #tpu.memory_space<vmem>>, vector<1x32x32xbf16>
    %49 = vector.shape_cast %48 : vector<1x32x32xbf16> to vector<32x32xbf16>
    %cst_24 = arith.constant dense<0.000000e+00> : vector<256x32xf32>
    %50 = tpu.matmul %47, %49, %cst_24 {dimension_numbers = #tpu.dot_dimension_numbers<[1], [0], [0], [1], [0, 0, 1, 1], [], []>} : vector<256x32xbf16>, vector<32x32xbf16>, vector<256x32xf32> -> vector<256x32xf32>
    %51 = arith.addf %44, %50 : vector<256x32xf32>
    %52 = vector.extract_strided_slice %1 {offsets = [2, 1, 0], sizes = [16, 16, 32], strides = [1, 1, 1]} : vector<18x18x32xf32> to vector<16x16x32xf32>
    %53 = vector.shape_cast %52 : vector<16x16x32xf32> to vector<256x32xf32>
    %54 = arith.truncf %53 : vector<256x32xf32> to vector<256x32xbf16>
    %c7 = arith.constant 7 : index
    %c0_25 = arith.constant 0 : index
    %c0_26 = arith.constant 0 : index
    %55 = vector.load %arg2[%c7, %c0_25, %c0_26] : memref<9x32x32xbf16, #tpu.memory_space<vmem>>, vector<1x32x32xbf16>
    %56 = vector.shape_cast %55 : vector<1x32x32xbf16> to vector<32x32xbf16>
    %cst_27 = arith.constant dense<0.000000e+00> : vector<256x32xf32>
    %57 = tpu.matmul %54, %56, %cst_27 {dimension_numbers = #tpu.dot_dimension_numbers<[1], [0], [0], [1], [0, 0, 1, 1], [], []>} : vector<256x32xbf16>, vector<32x32xbf16>, vector<256x32xf32> -> vector<256x32xf32>
    %58 = arith.addf %51, %57 : vector<256x32xf32>
    %59 = vector.extract_strided_slice %1 {offsets = [2, 2, 0], sizes = [16, 16, 32], strides = [1, 1, 1]} : vector<18x18x32xf32> to vector<16x16x32xf32>
    %60 = vector.shape_cast %59 : vector<16x16x32xf32> to vector<256x32xf32>
    %61 = arith.truncf %60 : vector<256x32xf32> to vector<256x32xbf16>
    %c8 = arith.constant 8 : index
    %c0_28 = arith.constant 0 : index
    %c0_29 = arith.constant 0 : index
    %62 = vector.load %arg2[%c8, %c0_28, %c0_29] : memref<9x32x32xbf16, #tpu.memory_space<vmem>>, vector<1x32x32xbf16>
    %63 = vector.shape_cast %62 : vector<1x32x32xbf16> to vector<32x32xbf16>
    %cst_30 = arith.constant dense<0.000000e+00> : vector<256x32xf32>
    %64 = tpu.matmul %61, %63, %cst_30 {dimension_numbers = #tpu.dot_dimension_numbers<[1], [0], [0], [1], [0, 0, 1, 1], [], []>} : vector<256x32xbf16>, vector<32x32xbf16>, vector<256x32xf32> -> vector<256x32xf32>
    %65 = arith.addf %58, %64 : vector<256x32xf32>
    %c0_31 = arith.constant 0 : index
    %c0_32 = arith.constant 0 : index
    %66 = vector.load %arg3[%c0_31, %c0_32] : memref<1x32xf32, #tpu.memory_space<vmem>>, vector<1x32xf32>
    %67 = vector.broadcast %66 : vector<1x32xf32> to vector<256x32xf32>
    %68 = arith.mulf %65, %67 : vector<256x32xf32>
    %c0_33 = arith.constant 0 : index
    %c0_34 = arith.constant 0 : index
    %69 = vector.load %arg4[%c0_33, %c0_34] : memref<1x32xf32, #tpu.memory_space<vmem>>, vector<1x32xf32>
    %70 = vector.broadcast %69 : vector<1x32xf32> to vector<256x32xf32>
    %71 = arith.addf %68, %70 : vector<256x32xf32>
    %c0_35 = arith.constant 0 : index
    %c0_36 = arith.constant 0 : index
    %c0_37 = arith.constant 0 : index
    %c0_38 = arith.constant 0 : index
    %72 = vector.load %arg5[%c0_35, %c0_36, %c0_37, %c0_38] : memref<1x16x16x32xf32, #tpu.memory_space<vmem>>, vector<1x16x16x32xf32>
    %73 = vector.shape_cast %72 : vector<1x16x16x32xf32> to vector<16x16x32xf32>
    %74 = vector.shape_cast %73 : vector<16x16x32xf32> to vector<256x32xf32>
    %75 = arith.addf %71, %74 : vector<256x32xf32>
    %cst_39 = arith.constant 0.000000e+00 : f32
    %76 = vector.broadcast %cst_39 : f32 to vector<256x32xf32>
    %77 = arith.maximumf %75, %76 : vector<256x32xf32>
    %78 = vector.shape_cast %77 : vector<256x32xf32> to vector<16x16x32xf32>
    %c0_40 = arith.constant 0 : index
    %c0_41 = arith.constant 0 : index
    %c0_42 = arith.constant 0 : index
    %c0_43 = arith.constant 0 : index
    %79 = vector.load %arg6[%c0_40, %c0_41, %c0_42, %c0_43] : memref<1x16x16x32xf32, #tpu.memory_space<vmem>>, vector<1x16x16x32xf32>
    %80 = vector.shape_cast %79 : vector<1x16x16x32xf32> to vector<16x16x32xf32>
    %81 = vector.shape_cast %78 : vector<16x16x32xf32> to vector<1x16x16x32xf32>
    tpu.vector_store %arg6[%c0_40, %c0_41, %c0_42, %c0_43], %81 {strides = array<i32>} : memref<1x16x16x32xf32, #tpu.memory_space<vmem>>, vector<1x16x16x32xf32>,
    return
  }
  func.func @transform_0(%arg0: i32) -> (i32, i32, i32, i32) {
    %c0_i32 = arith.constant 0 : i32
    %c0_i32_0 = arith.constant 0 : i32
    %c0_i32_1 = arith.constant 0 : i32
    %c0_i32_2 = arith.constant 0 : i32
    return %arg0, %c0_i32, %c0_i32_0, %c0_i32_1 : i32, i32, i32, i32
  }
  func.func @transform_1(%arg0: i32) -> (i32, i32, i32) {
    %c0_i32 = arith.constant 0 : i32
    %c0_i32_0 = arith.constant 0 : i32
    %c0_i32_1 = arith.constant 0 : i32
    %c0_i32_2 = arith.constant 0 : i32
    return %c0_i32, %c0_i32_0, %c0_i32_1 : i32, i32, i32
  }
  func.func @transform_2(%arg0: i32) -> (i32, i32) {
    %c0_i32 = arith.constant 0 : i32
    %c0_i32_0 = arith.constant 0 : i32
    %c0_i32_1 = arith.constant 0 : i32
    return %c0_i32, %c0_i32_0 : i32, i32
  }
  func.func @transform_3(%arg0: i32) -> (i32, i32) {
    %c0_i32 = arith.constant 0 : i32
    %c0_i32_0 = arith.constant 0 : i32
    %c0_i32_1 = arith.constant 0 : i32
    return %c0_i32, %c0_i32_0 : i32, i32
  }
  func.func @transform_4(%arg0: i32) -> (i32, i32, i32, i32) {
    %c0_i32 = arith.constant 0 : i32
    %c0_i32_0 = arith.constant 0 : i32
    %c0_i32_1 = arith.constant 0 : i32
    %c0_i32_2 = arith.constant 0 : i32
    return %arg0, %c0_i32, %c0_i32_0, %c0_i32_1 : i32, i32, i32, i32
  }
  func.func @transform_5(%arg0: i32) -> (i32, i32, i32, i32) {
    %c0_i32 = arith.constant 0 : i32
    %c0_i32_0 = arith.constant 0 : i32
    %c0_i32_1 = arith.constant 0 : i32
    %c0_i32_2 = arith.constant 0 : i32
    return %arg0, %c0_i32, %c0_i32_0, %c0_i32_1 : i32, i32, i32, i32
  }
}

module attributes {stable_mosaic.version = 11 : i64} {
  func.func @_matmul_bn_kernel(%arg0: i32, %arg1: i32, %arg2: memref<1x64x288xf32, #tpu.memory_space<vmem>>, %arg3: memref<288x64xbf16, #tpu.memory_space<vmem>>, %arg4: memref<1x64xf32, #tpu.memory_space<vmem>>, %arg5: memref<1x64xf32, #tpu.memory_space<vmem>>, %arg6: memref<1x64x64xf32, #tpu.memory_space<vmem>>) attributes {dimension_semantics = [#tpu.dimension_semantics<parallel>, #tpu.dimension_semantics<parallel>], iteration_bounds = array<i64: 2, 1>, scalar_prefetch = 0 : i64, scratch_operands = 0 : i64, tpu.core_type = #tpu.core_type<tc>, window_params = [{transform_indices = @transform_0, window_bounds = array<i64: 1, 64, 288>}, {pipeline_mode = #tpu.pipeline_mode<synchronous>, transform_indices = @transform_1, window_bounds = array<i64: 288, 64>}, {pipeline_mode = #tpu.pipeline_mode<synchronous>, transform_indices = @transform_2, window_bounds = array<i64: 1, 64>}, {pipeline_mode = #tpu.pipeline_mode<synchronous>, transform_indices = @transform_3, window_bounds = array<i64: 1, 64>}, {transform_indices = @transform_4, window_bounds = array<i64: 1, 64, 64>}]} {
    %c0 = arith.constant 0 : index
    %c0_0 = arith.constant 0 : index
    %c0_1 = arith.constant 0 : index
    %0 = vector.load %arg2[%c0, %c0_0, %c0_1] : memref<1x64x288xf32, #tpu.memory_space<vmem>>, vector<1x64x288xf32>
    %1 = vector.shape_cast %0 : vector<1x64x288xf32> to vector<64x288xf32>
    %2 = arith.truncf %1 : vector<64x288xf32> to vector<64x288xbf16>
    %c0_2 = arith.constant 0 : index
    %c0_3 = arith.constant 0 : index
    %3 = vector.load %arg3[%c0_2, %c0_3] : memref<288x64xbf16, #tpu.memory_space<vmem>>, vector<288x64xbf16>
    %cst = arith.constant dense<0.000000e+00> : vector<64x64xf32>
    %4 = tpu.matmul %2, %3, %cst {dimension_numbers = #tpu.dot_dimension_numbers<[1], [0], [0], [1], [0, 0, 1, 1], [], []>} : vector<64x288xbf16>, vector<288x64xbf16>, vector<64x64xf32> -> vector<64x64xf32>
    %c0_4 = arith.constant 0 : index
    %c0_5 = arith.constant 0 : index
    %5 = vector.load %arg4[%c0_4, %c0_5] : memref<1x64xf32, #tpu.memory_space<vmem>>, vector<1x64xf32>
    %6 = vector.broadcast %5 : vector<1x64xf32> to vector<64x64xf32>
    %7 = arith.mulf %4, %6 : vector<64x64xf32>
    %c0_6 = arith.constant 0 : index
    %c0_7 = arith.constant 0 : index
    %8 = vector.load %arg5[%c0_6, %c0_7] : memref<1x64xf32, #tpu.memory_space<vmem>>, vector<1x64xf32>
    %9 = vector.broadcast %8 : vector<1x64xf32> to vector<64x64xf32>
    %10 = arith.addf %7, %9 : vector<64x64xf32>
    %cst_8 = arith.constant 0.000000e+00 : f32
    %11 = vector.broadcast %cst_8 : f32 to vector<64x64xf32>
    %12 = arith.maximumf %10, %11 : vector<64x64xf32>
    %c0_9 = arith.constant 0 : index
    %c0_10 = arith.constant 0 : index
    %c0_11 = arith.constant 0 : index
    %13 = vector.load %arg6[%c0_9, %c0_10, %c0_11] : memref<1x64x64xf32, #tpu.memory_space<vmem>>, vector<1x64x64xf32>
    %14 = vector.shape_cast %13 : vector<1x64x64xf32> to vector<64x64xf32>
    %15 = vector.shape_cast %12 : vector<64x64xf32> to vector<1x64x64xf32>
    tpu.vector_store %arg6[%c0_9, %c0_10, %c0_11], %15 {strides = array<i32>} : memref<1x64x64xf32, #tpu.memory_space<vmem>>, vector<1x64x64xf32>,
    return
  }
  func.func @transform_0(%arg0: i32, %arg1: i32) -> (i32, i32, i32) {
    %c0_i32 = arith.constant 0 : i32
    %c0_i32_0 = arith.constant 0 : i32
    return %arg0, %arg1, %c0_i32 : i32, i32, i32
  }
  func.func @transform_1(%arg0: i32, %arg1: i32) -> (i32, i32) {
    %c0_i32 = arith.constant 0 : i32
    %c0_i32_0 = arith.constant 0 : i32
    %c0_i32_1 = arith.constant 0 : i32
    return %c0_i32, %c0_i32_0 : i32, i32
  }
  func.func @transform_2(%arg0: i32, %arg1: i32) -> (i32, i32) {
    %c0_i32 = arith.constant 0 : i32
    %c0_i32_0 = arith.constant 0 : i32
    %c0_i32_1 = arith.constant 0 : i32
    return %c0_i32, %c0_i32_0 : i32, i32
  }
  func.func @transform_3(%arg0: i32, %arg1: i32) -> (i32, i32) {
    %c0_i32 = arith.constant 0 : i32
    %c0_i32_0 = arith.constant 0 : i32
    %c0_i32_1 = arith.constant 0 : i32
    return %c0_i32, %c0_i32_0 : i32, i32
  }
  func.func @transform_4(%arg0: i32, %arg1: i32) -> (i32, i32, i32) {
    %c0_i32 = arith.constant 0 : i32
    %c0_i32_0 = arith.constant 0 : i32
    return %arg0, %arg1, %c0_i32 : i32, i32, i32
  }
}

module attributes {stable_mosaic.version = 11 : i64} {
  func.func @_matmul_bn_kernel(%arg0: i32, %arg1: i32, %arg2: memref<1x64x32xf32, #tpu.memory_space<vmem>>, %arg3: memref<32x64xbf16, #tpu.memory_space<vmem>>, %arg4: memref<1x64xf32, #tpu.memory_space<vmem>>, %arg5: memref<1x64xf32, #tpu.memory_space<vmem>>, %arg6: memref<1x64x64xf32, #tpu.memory_space<vmem>>) attributes {dimension_semantics = [#tpu.dimension_semantics<parallel>, #tpu.dimension_semantics<parallel>], iteration_bounds = array<i64: 2, 1>, scalar_prefetch = 0 : i64, scratch_operands = 0 : i64, tpu.core_type = #tpu.core_type<tc>, window_params = [{transform_indices = @transform_0, window_bounds = array<i64: 1, 64, 32>}, {pipeline_mode = #tpu.pipeline_mode<synchronous>, transform_indices = @transform_1, window_bounds = array<i64: 32, 64>}, {pipeline_mode = #tpu.pipeline_mode<synchronous>, transform_indices = @transform_2, window_bounds = array<i64: 1, 64>}, {pipeline_mode = #tpu.pipeline_mode<synchronous>, transform_indices = @transform_3, window_bounds = array<i64: 1, 64>}, {transform_indices = @transform_4, window_bounds = array<i64: 1, 64, 64>}]} {
    %c0 = arith.constant 0 : index
    %c0_0 = arith.constant 0 : index
    %c0_1 = arith.constant 0 : index
    %0 = vector.load %arg2[%c0, %c0_0, %c0_1] : memref<1x64x32xf32, #tpu.memory_space<vmem>>, vector<1x64x32xf32>
    %1 = vector.shape_cast %0 : vector<1x64x32xf32> to vector<64x32xf32>
    %2 = arith.truncf %1 : vector<64x32xf32> to vector<64x32xbf16>
    %c0_2 = arith.constant 0 : index
    %c0_3 = arith.constant 0 : index
    %3 = vector.load %arg3[%c0_2, %c0_3] : memref<32x64xbf16, #tpu.memory_space<vmem>>, vector<32x64xbf16>
    %cst = arith.constant dense<0.000000e+00> : vector<64x64xf32>
    %4 = tpu.matmul %2, %3, %cst {dimension_numbers = #tpu.dot_dimension_numbers<[1], [0], [0], [1], [0, 0, 1, 1], [], []>} : vector<64x32xbf16>, vector<32x64xbf16>, vector<64x64xf32> -> vector<64x64xf32>
    %c0_4 = arith.constant 0 : index
    %c0_5 = arith.constant 0 : index
    %5 = vector.load %arg4[%c0_4, %c0_5] : memref<1x64xf32, #tpu.memory_space<vmem>>, vector<1x64xf32>
    %6 = vector.broadcast %5 : vector<1x64xf32> to vector<64x64xf32>
    %7 = arith.mulf %4, %6 : vector<64x64xf32>
    %c0_6 = arith.constant 0 : index
    %c0_7 = arith.constant 0 : index
    %8 = vector.load %arg5[%c0_6, %c0_7] : memref<1x64xf32, #tpu.memory_space<vmem>>, vector<1x64xf32>
    %9 = vector.broadcast %8 : vector<1x64xf32> to vector<64x64xf32>
    %10 = arith.addf %7, %9 : vector<64x64xf32>
    %c0_8 = arith.constant 0 : index
    %c0_9 = arith.constant 0 : index
    %c0_10 = arith.constant 0 : index
    %11 = vector.load %arg6[%c0_8, %c0_9, %c0_10] : memref<1x64x64xf32, #tpu.memory_space<vmem>>, vector<1x64x64xf32>
    %12 = vector.shape_cast %11 : vector<1x64x64xf32> to vector<64x64xf32>
    %13 = vector.shape_cast %10 : vector<64x64xf32> to vector<1x64x64xf32>
    tpu.vector_store %arg6[%c0_8, %c0_9, %c0_10], %13 {strides = array<i32>} : memref<1x64x64xf32, #tpu.memory_space<vmem>>, vector<1x64x64xf32>,
    return
  }
  func.func @transform_0(%arg0: i32, %arg1: i32) -> (i32, i32, i32) {
    %c0_i32 = arith.constant 0 : i32
    %c0_i32_0 = arith.constant 0 : i32
    return %arg0, %arg1, %c0_i32 : i32, i32, i32
  }
  func.func @transform_1(%arg0: i32, %arg1: i32) -> (i32, i32) {
    %c0_i32 = arith.constant 0 : i32
    %c0_i32_0 = arith.constant 0 : i32
    %c0_i32_1 = arith.constant 0 : i32
    return %c0_i32, %c0_i32_0 : i32, i32
  }
  func.func @transform_2(%arg0: i32, %arg1: i32) -> (i32, i32) {
    %c0_i32 = arith.constant 0 : i32
    %c0_i32_0 = arith.constant 0 : i32
    %c0_i32_1 = arith.constant 0 : i32
    return %c0_i32, %c0_i32_0 : i32, i32
  }
  func.func @transform_3(%arg0: i32, %arg1: i32) -> (i32, i32) {
    %c0_i32 = arith.constant 0 : i32
    %c0_i32_0 = arith.constant 0 : i32
    %c0_i32_1 = arith.constant 0 : i32
    return %c0_i32, %c0_i32_0 : i32, i32
  }
  func.func @transform_4(%arg0: i32, %arg1: i32) -> (i32, i32, i32) {
    %c0_i32 = arith.constant 0 : i32
    %c0_i32_0 = arith.constant 0 : i32
    return %arg0, %arg1, %c0_i32 : i32, i32, i32
  }
}

module attributes {stable_mosaic.version = 11 : i64} {
  func.func @_conv3x3_bn_kernel(%arg0: i32, %arg1: memref<1x10x10x64xf32, #tpu.memory_space<vmem>>, %arg2: memref<9x64x64xbf16, #tpu.memory_space<vmem>>, %arg3: memref<1x64xf32, #tpu.memory_space<vmem>>, %arg4: memref<1x64xf32, #tpu.memory_space<vmem>>, %arg5: memref<1x8x8x64xf32, #tpu.memory_space<vmem>>) attributes {dimension_semantics = [#tpu.dimension_semantics<parallel>], iteration_bounds = array<i64: 2>, scalar_prefetch = 0 : i64, scratch_operands = 0 : i64, tpu.core_type = #tpu.core_type<tc>, window_params = [{transform_indices = @transform_0, window_bounds = array<i64: 1, 10, 10, 64>}, {pipeline_mode = #tpu.pipeline_mode<synchronous>, transform_indices = @transform_1, window_bounds = array<i64: 9, 64, 64>}, {pipeline_mode = #tpu.pipeline_mode<synchronous>, transform_indices = @transform_2, window_bounds = array<i64: 1, 64>}, {pipeline_mode = #tpu.pipeline_mode<synchronous>, transform_indices = @transform_3, window_bounds = array<i64: 1, 64>}, {transform_indices = @transform_4, window_bounds = array<i64: 1, 8, 8, 64>}]} {
    %c0 = arith.constant 0 : index
    %c0_0 = arith.constant 0 : index
    %c0_1 = arith.constant 0 : index
    %c0_2 = arith.constant 0 : index
    %0 = vector.load %arg1[%c0, %c0_0, %c0_1, %c0_2] : memref<1x10x10x64xf32, #tpu.memory_space<vmem>>, vector<1x10x10x64xf32>
    %1 = vector.shape_cast %0 : vector<1x10x10x64xf32> to vector<10x10x64xf32>
    %cst = arith.constant 0.000000e+00 : f32
    %2 = vector.broadcast %cst : f32 to vector<64x64xf32>
    %3 = vector.extract_strided_slice %1 {offsets = [0, 0, 0], sizes = [8, 8, 64], strides = [1, 1, 1]} : vector<10x10x64xf32> to vector<8x8x64xf32>
    %4 = vector.shape_cast %3 : vector<8x8x64xf32> to vector<64x64xf32>
    %5 = arith.truncf %4 : vector<64x64xf32> to vector<64x64xbf16>
    %c0_3 = arith.constant 0 : index
    %c0_4 = arith.constant 0 : index
    %c0_5 = arith.constant 0 : index
    %6 = vector.load %arg2[%c0_3, %c0_4, %c0_5] : memref<9x64x64xbf16, #tpu.memory_space<vmem>>, vector<1x64x64xbf16>
    %7 = vector.shape_cast %6 : vector<1x64x64xbf16> to vector<64x64xbf16>
    %cst_6 = arith.constant dense<0.000000e+00> : vector<64x64xf32>
    %8 = tpu.matmul %5, %7, %cst_6 {dimension_numbers = #tpu.dot_dimension_numbers<[1], [0], [0], [1], [0, 0, 1, 1], [], []>} : vector<64x64xbf16>, vector<64x64xbf16>, vector<64x64xf32> -> vector<64x64xf32>
    %9 = arith.addf %2, %8 : vector<64x64xf32>
    %10 = vector.extract_strided_slice %1 {offsets = [0, 1, 0], sizes = [8, 8, 64], strides = [1, 1, 1]} : vector<10x10x64xf32> to vector<8x8x64xf32>
    %11 = vector.shape_cast %10 : vector<8x8x64xf32> to vector<64x64xf32>
    %12 = arith.truncf %11 : vector<64x64xf32> to vector<64x64xbf16>
    %c1 = arith.constant 1 : index
    %c0_7 = arith.constant 0 : index
    %c0_8 = arith.constant 0 : index
    %13 = vector.load %arg2[%c1, %c0_7, %c0_8] : memref<9x64x64xbf16, #tpu.memory_space<vmem>>, vector<1x64x64xbf16>
    %14 = vector.shape_cast %13 : vector<1x64x64xbf16> to vector<64x64xbf16>
    %cst_9 = arith.constant dense<0.000000e+00> : vector<64x64xf32>
    %15 = tpu.matmul %12, %14, %cst_9 {dimension_numbers = #tpu.dot_dimension_numbers<[1], [0], [0], [1], [0, 0, 1, 1], [], []>} : vector<64x64xbf16>, vector<64x64xbf16>, vector<64x64xf32> -> vector<64x64xf32>
    %16 = arith.addf %9, %15 : vector<64x64xf32>
    %17 = vector.extract_strided_slice %1 {offsets = [0, 2, 0], sizes = [8, 8, 64], strides = [1, 1, 1]} : vector<10x10x64xf32> to vector<8x8x64xf32>
    %18 = vector.shape_cast %17 : vector<8x8x64xf32> to vector<64x64xf32>
    %19 = arith.truncf %18 : vector<64x64xf32> to vector<64x64xbf16>
    %c2 = arith.constant 2 : index
    %c0_10 = arith.constant 0 : index
    %c0_11 = arith.constant 0 : index
    %20 = vector.load %arg2[%c2, %c0_10, %c0_11] : memref<9x64x64xbf16, #tpu.memory_space<vmem>>, vector<1x64x64xbf16>
    %21 = vector.shape_cast %20 : vector<1x64x64xbf16> to vector<64x64xbf16>
    %cst_12 = arith.constant dense<0.000000e+00> : vector<64x64xf32>
    %22 = tpu.matmul %19, %21, %cst_12 {dimension_numbers = #tpu.dot_dimension_numbers<[1], [0], [0], [1], [0, 0, 1, 1], [], []>} : vector<64x64xbf16>, vector<64x64xbf16>, vector<64x64xf32> -> vector<64x64xf32>
    %23 = arith.addf %16, %22 : vector<64x64xf32>
    %24 = vector.extract_strided_slice %1 {offsets = [1, 0, 0], sizes = [8, 8, 64], strides = [1, 1, 1]} : vector<10x10x64xf32> to vector<8x8x64xf32>
    %25 = vector.shape_cast %24 : vector<8x8x64xf32> to vector<64x64xf32>
    %26 = arith.truncf %25 : vector<64x64xf32> to vector<64x64xbf16>
    %c3 = arith.constant 3 : index
    %c0_13 = arith.constant 0 : index
    %c0_14 = arith.constant 0 : index
    %27 = vector.load %arg2[%c3, %c0_13, %c0_14] : memref<9x64x64xbf16, #tpu.memory_space<vmem>>, vector<1x64x64xbf16>
    %28 = vector.shape_cast %27 : vector<1x64x64xbf16> to vector<64x64xbf16>
    %cst_15 = arith.constant dense<0.000000e+00> : vector<64x64xf32>
    %29 = tpu.matmul %26, %28, %cst_15 {dimension_numbers = #tpu.dot_dimension_numbers<[1], [0], [0], [1], [0, 0, 1, 1], [], []>} : vector<64x64xbf16>, vector<64x64xbf16>, vector<64x64xf32> -> vector<64x64xf32>
    %30 = arith.addf %23, %29 : vector<64x64xf32>
    %31 = vector.extract_strided_slice %1 {offsets = [1, 1, 0], sizes = [8, 8, 64], strides = [1, 1, 1]} : vector<10x10x64xf32> to vector<8x8x64xf32>
    %32 = vector.shape_cast %31 : vector<8x8x64xf32> to vector<64x64xf32>
    %33 = arith.truncf %32 : vector<64x64xf32> to vector<64x64xbf16>
    %c4 = arith.constant 4 : index
    %c0_16 = arith.constant 0 : index
    %c0_17 = arith.constant 0 : index
    %34 = vector.load %arg2[%c4, %c0_16, %c0_17] : memref<9x64x64xbf16, #tpu.memory_space<vmem>>, vector<1x64x64xbf16>
    %35 = vector.shape_cast %34 : vector<1x64x64xbf16> to vector<64x64xbf16>
    %cst_18 = arith.constant dense<0.000000e+00> : vector<64x64xf32>
    %36 = tpu.matmul %33, %35, %cst_18 {dimension_numbers = #tpu.dot_dimension_numbers<[1], [0], [0], [1], [0, 0, 1, 1], [], []>} : vector<64x64xbf16>, vector<64x64xbf16>, vector<64x64xf32> -> vector<64x64xf32>
    %37 = arith.addf %30, %36 : vector<64x64xf32>
    %38 = vector.extract_strided_slice %1 {offsets = [1, 2, 0], sizes = [8, 8, 64], strides = [1, 1, 1]} : vector<10x10x64xf32> to vector<8x8x64xf32>
    %39 = vector.shape_cast %38 : vector<8x8x64xf32> to vector<64x64xf32>
    %40 = arith.truncf %39 : vector<64x64xf32> to vector<64x64xbf16>
    %c5 = arith.constant 5 : index
    %c0_19 = arith.constant 0 : index
    %c0_20 = arith.constant 0 : index
    %41 = vector.load %arg2[%c5, %c0_19, %c0_20] : memref<9x64x64xbf16, #tpu.memory_space<vmem>>, vector<1x64x64xbf16>
    %42 = vector.shape_cast %41 : vector<1x64x64xbf16> to vector<64x64xbf16>
    %cst_21 = arith.constant dense<0.000000e+00> : vector<64x64xf32>
    %43 = tpu.matmul %40, %42, %cst_21 {dimension_numbers = #tpu.dot_dimension_numbers<[1], [0], [0], [1], [0, 0, 1, 1], [], []>} : vector<64x64xbf16>, vector<64x64xbf16>, vector<64x64xf32> -> vector<64x64xf32>
    %44 = arith.addf %37, %43 : vector<64x64xf32>
    %45 = vector.extract_strided_slice %1 {offsets = [2, 0, 0], sizes = [8, 8, 64], strides = [1, 1, 1]} : vector<10x10x64xf32> to vector<8x8x64xf32>
    %46 = vector.shape_cast %45 : vector<8x8x64xf32> to vector<64x64xf32>
    %47 = arith.truncf %46 : vector<64x64xf32> to vector<64x64xbf16>
    %c6 = arith.constant 6 : index
    %c0_22 = arith.constant 0 : index
    %c0_23 = arith.constant 0 : index
    %48 = vector.load %arg2[%c6, %c0_22, %c0_23] : memref<9x64x64xbf16, #tpu.memory_space<vmem>>, vector<1x64x64xbf16>
    %49 = vector.shape_cast %48 : vector<1x64x64xbf16> to vector<64x64xbf16>
    %cst_24 = arith.constant dense<0.000000e+00> : vector<64x64xf32>
    %50 = tpu.matmul %47, %49, %cst_24 {dimension_numbers = #tpu.dot_dimension_numbers<[1], [0], [0], [1], [0, 0, 1, 1], [], []>} : vector<64x64xbf16>, vector<64x64xbf16>, vector<64x64xf32> -> vector<64x64xf32>
    %51 = arith.addf %44, %50 : vector<64x64xf32>
    %52 = vector.extract_strided_slice %1 {offsets = [2, 1, 0], sizes = [8, 8, 64], strides = [1, 1, 1]} : vector<10x10x64xf32> to vector<8x8x64xf32>
    %53 = vector.shape_cast %52 : vector<8x8x64xf32> to vector<64x64xf32>
    %54 = arith.truncf %53 : vector<64x64xf32> to vector<64x64xbf16>
    %c7 = arith.constant 7 : index
    %c0_25 = arith.constant 0 : index
    %c0_26 = arith.constant 0 : index
    %55 = vector.load %arg2[%c7, %c0_25, %c0_26] : memref<9x64x64xbf16, #tpu.memory_space<vmem>>, vector<1x64x64xbf16>
    %56 = vector.shape_cast %55 : vector<1x64x64xbf16> to vector<64x64xbf16>
    %cst_27 = arith.constant dense<0.000000e+00> : vector<64x64xf32>
    %57 = tpu.matmul %54, %56, %cst_27 {dimension_numbers = #tpu.dot_dimension_numbers<[1], [0], [0], [1], [0, 0, 1, 1], [], []>} : vector<64x64xbf16>, vector<64x64xbf16>, vector<64x64xf32> -> vector<64x64xf32>
    %58 = arith.addf %51, %57 : vector<64x64xf32>
    %59 = vector.extract_strided_slice %1 {offsets = [2, 2, 0], sizes = [8, 8, 64], strides = [1, 1, 1]} : vector<10x10x64xf32> to vector<8x8x64xf32>
    %60 = vector.shape_cast %59 : vector<8x8x64xf32> to vector<64x64xf32>
    %61 = arith.truncf %60 : vector<64x64xf32> to vector<64x64xbf16>
    %c8 = arith.constant 8 : index
    %c0_28 = arith.constant 0 : index
    %c0_29 = arith.constant 0 : index
    %62 = vector.load %arg2[%c8, %c0_28, %c0_29] : memref<9x64x64xbf16, #tpu.memory_space<vmem>>, vector<1x64x64xbf16>
    %63 = vector.shape_cast %62 : vector<1x64x64xbf16> to vector<64x64xbf16>
    %cst_30 = arith.constant dense<0.000000e+00> : vector<64x64xf32>
    %64 = tpu.matmul %61, %63, %cst_30 {dimension_numbers = #tpu.dot_dimension_numbers<[1], [0], [0], [1], [0, 0, 1, 1], [], []>} : vector<64x64xbf16>, vector<64x64xbf16>, vector<64x64xf32> -> vector<64x64xf32>
    %65 = arith.addf %58, %64 : vector<64x64xf32>
    %c0_31 = arith.constant 0 : index
    %c0_32 = arith.constant 0 : index
    %66 = vector.load %arg3[%c0_31, %c0_32] : memref<1x64xf32, #tpu.memory_space<vmem>>, vector<1x64xf32>
    %67 = vector.broadcast %66 : vector<1x64xf32> to vector<64x64xf32>
    %68 = arith.mulf %65, %67 : vector<64x64xf32>
    %c0_33 = arith.constant 0 : index
    %c0_34 = arith.constant 0 : index
    %69 = vector.load %arg4[%c0_33, %c0_34] : memref<1x64xf32, #tpu.memory_space<vmem>>, vector<1x64xf32>
    %70 = vector.broadcast %69 : vector<1x64xf32> to vector<64x64xf32>
    %71 = arith.addf %68, %70 : vector<64x64xf32>
    %cst_35 = arith.constant 0.000000e+00 : f32
    %72 = vector.broadcast %cst_35 : f32 to vector<64x64xf32>
    %73 = arith.maximumf %71, %72 : vector<64x64xf32>
    %74 = vector.shape_cast %73 : vector<64x64xf32> to vector<8x8x64xf32>
    %c0_36 = arith.constant 0 : index
    %c0_37 = arith.constant 0 : index
    %c0_38 = arith.constant 0 : index
    %c0_39 = arith.constant 0 : index
    %75 = vector.load %arg5[%c0_36, %c0_37, %c0_38, %c0_39] : memref<1x8x8x64xf32, #tpu.memory_space<vmem>>, vector<1x8x8x64xf32>
    %76 = vector.shape_cast %75 : vector<1x8x8x64xf32> to vector<8x8x64xf32>
    %77 = vector.shape_cast %74 : vector<8x8x64xf32> to vector<1x8x8x64xf32>
    tpu.vector_store %arg5[%c0_36, %c0_37, %c0_38, %c0_39], %77 {strides = array<i32>} : memref<1x8x8x64xf32, #tpu.memory_space<vmem>>, vector<1x8x8x64xf32>,
    return
  }
  func.func @transform_0(%arg0: i32) -> (i32, i32, i32, i32) {
    %c0_i32 = arith.constant 0 : i32
    %c0_i32_0 = arith.constant 0 : i32
    %c0_i32_1 = arith.constant 0 : i32
    %c0_i32_2 = arith.constant 0 : i32
    return %arg0, %c0_i32, %c0_i32_0, %c0_i32_1 : i32, i32, i32, i32
  }
  func.func @transform_1(%arg0: i32) -> (i32, i32, i32) {
    %c0_i32 = arith.constant 0 : i32
    %c0_i32_0 = arith.constant 0 : i32
    %c0_i32_1 = arith.constant 0 : i32
    %c0_i32_2 = arith.constant 0 : i32
    return %c0_i32, %c0_i32_0, %c0_i32_1 : i32, i32, i32
  }
  func.func @transform_2(%arg0: i32) -> (i32, i32) {
    %c0_i32 = arith.constant 0 : i32
    %c0_i32_0 = arith.constant 0 : i32
    %c0_i32_1 = arith.constant 0 : i32
    return %c0_i32, %c0_i32_0 : i32, i32
  }
  func.func @transform_3(%arg0: i32) -> (i32, i32) {
    %c0_i32 = arith.constant 0 : i32
    %c0_i32_0 = arith.constant 0 : i32
    %c0_i32_1 = arith.constant 0 : i32
    return %c0_i32, %c0_i32_0 : i32, i32
  }
  func.func @transform_4(%arg0: i32) -> (i32, i32, i32, i32) {
    %c0_i32 = arith.constant 0 : i32
    %c0_i32_0 = arith.constant 0 : i32
    %c0_i32_1 = arith.constant 0 : i32
    %c0_i32_2 = arith.constant 0 : i32
    return %arg0, %c0_i32, %c0_i32_0, %c0_i32_1 : i32, i32, i32, i32
  }
}

module attributes {stable_mosaic.version = 11 : i64} {
  func.func @_conv3x3_bn_add_relu_kernel(%arg0: i32, %arg1: memref<1x10x10x64xf32, #tpu.memory_space<vmem>>, %arg2: memref<9x64x64xbf16, #tpu.memory_space<vmem>>, %arg3: memref<1x64xf32, #tpu.memory_space<vmem>>, %arg4: memref<1x64xf32, #tpu.memory_space<vmem>>, %arg5: memref<1x8x8x64xf32, #tpu.memory_space<vmem>>, %arg6: memref<1x8x8x64xf32, #tpu.memory_space<vmem>>) attributes {dimension_semantics = [#tpu.dimension_semantics<parallel>], iteration_bounds = array<i64: 2>, scalar_prefetch = 0 : i64, scratch_operands = 0 : i64, tpu.core_type = #tpu.core_type<tc>, window_params = [{transform_indices = @transform_0, window_bounds = array<i64: 1, 10, 10, 64>}, {pipeline_mode = #tpu.pipeline_mode<synchronous>, transform_indices = @transform_1, window_bounds = array<i64: 9, 64, 64>}, {pipeline_mode = #tpu.pipeline_mode<synchronous>, transform_indices = @transform_2, window_bounds = array<i64: 1, 64>}, {pipeline_mode = #tpu.pipeline_mode<synchronous>, transform_indices = @transform_3, window_bounds = array<i64: 1, 64>}, {transform_indices = @transform_4, window_bounds = array<i64: 1, 8, 8, 64>}, {transform_indices = @transform_5, window_bounds = array<i64: 1, 8, 8, 64>}]} {
    %c0 = arith.constant 0 : index
    %c0_0 = arith.constant 0 : index
    %c0_1 = arith.constant 0 : index
    %c0_2 = arith.constant 0 : index
    %0 = vector.load %arg1[%c0, %c0_0, %c0_1, %c0_2] : memref<1x10x10x64xf32, #tpu.memory_space<vmem>>, vector<1x10x10x64xf32>
    %1 = vector.shape_cast %0 : vector<1x10x10x64xf32> to vector<10x10x64xf32>
    %cst = arith.constant 0.000000e+00 : f32
    %2 = vector.broadcast %cst : f32 to vector<64x64xf32>
    %3 = vector.extract_strided_slice %1 {offsets = [0, 0, 0], sizes = [8, 8, 64], strides = [1, 1, 1]} : vector<10x10x64xf32> to vector<8x8x64xf32>
    %4 = vector.shape_cast %3 : vector<8x8x64xf32> to vector<64x64xf32>
    %5 = arith.truncf %4 : vector<64x64xf32> to vector<64x64xbf16>
    %c0_3 = arith.constant 0 : index
    %c0_4 = arith.constant 0 : index
    %c0_5 = arith.constant 0 : index
    %6 = vector.load %arg2[%c0_3, %c0_4, %c0_5] : memref<9x64x64xbf16, #tpu.memory_space<vmem>>, vector<1x64x64xbf16>
    %7 = vector.shape_cast %6 : vector<1x64x64xbf16> to vector<64x64xbf16>
    %cst_6 = arith.constant dense<0.000000e+00> : vector<64x64xf32>
    %8 = tpu.matmul %5, %7, %cst_6 {dimension_numbers = #tpu.dot_dimension_numbers<[1], [0], [0], [1], [0, 0, 1, 1], [], []>} : vector<64x64xbf16>, vector<64x64xbf16>, vector<64x64xf32> -> vector<64x64xf32>
    %9 = arith.addf %2, %8 : vector<64x64xf32>
    %10 = vector.extract_strided_slice %1 {offsets = [0, 1, 0], sizes = [8, 8, 64], strides = [1, 1, 1]} : vector<10x10x64xf32> to vector<8x8x64xf32>
    %11 = vector.shape_cast %10 : vector<8x8x64xf32> to vector<64x64xf32>
    %12 = arith.truncf %11 : vector<64x64xf32> to vector<64x64xbf16>
    %c1 = arith.constant 1 : index
    %c0_7 = arith.constant 0 : index
    %c0_8 = arith.constant 0 : index
    %13 = vector.load %arg2[%c1, %c0_7, %c0_8] : memref<9x64x64xbf16, #tpu.memory_space<vmem>>, vector<1x64x64xbf16>
    %14 = vector.shape_cast %13 : vector<1x64x64xbf16> to vector<64x64xbf16>
    %cst_9 = arith.constant dense<0.000000e+00> : vector<64x64xf32>
    %15 = tpu.matmul %12, %14, %cst_9 {dimension_numbers = #tpu.dot_dimension_numbers<[1], [0], [0], [1], [0, 0, 1, 1], [], []>} : vector<64x64xbf16>, vector<64x64xbf16>, vector<64x64xf32> -> vector<64x64xf32>
    %16 = arith.addf %9, %15 : vector<64x64xf32>
    %17 = vector.extract_strided_slice %1 {offsets = [0, 2, 0], sizes = [8, 8, 64], strides = [1, 1, 1]} : vector<10x10x64xf32> to vector<8x8x64xf32>
    %18 = vector.shape_cast %17 : vector<8x8x64xf32> to vector<64x64xf32>
    %19 = arith.truncf %18 : vector<64x64xf32> to vector<64x64xbf16>
    %c2 = arith.constant 2 : index
    %c0_10 = arith.constant 0 : index
    %c0_11 = arith.constant 0 : index
    %20 = vector.load %arg2[%c2, %c0_10, %c0_11] : memref<9x64x64xbf16, #tpu.memory_space<vmem>>, vector<1x64x64xbf16>
    %21 = vector.shape_cast %20 : vector<1x64x64xbf16> to vector<64x64xbf16>
    %cst_12 = arith.constant dense<0.000000e+00> : vector<64x64xf32>
    %22 = tpu.matmul %19, %21, %cst_12 {dimension_numbers = #tpu.dot_dimension_numbers<[1], [0], [0], [1], [0, 0, 1, 1], [], []>} : vector<64x64xbf16>, vector<64x64xbf16>, vector<64x64xf32> -> vector<64x64xf32>
    %23 = arith.addf %16, %22 : vector<64x64xf32>
    %24 = vector.extract_strided_slice %1 {offsets = [1, 0, 0], sizes = [8, 8, 64], strides = [1, 1, 1]} : vector<10x10x64xf32> to vector<8x8x64xf32>
    %25 = vector.shape_cast %24 : vector<8x8x64xf32> to vector<64x64xf32>
    %26 = arith.truncf %25 : vector<64x64xf32> to vector<64x64xbf16>
    %c3 = arith.constant 3 : index
    %c0_13 = arith.constant 0 : index
    %c0_14 = arith.constant 0 : index
    %27 = vector.load %arg2[%c3, %c0_13, %c0_14] : memref<9x64x64xbf16, #tpu.memory_space<vmem>>, vector<1x64x64xbf16>
    %28 = vector.shape_cast %27 : vector<1x64x64xbf16> to vector<64x64xbf16>
    %cst_15 = arith.constant dense<0.000000e+00> : vector<64x64xf32>
    %29 = tpu.matmul %26, %28, %cst_15 {dimension_numbers = #tpu.dot_dimension_numbers<[1], [0], [0], [1], [0, 0, 1, 1], [], []>} : vector<64x64xbf16>, vector<64x64xbf16>, vector<64x64xf32> -> vector<64x64xf32>
    %30 = arith.addf %23, %29 : vector<64x64xf32>
    %31 = vector.extract_strided_slice %1 {offsets = [1, 1, 0], sizes = [8, 8, 64], strides = [1, 1, 1]} : vector<10x10x64xf32> to vector<8x8x64xf32>
    %32 = vector.shape_cast %31 : vector<8x8x64xf32> to vector<64x64xf32>
    %33 = arith.truncf %32 : vector<64x64xf32> to vector<64x64xbf16>
    %c4 = arith.constant 4 : index
    %c0_16 = arith.constant 0 : index
    %c0_17 = arith.constant 0 : index
    %34 = vector.load %arg2[%c4, %c0_16, %c0_17] : memref<9x64x64xbf16, #tpu.memory_space<vmem>>, vector<1x64x64xbf16>
    %35 = vector.shape_cast %34 : vector<1x64x64xbf16> to vector<64x64xbf16>
    %cst_18 = arith.constant dense<0.000000e+00> : vector<64x64xf32>
    %36 = tpu.matmul %33, %35, %cst_18 {dimension_numbers = #tpu.dot_dimension_numbers<[1], [0], [0], [1], [0, 0, 1, 1], [], []>} : vector<64x64xbf16>, vector<64x64xbf16>, vector<64x64xf32> -> vector<64x64xf32>
    %37 = arith.addf %30, %36 : vector<64x64xf32>
    %38 = vector.extract_strided_slice %1 {offsets = [1, 2, 0], sizes = [8, 8, 64], strides = [1, 1, 1]} : vector<10x10x64xf32> to vector<8x8x64xf32>
    %39 = vector.shape_cast %38 : vector<8x8x64xf32> to vector<64x64xf32>
    %40 = arith.truncf %39 : vector<64x64xf32> to vector<64x64xbf16>
    %c5 = arith.constant 5 : index
    %c0_19 = arith.constant 0 : index
    %c0_20 = arith.constant 0 : index
    %41 = vector.load %arg2[%c5, %c0_19, %c0_20] : memref<9x64x64xbf16, #tpu.memory_space<vmem>>, vector<1x64x64xbf16>
    %42 = vector.shape_cast %41 : vector<1x64x64xbf16> to vector<64x64xbf16>
    %cst_21 = arith.constant dense<0.000000e+00> : vector<64x64xf32>
    %43 = tpu.matmul %40, %42, %cst_21 {dimension_numbers = #tpu.dot_dimension_numbers<[1], [0], [0], [1], [0, 0, 1, 1], [], []>} : vector<64x64xbf16>, vector<64x64xbf16>, vector<64x64xf32> -> vector<64x64xf32>
    %44 = arith.addf %37, %43 : vector<64x64xf32>
    %45 = vector.extract_strided_slice %1 {offsets = [2, 0, 0], sizes = [8, 8, 64], strides = [1, 1, 1]} : vector<10x10x64xf32> to vector<8x8x64xf32>
    %46 = vector.shape_cast %45 : vector<8x8x64xf32> to vector<64x64xf32>
    %47 = arith.truncf %46 : vector<64x64xf32> to vector<64x64xbf16>
    %c6 = arith.constant 6 : index
    %c0_22 = arith.constant 0 : index
    %c0_23 = arith.constant 0 : index
    %48 = vector.load %arg2[%c6, %c0_22, %c0_23] : memref<9x64x64xbf16, #tpu.memory_space<vmem>>, vector<1x64x64xbf16>
    %49 = vector.shape_cast %48 : vector<1x64x64xbf16> to vector<64x64xbf16>
    %cst_24 = arith.constant dense<0.000000e+00> : vector<64x64xf32>
    %50 = tpu.matmul %47, %49, %cst_24 {dimension_numbers = #tpu.dot_dimension_numbers<[1], [0], [0], [1], [0, 0, 1, 1], [], []>} : vector<64x64xbf16>, vector<64x64xbf16>, vector<64x64xf32> -> vector<64x64xf32>
    %51 = arith.addf %44, %50 : vector<64x64xf32>
    %52 = vector.extract_strided_slice %1 {offsets = [2, 1, 0], sizes = [8, 8, 64], strides = [1, 1, 1]} : vector<10x10x64xf32> to vector<8x8x64xf32>
    %53 = vector.shape_cast %52 : vector<8x8x64xf32> to vector<64x64xf32>
    %54 = arith.truncf %53 : vector<64x64xf32> to vector<64x64xbf16>
    %c7 = arith.constant 7 : index
    %c0_25 = arith.constant 0 : index
    %c0_26 = arith.constant 0 : index
    %55 = vector.load %arg2[%c7, %c0_25, %c0_26] : memref<9x64x64xbf16, #tpu.memory_space<vmem>>, vector<1x64x64xbf16>
    %56 = vector.shape_cast %55 : vector<1x64x64xbf16> to vector<64x64xbf16>
    %cst_27 = arith.constant dense<0.000000e+00> : vector<64x64xf32>
    %57 = tpu.matmul %54, %56, %cst_27 {dimension_numbers = #tpu.dot_dimension_numbers<[1], [0], [0], [1], [0, 0, 1, 1], [], []>} : vector<64x64xbf16>, vector<64x64xbf16>, vector<64x64xf32> -> vector<64x64xf32>
    %58 = arith.addf %51, %57 : vector<64x64xf32>
    %59 = vector.extract_strided_slice %1 {offsets = [2, 2, 0], sizes = [8, 8, 64], strides = [1, 1, 1]} : vector<10x10x64xf32> to vector<8x8x64xf32>
    %60 = vector.shape_cast %59 : vector<8x8x64xf32> to vector<64x64xf32>
    %61 = arith.truncf %60 : vector<64x64xf32> to vector<64x64xbf16>
    %c8 = arith.constant 8 : index
    %c0_28 = arith.constant 0 : index
    %c0_29 = arith.constant 0 : index
    %62 = vector.load %arg2[%c8, %c0_28, %c0_29] : memref<9x64x64xbf16, #tpu.memory_space<vmem>>, vector<1x64x64xbf16>
    %63 = vector.shape_cast %62 : vector<1x64x64xbf16> to vector<64x64xbf16>
    %cst_30 = arith.constant dense<0.000000e+00> : vector<64x64xf32>
    %64 = tpu.matmul %61, %63, %cst_30 {dimension_numbers = #tpu.dot_dimension_numbers<[1], [0], [0], [1], [0, 0, 1, 1], [], []>} : vector<64x64xbf16>, vector<64x64xbf16>, vector<64x64xf32> -> vector<64x64xf32>
    %65 = arith.addf %58, %64 : vector<64x64xf32>
    %c0_31 = arith.constant 0 : index
    %c0_32 = arith.constant 0 : index
    %66 = vector.load %arg3[%c0_31, %c0_32] : memref<1x64xf32, #tpu.memory_space<vmem>>, vector<1x64xf32>
    %67 = vector.broadcast %66 : vector<1x64xf32> to vector<64x64xf32>
    %68 = arith.mulf %65, %67 : vector<64x64xf32>
    %c0_33 = arith.constant 0 : index
    %c0_34 = arith.constant 0 : index
    %69 = vector.load %arg4[%c0_33, %c0_34] : memref<1x64xf32, #tpu.memory_space<vmem>>, vector<1x64xf32>
    %70 = vector.broadcast %69 : vector<1x64xf32> to vector<64x64xf32>
    %71 = arith.addf %68, %70 : vector<64x64xf32>
    %c0_35 = arith.constant 0 : index
    %c0_36 = arith.constant 0 : index
    %c0_37 = arith.constant 0 : index
    %c0_38 = arith.constant 0 : index
    %72 = vector.load %arg5[%c0_35, %c0_36, %c0_37, %c0_38] : memref<1x8x8x64xf32, #tpu.memory_space<vmem>>, vector<1x8x8x64xf32>
    %73 = vector.shape_cast %72 : vector<1x8x8x64xf32> to vector<8x8x64xf32>
    %74 = vector.shape_cast %73 : vector<8x8x64xf32> to vector<64x64xf32>
    %75 = arith.addf %71, %74 : vector<64x64xf32>
    %cst_39 = arith.constant 0.000000e+00 : f32
    %76 = vector.broadcast %cst_39 : f32 to vector<64x64xf32>
    %77 = arith.maximumf %75, %76 : vector<64x64xf32>
    %78 = vector.shape_cast %77 : vector<64x64xf32> to vector<8x8x64xf32>
    %c0_40 = arith.constant 0 : index
    %c0_41 = arith.constant 0 : index
    %c0_42 = arith.constant 0 : index
    %c0_43 = arith.constant 0 : index
    %79 = vector.load %arg6[%c0_40, %c0_41, %c0_42, %c0_43] : memref<1x8x8x64xf32, #tpu.memory_space<vmem>>, vector<1x8x8x64xf32>
    %80 = vector.shape_cast %79 : vector<1x8x8x64xf32> to vector<8x8x64xf32>
    %81 = vector.shape_cast %78 : vector<8x8x64xf32> to vector<1x8x8x64xf32>
    tpu.vector_store %arg6[%c0_40, %c0_41, %c0_42, %c0_43], %81 {strides = array<i32>} : memref<1x8x8x64xf32, #tpu.memory_space<vmem>>, vector<1x8x8x64xf32>,
    return
  }
  func.func @transform_0(%arg0: i32) -> (i32, i32, i32, i32) {
    %c0_i32 = arith.constant 0 : i32
    %c0_i32_0 = arith.constant 0 : i32
    %c0_i32_1 = arith.constant 0 : i32
    %c0_i32_2 = arith.constant 0 : i32
    return %arg0, %c0_i32, %c0_i32_0, %c0_i32_1 : i32, i32, i32, i32
  }
  func.func @transform_1(%arg0: i32) -> (i32, i32, i32) {
    %c0_i32 = arith.constant 0 : i32
    %c0_i32_0 = arith.constant 0 : i32
    %c0_i32_1 = arith.constant 0 : i32
    %c0_i32_2 = arith.constant 0 : i32
    return %c0_i32, %c0_i32_0, %c0_i32_1 : i32, i32, i32
  }
  func.func @transform_2(%arg0: i32) -> (i32, i32) {
    %c0_i32 = arith.constant 0 : i32
    %c0_i32_0 = arith.constant 0 : i32
    %c0_i32_1 = arith.constant 0 : i32
    return %c0_i32, %c0_i32_0 : i32, i32
  }
  func.func @transform_3(%arg0: i32) -> (i32, i32) {
    %c0_i32 = arith.constant 0 : i32
    %c0_i32_0 = arith.constant 0 : i32
    %c0_i32_1 = arith.constant 0 : i32
    return %c0_i32, %c0_i32_0 : i32, i32
  }
  func.func @transform_4(%arg0: i32) -> (i32, i32, i32, i32) {
    %c0_i32 = arith.constant 0 : i32
    %c0_i32_0 = arith.constant 0 : i32
    %c0_i32_1 = arith.constant 0 : i32
    %c0_i32_2 = arith.constant 0 : i32
    return %arg0, %c0_i32, %c0_i32_0, %c0_i32_1 : i32, i32, i32, i32
  }
  func.func @transform_5(%arg0: i32) -> (i32, i32, i32, i32) {
    %c0_i32 = arith.constant 0 : i32
    %c0_i32_0 = arith.constant 0 : i32
    %c0_i32_1 = arith.constant 0 : i32
    %c0_i32_2 = arith.constant 0 : i32
    return %arg0, %c0_i32, %c0_i32_0, %c0_i32_1 : i32, i32, i32, i32
  }
}

module attributes {stable_mosaic.version = 11 : i64} {
  func.func @_matmul_bn_kernel(%arg0: i32, %arg1: i32, %arg2: memref<1x64x64xf32, #tpu.memory_space<vmem>>, %arg3: memref<64x256xbf16, #tpu.memory_space<vmem>>, %arg4: memref<1x256xf32, #tpu.memory_space<vmem>>, %arg5: memref<1x256xf32, #tpu.memory_space<vmem>>, %arg6: memref<1x64x256xf32, #tpu.memory_space<vmem>>) attributes {dimension_semantics = [#tpu.dimension_semantics<parallel>, #tpu.dimension_semantics<parallel>], iteration_bounds = array<i64: 2, 1>, scalar_prefetch = 0 : i64, scratch_operands = 0 : i64, tpu.core_type = #tpu.core_type<tc>, window_params = [{transform_indices = @transform_0, window_bounds = array<i64: 1, 64, 64>}, {pipeline_mode = #tpu.pipeline_mode<synchronous>, transform_indices = @transform_1, window_bounds = array<i64: 64, 256>}, {pipeline_mode = #tpu.pipeline_mode<synchronous>, transform_indices = @transform_2, window_bounds = array<i64: 1, 256>}, {pipeline_mode = #tpu.pipeline_mode<synchronous>, transform_indices = @transform_3, window_bounds = array<i64: 1, 256>}, {transform_indices = @transform_4, window_bounds = array<i64: 1, 64, 256>}]} {
    %c0 = arith.constant 0 : index
    %c0_0 = arith.constant 0 : index
    %c0_1 = arith.constant 0 : index
    %0 = vector.load %arg2[%c0, %c0_0, %c0_1] : memref<1x64x64xf32, #tpu.memory_space<vmem>>, vector<1x64x64xf32>
    %1 = vector.shape_cast %0 : vector<1x64x64xf32> to vector<64x64xf32>
    %2 = arith.truncf %1 : vector<64x64xf32> to vector<64x64xbf16>
    %c0_2 = arith.constant 0 : index
    %c0_3 = arith.constant 0 : index
    %3 = vector.load %arg3[%c0_2, %c0_3] : memref<64x256xbf16, #tpu.memory_space<vmem>>, vector<64x256xbf16>
    %cst = arith.constant dense<0.000000e+00> : vector<64x256xf32>
    %4 = tpu.matmul %2, %3, %cst {dimension_numbers = #tpu.dot_dimension_numbers<[1], [0], [0], [1], [0, 0, 1, 1], [], []>} : vector<64x64xbf16>, vector<64x256xbf16>, vector<64x256xf32> -> vector<64x256xf32>
    %c0_4 = arith.constant 0 : index
    %c0_5 = arith.constant 0 : index
    %5 = vector.load %arg4[%c0_4, %c0_5] : memref<1x256xf32, #tpu.memory_space<vmem>>, vector<1x256xf32>
    %6 = vector.broadcast %5 : vector<1x256xf32> to vector<64x256xf32>
    %7 = arith.mulf %4, %6 : vector<64x256xf32>
    %c0_6 = arith.constant 0 : index
    %c0_7 = arith.constant 0 : index
    %8 = vector.load %arg5[%c0_6, %c0_7] : memref<1x256xf32, #tpu.memory_space<vmem>>, vector<1x256xf32>
    %9 = vector.broadcast %8 : vector<1x256xf32> to vector<64x256xf32>
    %10 = arith.addf %7, %9 : vector<64x256xf32>
    %cst_8 = arith.constant 0.000000e+00 : f32
    %11 = vector.broadcast %cst_8 : f32 to vector<64x256xf32>
    %12 = arith.maximumf %10, %11 : vector<64x256xf32>
    %c0_9 = arith.constant 0 : index
    %c0_10 = arith.constant 0 : index
    %c0_11 = arith.constant 0 : index
    %13 = vector.load %arg6[%c0_9, %c0_10, %c0_11] : memref<1x64x256xf32, #tpu.memory_space<vmem>>, vector<1x64x256xf32>
    %14 = vector.shape_cast %13 : vector<1x64x256xf32> to vector<64x256xf32>
    %15 = vector.shape_cast %12 : vector<64x256xf32> to vector<1x64x256xf32>
    tpu.vector_store %arg6[%c0_9, %c0_10, %c0_11], %15 {strides = array<i32>} : memref<1x64x256xf32, #tpu.memory_space<vmem>>, vector<1x64x256xf32>,
    return
  }
  func.func @transform_0(%arg0: i32, %arg1: i32) -> (i32, i32, i32) {
    %c0_i32 = arith.constant 0 : i32
    %c0_i32_0 = arith.constant 0 : i32
    return %arg0, %arg1, %c0_i32 : i32, i32, i32
  }
  func.func @transform_1(%arg0: i32, %arg1: i32) -> (i32, i32) {
    %c0_i32 = arith.constant 0 : i32
    %c0_i32_0 = arith.constant 0 : i32
    %c0_i32_1 = arith.constant 0 : i32
    return %c0_i32, %c0_i32_0 : i32, i32
  }
  func.func @transform_2(%arg0: i32, %arg1: i32) -> (i32, i32) {
    %c0_i32 = arith.constant 0 : i32
    %c0_i32_0 = arith.constant 0 : i32
    %c0_i32_1 = arith.constant 0 : i32
    return %c0_i32, %c0_i32_0 : i32, i32
  }
  func.func @transform_3(%arg0: i32, %arg1: i32) -> (i32, i32) {
    %c0_i32 = arith.constant 0 : i32
    %c0_i32_0 = arith.constant 0 : i32
    %c0_i32_1 = arith.constant 0 : i32
    return %c0_i32, %c0_i32_0 : i32, i32
  }
  func.func @transform_4(%arg0: i32, %arg1: i32) -> (i32, i32, i32) {
    %c0_i32 = arith.constant 0 : i32
    %c0_i32_0 = arith.constant 0 : i32
    return %arg0, %arg1, %c0_i32 : i32, i32, i32
  }
}

module attributes {stable_mosaic.version = 11 : i64} {
  func.func @_matmul_bn_kernel(%arg0: i32, %arg1: i32, %arg2: memref<1x256x32xf32, #tpu.memory_space<vmem>>, %arg3: memref<32x64xbf16, #tpu.memory_space<vmem>>, %arg4: memref<1x64xf32, #tpu.memory_space<vmem>>, %arg5: memref<1x64xf32, #tpu.memory_space<vmem>>, %arg6: memref<1x256x64xf32, #tpu.memory_space<vmem>>) attributes {dimension_semantics = [#tpu.dimension_semantics<parallel>, #tpu.dimension_semantics<parallel>], iteration_bounds = array<i64: 2, 1>, scalar_prefetch = 0 : i64, scratch_operands = 0 : i64, tpu.core_type = #tpu.core_type<tc>, window_params = [{transform_indices = @transform_0, window_bounds = array<i64: 1, 256, 32>}, {pipeline_mode = #tpu.pipeline_mode<synchronous>, transform_indices = @transform_1, window_bounds = array<i64: 32, 64>}, {pipeline_mode = #tpu.pipeline_mode<synchronous>, transform_indices = @transform_2, window_bounds = array<i64: 1, 64>}, {pipeline_mode = #tpu.pipeline_mode<synchronous>, transform_indices = @transform_3, window_bounds = array<i64: 1, 64>}, {transform_indices = @transform_4, window_bounds = array<i64: 1, 256, 64>}]} {
    %c0 = arith.constant 0 : index
    %c0_0 = arith.constant 0 : index
    %c0_1 = arith.constant 0 : index
    %0 = vector.load %arg2[%c0, %c0_0, %c0_1] : memref<1x256x32xf32, #tpu.memory_space<vmem>>, vector<1x256x32xf32>
    %1 = vector.shape_cast %0 : vector<1x256x32xf32> to vector<256x32xf32>
    %2 = arith.truncf %1 : vector<256x32xf32> to vector<256x32xbf16>
    %c0_2 = arith.constant 0 : index
    %c0_3 = arith.constant 0 : index
    %3 = vector.load %arg3[%c0_2, %c0_3] : memref<32x64xbf16, #tpu.memory_space<vmem>>, vector<32x64xbf16>
    %cst = arith.constant dense<0.000000e+00> : vector<256x64xf32>
    %4 = tpu.matmul %2, %3, %cst {dimension_numbers = #tpu.dot_dimension_numbers<[1], [0], [0], [1], [0, 0, 1, 1], [], []>} : vector<256x32xbf16>, vector<32x64xbf16>, vector<256x64xf32> -> vector<256x64xf32>
    %c0_4 = arith.constant 0 : index
    %c0_5 = arith.constant 0 : index
    %5 = vector.load %arg4[%c0_4, %c0_5] : memref<1x64xf32, #tpu.memory_space<vmem>>, vector<1x64xf32>
    %6 = vector.broadcast %5 : vector<1x64xf32> to vector<256x64xf32>
    %7 = arith.mulf %4, %6 : vector<256x64xf32>
    %c0_6 = arith.constant 0 : index
    %c0_7 = arith.constant 0 : index
    %8 = vector.load %arg5[%c0_6, %c0_7] : memref<1x64xf32, #tpu.memory_space<vmem>>, vector<1x64xf32>
    %9 = vector.broadcast %8 : vector<1x64xf32> to vector<256x64xf32>
    %10 = arith.addf %7, %9 : vector<256x64xf32>
    %cst_8 = arith.constant 0.000000e+00 : f32
    %11 = vector.broadcast %cst_8 : f32 to vector<256x64xf32>
    %12 = arith.maximumf %10, %11 : vector<256x64xf32>
    %c0_9 = arith.constant 0 : index
    %c0_10 = arith.constant 0 : index
    %c0_11 = arith.constant 0 : index
    %13 = vector.load %arg6[%c0_9, %c0_10, %c0_11] : memref<1x256x64xf32, #tpu.memory_space<vmem>>, vector<1x256x64xf32>
    %14 = vector.shape_cast %13 : vector<1x256x64xf32> to vector<256x64xf32>
    %15 = vector.shape_cast %12 : vector<256x64xf32> to vector<1x256x64xf32>
    tpu.vector_store %arg6[%c0_9, %c0_10, %c0_11], %15 {strides = array<i32>} : memref<1x256x64xf32, #tpu.memory_space<vmem>>, vector<1x256x64xf32>,
    return
  }
  func.func @transform_0(%arg0: i32, %arg1: i32) -> (i32, i32, i32) {
    %c0_i32 = arith.constant 0 : i32
    %c0_i32_0 = arith.constant 0 : i32
    return %arg0, %arg1, %c0_i32 : i32, i32, i32
  }
  func.func @transform_1(%arg0: i32, %arg1: i32) -> (i32, i32) {
    %c0_i32 = arith.constant 0 : i32
    %c0_i32_0 = arith.constant 0 : i32
    %c0_i32_1 = arith.constant 0 : i32
    return %c0_i32, %c0_i32_0 : i32, i32
  }
  func.func @transform_2(%arg0: i32, %arg1: i32) -> (i32, i32) {
    %c0_i32 = arith.constant 0 : i32
    %c0_i32_0 = arith.constant 0 : i32
    %c0_i32_1 = arith.constant 0 : i32
    return %c0_i32, %c0_i32_0 : i32, i32
  }
  func.func @transform_3(%arg0: i32, %arg1: i32) -> (i32, i32) {
    %c0_i32 = arith.constant 0 : i32
    %c0_i32_0 = arith.constant 0 : i32
    %c0_i32_1 = arith.constant 0 : i32
    return %c0_i32, %c0_i32_0 : i32, i32
  }
  func.func @transform_4(%arg0: i32, %arg1: i32) -> (i32, i32, i32) {
    %c0_i32 = arith.constant 0 : i32
    %c0_i32_0 = arith.constant 0 : i32
    return %arg0, %arg1, %c0_i32 : i32, i32, i32
  }
}

</mosaic_0001>

<llo_original>
// kernel: _lambda_.13
$region0: #{_lambda_.13}
  #allocation0 [shape = 'u32[]', space=smem, size = 0x4, offset = 0x4, fixed_abs, tag = 'smem constant byte address 0x4 - core index']
  #allocation1 [shape = 'u32[72,128]{1,0:T(1,128)}', space=vmem, size = 0x9000, scoped, tag = 'internal scratch']
  %s0 = inlined_call_operand.vmem [shape: f32[2,256,32], index: 0, kind: input, shape index: {}]
  %s1 = inlined_call_operand.vmem [shape: bf16[32,32], index: 1, kind: input, shape index: {}]
  %s2 = inlined_call_operand.vmem [shape: f32[1,32], index: 2, kind: input, shape index: {}]
  %s3 = inlined_call_operand.vmem [shape: f32[1,32], index: 3, kind: input, shape index: {}]
  %s4 = inlined_call_operand.vmem [shape: f32[2,256,32], index: 4, kind: output, shape index: {}]
  %s5 = sld [smem:[#allocation0]]
  $region49: #{_lambda_.13} parent=0
    _
  %s7 = ssub.s32 1, %s5
  %s8 = scalar_select 0, %s7, %s5
  loop: start=0, step=1, limit=4
  $region2: #{_lambda_.13} parent=0 // loop_pre_header
    _
  $region3: #{_lambda_.13} parent=0 // loop_header
    %s10 = sphi 0, %s14
    %p11 = scmp.ge.s32.totalorder %s10, 4
    %s17 = sphi 0, %s29
    %s18 = sphi 0, %s25
    %s19 = sphi 0, %s17
    %s20 = sphi 0, %s18
    %s21 = sphi 0, %s19
    %s22 = sphi 0, %s20
    %s34 = sphi 0, %s36
    %s37 = sphi 0, %s34
    %s38 = sphi 0, %s37
    %s54 = sphi 0, %s38
    %s58 = sphi 0, %s58
    %s60 = sphi 0, %s58
    %s61 = sphi 0, %s60
    %s75 = sphi 0, %s61
    %s79 = sphi 0, %s79
    %s81 = sphi 0, %s79
    %s82 = sphi 0, %s81
    %s96 = sphi 0, %s82
    %s100 = sphi 0, %s100
    %s102 = sphi 0, %s100
    %s103 = sphi 0, %s102
    %s117 = sphi 0, %s103
    %s125 = sphi 0, %s127
    %s128 = sphi 0, %s125
    %s129 = sphi 0, %s128
    %s145 = sphi 0, %s129
  $region4: #{_lambda_.13} parent=0 // loop_header_branch
    %13 = sbr.rel (%p11) target = $region8
  $region5: #{_lambda_.13} parent=0 // loop_body
    %s15 = ssub.s32 %s10, 1
    %s16 = ssub.s32 %s10, 2
    %s23 = sadd.s32 1, %s18
    %p24 = scmp.ge.s32.totalorder %s23, 1
    %s25 = scalar_select %p24, 0, %s23
    %s26 = sadd.s32 1, %s17
    %s27 = scalar_select %p24, %s26, %s17
    %p28 = scmp.ge.s32.totalorder %s27, 2
    %s29 = scalar_select %p28, 0, %s27
    %s30 = ssub.s32 %s17, %s29
    %s31 = ssub.s32 %s18, %s25
    %s32 = sor.u32 %s30, %s31
    %p33 = scmp.eq.s32.totalorder %s32, 0
    %s35 = sadd.s32 %s34, 1
    %s36 = scalar_select %p33, %s34, %s35
    %p39 = pneg %p33
    %p40 = scmp.eq.s32.totalorder %s10, 1
    %p41 = por %p39, %p40
    %p42 = scmp.ne.s32.totalorder %s34, %s37
    %p43 = scmp.eq.s32.totalorder %s10, 0
    %p44 = por %p42, %p43
    %p45 = scmp.ne.s32.totalorder %s34, %s37
    %p46 = scmp.eq.s32.totalorder %s15, 1
    %p47 = por %p45, %p46
    %p48 = scmp.ne.s32.totalorder %s37, %s38
    %p49 = scmp.eq.s32.totalorder %s15, 0
    %p50 = por %p48, %p49
    %p51 = scmp.ne.s32.totalorder %s37, %s38
    %p52 = scmp.eq.s32.totalorder %s16, 1
    %p53 = por %p51, %p52
    %p55 = scmp.ne.s32.totalorder %s38, %s54
    %p56 = scmp.eq.s32.totalorder %s16, 0
    %p57 = por %p55, %p56
    %s59 = sadd.s32 %s58, 1
    %p62 = scmp.eq.s32.totalorder %s10, 1
    %p63 = scmp.ne.s32.totalorder %s58, %s60
    %p64 = scmp.eq.s32.totalorder %s10, 0
    %p65 = por %p63, %p64
    %p66 = scmp.ne.s32.totalorder %s58, %s60
    %p67 = scmp.eq.s32.totalorder %s15, 1
    %p68 = por %p66, %p67
    %p69 = scmp.ne.s32.totalorder %s60, %s61
    %p70 = scmp.eq.s32.totalorder %s15, 0
    %p71 = por %p69, %p70
    %p72 = scmp.ne.s32.totalorder %s60, %s61
    %p73 = scmp.eq.s32.totalorder %s16, 1
    %p74 = por %p72, %p73
    %p76 = scmp.ne.s32.totalorder %s61, %s75
    %p77 = scmp.eq.s32.totalorder %s16, 0
    %p78 = por %p76, %p77
    %s80 = sadd.s32 %s79, 1
    %p83 = scmp.eq.s32.totalorder %s10, 1
    %p84 = scmp.ne.s32.totalorder %s79, %s81
    %p85 = scmp.eq.s32.totalorder %s10, 0
    %p86 = por %p84, %p85
    %p87 = scmp.ne.s32.totalorder %s79, %s81
    %p88 = scmp.eq.s32.totalorder %s15, 1
    %p89 = por %p87, %p88
    %p90 = scmp.ne.s32.totalorder %s81, %s82
    %p91 = scmp.eq.s32.totalorder %s15, 0
    %p92 = por %p90, %p91
    %p93 = scmp.ne.s32.totalorder %s81, %s82
    %p94 = scmp.eq.s32.totalorder %s16, 1
    %p95 = por %p93, %p94
    %p97 = scmp.ne.s32.totalorder %s82, %s96
    %p98 = scmp.eq.s32.totalorder %s16, 0
    %p99 = por %p97, %p98
    %s101 = sadd.s32 %s100, 1
    %p104 = scmp.eq.s32.totalorder %s10, 1
    %p105 = scmp.ne.s32.totalorder %s100, %s102
    %p106 = scmp.eq.s32.totalorder %s10, 0
    %p107 = por %p105, %p106
    %p108 = scmp.ne.s32.totalorder %s100, %s102
    %p109 = scmp.eq.s32.totalorder %s15, 1
    %p110 = por %p108, %p109
    %p111 = scmp.ne.s32.totalorder %s102, %s103
    %p112 = scmp.eq.s32.totalorder %s15, 0
    %p113 = por %p111, %p112
    %p114 = scmp.ne.s32.totalorder %s102, %s103
    %p115 = scmp.eq.s32.totalorder %s16, 1
    %p116 = por %p114, %p115
    %p118 = scmp.ne.s32.totalorder %s103, %s117
    %p119 = scmp.eq.s32.totalorder %s16, 0
    %p120 = por %p118, %p119
    %s121 = ssub.s32 %s17, %s29
    %s122 = ssub.s32 %s18, %s25
    %s123 = sor.u32 %s121, %s122
    %p124 = scmp.eq.s32.totalorder %s123, 0
    %s126 = sadd.s32 %s125, 1
    %s127 = scalar_select %p124, %s125, %s126
    %p130 = pneg %p124
    %p131 = scmp.eq.s32.totalorder %s10, 1
    %p132 = por %p130, %p131
    %p133 = scmp.ne.s32.totalorder %s125, %s128
    %p134 = scmp.eq.s32.totalorder %s10, 0
    %p135 = por %p133, %p134
    %p136 = scmp.ne.s32.totalorder %s125, %s128
    %p137 = scmp.eq.s32.totalorder %s15, 1
    %p138 = por %p136, %p137
    %p139 = scmp.ne.s32.totalorder %s128, %s129
    %p140 = scmp.eq.s32.totalorder %s15, 0
    %p141 = por %p139, %p140
    %p142 = scmp.ne.s32.totalorder %s128, %s129
    %p143 = scmp.eq.s32.totalorder %s16, 1
    %p144 = por %p142, %p143
    %p146 = scmp.ne.s32.totalorder %s129, %s145
    %p147 = scmp.eq.s32.totalorder %s16, 0
    %p148 = por %p146, %p147
    %p149 = scmp.le.s32.totalorder 1, %s10
    %p150 = scmp.lt.s32.totalorder %s10, 3
    %p151 = pnand %p149, %p150
    %p152 = pneg %p151
    // Predicated region
    $region9: #{_lambda_.13} parent=5 // pred_check
      _
    $region10: #{_lambda_.13} parent=5 // pred_check_branch
      %154 = sbr.rel (%p151) target = $region12
    $region11: #{_lambda_.13} parent=5 // pred_region
      %s155 = ssub.s32 %s10, 1
      // Predicated region
      $region13: #{_lambda_.13} parent=11 // pred_check
        %p156 = pneg %p71
      $region14: #{_lambda_.13} parent=11 // pred_check_branch
        %158 = sbr.rel (%p156) target = $region16
      $region15: #{_lambda_.13} parent=11 // pred_region
        _
      $region16: #{_lambda_.13} parent=11 // pred_fallthru
        _
      // Predicated region
      $region17: #{_lambda_.13} parent=11 // pred_check
        %p159 = pneg %p92
      $region18: #{_lambda_.13} parent=11 // pred_check_branch
        %161 = sbr.rel (%p159) target = $region20
      $region19: #{_lambda_.13} parent=11 // pred_region
        _
      $region20: #{_lambda_.13} parent=11 // pred_fallthru
        _
      // Predicated region
      $region21: #{_lambda_.13} parent=11 // pred_check
        %p162 = pneg %p113
      $region22: #{_lambda_.13} parent=11 // pred_check_branch
        %164 = sbr.rel (%p162) target = $region24
      $region23: #{_lambda_.13} parent=11 // pred_region
        _
      $region24: #{_lambda_.13} parent=11 // pred_fallthru
        _
    $region12: #{_lambda_.13} parent=5 // pred_fallthru
      _
    %p165 = scmp.lt.s32.totalorder %s10, 2
    // Predicated region
    $region25: #{_lambda_.13} parent=5 // pred_check
      %p166 = pneg %p165
    $region26: #{_lambda_.13} parent=5 // pred_check_branch
      %168 = sbr.rel (%p166) target = $region28
    $region27: #{_lambda_.13} parent=5 // pred_region
      // Predicated region
      $region29: #{_lambda_.13} parent=27 // pred_check
        %p169 = pneg %p44
      $region30: #{_lambda_.13} parent=27 // pred_check_branch
        %171 = sbr.rel (%p169) target = $region32
      $region31: #{_lambda_.13} parent=27 // pred_region
        %s172 = smul.u32 32, %s18
        %p173 = scmp.lt.s32.totalorder %s17, 1
        %s174 = scalar_select %p173, %s17, 1
        %p175 = scmp.lt.s32.totalorder %s172, 31
        %s176 = scalar_select %p175, %s172, 31
        %s177 = smul.addr %s174, 32
        %s178 = sadd.s32 %s176, %s177
        %s179 = smul.addr %s178, 8
        %s180 = scalar_lea.vmem %s0, %s179
        %s181 = smul.u32 32, %s18
      $region32: #{_lambda_.13} parent=27 // pred_fallthru
        _
    $region28: #{_lambda_.13} parent=5 // pred_fallthru
      _
    %p182 = scmp.le.s32.totalorder 1, %s10
    %p183 = scmp.lt.s32.totalorder %s10, 3
    %p184 = pnand %p182, %p183
    %p185 = pneg %p184
    // Predicated region
    $region33: #{_lambda_.13} parent=5 // pred_check
      _
    $region34: #{_lambda_.13} parent=5 // pred_check_branch
      %187 = sbr.rel (%p184) target = $region36
    $region35: #{_lambda_.13} parent=5 // pred_region
      %s188 = ssub.s32 %s10, 1
      %s189 = smul.u32 32, %s20
      %p190 = scmp.lt.s32.totalorder %s19, 1
      %s191 = scalar_select %p190, %s19, 1
      %p192 = scmp.lt.s32.totalorder %s189, 31
      %s193 = scalar_select %p192, %s189, 31
      %s194 = smul.addr %s191, 32
      %s195 = sadd.s32 %s193, %s194
      %s196 = smul.addr %s195, 8
      %s197 = scalar_lea.vmem %s0, %s196
      %p198 = pneg %p50
      %p199 = pneg %p47
      %p200 = pneg %p71
      %p201 = pneg %p68
      %p202 = pneg %p92
      %p203 = pneg %p89
      %p204 = pneg %p113
      %p205 = pneg %p110
      %p206 = pneg %p141
      %p207 = pneg %p138
      %s208 = smul.u32 32, %s20
      %p209 = scmp.lt.s32.totalorder %s19, 1
      %s210 = scalar_select %p209, %s19, 1
      %p211 = scmp.lt.s32.totalorder %s208, 31
      %s212 = scalar_select %p211, %s208, 31
      %s213 = smul.addr %s210, 32
      %s214 = sadd.s32 %s212, %s213
      %s215 = smul.addr %s214, 8
      %s216 = scalar_lea.vmem %s4, %s215
      %s217 = smul.u32 32, %s20
      %p218 = scmp.lt.s32.totalorder %s19, 1
      %s219 = scalar_select %p218, %s19, 1
      %p220 = scmp.lt.s32.totalorder %s217, 31
      %s221 = scalar_select %p220, %s217, 31
      %s222 = smul.addr %s219, 32
      %s223 = sadd.s32 %s221, %s222
      %s224 = smul.addr %s223, 8
      %s225 = scalar_lea.vmem %s0, %s224
      %s226 = smul.u32 32, %s20
      %s227 = smul.u32 32, %s20
      %p228 = scmp.lt.s32.totalorder %s19, 1
      %s229 = scalar_select %p228, %s19, 1
      %p230 = scmp.lt.s32.totalorder %s227, 31
      %s231 = scalar_select %p230, %s227, 31
      %s232 = smul.addr %s229, 32
      %s233 = sadd.s32 %s231, %s232
      %s234 = smul.addr %s233, 8
      %s235 = scalar_lea.vmem %s4, %s234
      %s236 = smul.u32 32, %s20
      %v238 = vld [vmem:[%s225] sm:$0xff]
      %v239 = vld [vmem:[%s225 + $0x8] sm:$0xff]
      %v240 = vld [vmem:[%s225 + $0x10] sm:$0xff]
      %v241 = vld [vmem:[%s225 + $0x18] sm:$0xff]
      %v242 = vld [vmem:[%s225 + $0x20] sm:$0xff]
      %v243 = vld [vmem:[%s225 + $0x28] sm:$0xff]
      %v244 = vld [vmem:[%s225 + $0x30] sm:$0xff]
      %v245 = vld [vmem:[%s225 + $0x38] sm:$0xff]
      %v246 = vld [vmem:[%s225 + $0x40] sm:$0xff]
      %v247 = vld [vmem:[%s225 + $0x48] sm:$0xff]
      %v248 = vld [vmem:[%s225 + $0x50] sm:$0xff]
      %v249 = vld [vmem:[%s225 + $0x58] sm:$0xff]
      %v250 = vld [vmem:[%s225 + $0x60] sm:$0xff]
      %v251 = vld [vmem:[%s225 + $0x68] sm:$0xff]
      %v252 = vld [vmem:[%s225 + $0x70] sm:$0xff]
      %v253 = vld [vmem:[%s225 + $0x78] sm:$0xff]
      %v254 = vld [vmem:[%s225 + $0x80] sm:$0xff]
      %v255 = vld [vmem:[%s225 + $0x88] sm:$0xff]
      %v256 = vld [vmem:[%s225 + $0x90] sm:$0xff]
      %v257 = vld [vmem:[%s225 + $0x98] sm:$0xff]
      %v258 = vld [vmem:[%s225 + $0xa0] sm:$0xff]
      %v259 = vld [vmem:[%s225 + $0xa8] sm:$0xff]
      %v260 = vld [vmem:[%s225 + $0xb0] sm:$0xff]
      %v261 = vld [vmem:[%s225 + $0xb8] sm:$0xff]
      %v262 = vld [vmem:[%s225 + $0xc0] sm:$0xff]
      %v263 = vld [vmem:[%s225 + $0xc8] sm:$0xff]
      %v264 = vld [vmem:[%s225 + $0xd0] sm:$0xff]
      %v265 = vld [vmem:[%s225 + $0xd8] sm:$0xff]
      %v266 = vld [vmem:[%s225 + $0xe0] sm:$0xff]
      %v267 = vld [vmem:[%s225 + $0xe8] sm:$0xff]
      %v268 = vld [vmem:[%s225 + $0xf0] sm:$0xff]
      %v269 = vld [vmem:[%s225 + $0xf8] sm:$0xff]
      %v270 = vpack.c.bf16 %v239, %v238
      %v271 = vpack.c.bf16 %v241, %v240
      %v272 = vpack.c.bf16 %v243, %v242
      %v273 = vpack.c.bf16 %v245, %v244
      %v274 = vpack.c.bf16 %v247, %v246
      %v275 = vpack.c.bf16 %v249, %v248
      %v276 = vpack.c.bf16 %v251, %v250
      %v277 = vpack.c.bf16 %v253, %v252
      %v278 = vpack.c.bf16 %v255, %v254
      %v279 = vpack.c.bf16 %v257, %v256
      %v280 = vpack.c.bf16 %v259, %v258
      %v281 = vpack.c.bf16 %v261, %v260
      %v282 = vpack.c.bf16 %v263, %v262
      %v283 = vpack.c.bf16 %v265, %v264
      %v284 = vpack.c.bf16 %v267, %v266
      %v285 = vpack.c.bf16 %v269, %v268
      %v286 = vld [vmem:[%s1] sm:$0xf]
      %v287 = vld [vmem:[%s1 + $0x4] sm:$0xf]
      %v288 = vld [vmem:[%s1 + $0x8] sm:$0xf]
      %v289 = vld [vmem:[%s1 + $0xc] sm:$0xf]
      %v294 = vunpack.c.l.b16 %v286
      %v295 = vunpack.c.l.b16 %v287
      %v296 = vunpack.c.l.b16 %v288
      %v297 = vunpack.c.l.b16 %v289
      %v298 = vpack.c.b16 %v295, %v294
      %v299 = vpack.c.b16 %v297, %v296
      %vm302 = vcmask 261120
      %v304 = vsel %vm302, %v270, 0
      %v307 = vsel %vm302, %v271, 0
      %v310 = vsel %vm302, %v272, 0
      %v313 = vsel %vm302, %v273, 0
      %v316 = vsel %vm302, %v274, 0
      %v319 = vsel %vm302, %v275, 0
      %v322 = vsel %vm302, %v276, 0
      %v325 = vsel %vm302, %v277, 0
      %v328 = vsel %vm302, %v278, 0
      %v331 = vsel %vm302, %v279, 0
      %v334 = vsel %vm302, %v280, 0
      %v337 = vsel %vm302, %v281, 0
      %v340 = vsel %vm302, %v282, 0
      %v343 = vsel %vm302, %v283, 0
      %v346 = vsel %vm302, %v284, 0
      %v349 = vsel %vm302, %v285, 0
      %351 = vmatpush.bf16.msra.mxu0 0
      %352 = vmatpush.bf16.msra.mxu0 0
      %353 = vmatpush.bf16.msra.mxu0 0
      %354 = vmatpush.bf16.msra.mxu0 0
      %355 = vmatpush.bf16.msra.mxu0 0
      %356 = vmatpush.bf16.msra.mxu0 0
      %357 = vmatpush.bf16.msra.mxu0 %v299
      %358 = vmatpush.bf16.msra.mxu0 %v298
      %359 = vmatmul.bf16.gmra.mxu0 %v304
      %v360 = vpop.f32.mrf.mxu0
      %v361 = vadd.f32 0.0, %v360
      %v362 = vpop.f32.mrf.mxu0
      %v363 = vadd.f32 0.0, %v362
      %364 = vmatmul.bf16.gmra.mxu0 %v307
      %v365 = vpop.f32.mrf.mxu0
      %v366 = vadd.f32 0.0, %v365
      %v367 = vpop.f32.mrf.mxu0
      %v368 = vadd.f32 0.0, %v367
      %369 = vmatmul.bf16.gmra.mxu0 %v310
      %v370 = vpop.f32.mrf.mxu0
      %v371 = vadd.f32 0.0, %v370
      %v372 = vpop.f32.mrf.mxu0
      %v373 = vadd.f32 0.0, %v372
      %374 = vmatmul.bf16.gmra.mxu0 %v313
      %v375 = vpop.f32.mrf.mxu0
      %v376 = vadd.f32 0.0, %v375
      %v377 = vpop.f32.mrf.mxu0
      %v378 = vadd.f32 0.0, %v377
      %379 = vmatmul.bf16.gmra.mxu0 %v316
      %v380 = vpop.f32.mrf.mxu0
      %v381 = vadd.f32 0.0, %v380
      %v382 = vpop.f32.mrf.mxu0
      %v383 = vadd.f32 0.0, %v382
      %384 = vmatmul.bf16.gmra.mxu0 %v319
      %v385 = vpop.f32.mrf.mxu0
      %v386 = vadd.f32 0.0, %v385
      %v387 = vpop.f32.mrf.mxu0
      %v388 = vadd.f32 0.0, %v387
      %389 = vmatmul.bf16.gmra.mxu0 %v322
      %v390 = vpop.f32.mrf.mxu0
      %v391 = vadd.f32 0.0, %v390
      %v392 = vpop.f32.mrf.mxu0
      %v393 = vadd.f32 0.0, %v392
      %394 = vmatmul.bf16.gmra.mxu0 %v325
      %v395 = vpop.f32.mrf.mxu0
      %v396 = vadd.f32 0.0, %v395
      %v397 = vpop.f32.mrf.mxu0
      %v398 = vadd.f32 0.0, %v397
      %399 = vmatmul.bf16.gmra.mxu0 %v328
      %v400 = vpop.f32.mrf.mxu0
      %v401 = vadd.f32 0.0, %v400
      %v402 = vpop.f32.mrf.mxu0
      %v403 = vadd.f32 0.0, %v402
      %404 = vmatmul.bf16.gmra.mxu0 %v331
      %v405 = vpop.f32.mrf.mxu0
      %v406 = vadd.f32 0.0, %v405
      %v407 = vpop.f32.mrf.mxu0
      %v408 = vadd.f32 0.0, %v407
      %409 = vmatmul.bf16.gmra.mxu0 %v334
      %v410 = vpop.f32.mrf.mxu0
      %v411 = vadd.f32 0.0, %v410
      %v412 = vpop.f32.mrf.mxu0
      %v413 = vadd.f32 0.0, %v412
      %414 = vmatmul.bf16.gmra.mxu0 %v337
      %v415 = vpop.f32.mrf.mxu0
      %v416 = vadd.f32 0.0, %v415
      %v417 = vpop.f32.mrf.mxu0
      %v418 = vadd.f32 0.0, %v417
      %419 = vmatmul.bf16.gmra.mxu0 %v340
      %v420 = vpop.f32.mrf.mxu0
      %v421 = vadd.f32 0.0, %v420
      %v422 = vpop.f32.mrf.mxu0
      %v423 = vadd.f32 0.0, %v422
      %424 = vmatmul.bf16.gmra.mxu0 %v343
      %v425 = vpop.f32.mrf.mxu0
      %v426 = vadd.f32 0.0, %v425
      %v427 = vpop.f32.mrf.mxu0
      %v428 = vadd.f32 0.0, %v427
      %429 = vmatmul.bf16.gmra.mxu0 %v346
      %v430 = vpop.f32.mrf.mxu0
      %v431 = vadd.f32 0.0, %v430
      %v432 = vpop.f32.mrf.mxu0
      %v433 = vadd.f32 0.0, %v432
      %434 = vmatmul.bf16.gmra.mxu0 %v349
      %v435 = vpop.f32.mrf.mxu0
      %v436 = vadd.f32 0.0, %v435
      %v437 = vpop.f32.mrf.mxu0
      %v438 = vadd.f32 0.0, %v437
      %439 = vdwg.mxu0
      %v440 = vld [vmem:[%s2] sm:$0x1]
      %v442 = vperm.slane %v440, 0
      %v444 = vmul.f32 %v361, %v442
      %v445 = vmul.f32 %v363, %v442
      %v446 = vmul.f32 %v366, %v442
      %v447 = vmul.f32 %v368, %v442
      %v448 = vmul.f32 %v371, %v442
      %v449 = vmul.f32 %v373, %v442
      %v450 = vmul.f32 %v376, %v442
      %v451 = vmul.f32 %v378, %v442
      %v452 = vmul.f32 %v381, %v442
      %v453 = vmul.f32 %v383, %v442
      %v454 = vmul.f32 %v386, %v442
      %v455 = vmul.f32 %v388, %v442
      %v456 = vmul.f32 %v391, %v442
      %v457 = vmul.f32 %v393, %v442
      %v458 = vmul.f32 %v396, %v442
      %v459 = vmul.f32 %v398, %v442
      %v460 = vmul.f32 %v401, %v442
      %v461 = vmul.f32 %v403, %v442
      %v462 = vmul.f32 %v406, %v442
      %v463 = vmul.f32 %v408, %v442
      %v464 = vmul.f32 %v411, %v442
      %v465 = vmul.f32 %v413, %v442
      %v466 = vmul.f32 %v416, %v442
      %v467 = vmul.f32 %v418, %v442
      %v468 = vmul.f32 %v421, %v442
      %v469 = vmul.f32 %v423, %v442
      %v470 = vmul.f32 %v426, %v442
      %v471 = vmul.f32 %v428, %v442
      %v472 = vmul.f32 %v431, %v442
      %v473 = vmul.f32 %v433, %v442
      %v474 = vmul.f32 %v436, %v442
      %v475 = vmul.f32 %v438, %v442
      %v476 = vld [vmem:[%s3] sm:$0x1]
      %v478 = vperm.slane %v476, 0
      %v480 = vadd.f32 %v444, %v478
      %v481 = vadd.f32 %v445, %v478
      %v482 = vadd.f32 %v446, %v478
      %v483 = vadd.f32 %v447, %v478
      %v484 = vadd.f32 %v448, %v478
      %v485 = vadd.f32 %v449, %v478
      %v486 = vadd.f32 %v450, %v478
      %v487 = vadd.f32 %v451, %v478
      %v488 = vadd.f32 %v452, %v478
      %v489 = vadd.f32 %v453, %v478
      %v490 = vadd.f32 %v454, %v478
      %v491 = vadd.f32 %v455, %v478
      %v492 = vadd.f32 %v456, %v478
      %v493 = vadd.f32 %v457, %v478
      %v494 = vadd.f32 %v458, %v478
      %v495 = vadd.f32 %v459, %v478
      %v496 = vadd.f32 %v460, %v478
      %v497 = vadd.f32 %v461, %v478
      %v498 = vadd.f32 %v462, %v478
      %v499 = vadd.f32 %v463, %v478
      %v500 = vadd.f32 %v464, %v478
      %v501 = vadd.f32 %v465, %v478
      %v502 = vadd.f32 %v466, %v478
      %v503 = vadd.f32 %v467, %v478
      %v504 = vadd.f32 %v468, %v478
      %v505 = vadd.f32 %v469, %v478
      %v506 = vadd.f32 %v470, %v478
      %v507 = vadd.f32 %v471, %v478
      %v508 = vadd.f32 %v472, %v478
      %v509 = vadd.f32 %v473, %v478
      %v510 = vadd.f32 %v474, %v478
      %v511 = vadd.f32 %v475, %v478
      %512 = vst.msk [vmem:[%s235] sm:$0xff] %vm302, %v480
      %513 = vst.msk [vmem:[%s235 + $0x8] sm:$0xff] %vm302, %v481
      %514 = vst.msk [vmem:[%s235 + $0x10] sm:$0xff] %vm302, %v482
      %515 = vst.msk [vmem:[%s235 + $0x18] sm:$0xff] %vm302, %v483
      %516 = vst.msk [vmem:[%s235 + $0x20] sm:$0xff] %vm302, %v484
      %517 = vst.msk [vmem:[%s235 + $0x28] sm:$0xff] %vm302, %v485
      %518 = vst.msk [vmem:[%s235 + $0x30] sm:$0xff] %vm302, %v486
      %519 = vst.msk [vmem:[%s235 + $0x38] sm:$0xff] %vm302, %v487
      %520 = vst.msk [vmem:[%s235 + $0x40] sm:$0xff] %vm302, %v488
      %521 = vst.msk [vmem:[%s235 + $0x48] sm:$0xff] %vm302, %v489
      %522 = vst.msk [vmem:[%s235 + $0x50] sm:$0xff] %vm302, %v490
      %523 = vst.msk [vmem:[%s235 + $0x58] sm:$0xff] %vm302, %v491
      %524 = vst.msk [vmem:[%s235 + $0x60] sm:$0xff] %vm302, %v492
      %525 = vst.msk [vmem:[%s235 + $0x68] sm:$0xff] %vm302, %v493
      %526 = vst.msk [vmem:[%s235 + $0x70] sm:$0xff] %vm302, %v494
      %527 = vst.msk [vmem:[%s235 + $0x78] sm:$0xff] %vm302, %v495
      %528 = vst.msk [vmem:[%s235 + $0x80] sm:$0xff] %vm302, %v496
      %529 = vst.msk [vmem:[%s235 + $0x88] sm:$0xff] %vm302, %v497
      %530 = vst.msk [vmem:[%s235 + $0x90] sm:$0xff] %vm302, %v498
      %531 = vst.msk [vmem:[%s235 + $0x98] sm:$0xff] %vm302, %v499
      %532 = vst.msk [vmem:[%s235 + $0xa0] sm:$0xff] %vm302, %v500
      %533 = vst.msk [vmem:[%s235 + $0xa8] sm:$0xff] %vm302, %v501
      %534 = vst.msk [vmem:[%s235 + $0xb0] sm:$0xff] %vm302, %v502
      %535 = vst.msk [vmem:[%s235 + $0xb8] sm:$0xff] %vm302, %v503
      %536 = vst.msk [vmem:[%s235 + $0xc0] sm:$0xff] %vm302, %v504
      %537 = vst.msk [vmem:[%s235 + $0xc8] sm:$0xff] %vm302, %v505
      %538 = vst.msk [vmem:[%s235 + $0xd0] sm:$0xff] %vm302, %v506
      %539 = vst.msk [vmem:[%s235 + $0xd8] sm:$0xff] %vm302, %v507
      %540 = vst.msk [vmem:[%s235 + $0xe0] sm:$0xff] %vm302, %v508
      %541 = vst.msk [vmem:[%s235 + $0xe8] sm:$0xff] %vm302, %v509
      %542 = vst.msk [vmem:[%s235 + $0xf0] sm:$0xff] %vm302, %v510
      %543 = vst.msk [vmem:[%s235 + $0xf8] sm:$0xff] %vm302, %v511
      %s544 = smul.u32 32, %s20
      %p545 = scmp.lt.s32.totalorder %s19, 1
      %s546 = scalar_select %p545, %s19, 1
      %p547 = scmp.lt.s32.totalorder %s544, 31
      %s548 = scalar_select %p547, %s544, 31
      %s549 = smul.addr %s546, 32
      %s550 = sadd.s32 %s548, %s549
      %s551 = smul.addr %s550, 8
      %s552 = scalar_lea.vmem %s4, %s551
      // Predicated region
      $region37: #{_lambda_.13} parent=35 // pred_check
        %p553 = pneg %p138
      $region38: #{_lambda_.13} parent=35 // pred_check_branch
        %555 = sbr.rel (%p553) target = $region40
      $region39: #{_lambda_.13} parent=35 // pred_region
        %s556 = smul.u32 32, %s20
      $region40: #{_lambda_.13} parent=35 // pred_fallthru
        _
    $region36: #{_lambda_.13} parent=5 // pred_fallthru
      _
    %p557 = scmp.le.s32.totalorder 2, %s10
    // Predicated region
    $region41: #{_lambda_.13} parent=5 // pred_check
      %p558 = pneg %p557
    $region42: #{_lambda_.13} parent=5 // pred_check_branch
      %560 = sbr.rel (%p558) target = $region44
    $region43: #{_lambda_.13} parent=5 // pred_region
      %s561 = ssub.s32 %s10, 2
      // Predicated region
      $region45: #{_lambda_.13} parent=43 // pred_check
        %p562 = pneg %p144
      $region46: #{_lambda_.13} parent=43 // pred_check_branch
        %564 = sbr.rel (%p562) target = $region48
      $region47: #{_lambda_.13} parent=43 // pred_region
        %s565 = smul.u32 32, %s22
        %p566 = scmp.lt.s32.totalorder %s21, 1
        %s567 = scalar_select %p566, %s21, 1
        %p568 = scmp.lt.s32.totalorder %s565, 31
        %s569 = scalar_select %p568, %s565, 31
        %s570 = smul.addr %s567, 32
        %s571 = sadd.s32 %s569, %s570
        %s572 = smul.addr %s571, 8
        %s573 = scalar_lea.vmem %s4, %s572
      $region48: #{_lambda_.13} parent=43 // pred_fallthru
        _
    $region44: #{_lambda_.13} parent=5 // pred_fallthru
      _
  $region6: #{_lambda_.13} parent=0 // loop_footer
    %s14 = sadd.s32 1, %s10
  $region7: #{_lambda_.13} parent=0 // loop_footer_branch
    %9 = sbr.rel target = $region3
  $region8: #{_lambda_.13} parent=0 // loop_exit
    _

// kernel: _lambda_.12
$region0: #{_lambda_.12}
  #allocation0 [shape = 'u32[]', space=smem, size = 0x4, offset = 0x4, fixed_abs, tag = 'smem constant byte address 0x4 - core index']
  #allocation1 [shape = 'u32[72,128]{1,0:T(1,128)}', space=vmem, size = 0x9000, scoped, tag = 'internal scratch']
  %s0 = inlined_call_operand.vmem [shape: f32[2,18,18,32], index: 0, kind: input, shape index: {}]
  %s1 = inlined_call_operand.vmem [shape: bf16[9,32,32], index: 1, kind: input, shape index: {}]
  %s2 = inlined_call_operand.vmem [shape: f32[1,32], index: 2, kind: input, shape index: {}]
  %s3 = inlined_call_operand.vmem [shape: f32[1,32], index: 3, kind: input, shape index: {}]
  %s4 = inlined_call_operand.vmem [shape: f32[2,16,16,32], index: 4, kind: output, shape index: {}]
  %s5 = sld [smem:[#allocation0]]
  $region49: #{_lambda_.12} parent=0
    _
  %s7 = ssub.s32 1, %s5
  %s8 = scalar_select 0, %s7, %s5
  loop: start=0, step=1, limit=4
  $region2: #{_lambda_.12} parent=0 // loop_pre_header
    _
  $region3: #{_lambda_.12} parent=0 // loop_header
    %s10 = sphi 0, %s14
    %p11 = scmp.ge.s32.totalorder %s10, 4
    %s20 = sphi 0, %s22
    %s23 = sphi 0, %s20
    %s24 = sphi 0, %s23
    %s40 = sphi 0, %s24
    %s44 = sphi 0, %s44
    %s46 = sphi 0, %s44
    %s47 = sphi 0, %s46
    %s61 = sphi 0, %s47
    %s65 = sphi 0, %s65
    %s67 = sphi 0, %s65
    %s68 = sphi 0, %s67
    %s82 = sphi 0, %s68
    %s86 = sphi 0, %s86
    %s88 = sphi 0, %s86
    %s89 = sphi 0, %s88
    %s103 = sphi 0, %s89
    %s109 = sphi 0, %s111
    %s112 = sphi 0, %s109
    %s113 = sphi 0, %s112
    %s129 = sphi 0, %s113
  $region4: #{_lambda_.12} parent=0 // loop_header_branch
    %13 = sbr.rel (%p11) target = $region8
  $region5: #{_lambda_.12} parent=0 // loop_body
    %s15 = ssub.s32 %s10, 1
    %s16 = ssub.s32 %s10, 2
    %s17 = sadd.s32 %s10, 1
    %s18 = ssub.s32 %s10, %s17
    %p19 = scmp.eq.s32.totalorder %s18, 0
    %s21 = sadd.s32 %s20, 1
    %s22 = scalar_select %p19, %s20, %s21
    %p25 = pneg %p19
    %p26 = scmp.eq.s32.totalorder %s10, 1
    %p27 = por %p25, %p26
    %p28 = scmp.ne.s32.totalorder %s20, %s23
    %p29 = scmp.eq.s32.totalorder %s10, 0
    %p30 = por %p28, %p29
    %p31 = scmp.ne.s32.totalorder %s20, %s23
    %p32 = scmp.eq.s32.totalorder %s15, 1
    %p33 = por %p31, %p32
    %p34 = scmp.ne.s32.totalorder %s23, %s24
    %p35 = scmp.eq.s32.totalorder %s15, 0
    %p36 = por %p34, %p35
    %p37 = scmp.ne.s32.totalorder %s23, %s24
    %p38 = scmp.eq.s32.totalorder %s16, 1
    %p39 = por %p37, %p38
    %p41 = scmp.ne.s32.totalorder %s24, %s40
    %p42 = scmp.eq.s32.totalorder %s16, 0
    %p43 = por %p41, %p42
    %s45 = sadd.s32 %s44, 1
    %p48 = scmp.eq.s32.totalorder %s10, 1
    %p49 = scmp.ne.s32.totalorder %s44, %s46
    %p50 = scmp.eq.s32.totalorder %s10, 0
    %p51 = por %p49, %p50
    %p52 = scmp.ne.s32.totalorder %s44, %s46
    %p53 = scmp.eq.s32.totalorder %s15, 1
    %p54 = por %p52, %p53
    %p55 = scmp.ne.s32.totalorder %s46, %s47
    %p56 = scmp.eq.s32.totalorder %s15, 0
    %p57 = por %p55, %p56
    %p58 = scmp.ne.s32.totalorder %s46, %s47
    %p59 = scmp.eq.s32.totalorder %s16, 1
    %p60 = por %p58, %p59
    %p62 = scmp.ne.s32.totalorder %s47, %s61
    %p63 = scmp.eq.s32.totalorder %s16, 0
    %p64 = por %p62, %p63
    %s66 = sadd.s32 %s65, 1
    %p69 = scmp.eq.s32.totalorder %s10, 1
    %p70 = scmp.ne.s32.totalorder %s65, %s67
    %p71 = scmp.eq.s32.totalorder %s10, 0
    %p72 = por %p70, %p71
    %p73 = scmp.ne.s32.totalorder %s65, %s67
    %p74 = scmp.eq.s32.totalorder %s15, 1
    %p75 = por %p73, %p74
    %p76 = scmp.ne.s32.totalorder %s67, %s68
    %p77 = scmp.eq.s32.totalorder %s15, 0
    %p78 = por %p76, %p77
    %p79 = scmp.ne.s32.totalorder %s67, %s68
    %p80 = scmp.eq.s32.totalorder %s16, 1
    %p81 = por %p79, %p80
    %p83 = scmp.ne.s32.totalorder %s68, %s82
    %p84 = scmp.eq.s32.totalorder %s16, 0
    %p85 = por %p83, %p84
    %s87 = sadd.s32 %s86, 1
    %p90 = scmp.eq.s32.totalorder %s10, 1
    %p91 = scmp.ne.s32.totalorder %s86, %s88
    %p92 = scmp.eq.s32.totalorder %s10, 0
    %p93 = por %p91, %p92
    %p94 = scmp.ne.s32.totalorder %s86, %s88
    %p95 = scmp.eq.s32.totalorder %s15, 1
    %p96 = por %p94, %p95
    %p97 = scmp.ne.s32.totalorder %s88, %s89
    %p98 = scmp.eq.s32.totalorder %s15, 0
    %p99 = por %p97, %p98
    %p100 = scmp.ne.s32.totalorder %s88, %s89
    %p101 = scmp.eq.s32.totalorder %s16, 1
    %p102 = por %p100, %p101
    %p104 = scmp.ne.s32.totalorder %s89, %s103
    %p105 = scmp.eq.s32.totalorder %s16, 0
    %p106 = por %p104, %p105
    %s107 = ssub.s32 %s10, %s17
    %p108 = scmp.eq.s32.totalorder %s107, 0
    %s110 = sadd.s32 %s109, 1
    %s111 = scalar_select %p108, %s109, %s110
    %p114 = pneg %p108
    %p115 = scmp.eq.s32.totalorder %s10, 1
    %p116 = por %p114, %p115
    %p117 = scmp.ne.s32.totalorder %s109, %s112
    %p118 = scmp.eq.s32.totalorder %s10, 0
    %p119 = por %p117, %p118
    %p120 = scmp.ne.s32.totalorder %s109, %s112
    %p121 = scmp.eq.s32.totalorder %s15, 1
    %p122 = por %p120, %p121
    %p123 = scmp.ne.s32.totalorder %s112, %s113
    %p124 = scmp.eq.s32.totalorder %s15, 0
    %p125 = por %p123, %p124
    %p126 = scmp.ne.s32.totalorder %s112, %s113
    %p127 = scmp.eq.s32.totalorder %s16, 1
    %p128 = por %p126, %p127
    %p130 = scmp.ne.s32.totalorder %s113, %s129
    %p131 = scmp.eq.s32.totalorder %s16, 0
    %p132 = por %p130, %p131
    %p133 = scmp.le.s32.totalorder 1, %s10
    %p134 = scmp.lt.s32.totalorder %s10, 3
    %p135 = pnand %p133, %p134
    %p136 = pneg %p135
    // Predicated region
    $region9: #{_lambda_.12} parent=5 // pred_check
      _
    $region10: #{_lambda_.12} parent=5 // pred_check_branch
      %138 = sbr.rel (%p135) target = $region12
    $region11: #{_lambda_.12} parent=5 // pred_region
      %s139 = ssub.s32 %s10, 1
      // Predicated region
      $region13: #{_lambda_.12} parent=11 // pred_check
        %p140 = pneg %p57
      $region14: #{_lambda_.12} parent=11 // pred_check_branch
        %142 = sbr.rel (%p140) target = $region16
      $region15: #{_lambda_.12} parent=11 // pred_region
        _
      $region16: #{_lambda_.12} parent=11 // pred_fallthru
        _
      // Predicated region
      $region17: #{_lambda_.12} parent=11 // pred_check
        %p143 = pneg %p78
      $region18: #{_lambda_.12} parent=11 // pred_check_branch
        %145 = sbr.rel (%p143) target = $region20
      $region19: #{_lambda_.12} parent=11 // pred_region
        _
      $region20: #{_lambda_.12} parent=11 // pred_fallthru
        _
      // Predicated region
      $region21: #{_lambda_.12} parent=11 // pred_check
        %p146 = pneg %p99
      $region22: #{_lambda_.12} parent=11 // pred_check_branch
        %148 = sbr.rel (%p146) target = $region24
      $region23: #{_lambda_.12} parent=11 // pred_region
        _
      $region24: #{_lambda_.12} parent=11 // pred_fallthru
        _
    $region12: #{_lambda_.12} parent=5 // pred_fallthru
      _
    %p149 = scmp.lt.s32.totalorder %s10, 2
    // Predicated region
    $region25: #{_lambda_.12} parent=5 // pred_check
      %p150 = pneg %p149
    $region26: #{_lambda_.12} parent=5 // pred_check_branch
      %152 = sbr.rel (%p150) target = $region28
    $region27: #{_lambda_.12} parent=5 // pred_region
      // Predicated region
      $region29: #{_lambda_.12} parent=27 // pred_check
        %p153 = pneg %p30
      $region30: #{_lambda_.12} parent=27 // pred_check_branch
        %155 = sbr.rel (%p153) target = $region32
      $region31: #{_lambda_.12} parent=27 // pred_region
        %p156 = scmp.lt.s32.totalorder %s10, 1
        %s157 = scalar_select %p156, %s10, 1
        %s158 = smul.addr %s157, 54
        %s159 = smul.addr %s158, 8
        %s160 = scalar_lea.vmem %s0, %s159
      $region32: #{_lambda_.12} parent=27 // pred_fallthru
        _
    $region28: #{_lambda_.12} parent=5 // pred_fallthru
      _
    %p161 = scmp.le.s32.totalorder 1, %s10
    %p162 = scmp.lt.s32.totalorder %s10, 3
    %p163 = pnand %p161, %p162
    %p164 = pneg %p163
    // Predicated region
    $region33: #{_lambda_.12} parent=5 // pred_check
      _
    $region34: #{_lambda_.12} parent=5 // pred_check_branch
      %166 = sbr.rel (%p163) target = $region36
    $region35: #{_lambda_.12} parent=5 // pred_region
      %s167 = ssub.s32 %s10, 1
      %p168 = scmp.lt.s32.totalorder %s15, 1
      %s169 = scalar_select %p168, %s15, 1
      %s170 = smul.addr %s169, 54
      %s171 = smul.addr %s170, 8
      %s172 = scalar_lea.vmem %s0, %s171
      %p173 = pneg %p36
      %p174 = pneg %p33
      %p175 = pneg %p57
      %p176 = pneg %p54
      %p177 = pneg %p78
      %p178 = pneg %p75
      %p179 = pneg %p99
      %p180 = pneg %p96
      %p181 = pneg %p125
      %p182 = pneg %p122
      %p183 = scmp.lt.s32.totalorder %s15, 1
      %s184 = scalar_select %p183, %s15, 1
      %s185 = smul.addr %s184, 32
      %s186 = smul.addr %s185, 8
      %s187 = scalar_lea.vmem %s4, %s186
      %p188 = scmp.lt.s32.totalorder %s15, 1
      %s189 = scalar_select %p188, %s15, 1
      %s190 = smul.addr %s189, 54
      %s191 = smul.addr %s190, 8
      %s192 = scalar_lea.vmem %s0, %s191
      %p193 = scmp.lt.s32.totalorder %s15, 1
      %s194 = scalar_select %p193, %s15, 1
      %s195 = smul.addr %s194, 32
      %s196 = smul.addr %s195, 8
      %s197 = scalar_lea.vmem %s4, %s196
      %v199 = vld [vmem:[%s192] sm:$0xff]
      %v200 = vld [vmem:[%s192 + $0x8] sm:$0xff]
      %v201 = vld [vmem:[%s192 + $0x10] sm:$0x3]
      %v202 = vld [vmem:[%s192 + $0x18] sm:$0xff]
      %v203 = vld [vmem:[%s192 + $0x20] sm:$0xff]
      %v204 = vld [vmem:[%s192 + $0x28] sm:$0x3]
      %v205 = vld [vmem:[%s192 + $0x30] sm:$0xff]
      %v206 = vld [vmem:[%s192 + $0x38] sm:$0xff]
      %v207 = vld [vmem:[%s192 + $0x40] sm:$0x3]
      %v208 = vld [vmem:[%s192 + $0x48] sm:$0xff]
      %v209 = vld [vmem:[%s192 + $0x50] sm:$0xff]
      %v210 = vld [vmem:[%s192 + $0x58] sm:$0x3]
      %v211 = vld [vmem:[%s192 + $0x60] sm:$0xff]
      %v212 = vld [vmem:[%s192 + $0x68] sm:$0xff]
      %v213 = vld [vmem:[%s192 + $0x70] sm:$0x3]
      %v214 = vld [vmem:[%s192 + $0x78] sm:$0xff]
      %v215 = vld [vmem:[%s192 + $0x80] sm:$0xff]
      %v216 = vld [vmem:[%s192 + $0x88] sm:$0x3]
      %v217 = vld [vmem:[%s192 + $0x90] sm:$0xff]
      %v218 = vld [vmem:[%s192 + $0x98] sm:$0xff]
      %v219 = vld [vmem:[%s192 + $0xa0] sm:$0x3]
      %v220 = vld [vmem:[%s192 + $0xa8] sm:$0xff]
      %v221 = vld [vmem:[%s192 + $0xb0] sm:$0xff]
      %v222 = vld [vmem:[%s192 + $0xb8] sm:$0x3]
      %v223 = vld [vmem:[%s192 + $0xc0] sm:$0xff]
      %v224 = vld [vmem:[%s192 + $0xc8] sm:$0xff]
      %v225 = vld [vmem:[%s192 + $0xd0] sm:$0x3]
      %v226 = vld [vmem:[%s192 + $0xd8] sm:$0xff]
      %v227 = vld [vmem:[%s192 + $0xe0] sm:$0xff]
      %v228 = vld [vmem:[%s192 + $0xe8] sm:$0x3]
      %v229 = vld [vmem:[%s192 + $0xf0] sm:$0xff]
      %v230 = vld [vmem:[%s192 + $0xf8] sm:$0xff]
      %v231 = vld [vmem:[%s192 + $0x100] sm:$0x3]
      %v232 = vld [vmem:[%s192 + $0x108] sm:$0xff]
      %v233 = vld [vmem:[%s192 + $0x110] sm:$0xff]
      %v234 = vld [vmem:[%s192 + $0x118] sm:$0x3]
      %v235 = vld [vmem:[%s192 + $0x120] sm:$0xff]
      %v236 = vld [vmem:[%s192 + $0x128] sm:$0xff]
      %v237 = vld [vmem:[%s192 + $0x130] sm:$0x3]
      %v238 = vld [vmem:[%s192 + $0x138] sm:$0xff]
      %v239 = vld [vmem:[%s192 + $0x140] sm:$0xff]
      %v240 = vld [vmem:[%s192 + $0x148] sm:$0x3]
      %v241 = vld [vmem:[%s192 + $0x150] sm:$0xff]
      %v242 = vld [vmem:[%s192 + $0x158] sm:$0xff]
      %v243 = vld [vmem:[%s192 + $0x160] sm:$0x3]
      %v244 = vld [vmem:[%s192 + $0x168] sm:$0xff]
      %v245 = vld [vmem:[%s192 + $0x170] sm:$0xff]
      %v246 = vld [vmem:[%s192 + $0x178] sm:$0x3]
      %v247 = vld [vmem:[%s192 + $0x180] sm:$0xff]
      %v248 = vld [vmem:[%s192 + $0x188] sm:$0xff]
      %v249 = vld [vmem:[%s192 + $0x190] sm:$0x3]
      %v250 = vld [vmem:[%s192 + $0x198] sm:$0xff]
      %v251 = vld [vmem:[%s192 + $0x1a0] sm:$0xff]
      %v252 = vld [vmem:[%s192 + $0x1a8] sm:$0x3]
      %v253 = vpack.c.bf16 %v200, %v199
      %v254 = vpack.c.bf16 %v203, %v202
      %v255 = vpack.c.bf16 %v206, %v205
      %v256 = vpack.c.bf16 %v209, %v208
      %v257 = vpack.c.bf16 %v212, %v211
      %v258 = vpack.c.bf16 %v215, %v214
      %v259 = vpack.c.bf16 %v218, %v217
      %v260 = vpack.c.bf16 %v221, %v220
      %v261 = vpack.c.bf16 %v224, %v223
      %v262 = vpack.c.bf16 %v227, %v226
      %v263 = vpack.c.bf16 %v230, %v229
      %v264 = vpack.c.bf16 %v233, %v232
      %v265 = vpack.c.bf16 %v236, %v235
      %v266 = vpack.c.bf16 %v239, %v238
      %v267 = vpack.c.bf16 %v242, %v241
      %v268 = vpack.c.bf16 %v245, %v244
      %v269 = vld [vmem:[%s1] sm:$0xf]
      %v270 = vld [vmem:[%s1 + $0x4] sm:$0xf]
      %v271 = vld [vmem:[%s1 + $0x8] sm:$0xf]
      %v272 = vld [vmem:[%s1 + $0xc] sm:$0xf]
      %vm321 = vcmask 1046528
      %v322 = vrot.slane %v199, 1
      %v323 = vrot.slane %v200, 1
      %v324 = vsel %vm321, %v322, %v323
      %v325 = vrot.slane %v201, 1
      %v326 = vsel %vm321, %v323, %v325
      %v327 = vrot.slane %v202, 1
      %v328 = vrot.slane %v203, 1
      %v329 = vsel %vm321, %v327, %v328
      %v330 = vrot.slane %v204, 1
      %v331 = vsel %vm321, %v328, %v330
      %v332 = vrot.slane %v205, 1
      %v333 = vrot.slane %v206, 1
      %v334 = vsel %vm321, %v332, %v333
      %v335 = vrot.slane %v207, 1
      %v336 = vsel %vm321, %v333, %v335
      %v337 = vrot.slane %v208, 1
      %v338 = vrot.slane %v209, 1
      %v339 = vsel %vm321, %v337, %v338
      %v340 = vrot.slane %v210, 1
      %v341 = vsel %vm321, %v338, %v340
      %v342 = vrot.slane %v211, 1
      %v343 = vrot.slane %v212, 1
      %v344 = vsel %vm321, %v342, %v343
      %v345 = vrot.slane %v213, 1
      %v346 = vsel %vm321, %v343, %v345
      %v347 = vrot.slane %v214, 1
      %v348 = vrot.slane %v215, 1
      %v349 = vsel %vm321, %v347, %v348
      %v350 = vrot.slane %v216, 1
      %v351 = vsel %vm321, %v348, %v350
      %v352 = vrot.slane %v217, 1
      %v353 = vrot.slane %v218, 1
      %v354 = vsel %vm321, %v352, %v353
      %v355 = vrot.slane %v219, 1
      %v356 = vsel %vm321, %v353, %v355
      %v357 = vrot.slane %v220, 1
      %v358 = vrot.slane %v221, 1
      %v359 = vsel %vm321, %v357, %v358
      %v360 = vrot.slane %v222, 1
      %v361 = vsel %vm321, %v358, %v360
      %v362 = vrot.slane %v223, 1
      %v363 = vrot.slane %v224, 1
      %v364 = vsel %vm321, %v362, %v363
      %v365 = vrot.slane %v225, 1
      %v366 = vsel %vm321, %v363, %v365
      %v367 = vrot.slane %v226, 1
      %v368 = vrot.slane %v227, 1
      %v369 = vsel %vm321, %v367, %v368
      %v370 = vrot.slane %v228, 1
      %v371 = vsel %vm321, %v368, %v370
      %v372 = vrot.slane %v229, 1
      %v373 = vrot.slane %v230, 1
      %v374 = vsel %vm321, %v372, %v373
      %v375 = vrot.slane %v231, 1
      %v376 = vsel %vm321, %v373, %v375
      %v377 = vrot.slane %v232, 1
      %v378 = vrot.slane %v233, 1
      %v379 = vsel %vm321, %v377, %v378
      %v380 = vrot.slane %v234, 1
      %v381 = vsel %vm321, %v378, %v380
      %v382 = vrot.slane %v235, 1
      %v383 = vrot.slane %v236, 1
      %v384 = vsel %vm321, %v382, %v383
      %v385 = vrot.slane %v237, 1
      %v386 = vsel %vm321, %v383, %v385
      %v387 = vrot.slane %v238, 1
      %v388 = vrot.slane %v239, 1
      %v389 = vsel %vm321, %v387, %v388
      %v390 = vrot.slane %v240, 1
      %v391 = vsel %vm321, %v388, %v390
      %v392 = vrot.slane %v241, 1
      %v393 = vrot.slane %v242, 1
      %v394 = vsel %vm321, %v392, %v393
      %v395 = vrot.slane %v243, 1
      %v396 = vsel %vm321, %v393, %v395
      %v397 = vrot.slane %v244, 1
      %v398 = vrot.slane %v245, 1
      %v399 = vsel %vm321, %v397, %v398
      %v400 = vrot.slane %v246, 1
      %v401 = vsel %vm321, %v398, %v400
      %v434 = vpack.c.bf16 %v326, %v324
      %v435 = vpack.c.bf16 %v331, %v329
      %v436 = vpack.c.bf16 %v336, %v334
      %v437 = vpack.c.bf16 %v341, %v339
      %v438 = vpack.c.bf16 %v346, %v344
      %v439 = vpack.c.bf16 %v351, %v349
      %v440 = vpack.c.bf16 %v356, %v354
      %v441 = vpack.c.bf16 %v361, %v359
      %v442 = vpack.c.bf16 %v366, %v364
      %v443 = vpack.c.bf16 %v371, %v369
      %v444 = vpack.c.bf16 %v376, %v374
      %v445 = vpack.c.bf16 %v381, %v379
      %v446 = vpack.c.bf16 %v386, %v384
      %v447 = vpack.c.bf16 %v391, %v389
      %v448 = vpack.c.bf16 %v396, %v394
      %v449 = vpack.c.bf16 %v401, %v399
      %s450 = scalar_lea.vmem %s1, 16
      %v451 = vld [vmem:[%s450] sm:$0xf]
      %v452 = vld [vmem:[%s450 + $0x4] sm:$0xf]
      %v453 = vld [vmem:[%s450 + $0x8] sm:$0xf]
      %v454 = vld [vmem:[%s450 + $0xc] sm:$0xf]
      %v459 = vunpack.c.l.b16 %v451
      %v460 = vunpack.c.l.b16 %v452
      %v461 = vunpack.c.l.b16 %v453
      %v462 = vunpack.c.l.b16 %v454
      %v463 = vpack.c.b16 %v460, %v459
      %v464 = vpack.c.b16 %v462, %v461
      %vm467 = vcmask 261120
      %v469 = vsel %vm467, %v434, 0
      %v472 = vsel %vm467, %v435, 0
      %v475 = vsel %vm467, %v436, 0
      %v478 = vsel %vm467, %v437, 0
      %v481 = vsel %vm467, %v438, 0
      %v484 = vsel %vm467, %v439, 0
      %v487 = vsel %vm467, %v440, 0
      %v490 = vsel %vm467, %v441, 0
      %v493 = vsel %vm467, %v442, 0
      %v496 = vsel %vm467, %v443, 0
      %v499 = vsel %vm467, %v444, 0
      %v502 = vsel %vm467, %v445, 0
      %v505 = vsel %vm467, %v446, 0
      %v508 = vsel %vm467, %v447, 0
      %v511 = vsel %vm467, %v448, 0
      %v514 = vsel %vm467, %v449, 0
      %516 = vmatpush.bf16.msra.mxu0 0
      %517 = vmatpush.bf16.msra.mxu0 0
      %518 = vmatpush.bf16.msra.mxu0 0
      %519 = vmatpush.bf16.msra.mxu0 0
      %520 = vmatpush.bf16.msra.mxu0 0
      %521 = vmatpush.bf16.msra.mxu0 0
      %522 = vmatpush.bf16.msra.mxu0 %v464
      %523 = vmatpush.bf16.msra.mxu0 %v463
      %524 = vmatmul.bf16.gmra.mxu0 %v469
      %v525 = vpop.f32.mrf.mxu0
      %v526 = vadd.f32 0.0, %v525
      %v527 = vpop.f32.mrf.mxu0
      %v528 = vadd.f32 0.0, %v527
      %529 = vmatmul.bf16.gmra.mxu0 %v472
      %v530 = vpop.f32.mrf.mxu0
      %v531 = vadd.f32 0.0, %v530
      %v532 = vpop.f32.mrf.mxu0
      %v533 = vadd.f32 0.0, %v532
      %534 = vmatmul.bf16.gmra.mxu0 %v475
      %v535 = vpop.f32.mrf.mxu0
      %v536 = vadd.f32 0.0, %v535
      %v537 = vpop.f32.mrf.mxu0
      %v538 = vadd.f32 0.0, %v537
      %539 = vmatmul.bf16.gmra.mxu0 %v478
      %v540 = vpop.f32.mrf.mxu0
      %v541 = vadd.f32 0.0, %v540
      %v542 = vpop.f32.mrf.mxu0
      %v543 = vadd.f32 0.0, %v542
      %544 = vmatmul.bf16.gmra.mxu0 %v481
      %v545 = vpop.f32.mrf.mxu0
      %v546 = vadd.f32 0.0, %v545
      %v547 = vpop.f32.mrf.mxu0
      %v548 = vadd.f32 0.0, %v547
      %549 = vmatmul.bf16.gmra.mxu0 %v484
      %v550 = vpop.f32.mrf.mxu0
      %v551 = vadd.f32 0.0, %v550
      %v552 = vpop.f32.mrf.mxu0
      %v553 = vadd.f32 0.0, %v552
      %554 = vmatmul.bf16.gmra.mxu0 %v487
      %v555 = vpop.f32.mrf.mxu0
      %v556 = vadd.f32 0.0, %v555
      %v557 = vpop.f32.mrf.mxu0
      %v558 = vadd.f32 0.0, %v557
      %559 = vmatmul.bf16.gmra.mxu0 %v490
      %v560 = vpop.f32.mrf.mxu0
      %v561 = vadd.f32 0.0, %v560
      %v562 = vpop.f32.mrf.mxu0
      %v563 = vadd.f32 0.0, %v562
      %564 = vmatmul.bf16.gmra.mxu0 %v493
      %v565 = vpop.f32.mrf.mxu0
      %v566 = vadd.f32 0.0, %v565
      %v567 = vpop.f32.mrf.mxu0
      %v568 = vadd.f32 0.0, %v567
      %569 = vmatmul.bf16.gmra.mxu0 %v496
      %v570 = vpop.f32.mrf.mxu0
      %v571 = vadd.f32 0.0, %v570
      %v572 = vpop.f32.mrf.mxu0
      %v573 = vadd.f32 0.0, %v572
      %574 = vmatmul.bf16.gmra.mxu0 %v499
      %v575 = vpop.f32.mrf.mxu0
      %v576 = vadd.f32 0.0, %v575
      %v577 = vpop.f32.mrf.mxu0
      %v578 = vadd.f32 0.0, %v577
      %579 = vmatmul.bf16.gmra.mxu0 %v502
      %v580 = vpop.f32.mrf.mxu0
      %v581 = vadd.f32 0.0, %v580
      %v582 = vpop.f32.mrf.mxu0
      %v583 = vadd.f32 0.0, %v582
      %584 = vmatmul.bf16.gmra.mxu0 %v505
      %v585 = vpop.f32.mrf.mxu0
      %v586 = vadd.f32 0.0, %v585
      %v587 = vpop.f32.mrf.mxu0
      %v588 = vadd.f32 0.0, %v587
      %589 = vmatmul.bf16.gmra.mxu0 %v508
      %v590 = vpop.f32.mrf.mxu0
      %v591 = vadd.f32 0.0, %v590
      %v592 = vpop.f32.mrf.mxu0
      %v593 = vadd.f32 0.0, %v592
      %594 = vmatmul.bf16.gmra.mxu0 %v511
      %v595 = vpop.f32.mrf.mxu0
      %v596 = vadd.f32 0.0, %v595
      %v597 = vpop.f32.mrf.mxu0
      %v598 = vadd.f32 0.0, %v597
      %599 = vmatmul.bf16.gmra.mxu0 %v514
      %v600 = vpop.f32.mrf.mxu0
      %v601 = vadd.f32 0.0, %v600
      %v602 = vpop.f32.mrf.mxu0
      %v603 = vadd.f32 0.0, %v602
      %604 = vdwg.mxu0
      %v609 = vunpack.c.l.b16 %v269
      %v610 = vunpack.c.l.b16 %v270
      %v611 = vunpack.c.l.b16 %v271
      %v612 = vunpack.c.l.b16 %v272
      %v613 = vpack.c.b16 %v610, %v609
      %v614 = vpack.c.b16 %v612, %v611
      %v618 = vsel %vm467, %v253, 0
      %v621 = vsel %vm467, %v254, 0
      %v624 = vsel %vm467, %v255, 0
      %v627 = vsel %vm467, %v256, 0
      %v630 = vsel %vm467, %v257, 0
      %v633 = vsel %vm467, %v258, 0
      %v636 = vsel %vm467, %v259, 0
      %v639 = vsel %vm467, %v260, 0
      %v642 = vsel %vm467, %v261, 0
      %v645 = vsel %vm467, %v262, 0
      %v648 = vsel %vm467, %v263, 0
      %v651 = vsel %vm467, %v264, 0
      %v654 = vsel %vm467, %v265, 0
      %v657 = vsel %vm467, %v266, 0
      %v660 = vsel %vm467, %v267, 0
      %v663 = vsel %vm467, %v268, 0
      %665 = vmatpush.bf16.msra.mxu0 0
      %666 = vmatpush.bf16.msra.mxu0 0
      %667 = vmatpush.bf16.msra.mxu0 0
      %668 = vmatpush.bf16.msra.mxu0 0
      %669 = vmatpush.bf16.msra.mxu0 0
      %670 = vmatpush.bf16.msra.mxu0 0
      %671 = vmatpush.bf16.msra.mxu0 %v614
      %672 = vmatpush.bf16.msra.mxu0 %v613
      %673 = vmatmul.bf16.gmra.mxu0 %v618
      %v674 = vpop.f32.mrf.mxu0
      %v675 = vadd.f32 %v526, %v674
      %v676 = vpop.f32.mrf.mxu0
      %v677 = vadd.f32 %v528, %v676
      %678 = vmatmul.bf16.gmra.mxu0 %v621
      %v679 = vpop.f32.mrf.mxu0
      %v680 = vadd.f32 %v531, %v679
      %v681 = vpop.f32.mrf.mxu0
      %v682 = vadd.f32 %v533, %v681
      %683 = vmatmul.bf16.gmra.mxu0 %v624
      %v684 = vpop.f32.mrf.mxu0
      %v685 = vadd.f32 %v536, %v684
      %v686 = vpop.f32.mrf.mxu0
      %v687 = vadd.f32 %v538, %v686
      %688 = vmatmul.bf16.gmra.mxu0 %v627
      %v689 = vpop.f32.mrf.mxu0
      %v690 = vadd.f32 %v541, %v689
      %v691 = vpop.f32.mrf.mxu0
      %v692 = vadd.f32 %v543, %v691
      %693 = vmatmul.bf16.gmra.mxu0 %v630
      %v694 = vpop.f32.mrf.mxu0
      %v695 = vadd.f32 %v546, %v694
      %v696 = vpop.f32.mrf.mxu0
      %v697 = vadd.f32 %v548, %v696
      %698 = vmatmul.bf16.gmra.mxu0 %v633
      %v699 = vpop.f32.mrf.mxu0
      %v700 = vadd.f32 %v551, %v699
      %v701 = vpop.f32.mrf.mxu0
      %v702 = vadd.f32 %v553, %v701
      %703 = vmatmul.bf16.gmra.mxu0 %v636
      %v704 = vpop.f32.mrf.mxu0
      %v705 = vadd.f32 %v556, %v704
      %v706 = vpop.f32.mrf.mxu0
      %v707 = vadd.f32 %v558, %v706
      %708 = vmatmul.bf16.gmra.mxu0 %v639
      %v709 = vpop.f32.mrf.mxu0
      %v710 = vadd.f32 %v561, %v709
      %v711 = vpop.f32.mrf.mxu0
      %v712 = vadd.f32 %v563, %v711
      %713 = vmatmul.bf16.gmra.mxu0 %v642
      %v714 = vpop.f32.mrf.mxu0
      %v715 = vadd.f32 %v566, %v714
      %v716 = vpop.f32.mrf.mxu0
      %v717 = vadd.f32 %v568, %v716
      %718 = vmatmul.bf16.gmra.mxu0 %v645
      %v719 = vpop.f32.mrf.mxu0
      %v720 = vadd.f32 %v571, %v719
      %v721 = vpop.f32.mrf.mxu0
      %v722 = vadd.f32 %v573, %v721
      %723 = vmatmul.bf16.gmra.mxu0 %v648
      %v724 = vpop.f32.mrf.mxu0
      %v725 = vadd.f32 %v576, %v724
      %v726 = vpop.f32.mrf.mxu0
      %v727 = vadd.f32 %v578, %v726
      %728 = vmatmul.bf16.gmra.mxu0 %v651
      %v729 = vpop.f32.mrf.mxu0
      %v730 = vadd.f32 %v581, %v729
      %v731 = vpop.f32.mrf.mxu0
      %v732 = vadd.f32 %v583, %v731
      %733 = vmatmul.bf16.gmra.mxu0 %v654
      %v734 = vpop.f32.mrf.mxu0
      %v735 = vadd.f32 %v586, %v734
      %v736 = vpop.f32.mrf.mxu0
      %v737 = vadd.f32 %v588, %v736
      %738 = vmatmul.bf16.gmra.mxu0 %v657
      %v739 = vpop.f32.mrf.mxu0
      %v740 = vadd.f32 %v591, %v739
      %v741 = vpop.f32.mrf.mxu0
      %v742 = vadd.f32 %v593, %v741
      %743 = vmatmul.bf16.gmra.mxu0 %v660
      %v744 = vpop.f32.mrf.mxu0
      %v745 = vadd.f32 %v596, %v744
      %v746 = vpop.f32.mrf.mxu0
      %v747 = vadd.f32 %v598, %v746
      %748 = vmatmul.bf16.gmra.mxu0 %v663
      %v749 = vpop.f32.mrf.mxu0
      %v750 = vadd.f32 %v601, %v749
      %v751 = vpop.f32.mrf.mxu0
      %v752 = vadd.f32 %v603, %v751
      %753 = vdwg.mxu0
      %vm754 = vcmask 1045504
      %v755 = vrot.slane %v199, 2
      %v756 = vrot.slane %v200, 2
      %v757 = vsel %vm754, %v755, %v756
      %v758 = vrot.slane %v201, 2
      %v759 = vsel %vm754, %v756, %v758
      %v760 = vrot.slane %v202, 2
      %v761 = vrot.slane %v203, 2
      %v762 = vsel %vm754, %v760, %v761
      %v763 = vrot.slane %v204, 2
      %v764 = vsel %vm754, %v761, %v763
      %v765 = vrot.slane %v205, 2
      %v766 = vrot.slane %v206, 2
      %v767 = vsel %vm754, %v765, %v766
      %v768 = vrot.slane %v207, 2
      %v769 = vsel %vm754, %v766, %v768
      %v770 = vrot.slane %v208, 2
      %v771 = vrot.slane %v209, 2
      %v772 = vsel %vm754, %v770, %v771
      %v773 = vrot.slane %v210, 2
      %v774 = vsel %vm754, %v771, %v773
      %v775 = vrot.slane %v211, 2
      %v776 = vrot.slane %v212, 2
      %v777 = vsel %vm754, %v775, %v776
      %v778 = vrot.slane %v213, 2
      %v779 = vsel %vm754, %v776, %v778
      %v780 = vrot.slane %v214, 2
      %v781 = vrot.slane %v215, 2
      %v782 = vsel %vm754, %v780, %v781
      %v783 = vrot.slane %v216, 2
      %v784 = vsel %vm754, %v781, %v783
      %v785 = vrot.slane %v217, 2
      %v786 = vrot.slane %v218, 2
      %v787 = vsel %vm754, %v785, %v786
      %v788 = vrot.slane %v219, 2
      %v789 = vsel %vm754, %v786, %v788
      %v790 = vrot.slane %v220, 2
      %v791 = vrot.slane %v221, 2
      %v792 = vsel %vm754, %v790, %v791
      %v793 = vrot.slane %v222, 2
      %v794 = vsel %vm754, %v791, %v793
      %v795 = vrot.slane %v223, 2
      %v796 = vrot.slane %v224, 2
      %v797 = vsel %vm754, %v795, %v796
      %v798 = vrot.slane %v225, 2
      %v799 = vsel %vm754, %v796, %v798
      %v800 = vrot.slane %v226, 2
      %v801 = vrot.slane %v227, 2
      %v802 = vsel %vm754, %v800, %v801
      %v803 = vrot.slane %v228, 2
      %v804 = vsel %vm754, %v801, %v803
      %v805 = vrot.slane %v229, 2
      %v806 = vrot.slane %v230, 2
      %v807 = vsel %vm754, %v805, %v806
      %v808 = vrot.slane %v231, 2
      %v809 = vsel %vm754, %v806, %v808
      %v810 = vrot.slane %v232, 2
      %v811 = vrot.slane %v233, 2
      %v812 = vsel %vm754, %v810, %v811
      %v813 = vrot.slane %v234, 2
      %v814 = vsel %vm754, %v811, %v813
      %v815 = vrot.slane %v235, 2
      %v816 = vrot.slane %v236, 2
      %v817 = vsel %vm754, %v815, %v816
      %v818 = vrot.slane %v237, 2
      %v819 = vsel %vm754, %v816, %v818
      %v820 = vrot.slane %v238, 2
      %v821 = vrot.slane %v239, 2
      %v822 = vsel %vm754, %v820, %v821
      %v823 = vrot.slane %v240, 2
      %v824 = vsel %vm754, %v821, %v823
      %v825 = vrot.slane %v241, 2
      %v826 = vrot.slane %v242, 2
      %v827 = vsel %vm754, %v825, %v826
      %v828 = vrot.slane %v243, 2
      %v829 = vsel %vm754, %v826, %v828
      %v830 = vrot.slane %v244, 2
      %v831 = vrot.slane %v245, 2
      %v832 = vsel %vm754, %v830, %v831
      %v833 = vrot.slane %v246, 2
      %v834 = vsel %vm754, %v831, %v833
      %v867 = vpack.c.bf16 %v759, %v757
      %v868 = vpack.c.bf16 %v764, %v762
      %v869 = vpack.c.bf16 %v769, %v767
      %v870 = vpack.c.bf16 %v774, %v772
      %v871 = vpack.c.bf16 %v779, %v777
      %v872 = vpack.c.bf16 %v784, %v782
      %v873 = vpack.c.bf16 %v789, %v787
      %v874 = vpack.c.bf16 %v794, %v792
      %v875 = vpack.c.bf16 %v799, %v797
      %v876 = vpack.c.bf16 %v804, %v802
      %v877 = vpack.c.bf16 %v809, %v807
      %v878 = vpack.c.bf16 %v814, %v812
      %v879 = vpack.c.bf16 %v819, %v817
      %v880 = vpack.c.bf16 %v824, %v822
      %v881 = vpack.c.bf16 %v829, %v827
      %v882 = vpack.c.bf16 %v834, %v832
      %s883 = scalar_lea.vmem %s1, 32
      %v884 = vld [vmem:[%s883] sm:$0xf]
      %v885 = vld [vmem:[%s883 + $0x4] sm:$0xf]
      %v886 = vld [vmem:[%s883 + $0x8] sm:$0xf]
      %v887 = vld [vmem:[%s883 + $0xc] sm:$0xf]
      %v892 = vunpack.c.l.b16 %v884
      %v893 = vunpack.c.l.b16 %v885
      %v894 = vunpack.c.l.b16 %v886
      %v895 = vunpack.c.l.b16 %v887
      %v896 = vpack.c.b16 %v893, %v892
      %v897 = vpack.c.b16 %v895, %v894
      %v901 = vsel %vm467, %v867, 0
      %v904 = vsel %vm467, %v868, 0
      %v907 = vsel %vm467, %v869, 0
      %v910 = vsel %vm467, %v870, 0
      %v913 = vsel %vm467, %v871, 0
      %v916 = vsel %vm467, %v872, 0
      %v919 = vsel %vm467, %v873, 0
      %v922 = vsel %vm467, %v874, 0
      %v925 = vsel %vm467, %v875, 0
      %v928 = vsel %vm467, %v876, 0
      %v931 = vsel %vm467, %v877, 0
      %v934 = vsel %vm467, %v878, 0
      %v937 = vsel %vm467, %v879, 0
      %v940 = vsel %vm467, %v880, 0
      %v943 = vsel %vm467, %v881, 0
      %v946 = vsel %vm467, %v882, 0
      %948 = vmatpush.bf16.msra.mxu0 0
      %949 = vmatpush.bf16.msra.mxu0 0
      %950 = vmatpush.bf16.msra.mxu0 0
      %951 = vmatpush.bf16.msra.mxu0 0
      %952 = vmatpush.bf16.msra.mxu0 0
      %953 = vmatpush.bf16.msra.mxu0 0
      %954 = vmatpush.bf16.msra.mxu0 %v897
      %955 = vmatpush.bf16.msra.mxu0 %v896
      %956 = vmatmul.bf16.gmra.mxu0 %v901
      %v957 = vpop.f32.mrf.mxu0
      %v958 = vadd.f32 0.0, %v957
      %v959 = vpop.f32.mrf.mxu0
      %v960 = vadd.f32 0.0, %v959
      %961 = vmatmul.bf16.gmra.mxu0 %v904
      %v962 = vpop.f32.mrf.mxu0
      %v963 = vadd.f32 0.0, %v962
      %v964 = vpop.f32.mrf.mxu0
      %v965 = vadd.f32 0.0, %v964
      %966 = vmatmul.bf16.gmra.mxu0 %v907
      %v967 = vpop.f32.mrf.mxu0
      %v968 = vadd.f32 0.0, %v967
      %v969 = vpop.f32.mrf.mxu0
      %v970 = vadd.f32 0.0, %v969
      %971 = vmatmul.bf16.gmra.mxu0 %v910
      %v972 = vpop.f32.mrf.mxu0
      %v973 = vadd.f32 0.0, %v972
      %v974 = vpop.f32.mrf.mxu0
      %v975 = vadd.f32 0.0, %v974
      %976 = vmatmul.bf16.gmra.mxu0 %v913
      %v977 = vpop.f32.mrf.mxu0
      %v978 = vadd.f32 0.0, %v977
      %v979 = vpop.f32.mrf.mxu0
      %v980 = vadd.f32 0.0, %v979
      %981 = vmatmul.bf16.gmra.mxu0 %v916
      %v982 = vpop.f32.mrf.mxu0
      %v983 = vadd.f32 0.0, %v982
      %v984 = vpop.f32.mrf.mxu0
      %v985 = vadd.f32 0.0, %v984
      %986 = vmatmul.bf16.gmra.mxu0 %v919
      %v987 = vpop.f32.mrf.mxu0
      %v988 = vadd.f32 0.0, %v987
      %v989 = vpop.f32.mrf.mxu0
      %v990 = vadd.f32 0.0, %v989
      %991 = vmatmul.bf16.gmra.mxu0 %v922
      %v992 = vpop.f32.mrf.mxu0
      %v993 = vadd.f32 0.0, %v992
      %v994 = vpop.f32.mrf.mxu0
      %v995 = vadd.f32 0.0, %v994
      %996 = vmatmul.bf16.gmra.mxu0 %v925
      %v997 = vpop.f32.mrf.mxu0
      %v998 = vadd.f32 0.0, %v997
      %v999 = vpop.f32.mrf.mxu0
      %v1000 = vadd.f32 0.0, %v999
      %1001 = vmatmul.bf16.gmra.mxu0 %v928
      %v1002 = vpop.f32.mrf.mxu0
      %v1003 = vadd.f32 0.0, %v1002
      %v1004 = vpop.f32.mrf.mxu0
      %v1005 = vadd.f32 0.0, %v1004
      %1006 = vmatmul.bf16.gmra.mxu0 %v931
      %v1007 = vpop.f32.mrf.mxu0
      %v1008 = vadd.f32 0.0, %v1007
      %v1009 = vpop.f32.mrf.mxu0
      %v1010 = vadd.f32 0.0, %v1009
      %1011 = vmatmul.bf16.gmra.mxu0 %v934
      %v1012 = vpop.f32.mrf.mxu0
      %v1013 = vadd.f32 0.0, %v1012
      %v1014 = vpop.f32.mrf.mxu0
      %v1015 = vadd.f32 0.0, %v1014
      %1016 = vmatmul.bf16.gmra.mxu0 %v937
      %v1017 = vpop.f32.mrf.mxu0
      %v1018 = vadd.f32 0.0, %v1017
      %v1019 = vpop.f32.mrf.mxu0
      %v1020 = vadd.f32 0.0, %v1019
      %1021 = vmatmul.bf16.gmra.mxu0 %v940
      %v1022 = vpop.f32.mrf.mxu0
      %v1023 = vadd.f32 0.0, %v1022
      %v1024 = vpop.f32.mrf.mxu0
      %v1025 = vadd.f32 0.0, %v1024
      %1026 = vmatmul.bf16.gmra.mxu0 %v943
      %v1027 = vpop.f32.mrf.mxu0
      %v1028 = vadd.f32 0.0, %v1027
      %v1029 = vpop.f32.mrf.mxu0
      %v1030 = vadd.f32 0.0, %v1029
      %1031 = vmatmul.bf16.gmra.mxu0 %v946
      %v1032 = vpop.f32.mrf.mxu0
      %v1033 = vadd.f32 0.0, %v1032
      %v1034 = vpop.f32.mrf.mxu0
      %v1035 = vadd.f32 0.0, %v1034
      %1036 = vdwg.mxu0
      %v1037 = vadd.f32 %v675, %v958
      %v1038 = vadd.f32 %v677, %v960
      %v1039 = vadd.f32 %v680, %v963
      %v1040 = vadd.f32 %v682, %v965
      %v1041 = vadd.f32 %v685, %v968
      %v1042 = vadd.f32 %v687, %v970
      %v1043 = vadd.f32 %v690, %v973
      %v1044 = vadd.f32 %v692, %v975
      %v1045 = vadd.f32 %v695, %v978
      %v1046 = vadd.f32 %v697, %v980
      %v1047 = vadd.f32 %v700, %v983
      %v1048 = vadd.f32 %v702, %v985
      %v1049 = vadd.f32 %v705, %v988
      %v1050 = vadd.f32 %v707, %v990
      %v1051 = vadd.f32 %v710, %v993
      %v1052 = vadd.f32 %v712, %v995
      %v1053 = vadd.f32 %v715, %v998
      %v1054 = vadd.f32 %v717, %v1000
      %v1055 = vadd.f32 %v720, %v1003
      %v1056 = vadd.f32 %v722, %v1005
      %v1057 = vadd.f32 %v725, %v1008
      %v1058 = vadd.f32 %v727, %v1010
      %v1059 = vadd.f32 %v730, %v1013
      %v1060 = vadd.f32 %v732, %v1015
      %v1061 = vadd.f32 %v735, %v1018
      %v1062 = vadd.f32 %v737, %v1020
      %v1063 = vadd.f32 %v740, %v1023
      %v1064 = vadd.f32 %v742, %v1025
      %v1065 = vadd.f32 %v745, %v1028
      %v1066 = vadd.f32 %v747, %v1030
      %v1067 = vadd.f32 %v750, %v1033
      %v1068 = vadd.f32 %v752, %v1035
      %v1069 = vpack.c.bf16 %v248, %v247
      %s1070 = scalar_lea.vmem %s1, 48
      %v1071 = vld [vmem:[%s1070] sm:$0xf]
      %v1072 = vld [vmem:[%s1070 + $0x4] sm:$0xf]
      %v1073 = vld [vmem:[%s1070 + $0x8] sm:$0xf]
      %v1074 = vld [vmem:[%s1070 + $0xc] sm:$0xf]
      %v1079 = vunpack.c.l.b16 %v1071
      %v1080 = vunpack.c.l.b16 %v1072
      %v1081 = vunpack.c.l.b16 %v1073
      %v1082 = vunpack.c.l.b16 %v1074
      %v1083 = vpack.c.b16 %v1080, %v1079
      %v1084 = vpack.c.b16 %v1082, %v1081
      %v1088 = vsel %vm467, %v1069, 0
      %1090 = vmatpush.bf16.msra.mxu0 0
      %1091 = vmatpush.bf16.msra.mxu0 0
      %1092 = vmatpush.bf16.msra.mxu0 0
      %1093 = vmatpush.bf16.msra.mxu0 0
      %1094 = vmatpush.bf16.msra.mxu0 0
      %1095 = vmatpush.bf16.msra.mxu0 0
      %1096 = vmatpush.bf16.msra.mxu0 %v1084
      %1097 = vmatpush.bf16.msra.mxu0 %v1083
      %1098 = vmatmul.bf16.gmra.mxu0 %v621
      %v1099 = vpop.f32.mrf.mxu0
      %v1100 = vadd.f32 0.0, %v1099
      %v1101 = vpop.f32.mrf.mxu0
      %v1102 = vadd.f32 0.0, %v1101
      %1103 = vmatmul.bf16.gmra.mxu0 %v624
      %v1104 = vpop.f32.mrf.mxu0
      %v1105 = vadd.f32 0.0, %v1104
      %v1106 = vpop.f32.mrf.mxu0
      %v1107 = vadd.f32 0.0, %v1106
      %1108 = vmatmul.bf16.gmra.mxu0 %v627
      %v1109 = vpop.f32.mrf.mxu0
      %v1110 = vadd.f32 0.0, %v1109
      %v1111 = vpop.f32.mrf.mxu0
      %v1112 = vadd.f32 0.0, %v1111
      %1113 = vmatmul.bf16.gmra.mxu0 %v630
      %v1114 = vpop.f32.mrf.mxu0
      %v1115 = vadd.f32 0.0, %v1114
      %v1116 = vpop.f32.mrf.mxu0
      %v1117 = vadd.f32 0.0, %v1116
      %1118 = vmatmul.bf16.gmra.mxu0 %v633
      %v1119 = vpop.f32.mrf.mxu0
      %v1120 = vadd.f32 0.0, %v1119
      %v1121 = vpop.f32.mrf.mxu0
      %v1122 = vadd.f32 0.0, %v1121
      %1123 = vmatmul.bf16.gmra.mxu0 %v636
      %v1124 = vpop.f32.mrf.mxu0
      %v1125 = vadd.f32 0.0, %v1124
      %v1126 = vpop.f32.mrf.mxu0
      %v1127 = vadd.f32 0.0, %v1126
      %1128 = vmatmul.bf16.gmra.mxu0 %v639
      %v1129 = vpop.f32.mrf.mxu0
      %v1130 = vadd.f32 0.0, %v1129
      %v1131 = vpop.f32.mrf.mxu0
      %v1132 = vadd.f32 0.0, %v1131
      %1133 = vmatmul.bf16.gmra.mxu0 %v642
      %v1134 = vpop.f32.mrf.mxu0
      %v1135 = vadd.f32 0.0, %v1134
      %v1136 = vpop.f32.mrf.mxu0
      %v1137 = vadd.f32 0.0, %v1136
      %1138 = vmatmul.bf16.gmra.mxu0 %v645
      %v1139 = vpop.f32.mrf.mxu0
      %v1140 = vadd.f32 0.0, %v1139
      %v1141 = vpop.f32.mrf.mxu0
      %v1142 = vadd.f32 0.0, %v1141
      %1143 = vmatmul.bf16.gmra.mxu0 %v648
      %v1144 = vpop.f32.mrf.mxu0
      %v1145 = vadd.f32 0.0, %v1144
      %v1146 = vpop.f32.mrf.mxu0
      %v1147 = vadd.f32 0.0, %v1146
      %1148 = vmatmul.bf16.gmra.mxu0 %v651
      %v1149 = vpop.f32.mrf.mxu0
      %v1150 = vadd.f32 0.0, %v1149
      %v1151 = vpop.f32.mrf.mxu0
      %v1152 = vadd.f32 0.0, %v1151
      %1153 = vmatmul.bf16.gmra.mxu0 %v654
      %v1154 = vpop.f32.mrf.mxu0
      %v1155 = vadd.f32 0.0, %v1154
      %v1156 = vpop.f32.mrf.mxu0
      %v1157 = vadd.f32 0.0, %v1156
      %1158 = vmatmul.bf16.gmra.mxu0 %v657
      %v1159 = vpop.f32.mrf.mxu0
      %v1160 = vadd.f32 0.0, %v1159
      %v1161 = vpop.f32.mrf.mxu0
      %v1162 = vadd.f32 0.0, %v1161
      %1163 = vmatmul.bf16.gmra.mxu0 %v660
      %v1164 = vpop.f32.mrf.mxu0
      %v1165 = vadd.f32 0.0, %v1164
      %v1166 = vpop.f32.mrf.mxu0
      %v1167 = vadd.f32 0.0, %v1166
      %1168 = vmatmul.bf16.gmra.mxu0 %v663
      %v1169 = vpop.f32.mrf.mxu0
      %v1170 = vadd.f32 0.0, %v1169
      %v1171 = vpop.f32.mrf.mxu0
      %v1172 = vadd.f32 0.0, %v1171
      %1173 = vmatmul.bf16.gmra.mxu0 %v1088
      %v1174 = vpop.f32.mrf.mxu0
      %v1175 = vadd.f32 0.0, %v1174
      %v1176 = vpop.f32.mrf.mxu0
      %v1177 = vadd.f32 0.0, %v1176
      %1178 = vdwg.mxu0
      %v1179 = vadd.f32 %v1037, %v1100
      %v1180 = vadd.f32 %v1038, %v1102
      %v1181 = vadd.f32 %v1039, %v1105
      %v1182 = vadd.f32 %v1040, %v1107
      %v1183 = vadd.f32 %v1041, %v1110
      %v1184 = vadd.f32 %v1042, %v1112
      %v1185 = vadd.f32 %v1043, %v1115
      %v1186 = vadd.f32 %v1044, %v1117
      %v1187 = vadd.f32 %v1045, %v1120
      %v1188 = vadd.f32 %v1046, %v1122
      %v1189 = vadd.f32 %v1047, %v1125
      %v1190 = vadd.f32 %v1048, %v1127
      %v1191 = vadd.f32 %v1049, %v1130
      %v1192 = vadd.f32 %v1050, %v1132
      %v1193 = vadd.f32 %v1051, %v1135
      %v1194 = vadd.f32 %v1052, %v1137
      %v1195 = vadd.f32 %v1053, %v1140
      %v1196 = vadd.f32 %v1054, %v1142
      %v1197 = vadd.f32 %v1055, %v1145
      %v1198 = vadd.f32 %v1056, %v1147
      %v1199 = vadd.f32 %v1057, %v1150
      %v1200 = vadd.f32 %v1058, %v1152
      %v1201 = vadd.f32 %v1059, %v1155
      %v1202 = vadd.f32 %v1060, %v1157
      %v1203 = vadd.f32 %v1061, %v1160
      %v1204 = vadd.f32 %v1062, %v1162
      %v1205 = vadd.f32 %v1063, %v1165
      %v1206 = vadd.f32 %v1064, %v1167
      %v1207 = vadd.f32 %v1065, %v1170
      %v1208 = vadd.f32 %v1066, %v1172
      %v1209 = vadd.f32 %v1067, %v1175
      %v1210 = vadd.f32 %v1068, %v1177
      %v1214 = vrot.slane %v247, 1
      %v1215 = vrot.slane %v248, 1
      %v1216 = vsel %vm321, %v1214, %v1215
      %v1217 = vrot.slane %v249, 1
      %v1218 = vsel %vm321, %v1215, %v1217
      %v1221 = vpack.c.bf16 %v1218, %v1216
      %s1222 = scalar_lea.vmem %s1, 64
      %v1223 = vld [vmem:[%s1222] sm:$0xf]
      %v1224 = vld [vmem:[%s1222 + $0x4] sm:$0xf]
      %v1225 = vld [vmem:[%s1222 + $0x8] sm:$0xf]
      %v1226 = vld [vmem:[%s1222 + $0xc] sm:$0xf]
      %v1231 = vunpack.c.l.b16 %v1223
      %v1232 = vunpack.c.l.b16 %v1224
      %v1233 = vunpack.c.l.b16 %v1225
      %v1234 = vunpack.c.l.b16 %v1226
      %v1235 = vpack.c.b16 %v1232, %v1231
      %v1236 = vpack.c.b16 %v1234, %v1233
      %v1240 = vsel %vm467, %v1221, 0
      %1242 = vmatpush.bf16.msra.mxu0 0
      %1243 = vmatpush.bf16.msra.mxu0 0
      %1244 = vmatpush.bf16.msra.mxu0 0
      %1245 = vmatpush.bf16.msra.mxu0 0
      %1246 = vmatpush.bf16.msra.mxu0 0
      %1247 = vmatpush.bf16.msra.mxu0 0
      %1248 = vmatpush.bf16.msra.mxu0 %v1236
      %1249 = vmatpush.bf16.msra.mxu0 %v1235
      %1250 = vmatmul.bf16.gmra.mxu0 %v472
      %v1251 = vpop.f32.mrf.mxu0
      %v1252 = vadd.f32 0.0, %v1251
      %v1253 = vpop.f32.mrf.mxu0
      %v1254 = vadd.f32 0.0, %v1253
      %1255 = vmatmul.bf16.gmra.mxu0 %v475
      %v1256 = vpop.f32.mrf.mxu0
      %v1257 = vadd.f32 0.0, %v1256
      %v1258 = vpop.f32.mrf.mxu0
      %v1259 = vadd.f32 0.0, %v1258
      %1260 = vmatmul.bf16.gmra.mxu0 %v478
      %v1261 = vpop.f32.mrf.mxu0
      %v1262 = vadd.f32 0.0, %v1261
      %v1263 = vpop.f32.mrf.mxu0
      %v1264 = vadd.f32 0.0, %v1263
      %1265 = vmatmul.bf16.gmra.mxu0 %v481
      %v1266 = vpop.f32.mrf.mxu0
      %v1267 = vadd.f32 0.0, %v1266
      %v1268 = vpop.f32.mrf.mxu0
      %v1269 = vadd.f32 0.0, %v1268
      %1270 = vmatmul.bf16.gmra.mxu0 %v484
      %v1271 = vpop.f32.mrf.mxu0
      %v1272 = vadd.f32 0.0, %v1271
      %v1273 = vpop.f32.mrf.mxu0
      %v1274 = vadd.f32 0.0, %v1273
      %1275 = vmatmul.bf16.gmra.mxu0 %v487
      %v1276 = vpop.f32.mrf.mxu0
      %v1277 = vadd.f32 0.0, %v1276
      %v1278 = vpop.f32.mrf.mxu0
      %v1279 = vadd.f32 0.0, %v1278
      %1280 = vmatmul.bf16.gmra.mxu0 %v490
      %v1281 = vpop.f32.mrf.mxu0
      %v1282 = vadd.f32 0.0, %v1281
      %v1283 = vpop.f32.mrf.mxu0
      %v1284 = vadd.f32 0.0, %v1283
      %1285 = vmatmul.bf16.gmra.mxu0 %v493
      %v1286 = vpop.f32.mrf.mxu0
      %v1287 = vadd.f32 0.0, %v1286
      %v1288 = vpop.f32.mrf.mxu0
      %v1289 = vadd.f32 0.0, %v1288
      %1290 = vmatmul.bf16.gmra.mxu0 %v496
      %v1291 = vpop.f32.mrf.mxu0
      %v1292 = vadd.f32 0.0, %v1291
      %v1293 = vpop.f32.mrf.mxu0
      %v1294 = vadd.f32 0.0, %v1293
      %1295 = vmatmul.bf16.gmra.mxu0 %v499
      %v1296 = vpop.f32.mrf.mxu0
      %v1297 = vadd.f32 0.0, %v1296
      %v1298 = vpop.f32.mrf.mxu0
      %v1299 = vadd.f32 0.0, %v1298
      %1300 = vmatmul.bf16.gmra.mxu0 %v502
      %v1301 = vpop.f32.mrf.mxu0
      %v1302 = vadd.f32 0.0, %v1301
      %v1303 = vpop.f32.mrf.mxu0
      %v1304 = vadd.f32 0.0, %v1303
      %1305 = vmatmul.bf16.gmra.mxu0 %v505
      %v1306 = vpop.f32.mrf.mxu0
      %v1307 = vadd.f32 0.0, %v1306
      %v1308 = vpop.f32.mrf.mxu0
      %v1309 = vadd.f32 0.0, %v1308
      %1310 = vmatmul.bf16.gmra.mxu0 %v508
      %v1311 = vpop.f32.mrf.mxu0
      %v1312 = vadd.f32 0.0, %v1311
      %v1313 = vpop.f32.mrf.mxu0
      %v1314 = vadd.f32 0.0, %v1313
      %1315 = vmatmul.bf16.gmra.mxu0 %v511
      %v1316 = vpop.f32.mrf.mxu0
      %v1317 = vadd.f32 0.0, %v1316
      %v1318 = vpop.f32.mrf.mxu0
      %v1319 = vadd.f32 0.0, %v1318
      %1320 = vmatmul.bf16.gmra.mxu0 %v514
      %v1321 = vpop.f32.mrf.mxu0
      %v1322 = vadd.f32 0.0, %v1321
      %v1323 = vpop.f32.mrf.mxu0
      %v1324 = vadd.f32 0.0, %v1323
      %1325 = vmatmul.bf16.gmra.mxu0 %v1240
      %v1326 = vpop.f32.mrf.mxu0
      %v1327 = vadd.f32 0.0, %v1326
      %v1328 = vpop.f32.mrf.mxu0
      %v1329 = vadd.f32 0.0, %v1328
      %1330 = vdwg.mxu0
      %v1331 = vadd.f32 %v1179, %v1252
      %v1332 = vadd.f32 %v1180, %v1254
      %v1333 = vadd.f32 %v1181, %v1257
      %v1334 = vadd.f32 %v1182, %v1259
      %v1335 = vadd.f32 %v1183, %v1262
      %v1336 = vadd.f32 %v1184, %v1264
      %v1337 = vadd.f32 %v1185, %v1267
      %v1338 = vadd.f32 %v1186, %v1269
      %v1339 = vadd.f32 %v1187, %v1272
      %v1340 = vadd.f32 %v1188, %v1274
      %v1341 = vadd.f32 %v1189, %v1277
      %v1342 = vadd.f32 %v1190, %v1279
      %v1343 = vadd.f32 %v1191, %v1282
      %v1344 = vadd.f32 %v1192, %v1284
      %v1345 = vadd.f32 %v1193, %v1287
      %v1346 = vadd.f32 %v1194, %v1289
      %v1347 = vadd.f32 %v1195, %v1292
      %v1348 = vadd.f32 %v1196, %v1294
      %v1349 = vadd.f32 %v1197, %v1297
      %v1350 = vadd.f32 %v1198, %v1299
      %v1351 = vadd.f32 %v1199, %v1302
      %v1352 = vadd.f32 %v1200, %v1304
      %v1353 = vadd.f32 %v1201, %v1307
      %v1354 = vadd.f32 %v1202, %v1309
      %v1355 = vadd.f32 %v1203, %v1312
      %v1356 = vadd.f32 %v1204, %v1314
      %v1357 = vadd.f32 %v1205, %v1317
      %v1358 = vadd.f32 %v1206, %v1319
      %v1359 = vadd.f32 %v1207, %v1322
      %v1360 = vadd.f32 %v1208, %v1324
      %v1361 = vadd.f32 %v1209, %v1327
      %v1362 = vadd.f32 %v1210, %v1329
      %v1363 = vrot.slane %v247, 2
      %v1364 = vrot.slane %v248, 2
      %v1365 = vsel %vm754, %v1363, %v1364
      %v1366 = vrot.slane %v249, 2
      %v1367 = vsel %vm754, %v1364, %v1366
      %v1370 = vpack.c.bf16 %v1367, %v1365
      %s1371 = scalar_lea.vmem %s1, 80
      %v1372 = vld [vmem:[%s1371] sm:$0xf]
      %v1373 = vld [vmem:[%s1371 + $0x4] sm:$0xf]
      %v1374 = vld [vmem:[%s1371 + $0x8] sm:$0xf]
      %v1375 = vld [vmem:[%s1371 + $0xc] sm:$0xf]
      %v1380 = vunpack.c.l.b16 %v1372
      %v1381 = vunpack.c.l.b16 %v1373
      %v1382 = vunpack.c.l.b16 %v1374
      %v1383 = vunpack.c.l.b16 %v1375
      %v1384 = vpack.c.b16 %v1381, %v1380
      %v1385 = vpack.c.b16 %v1383, %v1382
      %v1389 = vsel %vm467, %v1370, 0
      %1391 = vmatpush.bf16.msra.mxu0 0
      %1392 = vmatpush.bf16.msra.mxu0 0
      %1393 = vmatpush.bf16.msra.mxu0 0
      %1394 = vmatpush.bf16.msra.mxu0 0
      %1395 = vmatpush.bf16.msra.mxu0 0
      %1396 = vmatpush.bf16.msra.mxu0 0
      %1397 = vmatpush.bf16.msra.mxu0 %v1385
      %1398 = vmatpush.bf16.msra.mxu0 %v1384
      %1399 = vmatmul.bf16.gmra.mxu0 %v904
      %v1400 = vpop.f32.mrf.mxu0
      %v1401 = vadd.f32 0.0, %v1400
      %v1402 = vpop.f32.mrf.mxu0
      %v1403 = vadd.f32 0.0, %v1402
      %1404 = vmatmul.bf16.gmra.mxu0 %v907
      %v1405 = vpop.f32.mrf.mxu0
      %v1406 = vadd.f32 0.0, %v1405
      %v1407 = vpop.f32.mrf.mxu0
      %v1408 = vadd.f32 0.0, %v1407
      %1409 = vmatmul.bf16.gmra.mxu0 %v910
      %v1410 = vpop.f32.mrf.mxu0
      %v1411 = vadd.f32 0.0, %v1410
      %v1412 = vpop.f32.mrf.mxu0
      %v1413 = vadd.f32 0.0, %v1412
      %1414 = vmatmul.bf16.gmra.mxu0 %v913
      %v1415 = vpop.f32.mrf.mxu0
      %v1416 = vadd.f32 0.0, %v1415
      %v1417 = vpop.f32.mrf.mxu0
      %v1418 = vadd.f32 0.0, %v1417
      %1419 = vmatmul.bf16.gmra.mxu0 %v916
      %v1420 = vpop.f32.mrf.mxu0
      %v1421 = vadd.f32 0.0, %v1420
      %v1422 = vpop.f32.mrf.mxu0
      %v1423 = vadd.f32 0.0, %v1422
      %1424 = vmatmul.bf16.gmra.mxu0 %v919
      %v1425 = vpop.f32.mrf.mxu0
      %v1426 = vadd.f32 0.0, %v1425
      %v1427 = vpop.f32.mrf.mxu0
      %v1428 = vadd.f32 0.0, %v1427
      %1429 = vmatmul.bf16.gmra.mxu0 %v922
      %v1430 = vpop.f32.mrf.mxu0
      %v1431 = vadd.f32 0.0, %v1430
      %v1432 = vpop.f32.mrf.mxu0
      %v1433 = vadd.f32 0.0, %v1432
      %1434 = vmatmul.bf16.gmra.mxu0 %v925
      %v1435 = vpop.f32.mrf.mxu0
      %v1436 = vadd.f32 0.0, %v1435
      %v1437 = vpop.f32.mrf.mxu0
      %v1438 = vadd.f32 0.0, %v1437
      %1439 = vmatmul.bf16.gmra.mxu0 %v928
      %v1440 = vpop.f32.mrf.mxu0
      %v1441 = vadd.f32 0.0, %v1440
      %v1442 = vpop.f32.mrf.mxu0
      %v1443 = vadd.f32 0.0, %v1442
      %1444 = vmatmul.bf16.gmra.mxu0 %v931
      %v1445 = vpop.f32.mrf.mxu0
      %v1446 = vadd.f32 0.0, %v1445
      %v1447 = vpop.f32.mrf.mxu0
      %v1448 = vadd.f32 0.0, %v1447
      %1449 = vmatmul.bf16.gmra.mxu0 %v934
      %v1450 = vpop.f32.mrf.mxu0
      %v1451 = vadd.f32 0.0, %v1450
      %v1452 = vpop.f32.mrf.mxu0
      %v1453 = vadd.f32 0.0, %v1452
      %1454 = vmatmul.bf16.gmra.mxu0 %v937
      %v1455 = vpop.f32.mrf.mxu0
      %v1456 = vadd.f32 0.0, %v1455
      %v1457 = vpop.f32.mrf.mxu0
      %v1458 = vadd.f32 0.0, %v1457
      %1459 = vmatmul.bf16.gmra.mxu0 %v940
      %v1460 = vpop.f32.mrf.mxu0
      %v1461 = vadd.f32 0.0, %v1460
      %v1462 = vpop.f32.mrf.mxu0
      %v1463 = vadd.f32 0.0, %v1462
      %1464 = vmatmul.bf16.gmra.mxu0 %v943
      %v1465 = vpop.f32.mrf.mxu0
      %v1466 = vadd.f32 0.0, %v1465
      %v1467 = vpop.f32.mrf.mxu0
      %v1468 = vadd.f32 0.0, %v1467
      %1469 = vmatmul.bf16.gmra.mxu0 %v946
      %v1470 = vpop.f32.mrf.mxu0
      %v1471 = vadd.f32 0.0, %v1470
      %v1472 = vpop.f32.mrf.mxu0
      %v1473 = vadd.f32 0.0, %v1472
      %1474 = vmatmul.bf16.gmra.mxu0 %v1389
      %v1475 = vpop.f32.mrf.mxu0
      %v1476 = vadd.f32 0.0, %v1475
      %v1477 = vpop.f32.mrf.mxu0
      %v1478 = vadd.f32 0.0, %v1477
      %1479 = vdwg.mxu0
      %v1480 = vadd.f32 %v1331, %v1401
      %v1481 = vadd.f32 %v1332, %v1403
      %v1482 = vadd.f32 %v1333, %v1406
      %v1483 = vadd.f32 %v1334, %v1408
      %v1484 = vadd.f32 %v1335, %v1411
      %v1485 = vadd.f32 %v1336, %v1413
      %v1486 = vadd.f32 %v1337, %v1416
      %v1487 = vadd.f32 %v1338, %v1418
      %v1488 = vadd.f32 %v1339, %v1421
      %v1489 = vadd.f32 %v1340, %v1423
      %v1490 = vadd.f32 %v1341, %v1426
      %v1491 = vadd.f32 %v1342, %v1428
      %v1492 = vadd.f32 %v1343, %v1431
      %v1493 = vadd.f32 %v1344, %v1433
      %v1494 = vadd.f32 %v1345, %v1436
      %v1495 = vadd.f32 %v1346, %v1438
      %v1496 = vadd.f32 %v1347, %v1441
      %v1497 = vadd.f32 %v1348, %v1443
      %v1498 = vadd.f32 %v1349, %v1446
      %v1499 = vadd.f32 %v1350, %v1448
      %v1500 = vadd.f32 %v1351, %v1451
      %v1501 = vadd.f32 %v1352, %v1453
      %v1502 = vadd.f32 %v1353, %v1456
      %v1503 = vadd.f32 %v1354, %v1458
      %v1504 = vadd.f32 %v1355, %v1461
      %v1505 = vadd.f32 %v1356, %v1463
      %v1506 = vadd.f32 %v1357, %v1466
      %v1507 = vadd.f32 %v1358, %v1468
      %v1508 = vadd.f32 %v1359, %v1471
      %v1509 = vadd.f32 %v1360, %v1473
      %v1510 = vadd.f32 %v1361, %v1476
      %v1511 = vadd.f32 %v1362, %v1478
      %v1512 = vpack.c.bf16 %v251, %v250
      %s1513 = scalar_lea.vmem %s1, 96
      %v1514 = vld [vmem:[%s1513] sm:$0xf]
      %v1515 = vld [vmem:[%s1513 + $0x4] sm:$0xf]
      %v1516 = vld [vmem:[%s1513 + $0x8] sm:$0xf]
      %v1517 = vld [vmem:[%s1513 + $0xc] sm:$0xf]
      %v1522 = vunpack.c.l.b16 %v1514
      %v1523 = vunpack.c.l.b16 %v1515
      %v1524 = vunpack.c.l.b16 %v1516
      %v1525 = vunpack.c.l.b16 %v1517
      %v1526 = vpack.c.b16 %v1523, %v1522
      %v1527 = vpack.c.b16 %v1525, %v1524
      %v1531 = vsel %vm467, %v1512, 0
      %1533 = vmatpush.bf16.msra.mxu0 0
      %1534 = vmatpush.bf16.msra.mxu0 0
      %1535 = vmatpush.bf16.msra.mxu0 0
      %1536 = vmatpush.bf16.msra.mxu0 0
      %1537 = vmatpush.bf16.msra.mxu0 0
      %1538 = vmatpush.bf16.msra.mxu0 0
      %1539 = vmatpush.bf16.msra.mxu0 %v1527
      %1540 = vmatpush.bf16.msra.mxu0 %v1526
      %1541 = vmatmul.bf16.gmra.mxu0 %v624
      %v1542 = vpop.f32.mrf.mxu0
      %v1543 = vadd.f32 0.0, %v1542
      %v1544 = vpop.f32.mrf.mxu0
      %v1545 = vadd.f32 0.0, %v1544
      %1546 = vmatmul.bf16.gmra.mxu0 %v627
      %v1547 = vpop.f32.mrf.mxu0
      %v1548 = vadd.f32 0.0, %v1547
      %v1549 = vpop.f32.mrf.mxu0
      %v1550 = vadd.f32 0.0, %v1549
      %1551 = vmatmul.bf16.gmra.mxu0 %v630
      %v1552 = vpop.f32.mrf.mxu0
      %v1553 = vadd.f32 0.0, %v1552
      %v1554 = vpop.f32.mrf.mxu0
      %v1555 = vadd.f32 0.0, %v1554
      %1556 = vmatmul.bf16.gmra.mxu0 %v633
      %v1557 = vpop.f32.mrf.mxu0
      %v1558 = vadd.f32 0.0, %v1557
      %v1559 = vpop.f32.mrf.mxu0
      %v1560 = vadd.f32 0.0, %v1559
      %1561 = vmatmul.bf16.gmra.mxu0 %v636
      %v1562 = vpop.f32.mrf.mxu0
      %v1563 = vadd.f32 0.0, %v1562
      %v1564 = vpop.f32.mrf.mxu0
      %v1565 = vadd.f32 0.0, %v1564
      %1566 = vmatmul.bf16.gmra.mxu0 %v639
      %v1567 = vpop.f32.mrf.mxu0
      %v1568 = vadd.f32 0.0, %v1567
      %v1569 = vpop.f32.mrf.mxu0
      %v1570 = vadd.f32 0.0, %v1569
      %1571 = vmatmul.bf16.gmra.mxu0 %v642
      %v1572 = vpop.f32.mrf.mxu0
      %v1573 = vadd.f32 0.0, %v1572
      %v1574 = vpop.f32.mrf.mxu0
      %v1575 = vadd.f32 0.0, %v1574
      %1576 = vmatmul.bf16.gmra.mxu0 %v645
      %v1577 = vpop.f32.mrf.mxu0
      %v1578 = vadd.f32 0.0, %v1577
      %v1579 = vpop.f32.mrf.mxu0
      %v1580 = vadd.f32 0.0, %v1579
      %1581 = vmatmul.bf16.gmra.mxu0 %v648
      %v1582 = vpop.f32.mrf.mxu0
      %v1583 = vadd.f32 0.0, %v1582
      %v1584 = vpop.f32.mrf.mxu0
      %v1585 = vadd.f32 0.0, %v1584
      %1586 = vmatmul.bf16.gmra.mxu0 %v651
      %v1587 = vpop.f32.mrf.mxu0
      %v1588 = vadd.f32 0.0, %v1587
      %v1589 = vpop.f32.mrf.mxu0
      %v1590 = vadd.f32 0.0, %v1589
      %1591 = vmatmul.bf16.gmra.mxu0 %v654
      %v1592 = vpop.f32.mrf.mxu0
      %v1593 = vadd.f32 0.0, %v1592
      %v1594 = vpop.f32.mrf.mxu0
      %v1595 = vadd.f32 0.0, %v1594
      %1596 = vmatmul.bf16.gmra.mxu0 %v657
      %v1597 = vpop.f32.mrf.mxu0
      %v1598 = vadd.f32 0.0, %v1597
      %v1599 = vpop.f32.mrf.mxu0
      %v1600 = vadd.f32 0.0, %v1599
      %1601 = vmatmul.bf16.gmra.mxu0 %v660
      %v1602 = vpop.f32.mrf.mxu0
      %v1603 = vadd.f32 0.0, %v1602
      %v1604 = vpop.f32.mrf.mxu0
      %v1605 = vadd.f32 0.0, %v1604
      %1606 = vmatmul.bf16.gmra.mxu0 %v663
      %v1607 = vpop.f32.mrf.mxu0
      %v1608 = vadd.f32 0.0, %v1607
      %v1609 = vpop.f32.mrf.mxu0
      %v1610 = vadd.f32 0.0, %v1609
      %1611 = vmatmul.bf16.gmra.mxu0 %v1088
      %v1612 = vpop.f32.mrf.mxu0
      %v1613 = vadd.f32 0.0, %v1612
      %v1614 = vpop.f32.mrf.mxu0
      %v1615 = vadd.f32 0.0, %v1614
      %1616 = vmatmul.bf16.gmra.mxu0 %v1531
      %v1617 = vpop.f32.mrf.mxu0
      %v1618 = vadd.f32 0.0, %v1617
      %v1619 = vpop.f32.mrf.mxu0
      %v1620 = vadd.f32 0.0, %v1619
      %1621 = vdwg.mxu0
      %v1622 = vadd.f32 %v1480, %v1543
      %v1623 = vadd.f32 %v1481, %v1545
      %v1624 = vadd.f32 %v1482, %v1548
      %v1625 = vadd.f32 %v1483, %v1550
      %v1626 = vadd.f32 %v1484, %v1553
      %v1627 = vadd.f32 %v1485, %v1555
      %v1628 = vadd.f32 %v1486, %v1558
      %v1629 = vadd.f32 %v1487, %v1560
      %v1630 = vadd.f32 %v1488, %v1563
      %v1631 = vadd.f32 %v1489, %v1565
      %v1632 = vadd.f32 %v1490, %v1568
      %v1633 = vadd.f32 %v1491, %v1570
      %v1634 = vadd.f32 %v1492, %v1573
      %v1635 = vadd.f32 %v1493, %v1575
      %v1636 = vadd.f32 %v1494, %v1578
      %v1637 = vadd.f32 %v1495, %v1580
      %v1638 = vadd.f32 %v1496, %v1583
      %v1639 = vadd.f32 %v1497, %v1585
      %v1640 = vadd.f32 %v1498, %v1588
      %v1641 = vadd.f32 %v1499, %v1590
      %v1642 = vadd.f32 %v1500, %v1593
      %v1643 = vadd.f32 %v1501, %v1595
      %v1644 = vadd.f32 %v1502, %v1598
      %v1645 = vadd.f32 %v1503, %v1600
      %v1646 = vadd.f32 %v1504, %v1603
      %v1647 = vadd.f32 %v1505, %v1605
      %v1648 = vadd.f32 %v1506, %v1608
      %v1649 = vadd.f32 %v1507, %v1610
      %v1650 = vadd.f32 %v1508, %v1613
      %v1651 = vadd.f32 %v1509, %v1615
      %v1652 = vadd.f32 %v1510, %v1618
      %v1653 = vadd.f32 %v1511, %v1620
      %v1657 = vrot.slane %v250, 1
      %v1658 = vrot.slane %v251, 1
      %v1659 = vsel %vm321, %v1657, %v1658
      %v1660 = vrot.slane %v252, 1
      %v1661 = vsel %vm321, %v1658, %v1660
      %v1664 = vpack.c.bf16 %v1661, %v1659
      %s1665 = scalar_lea.vmem %s1, 112
      %v1666 = vld [vmem:[%s1665] sm:$0xf]
      %v1667 = vld [vmem:[%s1665 + $0x4] sm:$0xf]
      %v1668 = vld [vmem:[%s1665 + $0x8] sm:$0xf]
      %v1669 = vld [vmem:[%s1665 + $0xc] sm:$0xf]
      %v1674 = vunpack.c.l.b16 %v1666
      %v1675 = vunpack.c.l.b16 %v1667
      %v1676 = vunpack.c.l.b16 %v1668
      %v1677 = vunpack.c.l.b16 %v1669
      %v1678 = vpack.c.b16 %v1675, %v1674
      %v1679 = vpack.c.b16 %v1677, %v1676
      %v1683 = vsel %vm467, %v1664, 0
      %1685 = vmatpush.bf16.msra.mxu0 0
      %1686 = vmatpush.bf16.msra.mxu0 0
      %1687 = vmatpush.bf16.msra.mxu0 0
      %1688 = vmatpush.bf16.msra.mxu0 0
      %1689 = vmatpush.bf16.msra.mxu0 0
      %1690 = vmatpush.bf16.msra.mxu0 0
      %1691 = vmatpush.bf16.msra.mxu0 %v1679
      %1692 = vmatpush.bf16.msra.mxu0 %v1678
      %1693 = vmatmul.bf16.gmra.mxu0 %v475
      %v1694 = vpop.f32.mrf.mxu0
      %v1695 = vadd.f32 0.0, %v1694
      %v1696 = vpop.f32.mrf.mxu0
      %v1697 = vadd.f32 0.0, %v1696
      %1698 = vmatmul.bf16.gmra.mxu0 %v478
      %v1699 = vpop.f32.mrf.mxu0
      %v1700 = vadd.f32 0.0, %v1699
      %v1701 = vpop.f32.mrf.mxu0
      %v1702 = vadd.f32 0.0, %v1701
      %1703 = vmatmul.bf16.gmra.mxu0 %v481
      %v1704 = vpop.f32.mrf.mxu0
      %v1705 = vadd.f32 0.0, %v1704
      %v1706 = vpop.f32.mrf.mxu0
      %v1707 = vadd.f32 0.0, %v1706
      %1708 = vmatmul.bf16.gmra.mxu0 %v484
      %v1709 = vpop.f32.mrf.mxu0
      %v1710 = vadd.f32 0.0, %v1709
      %v1711 = vpop.f32.mrf.mxu0
      %v1712 = vadd.f32 0.0, %v1711
      %1713 = vmatmul.bf16.gmra.mxu0 %v487
      %v1714 = vpop.f32.mrf.mxu0
      %v1715 = vadd.f32 0.0, %v1714
      %v1716 = vpop.f32.mrf.mxu0
      %v1717 = vadd.f32 0.0, %v1716
      %1718 = vmatmul.bf16.gmra.mxu0 %v490
      %v1719 = vpop.f32.mrf.mxu0
      %v1720 = vadd.f32 0.0, %v1719
      %v1721 = vpop.f32.mrf.mxu0
      %v1722 = vadd.f32 0.0, %v1721
      %1723 = vmatmul.bf16.gmra.mxu0 %v493
      %v1724 = vpop.f32.mrf.mxu0
      %v1725 = vadd.f32 0.0, %v1724
      %v1726 = vpop.f32.mrf.mxu0
      %v1727 = vadd.f32 0.0, %v1726
      %1728 = vmatmul.bf16.gmra.mxu0 %v496
      %v1729 = vpop.f32.mrf.mxu0
      %v1730 = vadd.f32 0.0, %v1729
      %v1731 = vpop.f32.mrf.mxu0
      %v1732 = vadd.f32 0.0, %v1731
      %1733 = vmatmul.bf16.gmra.mxu0 %v499
      %v1734 = vpop.f32.mrf.mxu0
      %v1735 = vadd.f32 0.0, %v1734
      %v1736 = vpop.f32.mrf.mxu0
      %v1737 = vadd.f32 0.0, %v1736
      %1738 = vmatmul.bf16.gmra.mxu0 %v502
      %v1739 = vpop.f32.mrf.mxu0
      %v1740 = vadd.f32 0.0, %v1739
      %v1741 = vpop.f32.mrf.mxu0
      %v1742 = vadd.f32 0.0, %v1741
      %1743 = vmatmul.bf16.gmra.mxu0 %v505
      %v1744 = vpop.f32.mrf.mxu0
      %v1745 = vadd.f32 0.0, %v1744
      %v1746 = vpop.f32.mrf.mxu0
      %v1747 = vadd.f32 0.0, %v1746
      %1748 = vmatmul.bf16.gmra.mxu0 %v508
      %v1749 = vpop.f32.mrf.mxu0
      %v1750 = vadd.f32 0.0, %v1749
      %v1751 = vpop.f32.mrf.mxu0
      %v1752 = vadd.f32 0.0, %v1751
      %1753 = vmatmul.bf16.gmra.mxu0 %v511
      %v1754 = vpop.f32.mrf.mxu0
      %v1755 = vadd.f32 0.0, %v1754
      %v1756 = vpop.f32.mrf.mxu0
      %v1757 = vadd.f32 0.0, %v1756
      %1758 = vmatmul.bf16.gmra.mxu0 %v514
      %v1759 = vpop.f32.mrf.mxu0
      %v1760 = vadd.f32 0.0, %v1759
      %v1761 = vpop.f32.mrf.mxu0
      %v1762 = vadd.f32 0.0, %v1761
      %1763 = vmatmul.bf16.gmra.mxu0 %v1240
      %v1764 = vpop.f32.mrf.mxu0
      %v1765 = vadd.f32 0.0, %v1764
      %v1766 = vpop.f32.mrf.mxu0
      %v1767 = vadd.f32 0.0, %v1766
      %1768 = vmatmul.bf16.gmra.mxu0 %v1683
      %v1769 = vpop.f32.mrf.mxu0
      %v1770 = vadd.f32 0.0, %v1769
      %v1771 = vpop.f32.mrf.mxu0
      %v1772 = vadd.f32 0.0, %v1771
      %1773 = vdwg.mxu0
      %v1774 = vadd.f32 %v1622, %v1695
      %v1775 = vadd.f32 %v1623, %v1697
      %v1776 = vadd.f32 %v1624, %v1700
      %v1777 = vadd.f32 %v1625, %v1702
      %v1778 = vadd.f32 %v1626, %v1705
      %v1779 = vadd.f32 %v1627, %v1707
      %v1780 = vadd.f32 %v1628, %v1710
      %v1781 = vadd.f32 %v1629, %v1712
      %v1782 = vadd.f32 %v1630, %v1715
      %v1783 = vadd.f32 %v1631, %v1717
      %v1784 = vadd.f32 %v1632, %v1720
      %v1785 = vadd.f32 %v1633, %v1722
      %v1786 = vadd.f32 %v1634, %v1725
      %v1787 = vadd.f32 %v1635, %v1727
      %v1788 = vadd.f32 %v1636, %v1730
      %v1789 = vadd.f32 %v1637, %v1732
      %v1790 = vadd.f32 %v1638, %v1735
      %v1791 = vadd.f32 %v1639, %v1737
      %v1792 = vadd.f32 %v1640, %v1740
      %v1793 = vadd.f32 %v1641, %v1742
      %v1794 = vadd.f32 %v1642, %v1745
      %v1795 = vadd.f32 %v1643, %v1747
      %v1796 = vadd.f32 %v1644, %v1750
      %v1797 = vadd.f32 %v1645, %v1752
      %v1798 = vadd.f32 %v1646, %v1755
      %v1799 = vadd.f32 %v1647, %v1757
      %v1800 = vadd.f32 %v1648, %v1760
      %v1801 = vadd.f32 %v1649, %v1762
      %v1802 = vadd.f32 %v1650, %v1765
      %v1803 = vadd.f32 %v1651, %v1767
      %v1804 = vadd.f32 %v1652, %v1770
      %v1805 = vadd.f32 %v1653, %v1772
      %v1806 = vrot.slane %v250, 2
      %v1807 = vrot.slane %v251, 2
      %v1808 = vsel %vm754, %v1806, %v1807
      %v1809 = vrot.slane %v252, 2
      %v1810 = vsel %vm754, %v1807, %v1809
      %v1813 = vpack.c.bf16 %v1810, %v1808
      %s1814 = scalar_lea.vmem %s1, 128
      %v1815 = vld [vmem:[%s1814] sm:$0xf]
      %v1816 = vld [vmem:[%s1814 + $0x4] sm:$0xf]
      %v1817 = vld [vmem:[%s1814 + $0x8] sm:$0xf]
      %v1818 = vld [vmem:[%s1814 + $0xc] sm:$0xf]
      %v1823 = vunpack.c.l.b16 %v1815
      %v1824 = vunpack.c.l.b16 %v1816
      %v1825 = vunpack.c.l.b16 %v1817
      %v1826 = vunpack.c.l.b16 %v1818
      %v1827 = vpack.c.b16 %v1824, %v1823
      %v1828 = vpack.c.b16 %v1826, %v1825
      %v1832 = vsel %vm467, %v1813, 0
      %1834 = vmatpush.bf16.msra.mxu0 0
      %1835 = vmatpush.bf16.msra.mxu0 0
      %1836 = vmatpush.bf16.msra.mxu0 0
      %1837 = vmatpush.bf16.msra.mxu0 0
      %1838 = vmatpush.bf16.msra.mxu0 0
      %1839 = vmatpush.bf16.msra.mxu0 0
      %1840 = vmatpush.bf16.msra.mxu0 %v1828
      %1841 = vmatpush.bf16.msra.mxu0 %v1827
      %1842 = vmatmul.bf16.gmra.mxu0 %v907
      %v1843 = vpop.f32.mrf.mxu0
      %v1844 = vadd.f32 0.0, %v1843
      %v1845 = vpop.f32.mrf.mxu0
      %v1846 = vadd.f32 0.0, %v1845
      %1847 = vmatmul.bf16.gmra.mxu0 %v910
      %v1848 = vpop.f32.mrf.mxu0
      %v1849 = vadd.f32 0.0, %v1848
      %v1850 = vpop.f32.mrf.mxu0
      %v1851 = vadd.f32 0.0, %v1850
      %1852 = vmatmul.bf16.gmra.mxu0 %v913
      %v1853 = vpop.f32.mrf.mxu0
      %v1854 = vadd.f32 0.0, %v1853
      %v1855 = vpop.f32.mrf.mxu0
      %v1856 = vadd.f32 0.0, %v1855
      %1857 = vmatmul.bf16.gmra.mxu0 %v916
      %v1858 = vpop.f32.mrf.mxu0
      %v1859 = vadd.f32 0.0, %v1858
      %v1860 = vpop.f32.mrf.mxu0
      %v1861 = vadd.f32 0.0, %v1860
      %1862 = vmatmul.bf16.gmra.mxu0 %v919
      %v1863 = vpop.f32.mrf.mxu0
      %v1864 = vadd.f32 0.0, %v1863
      %v1865 = vpop.f32.mrf.mxu0
      %v1866 = vadd.f32 0.0, %v1865
      %1867 = vmatmul.bf16.gmra.mxu0 %v922
      %v1868 = vpop.f32.mrf.mxu0
      %v1869 = vadd.f32 0.0, %v1868
      %v1870 = vpop.f32.mrf.mxu0
      %v1871 = vadd.f32 0.0, %v1870
      %1872 = vmatmul.bf16.gmra.mxu0 %v925
      %v1873 = vpop.f32.mrf.mxu0
      %v1874 = vadd.f32 0.0, %v1873
      %v1875 = vpop.f32.mrf.mxu0
      %v1876 = vadd.f32 0.0, %v1875
      %1877 = vmatmul.bf16.gmra.mxu0 %v928
      %v1878 = vpop.f32.mrf.mxu0
      %v1879 = vadd.f32 0.0, %v1878
      %v1880 = vpop.f32.mrf.mxu0
      %v1881 = vadd.f32 0.0, %v1880
      %1882 = vmatmul.bf16.gmra.mxu0 %v931
      %v1883 = vpop.f32.mrf.mxu0
      %v1884 = vadd.f32 0.0, %v1883
      %v1885 = vpop.f32.mrf.mxu0
      %v1886 = vadd.f32 0.0, %v1885
      %1887 = vmatmul.bf16.gmra.mxu0 %v934
      %v1888 = vpop.f32.mrf.mxu0
      %v1889 = vadd.f32 0.0, %v1888
      %v1890 = vpop.f32.mrf.mxu0
      %v1891 = vadd.f32 0.0, %v1890
      %1892 = vmatmul.bf16.gmra.mxu0 %v937
      %v1893 = vpop.f32.mrf.mxu0
      %v1894 = vadd.f32 0.0, %v1893
      %v1895 = vpop.f32.mrf.mxu0
      %v1896 = vadd.f32 0.0, %v1895
      %1897 = vmatmul.bf16.gmra.mxu0 %v940
      %v1898 = vpop.f32.mrf.mxu0
      %v1899 = vadd.f32 0.0, %v1898
      %v1900 = vpop.f32.mrf.mxu0
      %v1901 = vadd.f32 0.0, %v1900
      %1902 = vmatmul.bf16.gmra.mxu0 %v943
      %v1903 = vpop.f32.mrf.mxu0
      %v1904 = vadd.f32 0.0, %v1903
      %v1905 = vpop.f32.mrf.mxu0
      %v1906 = vadd.f32 0.0, %v1905
      %1907 = vmatmul.bf16.gmra.mxu0 %v946
      %v1908 = vpop.f32.mrf.mxu0
      %v1909 = vadd.f32 0.0, %v1908
      %v1910 = vpop.f32.mrf.mxu0
      %v1911 = vadd.f32 0.0, %v1910
      %1912 = vmatmul.bf16.gmra.mxu0 %v1389
      %v1913 = vpop.f32.mrf.mxu0
      %v1914 = vadd.f32 0.0, %v1913
      %v1915 = vpop.f32.mrf.mxu0
      %v1916 = vadd.f32 0.0, %v1915
      %1917 = vmatmul.bf16.gmra.mxu0 %v1832
      %v1918 = vpop.f32.mrf.mxu0
      %v1919 = vadd.f32 0.0, %v1918
      %v1920 = vpop.f32.mrf.mxu0
      %v1921 = vadd.f32 0.0, %v1920
      %1922 = vdwg.mxu0
      %v1923 = vadd.f32 %v1774, %v1844
      %v1924 = vadd.f32 %v1775, %v1846
      %v1925 = vadd.f32 %v1776, %v1849
      %v1926 = vadd.f32 %v1777, %v1851
      %v1927 = vadd.f32 %v1778, %v1854
      %v1928 = vadd.f32 %v1779, %v1856
      %v1929 = vadd.f32 %v1780, %v1859
      %v1930 = vadd.f32 %v1781, %v1861
      %v1931 = vadd.f32 %v1782, %v1864
      %v1932 = vadd.f32 %v1783, %v1866
      %v1933 = vadd.f32 %v1784, %v1869
      %v1934 = vadd.f32 %v1785, %v1871
      %v1935 = vadd.f32 %v1786, %v1874
      %v1936 = vadd.f32 %v1787, %v1876
      %v1937 = vadd.f32 %v1788, %v1879
      %v1938 = vadd.f32 %v1789, %v1881
      %v1939 = vadd.f32 %v1790, %v1884
      %v1940 = vadd.f32 %v1791, %v1886
      %v1941 = vadd.f32 %v1792, %v1889
      %v1942 = vadd.f32 %v1793, %v1891
      %v1943 = vadd.f32 %v1794, %v1894
      %v1944 = vadd.f32 %v1795, %v1896
      %v1945 = vadd.f32 %v1796, %v1899
      %v1946 = vadd.f32 %v1797, %v1901
      %v1947 = vadd.f32 %v1798, %v1904
      %v1948 = vadd.f32 %v1799, %v1906
      %v1949 = vadd.f32 %v1800, %v1909
      %v1950 = vadd.f32 %v1801, %v1911
      %v1951 = vadd.f32 %v1802, %v1914
      %v1952 = vadd.f32 %v1803, %v1916
      %v1953 = vadd.f32 %v1804, %v1919
      %v1954 = vadd.f32 %v1805, %v1921
      %v1955 = vld [vmem:[%s2] sm:$0x1]
      %v1957 = vperm.slane %v1955, 0
      %v1959 = vmul.f32 %v1923, %v1957
      %v1960 = vmul.f32 %v1924, %v1957
      %v1961 = vmul.f32 %v1925, %v1957
      %v1962 = vmul.f32 %v1926, %v1957
      %v1963 = vmul.f32 %v1927, %v1957
      %v1964 = vmul.f32 %v1928, %v1957
      %v1965 = vmul.f32 %v1929, %v1957
      %v1966 = vmul.f32 %v1930, %v1957
      %v1967 = vmul.f32 %v1931, %v1957
      %v1968 = vmul.f32 %v1932, %v1957
      %v1969 = vmul.f32 %v1933, %v1957
      %v1970 = vmul.f32 %v1934, %v1957
      %v1971 = vmul.f32 %v1935, %v1957
      %v1972 = vmul.f32 %v1936, %v1957
      %v1973 = vmul.f32 %v1937, %v1957
      %v1974 = vmul.f32 %v1938, %v1957
      %v1975 = vmul.f32 %v1939, %v1957
      %v1976 = vmul.f32 %v1940, %v1957
      %v1977 = vmul.f32 %v1941, %v1957
      %v1978 = vmul.f32 %v1942, %v1957
      %v1979 = vmul.f32 %v1943, %v1957
      %v1980 = vmul.f32 %v1944, %v1957
      %v1981 = vmul.f32 %v1945, %v1957
      %v1982 = vmul.f32 %v1946, %v1957
      %v1983 = vmul.f32 %v1947, %v1957
      %v1984 = vmul.f32 %v1948, %v1957
      %v1985 = vmul.f32 %v1949, %v1957
      %v1986 = vmul.f32 %v1950, %v1957
      %v1987 = vmul.f32 %v1951, %v1957
      %v1988 = vmul.f32 %v1952, %v1957
      %v1989 = vmul.f32 %v1953, %v1957
      %v1990 = vmul.f32 %v1954, %v1957
      %v1991 = vld [vmem:[%s3] sm:$0x1]
      %v1993 = vperm.slane %v1991, 0
      %v1995 = vadd.f32 %v1959, %v1993
      %v1996 = vadd.f32 %v1960, %v1993
      %v1997 = vadd.f32 %v1961, %v1993
      %v1998 = vadd.f32 %v1962, %v1993
      %v1999 = vadd.f32 %v1963, %v1993
      %v2000 = vadd.f32 %v1964, %v1993
      %v2001 = vadd.f32 %v1965, %v1993
      %v2002 = vadd.f32 %v1966, %v1993
      %v2003 = vadd.f32 %v1967, %v1993
      %v2004 = vadd.f32 %v1968, %v1993
      %v2005 = vadd.f32 %v1969, %v1993
      %v2006 = vadd.f32 %v1970, %v1993
      %v2007 = vadd.f32 %v1971, %v1993
      %v2008 = vadd.f32 %v1972, %v1993
      %v2009 = vadd.f32 %v1973, %v1993
      %v2010 = vadd.f32 %v1974, %v1993
      %v2011 = vadd.f32 %v1975, %v1993
      %v2012 = vadd.f32 %v1976, %v1993
      %v2013 = vadd.f32 %v1977, %v1993
      %v2014 = vadd.f32 %v1978, %v1993
      %v2015 = vadd.f32 %v1979, %v1993
      %v2016 = vadd.f32 %v1980, %v1993
      %v2017 = vadd.f32 %v1981, %v1993
      %v2018 = vadd.f32 %v1982, %v1993
      %v2019 = vadd.f32 %v1983, %v1993
      %v2020 = vadd.f32 %v1984, %v1993
      %v2021 = vadd.f32 %v1985, %v1993
      %v2022 = vadd.f32 %v1986, %v1993
      %v2023 = vadd.f32 %v1987, %v1993
      %v2024 = vadd.f32 %v1988, %v1993
      %v2025 = vadd.f32 %v1989, %v1993
      %v2026 = vadd.f32 %v1990, %v1993
      %v2027 = vmax.f32 %v1995, 0.0
      %v2028 = vmax.f32 %v1996, 0.0
      %v2029 = vmax.f32 %v1997, 0.0
      %v2030 = vmax.f32 %v1998, 0.0
      %v2031 = vmax.f32 %v1999, 0.0
      %v2032 = vmax.f32 %v2000, 0.0
      %v2033 = vmax.f32 %v2001, 0.0
      %v2034 = vmax.f32 %v2002, 0.0
      %v2035 = vmax.f32 %v2003, 0.0
      %v2036 = vmax.f32 %v2004, 0.0
      %v2037 = vmax.f32 %v2005, 0.0
      %v2038 = vmax.f32 %v2006, 0.0
      %v2039 = vmax.f32 %v2007, 0.0
      %v2040 = vmax.f32 %v2008, 0.0
      %v2041 = vmax.f32 %v2009, 0.0
      %v2042 = vmax.f32 %v2010, 0.0
      %v2043 = vmax.f32 %v2011, 0.0
      %v2044 = vmax.f32 %v2012, 0.0
      %v2045 = vmax.f32 %v2013, 0.0
      %v2046 = vmax.f32 %v2014, 0.0
      %v2047 = vmax.f32 %v2015, 0.0
      %v2048 = vmax.f32 %v2016, 0.0
      %v2049 = vmax.f32 %v2017, 0.0
      %v2050 = vmax.f32 %v2018, 0.0
      %v2051 = vmax.f32 %v2019, 0.0
      %v2052 = vmax.f32 %v2020, 0.0
      %v2053 = vmax.f32 %v2021, 0.0
      %v2054 = vmax.f32 %v2022, 0.0
      %v2055 = vmax.f32 %v2023, 0.0
      %v2056 = vmax.f32 %v2024, 0.0
      %v2057 = vmax.f32 %v2025, 0.0
      %v2058 = vmax.f32 %v2026, 0.0
      %2059 = vst.msk [vmem:[%s197] sm:$0xff] %vm467, %v2027
      %2060 = vst.msk [vmem:[%s197 + $0x8] sm:$0xff] %vm467, %v2028
      %2061 = vst.msk [vmem:[%s197 + $0x10] sm:$0xff] %vm467, %v2029
      %2062 = vst.msk [vmem:[%s197 + $0x18] sm:$0xff] %vm467, %v2030
      %2063 = vst.msk [vmem:[%s197 + $0x20] sm:$0xff] %vm467, %v2031
      %2064 = vst.msk [vmem:[%s197 + $0x28] sm:$0xff] %vm467, %v2032
      %2065 = vst.msk [vmem:[%s197 + $0x30] sm:$0xff] %vm467, %v2033
      %2066 = vst.msk [vmem:[%s197 + $0x38] sm:$0xff] %vm467, %v2034
      %2067 = vst.msk [vmem:[%s197 + $0x40] sm:$0xff] %vm467, %v2035
      %2068 = vst.msk [vmem:[%s197 + $0x48] sm:$0xff] %vm467, %v2036
      %2069 = vst.msk [vmem:[%s197 + $0x50] sm:$0xff] %vm467, %v2037
      %2070 = vst.msk [vmem:[%s197 + $0x58] sm:$0xff] %vm467, %v2038
      %2071 = vst.msk [vmem:[%s197 + $0x60] sm:$0xff] %vm467, %v2039
      %2072 = vst.msk [vmem:[%s197 + $0x68] sm:$0xff] %vm467, %v2040
      %2073 = vst.msk [vmem:[%s197 + $0x70] sm:$0xff] %vm467, %v2041
      %2074 = vst.msk [vmem:[%s197 + $0x78] sm:$0xff] %vm467, %v2042
      %2075 = vst.msk [vmem:[%s197 + $0x80] sm:$0xff] %vm467, %v2043
      %2076 = vst.msk [vmem:[%s197 + $0x88] sm:$0xff] %vm467, %v2044
      %2077 = vst.msk [vmem:[%s197 + $0x90] sm:$0xff] %vm467, %v2045
      %2078 = vst.msk [vmem:[%s197 + $0x98] sm:$0xff] %vm467, %v2046
      %2079 = vst.msk [vmem:[%s197 + $0xa0] sm:$0xff] %vm467, %v2047
      %2080 = vst.msk [vmem:[%s197 + $0xa8] sm:$0xff] %vm467, %v2048
      %2081 = vst.msk [vmem:[%s197 + $0xb0] sm:$0xff] %vm467, %v2049
      %2082 = vst.msk [vmem:[%s197 + $0xb8] sm:$0xff] %vm467, %v2050
      %2083 = vst.msk [vmem:[%s197 + $0xc0] sm:$0xff] %vm467, %v2051
      %2084 = vst.msk [vmem:[%s197 + $0xc8] sm:$0xff] %vm467, %v2052
      %2085 = vst.msk [vmem:[%s197 + $0xd0] sm:$0xff] %vm467, %v2053
      %2086 = vst.msk [vmem:[%s197 + $0xd8] sm:$0xff] %vm467, %v2054
      %2087 = vst.msk [vmem:[%s197 + $0xe0] sm:$0xff] %vm467, %v2055
      %2088 = vst.msk [vmem:[%s197 + $0xe8] sm:$0xff] %vm467, %v2056
      %2089 = vst.msk [vmem:[%s197 + $0xf0] sm:$0xff] %vm467, %v2057
      %2090 = vst.msk [vmem:[%s197 + $0xf8] sm:$0xff] %vm467, %v2058
      %p2091 = scmp.lt.s32.totalorder %s15, 1
      %s2092 = scalar_select %p2091, %s15, 1
      %s2093 = smul.addr %s2092, 32
      %s2094 = smul.addr %s2093, 8
      %s2095 = scalar_lea.vmem %s4, %s2094
      // Predicated region
      $region37: #{_lambda_.12} parent=35 // pred_check
        %p2096 = pneg %p122
      $region38: #{_lambda_.12} parent=35 // pred_check_branch
        %2098 = sbr.rel (%p2096) target = $region40
      $region39: #{_lambda_.12} parent=35 // pred_region
        _
      $region40: #{_lambda_.12} parent=35 // pred_fallthru
        _
    $region36: #{_lambda_.12} parent=5 // pred_fallthru
      _
    %p2099 = scmp.le.s32.totalorder 2, %s10
    // Predicated region
    $region41: #{_lambda_.12} parent=5 // pred_check
      %p2100 = pneg %p2099
    $region42: #{_lambda_.12} parent=5 // pred_check_branch
      %2102 = sbr.rel (%p2100) target = $region44
    $region43: #{_lambda_.12} parent=5 // pred_region
      %s2103 = ssub.s32 %s10, 2
      // Predicated region
      $region45: #{_lambda_.12} parent=43 // pred_check
        %p2104 = pneg %p128
      $region46: #{_lambda_.12} parent=43 // pred_check_branch
        %2106 = sbr.rel (%p2104) target = $region48
      $region47: #{_lambda_.12} parent=43 // pred_region
        %p2107 = scmp.lt.s32.totalorder %s16, 1
        %s2108 = scalar_select %p2107, %s16, 1
        %s2109 = smul.addr %s2108, 32
        %s2110 = smul.addr %s2109, 8
        %s2111 = scalar_lea.vmem %s4, %s2110
      $region48: #{_lambda_.12} parent=43 // pred_fallthru
        _
    $region44: #{_lambda_.12} parent=5 // pred_fallthru
      _
  $region6: #{_lambda_.12} parent=0 // loop_footer
    %s14 = sadd.s32 1, %s10
  $region7: #{_lambda_.12} parent=0 // loop_footer_branch
    %9 = sbr.rel target = $region3
  $region8: #{_lambda_.12} parent=0 // loop_exit
    _

// kernel: _lambda_.18
$region0: #{_lambda_.18}
  #allocation0 [shape = 'u32[]', space=smem, size = 0x4, offset = 0x4, fixed_abs, tag = 'smem constant byte address 0x4 - core index']
  #allocation1 [shape = 'u32[72,128]{1,0:T(1,128)}', space=vmem, size = 0x9000, scoped, tag = 'internal scratch']
  %s0 = inlined_call_operand.vmem [shape: f32[2,64,288], index: 0, kind: input, shape index: {}]
  %s1 = inlined_call_operand.vmem [shape: bf16[288,64], index: 1, kind: input, shape index: {}]
  %s2 = inlined_call_operand.vmem [shape: f32[1,64], index: 2, kind: input, shape index: {}]
  %s3 = inlined_call_operand.vmem [shape: f32[1,64], index: 3, kind: input, shape index: {}]
  %s4 = inlined_call_operand.vmem [shape: f32[2,64,64], index: 4, kind: output, shape index: {}]
  %s5 = sld [smem:[#allocation0]]
  $region49: #{_lambda_.18} parent=0
    _
  %s7 = ssub.s32 1, %s5
  %s8 = scalar_select 0, %s7, %s5
  loop: start=0, step=1, limit=4
  $region2: #{_lambda_.18} parent=0 // loop_pre_header
    _
  $region3: #{_lambda_.18} parent=0 // loop_header
    %s10 = sphi 0, %s14
    %p11 = scmp.ge.s32.totalorder %s10, 4
    %s17 = sphi 0, %s29
    %s18 = sphi 0, %s25
    %s19 = sphi 0, %s17
    %s20 = sphi 0, %s18
    %s21 = sphi 0, %s19
    %s22 = sphi 0, %s20
    %s34 = sphi 0, %s36
    %s37 = sphi 0, %s34
    %s38 = sphi 0, %s37
    %s54 = sphi 0, %s38
    %s58 = sphi 0, %s58
    %s60 = sphi 0, %s58
    %s61 = sphi 0, %s60
    %s75 = sphi 0, %s61
    %s79 = sphi 0, %s79
    %s81 = sphi 0, %s79
    %s82 = sphi 0, %s81
    %s96 = sphi 0, %s82
    %s100 = sphi 0, %s100
    %s102 = sphi 0, %s100
    %s103 = sphi 0, %s102
    %s117 = sphi 0, %s103
    %s125 = sphi 0, %s127
    %s128 = sphi 0, %s125
    %s129 = sphi 0, %s128
    %s145 = sphi 0, %s129
  $region4: #{_lambda_.18} parent=0 // loop_header_branch
    %13 = sbr.rel (%p11) target = $region8
  $region5: #{_lambda_.18} parent=0 // loop_body
    %s15 = ssub.s32 %s10, 1
    %s16 = ssub.s32 %s10, 2
    %s23 = sadd.s32 1, %s18
    %p24 = scmp.ge.s32.totalorder %s23, 1
    %s25 = scalar_select %p24, 0, %s23
    %s26 = sadd.s32 1, %s17
    %s27 = scalar_select %p24, %s26, %s17
    %p28 = scmp.ge.s32.totalorder %s27, 2
    %s29 = scalar_select %p28, 0, %s27
    %s30 = ssub.s32 %s17, %s29
    %s31 = ssub.s32 %s18, %s25
    %s32 = sor.u32 %s30, %s31
    %p33 = scmp.eq.s32.totalorder %s32, 0
    %s35 = sadd.s32 %s34, 1
    %s36 = scalar_select %p33, %s34, %s35
    %p39 = pneg %p33
    %p40 = scmp.eq.s32.totalorder %s10, 1
    %p41 = por %p39, %p40
    %p42 = scmp.ne.s32.totalorder %s34, %s37
    %p43 = scmp.eq.s32.totalorder %s10, 0
    %p44 = por %p42, %p43
    %p45 = scmp.ne.s32.totalorder %s34, %s37
    %p46 = scmp.eq.s32.totalorder %s15, 1
    %p47 = por %p45, %p46
    %p48 = scmp.ne.s32.totalorder %s37, %s38
    %p49 = scmp.eq.s32.totalorder %s15, 0
    %p50 = por %p48, %p49
    %p51 = scmp.ne.s32.totalorder %s37, %s38
    %p52 = scmp.eq.s32.totalorder %s16, 1
    %p53 = por %p51, %p52
    %p55 = scmp.ne.s32.totalorder %s38, %s54
    %p56 = scmp.eq.s32.totalorder %s16, 0
    %p57 = por %p55, %p56
    %s59 = sadd.s32 %s58, 1
    %p62 = scmp.eq.s32.totalorder %s10, 1
    %p63 = scmp.ne.s32.totalorder %s58, %s60
    %p64 = scmp.eq.s32.totalorder %s10, 0
    %p65 = por %p63, %p64
    %p66 = scmp.ne.s32.totalorder %s58, %s60
    %p67 = scmp.eq.s32.totalorder %s15, 1
    %p68 = por %p66, %p67
    %p69 = scmp.ne.s32.totalorder %s60, %s61
    %p70 = scmp.eq.s32.totalorder %s15, 0
    %p71 = por %p69, %p70
    %p72 = scmp.ne.s32.totalorder %s60, %s61
    %p73 = scmp.eq.s32.totalorder %s16, 1
    %p74 = por %p72, %p73
    %p76 = scmp.ne.s32.totalorder %s61, %s75
    %p77 = scmp.eq.s32.totalorder %s16, 0
    %p78 = por %p76, %p77
    %s80 = sadd.s32 %s79, 1
    %p83 = scmp.eq.s32.totalorder %s10, 1
    %p84 = scmp.ne.s32.totalorder %s79, %s81
    %p85 = scmp.eq.s32.totalorder %s10, 0
    %p86 = por %p84, %p85
    %p87 = scmp.ne.s32.totalorder %s79, %s81
    %p88 = scmp.eq.s32.totalorder %s15, 1
    %p89 = por %p87, %p88
    %p90 = scmp.ne.s32.totalorder %s81, %s82
    %p91 = scmp.eq.s32.totalorder %s15, 0
    %p92 = por %p90, %p91
    %p93 = scmp.ne.s32.totalorder %s81, %s82
    %p94 = scmp.eq.s32.totalorder %s16, 1
    %p95 = por %p93, %p94
    %p97 = scmp.ne.s32.totalorder %s82, %s96
    %p98 = scmp.eq.s32.totalorder %s16, 0
    %p99 = por %p97, %p98
    %s101 = sadd.s32 %s100, 1
    %p104 = scmp.eq.s32.totalorder %s10, 1
    %p105 = scmp.ne.s32.totalorder %s100, %s102
    %p106 = scmp.eq.s32.totalorder %s10, 0
    %p107 = por %p105, %p106
    %p108 = scmp.ne.s32.totalorder %s100, %s102
    %p109 = scmp.eq.s32.totalorder %s15, 1
    %p110 = por %p108, %p109
    %p111 = scmp.ne.s32.totalorder %s102, %s103
    %p112 = scmp.eq.s32.totalorder %s15, 0
    %p113 = por %p111, %p112
    %p114 = scmp.ne.s32.totalorder %s102, %s103
    %p115 = scmp.eq.s32.totalorder %s16, 1
    %p116 = por %p114, %p115
    %p118 = scmp.ne.s32.totalorder %s103, %s117
    %p119 = scmp.eq.s32.totalorder %s16, 0
    %p120 = por %p118, %p119
    %s121 = ssub.s32 %s17, %s29
    %s122 = ssub.s32 %s18, %s25
    %s123 = sor.u32 %s121, %s122
    %p124 = scmp.eq.s32.totalorder %s123, 0
    %s126 = sadd.s32 %s125, 1
    %s127 = scalar_select %p124, %s125, %s126
    %p130 = pneg %p124
    %p131 = scmp.eq.s32.totalorder %s10, 1
    %p132 = por %p130, %p131
    %p133 = scmp.ne.s32.totalorder %s125, %s128
    %p134 = scmp.eq.s32.totalorder %s10, 0
    %p135 = por %p133, %p134
    %p136 = scmp.ne.s32.totalorder %s125, %s128
    %p137 = scmp.eq.s32.totalorder %s15, 1
    %p138 = por %p136, %p137
    %p139 = scmp.ne.s32.totalorder %s128, %s129
    %p140 = scmp.eq.s32.totalorder %s15, 0
    %p141 = por %p139, %p140
    %p142 = scmp.ne.s32.totalorder %s128, %s129
    %p143 = scmp.eq.s32.totalorder %s16, 1
    %p144 = por %p142, %p143
    %p146 = scmp.ne.s32.totalorder %s129, %s145
    %p147 = scmp.eq.s32.totalorder %s16, 0
    %p148 = por %p146, %p147
    %p149 = scmp.le.s32.totalorder 1, %s10
    %p150 = scmp.lt.s32.totalorder %s10, 3
    %p151 = pnand %p149, %p150
    %p152 = pneg %p151
    // Predicated region
    $region9: #{_lambda_.18} parent=5 // pred_check
      _
    $region10: #{_lambda_.18} parent=5 // pred_check_branch
      %154 = sbr.rel (%p151) target = $region12
    $region11: #{_lambda_.18} parent=5 // pred_region
      %s155 = ssub.s32 %s10, 1
      // Predicated region
      $region13: #{_lambda_.18} parent=11 // pred_check
        %p156 = pneg %p71
      $region14: #{_lambda_.18} parent=11 // pred_check_branch
        %158 = sbr.rel (%p156) target = $region16
      $region15: #{_lambda_.18} parent=11 // pred_region
        _
      $region16: #{_lambda_.18} parent=11 // pred_fallthru
        _
      // Predicated region
      $region17: #{_lambda_.18} parent=11 // pred_check
        %p159 = pneg %p92
      $region18: #{_lambda_.18} parent=11 // pred_check_branch
        %161 = sbr.rel (%p159) target = $region20
      $region19: #{_lambda_.18} parent=11 // pred_region
        _
      $region20: #{_lambda_.18} parent=11 // pred_fallthru
        _
      // Predicated region
      $region21: #{_lambda_.18} parent=11 // pred_check
        %p162 = pneg %p113
      $region22: #{_lambda_.18} parent=11 // pred_check_branch
        %164 = sbr.rel (%p162) target = $region24
      $region23: #{_lambda_.18} parent=11 // pred_region
        _
      $region24: #{_lambda_.18} parent=11 // pred_fallthru
        _
    $region12: #{_lambda_.18} parent=5 // pred_fallthru
      _
    %p165 = scmp.lt.s32.totalorder %s10, 2
    // Predicated region
    $region25: #{_lambda_.18} parent=5 // pred_check
      %p166 = pneg %p165
    $region26: #{_lambda_.18} parent=5 // pred_check_branch
      %168 = sbr.rel (%p166) target = $region28
    $region27: #{_lambda_.18} parent=5 // pred_region
      // Predicated region
      $region29: #{_lambda_.18} parent=27 // pred_check
        %p169 = pneg %p44
      $region30: #{_lambda_.18} parent=27 // pred_check_branch
        %171 = sbr.rel (%p169) target = $region32
      $region31: #{_lambda_.18} parent=27 // pred_region
        %s172 = smul.u32 8, %s18
        %p173 = scmp.lt.s32.totalorder %s17, 1
        %s174 = scalar_select %p173, %s17, 1
        %p175 = scmp.lt.s32.totalorder %s172, 7
        %s176 = scalar_select %p175, %s172, 7
        %s177 = smul.addr %s176, 3
        %s178 = smul.addr %s174, 24
        %s179 = sadd.s32 %s177, %s178
        %s180 = smul.addr %s179, 8
        %s181 = scalar_lea.vmem %s0, %s180
        %s182 = smul.u32 8, %s18
      $region32: #{_lambda_.18} parent=27 // pred_fallthru
        _
    $region28: #{_lambda_.18} parent=5 // pred_fallthru
      _
    %p183 = scmp.le.s32.totalorder 1, %s10
    %p184 = scmp.lt.s32.totalorder %s10, 3
    %p185 = pnand %p183, %p184
    %p186 = pneg %p185
    // Predicated region
    $region33: #{_lambda_.18} parent=5 // pred_check
      _
    $region34: #{_lambda_.18} parent=5 // pred_check_branch
      %188 = sbr.rel (%p185) target = $region36
    $region35: #{_lambda_.18} parent=5 // pred_region
      %s189 = ssub.s32 %s10, 1
      %s190 = smul.u32 8, %s20
      %p191 = scmp.lt.s32.totalorder %s19, 1
      %s192 = scalar_select %p191, %s19, 1
      %p193 = scmp.lt.s32.totalorder %s190, 7
      %s194 = scalar_select %p193, %s190, 7
      %s195 = smul.addr %s194, 3
      %s196 = smul.addr %s192, 24
      %s197 = sadd.s32 %s195, %s196
      %s198 = smul.addr %s197, 8
      %s199 = scalar_lea.vmem %s0, %s198
      %p200 = pneg %p50
      %p201 = pneg %p47
      %p202 = pneg %p71
      %p203 = pneg %p68
      %p204 = pneg %p92
      %p205 = pneg %p89
      %p206 = pneg %p113
      %p207 = pneg %p110
      %p208 = pneg %p141
      %p209 = pneg %p138
      %s210 = smul.u32 8, %s20
      %p211 = scmp.lt.s32.totalorder %s19, 1
      %s212 = scalar_select %p211, %s19, 1
      %p213 = scmp.lt.s32.totalorder %s210, 7
      %s214 = scalar_select %p213, %s210, 7
      %s215 = smul.addr %s212, 8
      %s216 = sadd.s32 %s214, %s215
      %s217 = smul.addr %s216, 8
      %s218 = scalar_lea.vmem %s4, %s217
      %s219 = smul.u32 8, %s20
      %p220 = scmp.lt.s32.totalorder %s19, 1
      %s221 = scalar_select %p220, %s19, 1
      %p222 = scmp.lt.s32.totalorder %s219, 7
      %s223 = scalar_select %p222, %s219, 7
      %s224 = smul.addr %s223, 3
      %s225 = smul.addr %s221, 24
      %s226 = sadd.s32 %s224, %s225
      %s227 = smul.addr %s226, 8
      %s228 = scalar_lea.vmem %s0, %s227
      %s229 = smul.u32 8, %s20
      %s230 = smul.u32 8, %s20
      %p231 = scmp.lt.s32.totalorder %s19, 1
      %s232 = scalar_select %p231, %s19, 1
      %p233 = scmp.lt.s32.totalorder %s230, 7
      %s234 = scalar_select %p233, %s230, 7
      %s235 = smul.addr %s232, 8
      %s236 = sadd.s32 %s234, %s235
      %s237 = smul.addr %s236, 8
      %s238 = scalar_lea.vmem %s4, %s237
      %s239 = smul.u32 8, %s20
      %v241 = vld [vmem:[%s228] sm:$0xff]
      %v242 = vld [vmem:[%s228 + $0x8] sm:$0xff]
      %v243 = vld [vmem:[%s228 + $0x10] sm:$0xff]
      %v244 = vld [vmem:[%s228 + $0x18] sm:$0xff]
      %v245 = vld [vmem:[%s228 + $0x20] sm:$0xff]
      %v246 = vld [vmem:[%s228 + $0x28] sm:$0xff]
      %v247 = vld [vmem:[%s228 + $0x30] sm:$0xff]
      %v248 = vld [vmem:[%s228 + $0x38] sm:$0xff]
      %v249 = vld [vmem:[%s228 + $0x40] sm:$0xff]
      %v250 = vld [vmem:[%s228 + $0x48] sm:$0xff]
      %v251 = vld [vmem:[%s228 + $0x50] sm:$0xff]
      %v252 = vld [vmem:[%s228 + $0x58] sm:$0xff]
      %v253 = vld [vmem:[%s228 + $0x60] sm:$0xff]
      %v254 = vld [vmem:[%s228 + $0x68] sm:$0xff]
      %v255 = vld [vmem:[%s228 + $0x70] sm:$0xff]
      %v256 = vld [vmem:[%s228 + $0x78] sm:$0xff]
      %v257 = vld [vmem:[%s228 + $0x80] sm:$0xff]
      %v258 = vld [vmem:[%s228 + $0x88] sm:$0xff]
      %v259 = vld [vmem:[%s228 + $0x90] sm:$0xff]
      %v260 = vld [vmem:[%s228 + $0x98] sm:$0xff]
      %v261 = vld [vmem:[%s228 + $0xa0] sm:$0xff]
      %v262 = vld [vmem:[%s228 + $0xa8] sm:$0xff]
      %v263 = vld [vmem:[%s228 + $0xb0] sm:$0xff]
      %v264 = vld [vmem:[%s228 + $0xb8] sm:$0xff]
      %v265 = vpack.c.bf16 %v244, %v241
      %v266 = vpack.c.bf16 %v245, %v242
      %v267 = vpack.c.bf16 %v246, %v243
      %v268 = vpack.c.bf16 %v250, %v247
      %v269 = vpack.c.bf16 %v251, %v248
      %v270 = vpack.c.bf16 %v252, %v249
      %v271 = vpack.c.bf16 %v256, %v253
      %v272 = vpack.c.bf16 %v257, %v254
      %v273 = vpack.c.bf16 %v258, %v255
      %v274 = vpack.c.bf16 %v262, %v259
      %v275 = vpack.c.bf16 %v263, %v260
      %v276 = vpack.c.bf16 %v264, %v261
      %v277 = vld [vmem:[%s1] sm:$0xf]
      %v278 = vld [vmem:[%s1 + $0x4] sm:$0xf]
      %v279 = vld [vmem:[%s1 + $0x8] sm:$0xf]
      %v280 = vld [vmem:[%s1 + $0xc] sm:$0xf]
      %v281 = vld [vmem:[%s1 + $0x10] sm:$0xf]
      %v282 = vld [vmem:[%s1 + $0x14] sm:$0xf]
      %v283 = vld [vmem:[%s1 + $0x18] sm:$0xf]
      %v284 = vld [vmem:[%s1 + $0x1c] sm:$0xf]
      %v285 = vld [vmem:[%s1 + $0x20] sm:$0xf]
      %v286 = vld [vmem:[%s1 + $0x24] sm:$0xf]
      %v287 = vld [vmem:[%s1 + $0x28] sm:$0xf]
      %v288 = vld [vmem:[%s1 + $0x2c] sm:$0xf]
      %v289 = vld [vmem:[%s1 + $0x30] sm:$0xf]
      %v290 = vld [vmem:[%s1 + $0x34] sm:$0xf]
      %v291 = vld [vmem:[%s1 + $0x38] sm:$0xf]
      %v292 = vld [vmem:[%s1 + $0x3c] sm:$0xf]
      %v293 = vld [vmem:[%s1 + $0x40] sm:$0xf]
      %v294 = vld [vmem:[%s1 + $0x44] sm:$0xf]
      %v295 = vld [vmem:[%s1 + $0x48] sm:$0xf]
      %v296 = vld [vmem:[%s1 + $0x4c] sm:$0xf]
      %v297 = vld [vmem:[%s1 + $0x50] sm:$0xf]
      %v298 = vld [vmem:[%s1 + $0x54] sm:$0xf]
      %v299 = vld [vmem:[%s1 + $0x58] sm:$0xf]
      %v300 = vld [vmem:[%s1 + $0x5c] sm:$0xf]
      %v301 = vld [vmem:[%s1 + $0x60] sm:$0xf]
      %v302 = vld [vmem:[%s1 + $0x64] sm:$0xf]
      %v303 = vld [vmem:[%s1 + $0x68] sm:$0xf]
      %v304 = vld [vmem:[%s1 + $0x6c] sm:$0xf]
      %v305 = vld [vmem:[%s1 + $0x70] sm:$0xf]
      %v306 = vld [vmem:[%s1 + $0x74] sm:$0xf]
      %v307 = vld [vmem:[%s1 + $0x78] sm:$0xf]
      %v308 = vld [vmem:[%s1 + $0x7c] sm:$0xf]
      %v309 = vld [vmem:[%s1 + $0x80] sm:$0xf]
      %v310 = vld [vmem:[%s1 + $0x84] sm:$0xf]
      %v311 = vld [vmem:[%s1 + $0x88] sm:$0xf]
      %v312 = vld [vmem:[%s1 + $0x8c] sm:$0xf]
      %v349 = vunpack.c.l.b16 %v277
      %v350 = vunpack.c.l.b16 %v278
      %v351 = vunpack.c.l.b16 %v279
      %v352 = vunpack.c.l.b16 %v280
      %v353 = vunpack.c.l.b16 %v281
      %v354 = vunpack.c.l.b16 %v282
      %v355 = vunpack.c.l.b16 %v283
      %v356 = vunpack.c.l.b16 %v284
      %v357 = vunpack.c.l.b16 %v285
      %v358 = vunpack.c.l.b16 %v286
      %v359 = vunpack.c.l.b16 %v287
      %v360 = vunpack.c.l.b16 %v288
      %v361 = vunpack.c.l.b16 %v289
      %v362 = vunpack.c.l.b16 %v290
      %v363 = vunpack.c.l.b16 %v291
      %v364 = vunpack.c.l.b16 %v292
      %v365 = vunpack.c.l.b16 %v293
      %v366 = vunpack.c.l.b16 %v294
      %v367 = vunpack.c.l.b16 %v295
      %v368 = vunpack.c.l.b16 %v296
      %v369 = vunpack.c.l.b16 %v297
      %v370 = vunpack.c.l.b16 %v298
      %v371 = vunpack.c.l.b16 %v299
      %v372 = vunpack.c.l.b16 %v300
      %v373 = vunpack.c.l.b16 %v301
      %v374 = vunpack.c.l.b16 %v302
      %v375 = vunpack.c.l.b16 %v303
      %v376 = vunpack.c.l.b16 %v304
      %v377 = vunpack.c.l.b16 %v305
      %v378 = vunpack.c.l.b16 %v306
      %v379 = vunpack.c.l.b16 %v307
      %v380 = vunpack.c.l.b16 %v308
      %v381 = vunpack.c.l.b16 %v309
      %v382 = vunpack.c.l.b16 %v310
      %v383 = vunpack.c.l.b16 %v311
      %v384 = vunpack.c.l.b16 %v312
      %v385 = vpack.c.b16 %v350, %v349
      %v386 = vpack.c.b16 %v352, %v351
      %v387 = vpack.c.b16 %v354, %v353
      %v388 = vpack.c.b16 %v356, %v355
      %v389 = vpack.c.b16 %v358, %v357
      %v390 = vpack.c.b16 %v360, %v359
      %v391 = vpack.c.b16 %v362, %v361
      %v392 = vpack.c.b16 %v364, %v363
      %v393 = vpack.c.b16 %v366, %v365
      %v394 = vpack.c.b16 %v368, %v367
      %v395 = vpack.c.b16 %v370, %v369
      %v396 = vpack.c.b16 %v372, %v371
      %v397 = vpack.c.b16 %v374, %v373
      %v398 = vpack.c.b16 %v376, %v375
      %v399 = vpack.c.b16 %v378, %v377
      %v400 = vpack.c.b16 %v380, %v379
      %v401 = vpack.c.b16 %v382, %v381
      %v402 = vpack.c.b16 %v384, %v383
      %vm421 = vcmask 261120
      %v423 = vsel %vm421, %v267, 0
      %v426 = vsel %vm421, %v270, 0
      %v429 = vsel %vm421, %v273, 0
      %v432 = vsel %vm421, %v276, 0
      %434 = vmatpush.bf16.msra.mxu0 %v392
      %435 = vmatpush.bf16.msra.mxu0 %v391
      %436 = vmatpush.bf16.msra.mxu0 %v390
      %437 = vmatpush.bf16.msra.mxu0 %v389
      %438 = vmatpush.bf16.msra.mxu0 %v388
      %439 = vmatpush.bf16.msra.mxu0 %v387
      %440 = vmatpush.bf16.msra.mxu0 %v386
      %441 = vmatpush.bf16.msra.mxu0 %v385
      %442 = vmatmul.bf16.gmra.mxu0 %v265
      %v443 = vpop.f32.mrf.mxu0
      %v444 = vadd.f32 0.0, %v443
      %v445 = vpop.f32.mrf.mxu0
      %v446 = vadd.f32 0.0, %v445
      %447 = vmatmul.bf16.gmra.mxu0 %v268
      %v448 = vpop.f32.mrf.mxu0
      %v449 = vadd.f32 0.0, %v448
      %v450 = vpop.f32.mrf.mxu0
      %v451 = vadd.f32 0.0, %v450
      %452 = vmatmul.bf16.gmra.mxu0 %v271
      %v453 = vpop.f32.mrf.mxu0
      %v454 = vadd.f32 0.0, %v453
      %v455 = vpop.f32.mrf.mxu0
      %v456 = vadd.f32 0.0, %v455
      %457 = vmatmul.bf16.gmra.mxu0 %v274
      %v458 = vpop.f32.mrf.mxu0
      %v459 = vadd.f32 0.0, %v458
      %v460 = vpop.f32.mrf.mxu0
      %v461 = vadd.f32 0.0, %v460
      %462 = vdwg.mxu0
      %463 = vmatpush.bf16.msra.mxu0 %v400
      %464 = vmatpush.bf16.msra.mxu0 %v399
      %465 = vmatpush.bf16.msra.mxu0 %v398
      %466 = vmatpush.bf16.msra.mxu0 %v397
      %467 = vmatpush.bf16.msra.mxu0 %v396
      %468 = vmatpush.bf16.msra.mxu0 %v395
      %469 = vmatpush.bf16.msra.mxu0 %v394
      %470 = vmatpush.bf16.msra.mxu0 %v393
      %471 = vmatmul.bf16.gmra.mxu0 %v266
      %v472 = vpop.f32.mrf.mxu0
      %v473 = vadd.f32 %v444, %v472
      %v474 = vpop.f32.mrf.mxu0
      %v475 = vadd.f32 %v446, %v474
      %476 = vmatmul.bf16.gmra.mxu0 %v269
      %v477 = vpop.f32.mrf.mxu0
      %v478 = vadd.f32 %v449, %v477
      %v479 = vpop.f32.mrf.mxu0
      %v480 = vadd.f32 %v451, %v479
      %481 = vmatmul.bf16.gmra.mxu0 %v272
      %v482 = vpop.f32.mrf.mxu0
      %v483 = vadd.f32 %v454, %v482
      %v484 = vpop.f32.mrf.mxu0
      %v485 = vadd.f32 %v456, %v484
      %486 = vmatmul.bf16.gmra.mxu0 %v275
      %v487 = vpop.f32.mrf.mxu0
      %v488 = vadd.f32 %v459, %v487
      %v489 = vpop.f32.mrf.mxu0
      %v490 = vadd.f32 %v461, %v489
      %491 = vdwg.mxu0
      %492 = vmatpush.bf16.msra.mxu0 0
      %493 = vmatpush.bf16.msra.mxu0 0
      %494 = vmatpush.bf16.msra.mxu0 0
      %495 = vmatpush.bf16.msra.mxu0 0
      %496 = vmatpush.bf16.msra.mxu0 0
      %497 = vmatpush.bf16.msra.mxu0 0
      %498 = vmatpush.bf16.msra.mxu0 %v402
      %499 = vmatpush.bf16.msra.mxu0 %v401
      %500 = vmatmul.bf16.gmra.mxu0 %v423
      %v501 = vpop.f32.mrf.mxu0
      %v502 = vadd.f32 %v473, %v501
      %v503 = vpop.f32.mrf.mxu0
      %v504 = vadd.f32 %v475, %v503
      %505 = vmatmul.bf16.gmra.mxu0 %v426
      %v506 = vpop.f32.mrf.mxu0
      %v507 = vadd.f32 %v478, %v506
      %v508 = vpop.f32.mrf.mxu0
      %v509 = vadd.f32 %v480, %v508
      %510 = vmatmul.bf16.gmra.mxu0 %v429
      %v511 = vpop.f32.mrf.mxu0
      %v512 = vadd.f32 %v483, %v511
      %v513 = vpop.f32.mrf.mxu0
      %v514 = vadd.f32 %v485, %v513
      %515 = vmatmul.bf16.gmra.mxu0 %v432
      %v516 = vpop.f32.mrf.mxu0
      %v517 = vadd.f32 %v488, %v516
      %v518 = vpop.f32.mrf.mxu0
      %v519 = vadd.f32 %v490, %v518
      %520 = vdwg.mxu0
      %v521 = vld [vmem:[%s2] sm:$0x1]
      %v523 = vperm.slane %v521, 0
      %v525 = vmul.f32 %v502, %v523
      %v526 = vmul.f32 %v504, %v523
      %v527 = vmul.f32 %v507, %v523
      %v528 = vmul.f32 %v509, %v523
      %v529 = vmul.f32 %v512, %v523
      %v530 = vmul.f32 %v514, %v523
      %v531 = vmul.f32 %v517, %v523
      %v532 = vmul.f32 %v519, %v523
      %v533 = vld [vmem:[%s3] sm:$0x1]
      %v535 = vperm.slane %v533, 0
      %v537 = vadd.f32 %v525, %v535
      %v538 = vadd.f32 %v526, %v535
      %v539 = vadd.f32 %v527, %v535
      %v540 = vadd.f32 %v528, %v535
      %v541 = vadd.f32 %v529, %v535
      %v542 = vadd.f32 %v530, %v535
      %v543 = vadd.f32 %v531, %v535
      %v544 = vadd.f32 %v532, %v535
      %v545 = vmax.f32 %v537, 0.0
      %v546 = vmax.f32 %v538, 0.0
      %v547 = vmax.f32 %v539, 0.0
      %v548 = vmax.f32 %v540, 0.0
      %v549 = vmax.f32 %v541, 0.0
      %v550 = vmax.f32 %v542, 0.0
      %v551 = vmax.f32 %v543, 0.0
      %v552 = vmax.f32 %v544, 0.0
      %vm553 = vcmask 523264
      %554 = vst.msk [vmem:[%s238] sm:$0xff] %vm553, %v545
      %555 = vst.msk [vmem:[%s238 + $0x8] sm:$0xff] %vm553, %v546
      %556 = vst.msk [vmem:[%s238 + $0x10] sm:$0xff] %vm553, %v547
      %557 = vst.msk [vmem:[%s238 + $0x18] sm:$0xff] %vm553, %v548
      %558 = vst.msk [vmem:[%s238 + $0x20] sm:$0xff] %vm553, %v549
      %559 = vst.msk [vmem:[%s238 + $0x28] sm:$0xff] %vm553, %v550
      %560 = vst.msk [vmem:[%s238 + $0x30] sm:$0xff] %vm553, %v551
      %561 = vst.msk [vmem:[%s238 + $0x38] sm:$0xff] %vm553, %v552
      %s562 = smul.u32 8, %s20
      %p563 = scmp.lt.s32.totalorder %s19, 1
      %s564 = scalar_select %p563, %s19, 1
      %p565 = scmp.lt.s32.totalorder %s562, 7
      %s566 = scalar_select %p565, %s562, 7
      %s567 = smul.addr %s564, 8
      %s568 = sadd.s32 %s566, %s567
      %s569 = smul.addr %s568, 8
      %s570 = scalar_lea.vmem %s4, %s569
      // Predicated region
      $region37: #{_lambda_.18} parent=35 // pred_check
        %p571 = pneg %p138
      $region38: #{_lambda_.18} parent=35 // pred_check_branch
        %573 = sbr.rel (%p571) target = $region40
      $region39: #{_lambda_.18} parent=35 // pred_region
        %s574 = smul.u32 8, %s20
      $region40: #{_lambda_.18} parent=35 // pred_fallthru
        _
    $region36: #{_lambda_.18} parent=5 // pred_fallthru
      _
    %p575 = scmp.le.s32.totalorder 2, %s10
    // Predicated region
    $region41: #{_lambda_.18} parent=5 // pred_check
      %p576 = pneg %p575
    $region42: #{_lambda_.18} parent=5 // pred_check_branch
      %578 = sbr.rel (%p576) target = $region44
    $region43: #{_lambda_.18} parent=5 // pred_region
      %s579 = ssub.s32 %s10, 2
      // Predicated region
      $region45: #{_lambda_.18} parent=43 // pred_check
        %p580 = pneg %p144
      $region46: #{_lambda_.18} parent=43 // pred_check_branch
        %582 = sbr.rel (%p580) target = $region48
      $region47: #{_lambda_.18} parent=43 // pred_region
        %s583 = smul.u32 8, %s22
        %p584 = scmp.lt.s32.totalorder %s21, 1
        %s585 = scalar_select %p584, %s21, 1
        %p586 = scmp.lt.s32.totalorder %s583, 7
        %s587 = scalar_select %p586, %s583, 7
        %s588 = smul.addr %s585, 8
        %s589 = sadd.s32 %s587, %s588
        %s590 = smul.addr %s589, 8
        %s591 = scalar_lea.vmem %s4, %s590
      $region48: #{_lambda_.18} parent=43 // pred_fallthru
        _
    $region44: #{_lambda_.18} parent=5 // pred_fallthru
      _
  $region6: #{_lambda_.18} parent=0 // loop_footer
    %s14 = sadd.s32 1, %s10
  $region7: #{_lambda_.18} parent=0 // loop_footer_branch
    %9 = sbr.rel target = $region3
  $region8: #{_lambda_.18} parent=0 // loop_exit
    _

// kernel: _lambda_.14
$region0: #{_lambda_.14}
  #allocation0 [shape = 'u32[]', space=smem, size = 0x4, offset = 0x4, fixed_abs, tag = 'smem constant byte address 0x4 - core index']
  #allocation1 [shape = 'u32[72,128]{1,0:T(1,128)}', space=vmem, size = 0x9000, scoped, tag = 'internal scratch']
  %s0 = inlined_call_operand.vmem [shape: f32[2,18,18,32], index: 0, kind: input, shape index: {}]
  %s1 = inlined_call_operand.vmem [shape: bf16[9,32,32], index: 1, kind: input, shape index: {}]
  %s2 = inlined_call_operand.vmem [shape: f32[1,32], index: 2, kind: input, shape index: {}]
  %s3 = inlined_call_operand.vmem [shape: f32[1,32], index: 3, kind: input, shape index: {}]
  %s4 = inlined_call_operand.vmem [shape: f32[2,16,16,32], index: 4, kind: input, shape index: {}]
  %s5 = inlined_call_operand.vmem [shape: f32[2,16,16,32], index: 5, kind: output, shape index: {}]
  %s6 = sld [smem:[#allocation0]]
  $region53: #{_lambda_.14} parent=0
    _
  %s8 = ssub.s32 1, %s6
  %s9 = scalar_select 0, %s8, %s6
  loop: start=0, step=1, limit=4
  $region2: #{_lambda_.14} parent=0 // loop_pre_header
    _
  $region3: #{_lambda_.14} parent=0 // loop_header
    %s11 = sphi 0, %s15
    %p12 = scmp.ge.s32.totalorder %s11, 4
    %s21 = sphi 0, %s23
    %s24 = sphi 0, %s21
    %s25 = sphi 0, %s24
    %s41 = sphi 0, %s25
    %s45 = sphi 0, %s45
    %s47 = sphi 0, %s45
    %s48 = sphi 0, %s47
    %s62 = sphi 0, %s48
    %s66 = sphi 0, %s66
    %s68 = sphi 0, %s66
    %s69 = sphi 0, %s68
    %s83 = sphi 0, %s69
    %s87 = sphi 0, %s87
    %s89 = sphi 0, %s87
    %s90 = sphi 0, %s89
    %s104 = sphi 0, %s90
    %s110 = sphi 0, %s112
    %s113 = sphi 0, %s110
    %s114 = sphi 0, %s113
    %s130 = sphi 0, %s114
    %s136 = sphi 0, %s138
    %s139 = sphi 0, %s136
    %s140 = sphi 0, %s139
    %s156 = sphi 0, %s140
  $region4: #{_lambda_.14} parent=0 // loop_header_branch
    %14 = sbr.rel (%p12) target = $region8
  $region5: #{_lambda_.14} parent=0 // loop_body
    %s16 = ssub.s32 %s11, 1
    %s17 = ssub.s32 %s11, 2
    %s18 = sadd.s32 %s11, 1
    %s19 = ssub.s32 %s11, %s18
    %p20 = scmp.eq.s32.totalorder %s19, 0
    %s22 = sadd.s32 %s21, 1
    %s23 = scalar_select %p20, %s21, %s22
    %p26 = pneg %p20
    %p27 = scmp.eq.s32.totalorder %s11, 1
    %p28 = por %p26, %p27
    %p29 = scmp.ne.s32.totalorder %s21, %s24
    %p30 = scmp.eq.s32.totalorder %s11, 0
    %p31 = por %p29, %p30
    %p32 = scmp.ne.s32.totalorder %s21, %s24
    %p33 = scmp.eq.s32.totalorder %s16, 1
    %p34 = por %p32, %p33
    %p35 = scmp.ne.s32.totalorder %s24, %s25
    %p36 = scmp.eq.s32.totalorder %s16, 0
    %p37 = por %p35, %p36
    %p38 = scmp.ne.s32.totalorder %s24, %s25
    %p39 = scmp.eq.s32.totalorder %s17, 1
    %p40 = por %p38, %p39
    %p42 = scmp.ne.s32.totalorder %s25, %s41
    %p43 = scmp.eq.s32.totalorder %s17, 0
    %p44 = por %p42, %p43
    %s46 = sadd.s32 %s45, 1
    %p49 = scmp.eq.s32.totalorder %s11, 1
    %p50 = scmp.ne.s32.totalorder %s45, %s47
    %p51 = scmp.eq.s32.totalorder %s11, 0
    %p52 = por %p50, %p51
    %p53 = scmp.ne.s32.totalorder %s45, %s47
    %p54 = scmp.eq.s32.totalorder %s16, 1
    %p55 = por %p53, %p54
    %p56 = scmp.ne.s32.totalorder %s47, %s48
    %p57 = scmp.eq.s32.totalorder %s16, 0
    %p58 = por %p56, %p57
    %p59 = scmp.ne.s32.totalorder %s47, %s48
    %p60 = scmp.eq.s32.totalorder %s17, 1
    %p61 = por %p59, %p60
    %p63 = scmp.ne.s32.totalorder %s48, %s62
    %p64 = scmp.eq.s32.totalorder %s17, 0
    %p65 = por %p63, %p64
    %s67 = sadd.s32 %s66, 1
    %p70 = scmp.eq.s32.totalorder %s11, 1
    %p71 = scmp.ne.s32.totalorder %s66, %s68
    %p72 = scmp.eq.s32.totalorder %s11, 0
    %p73 = por %p71, %p72
    %p74 = scmp.ne.s32.totalorder %s66, %s68
    %p75 = scmp.eq.s32.totalorder %s16, 1
    %p76 = por %p74, %p75
    %p77 = scmp.ne.s32.totalorder %s68, %s69
    %p78 = scmp.eq.s32.totalorder %s16, 0
    %p79 = por %p77, %p78
    %p80 = scmp.ne.s32.totalorder %s68, %s69
    %p81 = scmp.eq.s32.totalorder %s17, 1
    %p82 = por %p80, %p81
    %p84 = scmp.ne.s32.totalorder %s69, %s83
    %p85 = scmp.eq.s32.totalorder %s17, 0
    %p86 = por %p84, %p85
    %s88 = sadd.s32 %s87, 1
    %p91 = scmp.eq.s32.totalorder %s11, 1
    %p92 = scmp.ne.s32.totalorder %s87, %s89
    %p93 = scmp.eq.s32.totalorder %s11, 0
    %p94 = por %p92, %p93
    %p95 = scmp.ne.s32.totalorder %s87, %s89
    %p96 = scmp.eq.s32.totalorder %s16, 1
    %p97 = por %p95, %p96
    %p98 = scmp.ne.s32.totalorder %s89, %s90
    %p99 = scmp.eq.s32.totalorder %s16, 0
    %p100 = por %p98, %p99
    %p101 = scmp.ne.s32.totalorder %s89, %s90
    %p102 = scmp.eq.s32.totalorder %s17, 1
    %p103 = por %p101, %p102
    %p105 = scmp.ne.s32.totalorder %s90, %s104
    %p106 = scmp.eq.s32.totalorder %s17, 0
    %p107 = por %p105, %p106
    %s108 = ssub.s32 %s11, %s18
    %p109 = scmp.eq.s32.totalorder %s108, 0
    %s111 = sadd.s32 %s110, 1
    %s112 = scalar_select %p109, %s110, %s111
    %p115 = pneg %p109
    %p116 = scmp.eq.s32.totalorder %s11, 1
    %p117 = por %p115, %p116
    %p118 = scmp.ne.s32.totalorder %s110, %s113
    %p119 = scmp.eq.s32.totalorder %s11, 0
    %p120 = por %p118, %p119
    %p121 = scmp.ne.s32.totalorder %s110, %s113
    %p122 = scmp.eq.s32.totalorder %s16, 1
    %p123 = por %p121, %p122
    %p124 = scmp.ne.s32.totalorder %s113, %s114
    %p125 = scmp.eq.s32.totalorder %s16, 0
    %p126 = por %p124, %p125
    %p127 = scmp.ne.s32.totalorder %s113, %s114
    %p128 = scmp.eq.s32.totalorder %s17, 1
    %p129 = por %p127, %p128
    %p131 = scmp.ne.s32.totalorder %s114, %s130
    %p132 = scmp.eq.s32.totalorder %s17, 0
    %p133 = por %p131, %p132
    %s134 = ssub.s32 %s11, %s18
    %p135 = scmp.eq.s32.totalorder %s134, 0
    %s137 = sadd.s32 %s136, 1
    %s138 = scalar_select %p135, %s136, %s137
    %p141 = pneg %p135
    %p142 = scmp.eq.s32.totalorder %s11, 1
    %p143 = por %p141, %p142
    %p144 = scmp.ne.s32.totalorder %s136, %s139
    %p145 = scmp.eq.s32.totalorder %s11, 0
    %p146 = por %p144, %p145
    %p147 = scmp.ne.s32.totalorder %s136, %s139
    %p148 = scmp.eq.s32.totalorder %s16, 1
    %p149 = por %p147, %p148
    %p150 = scmp.ne.s32.totalorder %s139, %s140
    %p151 = scmp.eq.s32.totalorder %s16, 0
    %p152 = por %p150, %p151
    %p153 = scmp.ne.s32.totalorder %s139, %s140
    %p154 = scmp.eq.s32.totalorder %s17, 1
    %p155 = por %p153, %p154
    %p157 = scmp.ne.s32.totalorder %s140, %s156
    %p158 = scmp.eq.s32.totalorder %s17, 0
    %p159 = por %p157, %p158
    %p160 = scmp.le.s32.totalorder 1, %s11
    %p161 = scmp.lt.s32.totalorder %s11, 3
    %p162 = pnand %p160, %p161
    %p163 = pneg %p162
    // Predicated region
    $region9: #{_lambda_.14} parent=5 // pred_check
      _
    $region10: #{_lambda_.14} parent=5 // pred_check_branch
      %165 = sbr.rel (%p162) target = $region12
    $region11: #{_lambda_.14} parent=5 // pred_region
      %s166 = ssub.s32 %s11, 1
      // Predicated region
      $region13: #{_lambda_.14} parent=11 // pred_check
        %p167 = pneg %p58
      $region14: #{_lambda_.14} parent=11 // pred_check_branch
        %169 = sbr.rel (%p167) target = $region16
      $region15: #{_lambda_.14} parent=11 // pred_region
        _
      $region16: #{_lambda_.14} parent=11 // pred_fallthru
        _
      // Predicated region
      $region17: #{_lambda_.14} parent=11 // pred_check
        %p170 = pneg %p79
      $region18: #{_lambda_.14} parent=11 // pred_check_branch
        %172 = sbr.rel (%p170) target = $region20
      $region19: #{_lambda_.14} parent=11 // pred_region
        _
      $region20: #{_lambda_.14} parent=11 // pred_fallthru
        _
      // Predicated region
      $region21: #{_lambda_.14} parent=11 // pred_check
        %p173 = pneg %p100
      $region22: #{_lambda_.14} parent=11 // pred_check_branch
        %175 = sbr.rel (%p173) target = $region24
      $region23: #{_lambda_.14} parent=11 // pred_region
        _
      $region24: #{_lambda_.14} parent=11 // pred_fallthru
        _
    $region12: #{_lambda_.14} parent=5 // pred_fallthru
      _
    %p176 = scmp.lt.s32.totalorder %s11, 2
    // Predicated region
    $region25: #{_lambda_.14} parent=5 // pred_check
      %p177 = pneg %p176
    $region26: #{_lambda_.14} parent=5 // pred_check_branch
      %179 = sbr.rel (%p177) target = $region28
    $region27: #{_lambda_.14} parent=5 // pred_region
      // Predicated region
      $region29: #{_lambda_.14} parent=27 // pred_check
        %p180 = pneg %p31
      $region30: #{_lambda_.14} parent=27 // pred_check_branch
        %182 = sbr.rel (%p180) target = $region32
      $region31: #{_lambda_.14} parent=27 // pred_region
        %p183 = scmp.lt.s32.totalorder %s11, 1
        %s184 = scalar_select %p183, %s11, 1
        %s185 = smul.addr %s184, 54
        %s186 = smul.addr %s185, 8
        %s187 = scalar_lea.vmem %s0, %s186
      $region32: #{_lambda_.14} parent=27 // pred_fallthru
        _
      // Predicated region
      $region33: #{_lambda_.14} parent=27 // pred_check
        %p188 = pneg %p120
      $region34: #{_lambda_.14} parent=27 // pred_check_branch
        %190 = sbr.rel (%p188) target = $region36
      $region35: #{_lambda_.14} parent=27 // pred_region
        %p191 = scmp.lt.s32.totalorder %s11, 1
        %s192 = scalar_select %p191, %s11, 1
        %s193 = smul.addr %s192, 32
        %s194 = smul.addr %s193, 8
        %s195 = scalar_lea.vmem %s4, %s194
      $region36: #{_lambda_.14} parent=27 // pred_fallthru
        _
    $region28: #{_lambda_.14} parent=5 // pred_fallthru
      _
    %p196 = scmp.le.s32.totalorder 1, %s11
    %p197 = scmp.lt.s32.totalorder %s11, 3
    %p198 = pnand %p196, %p197
    %p199 = pneg %p198
    // Predicated region
    $region37: #{_lambda_.14} parent=5 // pred_check
      _
    $region38: #{_lambda_.14} parent=5 // pred_check_branch
      %201 = sbr.rel (%p198) target = $region40
    $region39: #{_lambda_.14} parent=5 // pred_region
      %s202 = ssub.s32 %s11, 1
      %p203 = scmp.lt.s32.totalorder %s16, 1
      %s204 = scalar_select %p203, %s16, 1
      %s205 = smul.addr %s204, 54
      %s206 = smul.addr %s205, 8
      %s207 = scalar_lea.vmem %s0, %s206
      %p208 = pneg %p37
      %p209 = pneg %p34
      %p210 = pneg %p58
      %p211 = pneg %p55
      %p212 = pneg %p79
      %p213 = pneg %p76
      %p214 = pneg %p100
      %p215 = pneg %p97
      %p216 = scmp.lt.s32.totalorder %s16, 1
      %s217 = scalar_select %p216, %s16, 1
      %s218 = smul.addr %s217, 32
      %s219 = smul.addr %s218, 8
      %s220 = scalar_lea.vmem %s4, %s219
      %p221 = pneg %p126
      %p222 = pneg %p123
      %p223 = pneg %p152
      %p224 = pneg %p149
      %p225 = scmp.lt.s32.totalorder %s16, 1
      %s226 = scalar_select %p225, %s16, 1
      %s227 = smul.addr %s226, 32
      %s228 = smul.addr %s227, 8
      %s229 = scalar_lea.vmem %s5, %s228
      %p230 = scmp.lt.s32.totalorder %s16, 1
      %s231 = scalar_select %p230, %s16, 1
      %s232 = smul.addr %s231, 54
      %s233 = smul.addr %s232, 8
      %s234 = scalar_lea.vmem %s0, %s233
      %p235 = scmp.lt.s32.totalorder %s16, 1
      %s236 = scalar_select %p235, %s16, 1
      %s237 = smul.addr %s236, 32
      %s238 = smul.addr %s237, 8
      %s239 = scalar_lea.vmem %s4, %s238
      %p240 = scmp.lt.s32.totalorder %s16, 1
      %s241 = scalar_select %p240, %s16, 1
      %s242 = smul.addr %s241, 32
      %s243 = smul.addr %s242, 8
      %s244 = scalar_lea.vmem %s5, %s243
      %v246 = vld [vmem:[%s234] sm:$0xff]
      %v247 = vld [vmem:[%s234 + $0x8] sm:$0xff]
      %v248 = vld [vmem:[%s234 + $0x10] sm:$0x3]
      %v249 = vld [vmem:[%s234 + $0x18] sm:$0xff]
      %v250 = vld [vmem:[%s234 + $0x20] sm:$0xff]
      %v251 = vld [vmem:[%s234 + $0x28] sm:$0x3]
      %v252 = vld [vmem:[%s234 + $0x30] sm:$0xff]
      %v253 = vld [vmem:[%s234 + $0x38] sm:$0xff]
      %v254 = vld [vmem:[%s234 + $0x40] sm:$0x3]
      %v255 = vld [vmem:[%s234 + $0x48] sm:$0xff]
      %v256 = vld [vmem:[%s234 + $0x50] sm:$0xff]
      %v257 = vld [vmem:[%s234 + $0x58] sm:$0x3]
      %v258 = vld [vmem:[%s234 + $0x60] sm:$0xff]
      %v259 = vld [vmem:[%s234 + $0x68] sm:$0xff]
      %v260 = vld [vmem:[%s234 + $0x70] sm:$0x3]
      %v261 = vld [vmem:[%s234 + $0x78] sm:$0xff]
      %v262 = vld [vmem:[%s234 + $0x80] sm:$0xff]
      %v263 = vld [vmem:[%s234 + $0x88] sm:$0x3]
      %v264 = vld [vmem:[%s234 + $0x90] sm:$0xff]
      %v265 = vld [vmem:[%s234 + $0x98] sm:$0xff]
      %v266 = vld [vmem:[%s234 + $0xa0] sm:$0x3]
      %v267 = vld [vmem:[%s234 + $0xa8] sm:$0xff]
      %v268 = vld [vmem:[%s234 + $0xb0] sm:$0xff]
      %v269 = vld [vmem:[%s234 + $0xb8] sm:$0x3]
      %v270 = vld [vmem:[%s234 + $0xc0] sm:$0xff]
      %v271 = vld [vmem:[%s234 + $0xc8] sm:$0xff]
      %v272 = vld [vmem:[%s234 + $0xd0] sm:$0x3]
      %v273 = vld [vmem:[%s234 + $0xd8] sm:$0xff]
      %v274 = vld [vmem:[%s234 + $0xe0] sm:$0xff]
      %v275 = vld [vmem:[%s234 + $0xe8] sm:$0x3]
      %v276 = vld [vmem:[%s234 + $0xf0] sm:$0xff]
      %v277 = vld [vmem:[%s234 + $0xf8] sm:$0xff]
      %v278 = vld [vmem:[%s234 + $0x100] sm:$0x3]
      %v279 = vld [vmem:[%s234 + $0x108] sm:$0xff]
      %v280 = vld [vmem:[%s234 + $0x110] sm:$0xff]
      %v281 = vld [vmem:[%s234 + $0x118] sm:$0x3]
      %v282 = vld [vmem:[%s234 + $0x120] sm:$0xff]
      %v283 = vld [vmem:[%s234 + $0x128] sm:$0xff]
      %v284 = vld [vmem:[%s234 + $0x130] sm:$0x3]
      %v285 = vld [vmem:[%s234 + $0x138] sm:$0xff]
      %v286 = vld [vmem:[%s234 + $0x140] sm:$0xff]
      %v287 = vld [vmem:[%s234 + $0x148] sm:$0x3]
      %v288 = vld [vmem:[%s234 + $0x150] sm:$0xff]
      %v289 = vld [vmem:[%s234 + $0x158] sm:$0xff]
      %v290 = vld [vmem:[%s234 + $0x160] sm:$0x3]
      %v291 = vld [vmem:[%s234 + $0x168] sm:$0xff]
      %v292 = vld [vmem:[%s234 + $0x170] sm:$0xff]
      %v293 = vld [vmem:[%s234 + $0x178] sm:$0x3]
      %v294 = vld [vmem:[%s234 + $0x180] sm:$0xff]
      %v295 = vld [vmem:[%s234 + $0x188] sm:$0xff]
      %v296 = vld [vmem:[%s234 + $0x190] sm:$0x3]
      %v297 = vld [vmem:[%s234 + $0x198] sm:$0xff]
      %v298 = vld [vmem:[%s234 + $0x1a0] sm:$0xff]
      %v299 = vld [vmem:[%s234 + $0x1a8] sm:$0x3]
      %v300 = vpack.c.bf16 %v247, %v246
      %v301 = vpack.c.bf16 %v250, %v249
      %v302 = vpack.c.bf16 %v253, %v252
      %v303 = vpack.c.bf16 %v256, %v255
      %v304 = vpack.c.bf16 %v259, %v258
      %v305 = vpack.c.bf16 %v262, %v261
      %v306 = vpack.c.bf16 %v265, %v264
      %v307 = vpack.c.bf16 %v268, %v267
      %v308 = vpack.c.bf16 %v271, %v270
      %v309 = vpack.c.bf16 %v274, %v273
      %v310 = vpack.c.bf16 %v277, %v276
      %v311 = vpack.c.bf16 %v280, %v279
      %v312 = vpack.c.bf16 %v283, %v282
      %v313 = vpack.c.bf16 %v286, %v285
      %v314 = vpack.c.bf16 %v289, %v288
      %v315 = vpack.c.bf16 %v292, %v291
      %v316 = vld [vmem:[%s1] sm:$0xf]
      %v317 = vld [vmem:[%s1 + $0x4] sm:$0xf]
      %v318 = vld [vmem:[%s1 + $0x8] sm:$0xf]
      %v319 = vld [vmem:[%s1 + $0xc] sm:$0xf]
      %vm368 = vcmask 1046528
      %v369 = vrot.slane %v246, 1
      %v370 = vrot.slane %v247, 1
      %v371 = vsel %vm368, %v369, %v370
      %v372 = vrot.slane %v248, 1
      %v373 = vsel %vm368, %v370, %v372
      %v374 = vrot.slane %v249, 1
      %v375 = vrot.slane %v250, 1
      %v376 = vsel %vm368, %v374, %v375
      %v377 = vrot.slane %v251, 1
      %v378 = vsel %vm368, %v375, %v377
      %v379 = vrot.slane %v252, 1
      %v380 = vrot.slane %v253, 1
      %v381 = vsel %vm368, %v379, %v380
      %v382 = vrot.slane %v254, 1
      %v383 = vsel %vm368, %v380, %v382
      %v384 = vrot.slane %v255, 1
      %v385 = vrot.slane %v256, 1
      %v386 = vsel %vm368, %v384, %v385
      %v387 = vrot.slane %v257, 1
      %v388 = vsel %vm368, %v385, %v387
      %v389 = vrot.slane %v258, 1
      %v390 = vrot.slane %v259, 1
      %v391 = vsel %vm368, %v389, %v390
      %v392 = vrot.slane %v260, 1
      %v393 = vsel %vm368, %v390, %v392
      %v394 = vrot.slane %v261, 1
      %v395 = vrot.slane %v262, 1
      %v396 = vsel %vm368, %v394, %v395
      %v397 = vrot.slane %v263, 1
      %v398 = vsel %vm368, %v395, %v397
      %v399 = vrot.slane %v264, 1
      %v400 = vrot.slane %v265, 1
      %v401 = vsel %vm368, %v399, %v400
      %v402 = vrot.slane %v266, 1
      %v403 = vsel %vm368, %v400, %v402
      %v404 = vrot.slane %v267, 1
      %v405 = vrot.slane %v268, 1
      %v406 = vsel %vm368, %v404, %v405
      %v407 = vrot.slane %v269, 1
      %v408 = vsel %vm368, %v405, %v407
      %v409 = vrot.slane %v270, 1
      %v410 = vrot.slane %v271, 1
      %v411 = vsel %vm368, %v409, %v410
      %v412 = vrot.slane %v272, 1
      %v413 = vsel %vm368, %v410, %v412
      %v414 = vrot.slane %v273, 1
      %v415 = vrot.slane %v274, 1
      %v416 = vsel %vm368, %v414, %v415
      %v417 = vrot.slane %v275, 1
      %v418 = vsel %vm368, %v415, %v417
      %v419 = vrot.slane %v276, 1
      %v420 = vrot.slane %v277, 1
      %v421 = vsel %vm368, %v419, %v420
      %v422 = vrot.slane %v278, 1
      %v423 = vsel %vm368, %v420, %v422
      %v424 = vrot.slane %v279, 1
      %v425 = vrot.slane %v280, 1
      %v426 = vsel %vm368, %v424, %v425
      %v427 = vrot.slane %v281, 1
      %v428 = vsel %vm368, %v425, %v427
      %v429 = vrot.slane %v282, 1
      %v430 = vrot.slane %v283, 1
      %v431 = vsel %vm368, %v429, %v430
      %v432 = vrot.slane %v284, 1
      %v433 = vsel %vm368, %v430, %v432
      %v434 = vrot.slane %v285, 1
      %v435 = vrot.slane %v286, 1
      %v436 = vsel %vm368, %v434, %v435
      %v437 = vrot.slane %v287, 1
      %v438 = vsel %vm368, %v435, %v437
      %v439 = vrot.slane %v288, 1
      %v440 = vrot.slane %v289, 1
      %v441 = vsel %vm368, %v439, %v440
      %v442 = vrot.slane %v290, 1
      %v443 = vsel %vm368, %v440, %v442
      %v444 = vrot.slane %v291, 1
      %v445 = vrot.slane %v292, 1
      %v446 = vsel %vm368, %v444, %v445
      %v447 = vrot.slane %v293, 1
      %v448 = vsel %vm368, %v445, %v447
      %v481 = vpack.c.bf16 %v373, %v371
      %v482 = vpack.c.bf16 %v378, %v376
      %v483 = vpack.c.bf16 %v383, %v381
      %v484 = vpack.c.bf16 %v388, %v386
      %v485 = vpack.c.bf16 %v393, %v391
      %v486 = vpack.c.bf16 %v398, %v396
      %v487 = vpack.c.bf16 %v403, %v401
      %v488 = vpack.c.bf16 %v408, %v406
      %v489 = vpack.c.bf16 %v413, %v411
      %v490 = vpack.c.bf16 %v418, %v416
      %v491 = vpack.c.bf16 %v423, %v421
      %v492 = vpack.c.bf16 %v428, %v426
      %v493 = vpack.c.bf16 %v433, %v431
      %v494 = vpack.c.bf16 %v438, %v436
      %v495 = vpack.c.bf16 %v443, %v441
      %v496 = vpack.c.bf16 %v448, %v446
      %s497 = scalar_lea.vmem %s1, 16
      %v498 = vld [vmem:[%s497] sm:$0xf]
      %v499 = vld [vmem:[%s497 + $0x4] sm:$0xf]
      %v500 = vld [vmem:[%s497 + $0x8] sm:$0xf]
      %v501 = vld [vmem:[%s497 + $0xc] sm:$0xf]
      %v506 = vunpack.c.l.b16 %v498
      %v507 = vunpack.c.l.b16 %v499
      %v508 = vunpack.c.l.b16 %v500
      %v509 = vunpack.c.l.b16 %v501
      %v510 = vpack.c.b16 %v507, %v506
      %v511 = vpack.c.b16 %v509, %v508
      %vm514 = vcmask 261120
      %v516 = vsel %vm514, %v481, 0
      %v519 = vsel %vm514, %v482, 0
      %v522 = vsel %vm514, %v483, 0
      %v525 = vsel %vm514, %v484, 0
      %v528 = vsel %vm514, %v485, 0
      %v531 = vsel %vm514, %v486, 0
      %v534 = vsel %vm514, %v487, 0
      %v537 = vsel %vm514, %v488, 0
      %v540 = vsel %vm514, %v489, 0
      %v543 = vsel %vm514, %v490, 0
      %v546 = vsel %vm514, %v491, 0
      %v549 = vsel %vm514, %v492, 0
      %v552 = vsel %vm514, %v493, 0
      %v555 = vsel %vm514, %v494, 0
      %v558 = vsel %vm514, %v495, 0
      %v561 = vsel %vm514, %v496, 0
      %563 = vmatpush.bf16.msra.mxu0 0
      %564 = vmatpush.bf16.msra.mxu0 0
      %565 = vmatpush.bf16.msra.mxu0 0
      %566 = vmatpush.bf16.msra.mxu0 0
      %567 = vmatpush.bf16.msra.mxu0 0
      %568 = vmatpush.bf16.msra.mxu0 0
      %569 = vmatpush.bf16.msra.mxu0 %v511
      %570 = vmatpush.bf16.msra.mxu0 %v510
      %571 = vmatmul.bf16.gmra.mxu0 %v516
      %v572 = vpop.f32.mrf.mxu0
      %v573 = vadd.f32 0.0, %v572
      %v574 = vpop.f32.mrf.mxu0
      %v575 = vadd.f32 0.0, %v574
      %576 = vmatmul.bf16.gmra.mxu0 %v519
      %v577 = vpop.f32.mrf.mxu0
      %v578 = vadd.f32 0.0, %v577
      %v579 = vpop.f32.mrf.mxu0
      %v580 = vadd.f32 0.0, %v579
      %581 = vmatmul.bf16.gmra.mxu0 %v522
      %v582 = vpop.f32.mrf.mxu0
      %v583 = vadd.f32 0.0, %v582
      %v584 = vpop.f32.mrf.mxu0
      %v585 = vadd.f32 0.0, %v584
      %586 = vmatmul.bf16.gmra.mxu0 %v525
      %v587 = vpop.f32.mrf.mxu0
      %v588 = vadd.f32 0.0, %v587
      %v589 = vpop.f32.mrf.mxu0
      %v590 = vadd.f32 0.0, %v589
      %591 = vmatmul.bf16.gmra.mxu0 %v528
      %v592 = vpop.f32.mrf.mxu0
      %v593 = vadd.f32 0.0, %v592
      %v594 = vpop.f32.mrf.mxu0
      %v595 = vadd.f32 0.0, %v594
      %596 = vmatmul.bf16.gmra.mxu0 %v531
      %v597 = vpop.f32.mrf.mxu0
      %v598 = vadd.f32 0.0, %v597
      %v599 = vpop.f32.mrf.mxu0
      %v600 = vadd.f32 0.0, %v599
      %601 = vmatmul.bf16.gmra.mxu0 %v534
      %v602 = vpop.f32.mrf.mxu0
      %v603 = vadd.f32 0.0, %v602
      %v604 = vpop.f32.mrf.mxu0
      %v605 = vadd.f32 0.0, %v604
      %606 = vmatmul.bf16.gmra.mxu0 %v537
      %v607 = vpop.f32.mrf.mxu0
      %v608 = vadd.f32 0.0, %v607
      %v609 = vpop.f32.mrf.mxu0
      %v610 = vadd.f32 0.0, %v609
      %611 = vmatmul.bf16.gmra.mxu0 %v540
      %v612 = vpop.f32.mrf.mxu0
      %v613 = vadd.f32 0.0, %v612
      %v614 = vpop.f32.mrf.mxu0
      %v615 = vadd.f32 0.0, %v614
      %616 = vmatmul.bf16.gmra.mxu0 %v543
      %v617 = vpop.f32.mrf.mxu0
      %v618 = vadd.f32 0.0, %v617
      %v619 = vpop.f32.mrf.mxu0
      %v620 = vadd.f32 0.0, %v619
      %621 = vmatmul.bf16.gmra.mxu0 %v546
      %v622 = vpop.f32.mrf.mxu0
      %v623 = vadd.f32 0.0, %v622
      %v624 = vpop.f32.mrf.mxu0
      %v625 = vadd.f32 0.0, %v624
      %626 = vmatmul.bf16.gmra.mxu0 %v549
      %v627 = vpop.f32.mrf.mxu0
      %v628 = vadd.f32 0.0, %v627
      %v629 = vpop.f32.mrf.mxu0
      %v630 = vadd.f32 0.0, %v629
      %631 = vmatmul.bf16.gmra.mxu0 %v552
      %v632 = vpop.f32.mrf.mxu0
      %v633 = vadd.f32 0.0, %v632
      %v634 = vpop.f32.mrf.mxu0
      %v635 = vadd.f32 0.0, %v634
      %636 = vmatmul.bf16.gmra.mxu0 %v555
      %v637 = vpop.f32.mrf.mxu0
      %v638 = vadd.f32 0.0, %v637
      %v639 = vpop.f32.mrf.mxu0
      %v640 = vadd.f32 0.0, %v639
      %641 = vmatmul.bf16.gmra.mxu0 %v558
      %v642 = vpop.f32.mrf.mxu0
      %v643 = vadd.f32 0.0, %v642
      %v644 = vpop.f32.mrf.mxu0
      %v645 = vadd.f32 0.0, %v644
      %646 = vmatmul.bf16.gmra.mxu0 %v561
      %v647 = vpop.f32.mrf.mxu0
      %v648 = vadd.f32 0.0, %v647
      %v649 = vpop.f32.mrf.mxu0
      %v650 = vadd.f32 0.0, %v649
      %651 = vdwg.mxu0
      %v656 = vunpack.c.l.b16 %v316
      %v657 = vunpack.c.l.b16 %v317
      %v658 = vunpack.c.l.b16 %v318
      %v659 = vunpack.c.l.b16 %v319
      %v660 = vpack.c.b16 %v657, %v656
      %v661 = vpack.c.b16 %v659, %v658
      %v665 = vsel %vm514, %v300, 0
      %v668 = vsel %vm514, %v301, 0
      %v671 = vsel %vm514, %v302, 0
      %v674 = vsel %vm514, %v303, 0
      %v677 = vsel %vm514, %v304, 0
      %v680 = vsel %vm514, %v305, 0
      %v683 = vsel %vm514, %v306, 0
      %v686 = vsel %vm514, %v307, 0
      %v689 = vsel %vm514, %v308, 0
      %v692 = vsel %vm514, %v309, 0
      %v695 = vsel %vm514, %v310, 0
      %v698 = vsel %vm514, %v311, 0
      %v701 = vsel %vm514, %v312, 0
      %v704 = vsel %vm514, %v313, 0
      %v707 = vsel %vm514, %v314, 0
      %v710 = vsel %vm514, %v315, 0
      %712 = vmatpush.bf16.msra.mxu0 0
      %713 = vmatpush.bf16.msra.mxu0 0
      %714 = vmatpush.bf16.msra.mxu0 0
      %715 = vmatpush.bf16.msra.mxu0 0
      %716 = vmatpush.bf16.msra.mxu0 0
      %717 = vmatpush.bf16.msra.mxu0 0
      %718 = vmatpush.bf16.msra.mxu0 %v661
      %719 = vmatpush.bf16.msra.mxu0 %v660
      %720 = vmatmul.bf16.gmra.mxu0 %v665
      %v721 = vpop.f32.mrf.mxu0
      %v722 = vadd.f32 %v573, %v721
      %v723 = vpop.f32.mrf.mxu0
      %v724 = vadd.f32 %v575, %v723
      %725 = vmatmul.bf16.gmra.mxu0 %v668
      %v726 = vpop.f32.mrf.mxu0
      %v727 = vadd.f32 %v578, %v726
      %v728 = vpop.f32.mrf.mxu0
      %v729 = vadd.f32 %v580, %v728
      %730 = vmatmul.bf16.gmra.mxu0 %v671
      %v731 = vpop.f32.mrf.mxu0
      %v732 = vadd.f32 %v583, %v731
      %v733 = vpop.f32.mrf.mxu0
      %v734 = vadd.f32 %v585, %v733
      %735 = vmatmul.bf16.gmra.mxu0 %v674
      %v736 = vpop.f32.mrf.mxu0
      %v737 = vadd.f32 %v588, %v736
      %v738 = vpop.f32.mrf.mxu0
      %v739 = vadd.f32 %v590, %v738
      %740 = vmatmul.bf16.gmra.mxu0 %v677
      %v741 = vpop.f32.mrf.mxu0
      %v742 = vadd.f32 %v593, %v741
      %v743 = vpop.f32.mrf.mxu0
      %v744 = vadd.f32 %v595, %v743
      %745 = vmatmul.bf16.gmra.mxu0 %v680
      %v746 = vpop.f32.mrf.mxu0
      %v747 = vadd.f32 %v598, %v746
      %v748 = vpop.f32.mrf.mxu0
      %v749 = vadd.f32 %v600, %v748
      %750 = vmatmul.bf16.gmra.mxu0 %v683
      %v751 = vpop.f32.mrf.mxu0
      %v752 = vadd.f32 %v603, %v751
      %v753 = vpop.f32.mrf.mxu0
      %v754 = vadd.f32 %v605, %v753
      %755 = vmatmul.bf16.gmra.mxu0 %v686
      %v756 = vpop.f32.mrf.mxu0
      %v757 = vadd.f32 %v608, %v756
      %v758 = vpop.f32.mrf.mxu0
      %v759 = vadd.f32 %v610, %v758
      %760 = vmatmul.bf16.gmra.mxu0 %v689
      %v761 = vpop.f32.mrf.mxu0
      %v762 = vadd.f32 %v613, %v761
      %v763 = vpop.f32.mrf.mxu0
      %v764 = vadd.f32 %v615, %v763
      %765 = vmatmul.bf16.gmra.mxu0 %v692
      %v766 = vpop.f32.mrf.mxu0
      %v767 = vadd.f32 %v618, %v766
      %v768 = vpop.f32.mrf.mxu0
      %v769 = vadd.f32 %v620, %v768
      %770 = vmatmul.bf16.gmra.mxu0 %v695
      %v771 = vpop.f32.mrf.mxu0
      %v772 = vadd.f32 %v623, %v771
      %v773 = vpop.f32.mrf.mxu0
      %v774 = vadd.f32 %v625, %v773
      %775 = vmatmul.bf16.gmra.mxu0 %v698
      %v776 = vpop.f32.mrf.mxu0
      %v777 = vadd.f32 %v628, %v776
      %v778 = vpop.f32.mrf.mxu0
      %v779 = vadd.f32 %v630, %v778
      %780 = vmatmul.bf16.gmra.mxu0 %v701
      %v781 = vpop.f32.mrf.mxu0
      %v782 = vadd.f32 %v633, %v781
      %v783 = vpop.f32.mrf.mxu0
      %v784 = vadd.f32 %v635, %v783
      %785 = vmatmul.bf16.gmra.mxu0 %v704
      %v786 = vpop.f32.mrf.mxu0
      %v787 = vadd.f32 %v638, %v786
      %v788 = vpop.f32.mrf.mxu0
      %v789 = vadd.f32 %v640, %v788
      %790 = vmatmul.bf16.gmra.mxu0 %v707
      %v791 = vpop.f32.mrf.mxu0
      %v792 = vadd.f32 %v643, %v791
      %v793 = vpop.f32.mrf.mxu0
      %v794 = vadd.f32 %v645, %v793
      %795 = vmatmul.bf16.gmra.mxu0 %v710
      %v796 = vpop.f32.mrf.mxu0
      %v797 = vadd.f32 %v648, %v796
      %v798 = vpop.f32.mrf.mxu0
      %v799 = vadd.f32 %v650, %v798
      %800 = vdwg.mxu0
      %vm801 = vcmask 1045504
      %v802 = vrot.slane %v246, 2
      %v803 = vrot.slane %v247, 2
      %v804 = vsel %vm801, %v802, %v803
      %v805 = vrot.slane %v248, 2
      %v806 = vsel %vm801, %v803, %v805
      %v807 = vrot.slane %v249, 2
      %v808 = vrot.slane %v250, 2
      %v809 = vsel %vm801, %v807, %v808
      %v810 = vrot.slane %v251, 2
      %v811 = vsel %vm801, %v808, %v810
      %v812 = vrot.slane %v252, 2
      %v813 = vrot.slane %v253, 2
      %v814 = vsel %vm801, %v812, %v813
      %v815 = vrot.slane %v254, 2
      %v816 = vsel %vm801, %v813, %v815
      %v817 = vrot.slane %v255, 2
      %v818 = vrot.slane %v256, 2
      %v819 = vsel %vm801, %v817, %v818
      %v820 = vrot.slane %v257, 2
      %v821 = vsel %vm801, %v818, %v820
      %v822 = vrot.slane %v258, 2
      %v823 = vrot.slane %v259, 2
      %v824 = vsel %vm801, %v822, %v823
      %v825 = vrot.slane %v260, 2
      %v826 = vsel %vm801, %v823, %v825
      %v827 = vrot.slane %v261, 2
      %v828 = vrot.slane %v262, 2
      %v829 = vsel %vm801, %v827, %v828
      %v830 = vrot.slane %v263, 2
      %v831 = vsel %vm801, %v828, %v830
      %v832 = vrot.slane %v264, 2
      %v833 = vrot.slane %v265, 2
      %v834 = vsel %vm801, %v832, %v833
      %v835 = vrot.slane %v266, 2
      %v836 = vsel %vm801, %v833, %v835
      %v837 = vrot.slane %v267, 2
      %v838 = vrot.slane %v268, 2
      %v839 = vsel %vm801, %v837, %v838
      %v840 = vrot.slane %v269, 2
      %v841 = vsel %vm801, %v838, %v840
      %v842 = vrot.slane %v270, 2
      %v843 = vrot.slane %v271, 2
      %v844 = vsel %vm801, %v842, %v843
      %v845 = vrot.slane %v272, 2
      %v846 = vsel %vm801, %v843, %v845
      %v847 = vrot.slane %v273, 2
      %v848 = vrot.slane %v274, 2
      %v849 = vsel %vm801, %v847, %v848
      %v850 = vrot.slane %v275, 2
      %v851 = vsel %vm801, %v848, %v850
      %v852 = vrot.slane %v276, 2
      %v853 = vrot.slane %v277, 2
      %v854 = vsel %vm801, %v852, %v853
      %v855 = vrot.slane %v278, 2
      %v856 = vsel %vm801, %v853, %v855
      %v857 = vrot.slane %v279, 2
      %v858 = vrot.slane %v280, 2
      %v859 = vsel %vm801, %v857, %v858
      %v860 = vrot.slane %v281, 2
      %v861 = vsel %vm801, %v858, %v860
      %v862 = vrot.slane %v282, 2
      %v863 = vrot.slane %v283, 2
      %v864 = vsel %vm801, %v862, %v863
      %v865 = vrot.slane %v284, 2
      %v866 = vsel %vm801, %v863, %v865
      %v867 = vrot.slane %v285, 2
      %v868 = vrot.slane %v286, 2
      %v869 = vsel %vm801, %v867, %v868
      %v870 = vrot.slane %v287, 2
      %v871 = vsel %vm801, %v868, %v870
      %v872 = vrot.slane %v288, 2
      %v873 = vrot.slane %v289, 2
      %v874 = vsel %vm801, %v872, %v873
      %v875 = vrot.slane %v290, 2
      %v876 = vsel %vm801, %v873, %v875
      %v877 = vrot.slane %v291, 2
      %v878 = vrot.slane %v292, 2
      %v879 = vsel %vm801, %v877, %v878
      %v880 = vrot.slane %v293, 2
      %v881 = vsel %vm801, %v878, %v880
      %v914 = vpack.c.bf16 %v806, %v804
      %v915 = vpack.c.bf16 %v811, %v809
      %v916 = vpack.c.bf16 %v816, %v814
      %v917 = vpack.c.bf16 %v821, %v819
      %v918 = vpack.c.bf16 %v826, %v824
      %v919 = vpack.c.bf16 %v831, %v829
      %v920 = vpack.c.bf16 %v836, %v834
      %v921 = vpack.c.bf16 %v841, %v839
      %v922 = vpack.c.bf16 %v846, %v844
      %v923 = vpack.c.bf16 %v851, %v849
      %v924 = vpack.c.bf16 %v856, %v854
      %v925 = vpack.c.bf16 %v861, %v859
      %v926 = vpack.c.bf16 %v866, %v864
      %v927 = vpack.c.bf16 %v871, %v869
      %v928 = vpack.c.bf16 %v876, %v874
      %v929 = vpack.c.bf16 %v881, %v879
      %s930 = scalar_lea.vmem %s1, 32
      %v931 = vld [vmem:[%s930] sm:$0xf]
      %v932 = vld [vmem:[%s930 + $0x4] sm:$0xf]
      %v933 = vld [vmem:[%s930 + $0x8] sm:$0xf]
      %v934 = vld [vmem:[%s930 + $0xc] sm:$0xf]
      %v939 = vunpack.c.l.b16 %v931
      %v940 = vunpack.c.l.b16 %v932
      %v941 = vunpack.c.l.b16 %v933
      %v942 = vunpack.c.l.b16 %v934
      %v943 = vpack.c.b16 %v940, %v939
      %v944 = vpack.c.b16 %v942, %v941
      %v948 = vsel %vm514, %v914, 0
      %v951 = vsel %vm514, %v915, 0
      %v954 = vsel %vm514, %v916, 0
      %v957 = vsel %vm514, %v917, 0
      %v960 = vsel %vm514, %v918, 0
      %v963 = vsel %vm514, %v919, 0
      %v966 = vsel %vm514, %v920, 0
      %v969 = vsel %vm514, %v921, 0
      %v972 = vsel %vm514, %v922, 0
      %v975 = vsel %vm514, %v923, 0
      %v978 = vsel %vm514, %v924, 0
      %v981 = vsel %vm514, %v925, 0
      %v984 = vsel %vm514, %v926, 0
      %v987 = vsel %vm514, %v927, 0
      %v990 = vsel %vm514, %v928, 0
      %v993 = vsel %vm514, %v929, 0
      %995 = vmatpush.bf16.msra.mxu0 0
      %996 = vmatpush.bf16.msra.mxu0 0
      %997 = vmatpush.bf16.msra.mxu0 0
      %998 = vmatpush.bf16.msra.mxu0 0
      %999 = vmatpush.bf16.msra.mxu0 0
      %1000 = vmatpush.bf16.msra.mxu0 0
      %1001 = vmatpush.bf16.msra.mxu0 %v944
      %1002 = vmatpush.bf16.msra.mxu0 %v943
      %1003 = vmatmul.bf16.gmra.mxu0 %v948
      %v1004 = vpop.f32.mrf.mxu0
      %v1005 = vadd.f32 0.0, %v1004
      %v1006 = vpop.f32.mrf.mxu0
      %v1007 = vadd.f32 0.0, %v1006
      %1008 = vmatmul.bf16.gmra.mxu0 %v951
      %v1009 = vpop.f32.mrf.mxu0
      %v1010 = vadd.f32 0.0, %v1009
      %v1011 = vpop.f32.mrf.mxu0
      %v1012 = vadd.f32 0.0, %v1011
      %1013 = vmatmul.bf16.gmra.mxu0 %v954
      %v1014 = vpop.f32.mrf.mxu0
      %v1015 = vadd.f32 0.0, %v1014
      %v1016 = vpop.f32.mrf.mxu0
      %v1017 = vadd.f32 0.0, %v1016
      %1018 = vmatmul.bf16.gmra.mxu0 %v957
      %v1019 = vpop.f32.mrf.mxu0
      %v1020 = vadd.f32 0.0, %v1019
      %v1021 = vpop.f32.mrf.mxu0
      %v1022 = vadd.f32 0.0, %v1021
      %1023 = vmatmul.bf16.gmra.mxu0 %v960
      %v1024 = vpop.f32.mrf.mxu0
      %v1025 = vadd.f32 0.0, %v1024
      %v1026 = vpop.f32.mrf.mxu0
      %v1027 = vadd.f32 0.0, %v1026
      %1028 = vmatmul.bf16.gmra.mxu0 %v963
      %v1029 = vpop.f32.mrf.mxu0
      %v1030 = vadd.f32 0.0, %v1029
      %v1031 = vpop.f32.mrf.mxu0
      %v1032 = vadd.f32 0.0, %v1031
      %1033 = vmatmul.bf16.gmra.mxu0 %v966
      %v1034 = vpop.f32.mrf.mxu0
      %v1035 = vadd.f32 0.0, %v1034
      %v1036 = vpop.f32.mrf.mxu0
      %v1037 = vadd.f32 0.0, %v1036
      %1038 = vmatmul.bf16.gmra.mxu0 %v969
      %v1039 = vpop.f32.mrf.mxu0
      %v1040 = vadd.f32 0.0, %v1039
      %v1041 = vpop.f32.mrf.mxu0
      %v1042 = vadd.f32 0.0, %v1041
      %1043 = vmatmul.bf16.gmra.mxu0 %v972
      %v1044 = vpop.f32.mrf.mxu0
      %v1045 = vadd.f32 0.0, %v1044
      %v1046 = vpop.f32.mrf.mxu0
      %v1047 = vadd.f32 0.0, %v1046
      %1048 = vmatmul.bf16.gmra.mxu0 %v975
      %v1049 = vpop.f32.mrf.mxu0
      %v1050 = vadd.f32 0.0, %v1049
      %v1051 = vpop.f32.mrf.mxu0
      %v1052 = vadd.f32 0.0, %v1051
      %1053 = vmatmul.bf16.gmra.mxu0 %v978
      %v1054 = vpop.f32.mrf.mxu0
      %v1055 = vadd.f32 0.0, %v1054
      %v1056 = vpop.f32.mrf.mxu0
      %v1057 = vadd.f32 0.0, %v1056
      %1058 = vmatmul.bf16.gmra.mxu0 %v981
      %v1059 = vpop.f32.mrf.mxu0
      %v1060 = vadd.f32 0.0, %v1059
      %v1061 = vpop.f32.mrf.mxu0
      %v1062 = vadd.f32 0.0, %v1061
      %1063 = vmatmul.bf16.gmra.mxu0 %v984
      %v1064 = vpop.f32.mrf.mxu0
      %v1065 = vadd.f32 0.0, %v1064
      %v1066 = vpop.f32.mrf.mxu0
      %v1067 = vadd.f32 0.0, %v1066
      %1068 = vmatmul.bf16.gmra.mxu0 %v987
      %v1069 = vpop.f32.mrf.mxu0
      %v1070 = vadd.f32 0.0, %v1069
      %v1071 = vpop.f32.mrf.mxu0
      %v1072 = vadd.f32 0.0, %v1071
      %1073 = vmatmul.bf16.gmra.mxu0 %v990
      %v1074 = vpop.f32.mrf.mxu0
      %v1075 = vadd.f32 0.0, %v1074
      %v1076 = vpop.f32.mrf.mxu0
      %v1077 = vadd.f32 0.0, %v1076
      %1078 = vmatmul.bf16.gmra.mxu0 %v993
      %v1079 = vpop.f32.mrf.mxu0
      %v1080 = vadd.f32 0.0, %v1079
      %v1081 = vpop.f32.mrf.mxu0
      %v1082 = vadd.f32 0.0, %v1081
      %1083 = vdwg.mxu0
      %v1084 = vadd.f32 %v722, %v1005
      %v1085 = vadd.f32 %v724, %v1007
      %v1086 = vadd.f32 %v727, %v1010
      %v1087 = vadd.f32 %v729, %v1012
      %v1088 = vadd.f32 %v732, %v1015
      %v1089 = vadd.f32 %v734, %v1017
      %v1090 = vadd.f32 %v737, %v1020
      %v1091 = vadd.f32 %v739, %v1022
      %v1092 = vadd.f32 %v742, %v1025
      %v1093 = vadd.f32 %v744, %v1027
      %v1094 = vadd.f32 %v747, %v1030
      %v1095 = vadd.f32 %v749, %v1032
      %v1096 = vadd.f32 %v752, %v1035
      %v1097 = vadd.f32 %v754, %v1037
      %v1098 = vadd.f32 %v757, %v1040
      %v1099 = vadd.f32 %v759, %v1042
      %v1100 = vadd.f32 %v762, %v1045
      %v1101 = vadd.f32 %v764, %v1047
      %v1102 = vadd.f32 %v767, %v1050
      %v1103 = vadd.f32 %v769, %v1052
      %v1104 = vadd.f32 %v772, %v1055
      %v1105 = vadd.f32 %v774, %v1057
      %v1106 = vadd.f32 %v777, %v1060
      %v1107 = vadd.f32 %v779, %v1062
      %v1108 = vadd.f32 %v782, %v1065
      %v1109 = vadd.f32 %v784, %v1067
      %v1110 = vadd.f32 %v787, %v1070
      %v1111 = vadd.f32 %v789, %v1072
      %v1112 = vadd.f32 %v792, %v1075
      %v1113 = vadd.f32 %v794, %v1077
      %v1114 = vadd.f32 %v797, %v1080
      %v1115 = vadd.f32 %v799, %v1082
      %v1116 = vpack.c.bf16 %v295, %v294
      %s1117 = scalar_lea.vmem %s1, 48
      %v1118 = vld [vmem:[%s1117] sm:$0xf]
      %v1119 = vld [vmem:[%s1117 + $0x4] sm:$0xf]
      %v1120 = vld [vmem:[%s1117 + $0x8] sm:$0xf]
      %v1121 = vld [vmem:[%s1117 + $0xc] sm:$0xf]
      %v1126 = vunpack.c.l.b16 %v1118
      %v1127 = vunpack.c.l.b16 %v1119
      %v1128 = vunpack.c.l.b16 %v1120
      %v1129 = vunpack.c.l.b16 %v1121
      %v1130 = vpack.c.b16 %v1127, %v1126
      %v1131 = vpack.c.b16 %v1129, %v1128
      %v1135 = vsel %vm514, %v1116, 0
      %1137 = vmatpush.bf16.msra.mxu0 0
      %1138 = vmatpush.bf16.msra.mxu0 0
      %1139 = vmatpush.bf16.msra.mxu0 0
      %1140 = vmatpush.bf16.msra.mxu0 0
      %1141 = vmatpush.bf16.msra.mxu0 0
      %1142 = vmatpush.bf16.msra.mxu0 0
      %1143 = vmatpush.bf16.msra.mxu0 %v1131
      %1144 = vmatpush.bf16.msra.mxu0 %v1130
      %1145 = vmatmul.bf16.gmra.mxu0 %v668
      %v1146 = vpop.f32.mrf.mxu0
      %v1147 = vadd.f32 0.0, %v1146
      %v1148 = vpop.f32.mrf.mxu0
      %v1149 = vadd.f32 0.0, %v1148
      %1150 = vmatmul.bf16.gmra.mxu0 %v671
      %v1151 = vpop.f32.mrf.mxu0
      %v1152 = vadd.f32 0.0, %v1151
      %v1153 = vpop.f32.mrf.mxu0
      %v1154 = vadd.f32 0.0, %v1153
      %1155 = vmatmul.bf16.gmra.mxu0 %v674
      %v1156 = vpop.f32.mrf.mxu0
      %v1157 = vadd.f32 0.0, %v1156
      %v1158 = vpop.f32.mrf.mxu0
      %v1159 = vadd.f32 0.0, %v1158
      %1160 = vmatmul.bf16.gmra.mxu0 %v677
      %v1161 = vpop.f32.mrf.mxu0
      %v1162 = vadd.f32 0.0, %v1161
      %v1163 = vpop.f32.mrf.mxu0
      %v1164 = vadd.f32 0.0, %v1163
      %1165 = vmatmul.bf16.gmra.mxu0 %v680
      %v1166 = vpop.f32.mrf.mxu0
      %v1167 = vadd.f32 0.0, %v1166
      %v1168 = vpop.f32.mrf.mxu0
      %v1169 = vadd.f32 0.0, %v1168
      %1170 = vmatmul.bf16.gmra.mxu0 %v683
      %v1171 = vpop.f32.mrf.mxu0
      %v1172 = vadd.f32 0.0, %v1171
      %v1173 = vpop.f32.mrf.mxu0
      %v1174 = vadd.f32 0.0, %v1173
      %1175 = vmatmul.bf16.gmra.mxu0 %v686
      %v1176 = vpop.f32.mrf.mxu0
      %v1177 = vadd.f32 0.0, %v1176
      %v1178 = vpop.f32.mrf.mxu0
      %v1179 = vadd.f32 0.0, %v1178
      %1180 = vmatmul.bf16.gmra.mxu0 %v689
      %v1181 = vpop.f32.mrf.mxu0
      %v1182 = vadd.f32 0.0, %v1181
      %v1183 = vpop.f32.mrf.mxu0
      %v1184 = vadd.f32 0.0, %v1183
      %1185 = vmatmul.bf16.gmra.mxu0 %v692
      %v1186 = vpop.f32.mrf.mxu0
      %v1187 = vadd.f32 0.0, %v1186
      %v1188 = vpop.f32.mrf.mxu0
      %v1189 = vadd.f32 0.0, %v1188
      %1190 = vmatmul.bf16.gmra.mxu0 %v695
      %v1191 = vpop.f32.mrf.mxu0
      %v1192 = vadd.f32 0.0, %v1191
      %v1193 = vpop.f32.mrf.mxu0
      %v1194 = vadd.f32 0.0, %v1193
      %1195 = vmatmul.bf16.gmra.mxu0 %v698
      %v1196 = vpop.f32.mrf.mxu0
      %v1197 = vadd.f32 0.0, %v1196
      %v1198 = vpop.f32.mrf.mxu0
      %v1199 = vadd.f32 0.0, %v1198
      %1200 = vmatmul.bf16.gmra.mxu0 %v701
      %v1201 = vpop.f32.mrf.mxu0
      %v1202 = vadd.f32 0.0, %v1201
      %v1203 = vpop.f32.mrf.mxu0
      %v1204 = vadd.f32 0.0, %v1203
      %1205 = vmatmul.bf16.gmra.mxu0 %v704
      %v1206 = vpop.f32.mrf.mxu0
      %v1207 = vadd.f32 0.0, %v1206
      %v1208 = vpop.f32.mrf.mxu0
      %v1209 = vadd.f32 0.0, %v1208
      %1210 = vmatmul.bf16.gmra.mxu0 %v707
      %v1211 = vpop.f32.mrf.mxu0
      %v1212 = vadd.f32 0.0, %v1211
      %v1213 = vpop.f32.mrf.mxu0
      %v1214 = vadd.f32 0.0, %v1213
      %1215 = vmatmul.bf16.gmra.mxu0 %v710
      %v1216 = vpop.f32.mrf.mxu0
      %v1217 = vadd.f32 0.0, %v1216
      %v1218 = vpop.f32.mrf.mxu0
      %v1219 = vadd.f32 0.0, %v1218
      %1220 = vmatmul.bf16.gmra.mxu0 %v1135
      %v1221 = vpop.f32.mrf.mxu0
      %v1222 = vadd.f32 0.0, %v1221
      %v1223 = vpop.f32.mrf.mxu0
      %v1224 = vadd.f32 0.0, %v1223
      %1225 = vdwg.mxu0
      %v1226 = vadd.f32 %v1084, %v1147
      %v1227 = vadd.f32 %v1085, %v1149
      %v1228 = vadd.f32 %v1086, %v1152
      %v1229 = vadd.f32 %v1087, %v1154
      %v1230 = vadd.f32 %v1088, %v1157
      %v1231 = vadd.f32 %v1089, %v1159
      %v1232 = vadd.f32 %v1090, %v1162
      %v1233 = vadd.f32 %v1091, %v1164
      %v1234 = vadd.f32 %v1092, %v1167
      %v1235 = vadd.f32 %v1093, %v1169
      %v1236 = vadd.f32 %v1094, %v1172
      %v1237 = vadd.f32 %v1095, %v1174
      %v1238 = vadd.f32 %v1096, %v1177
      %v1239 = vadd.f32 %v1097, %v1179
      %v1240 = vadd.f32 %v1098, %v1182
      %v1241 = vadd.f32 %v1099, %v1184
      %v1242 = vadd.f32 %v1100, %v1187
      %v1243 = vadd.f32 %v1101, %v1189
      %v1244 = vadd.f32 %v1102, %v1192
      %v1245 = vadd.f32 %v1103, %v1194
      %v1246 = vadd.f32 %v1104, %v1197
      %v1247 = vadd.f32 %v1105, %v1199
      %v1248 = vadd.f32 %v1106, %v1202
      %v1249 = vadd.f32 %v1107, %v1204
      %v1250 = vadd.f32 %v1108, %v1207
      %v1251 = vadd.f32 %v1109, %v1209
      %v1252 = vadd.f32 %v1110, %v1212
      %v1253 = vadd.f32 %v1111, %v1214
      %v1254 = vadd.f32 %v1112, %v1217
      %v1255 = vadd.f32 %v1113, %v1219
      %v1256 = vadd.f32 %v1114, %v1222
      %v1257 = vadd.f32 %v1115, %v1224
      %v1261 = vrot.slane %v294, 1
      %v1262 = vrot.slane %v295, 1
      %v1263 = vsel %vm368, %v1261, %v1262
      %v1264 = vrot.slane %v296, 1
      %v1265 = vsel %vm368, %v1262, %v1264
      %v1268 = vpack.c.bf16 %v1265, %v1263
      %s1269 = scalar_lea.vmem %s1, 64
      %v1270 = vld [vmem:[%s1269] sm:$0xf]
      %v1271 = vld [vmem:[%s1269 + $0x4] sm:$0xf]
      %v1272 = vld [vmem:[%s1269 + $0x8] sm:$0xf]
      %v1273 = vld [vmem:[%s1269 + $0xc] sm:$0xf]
      %v1278 = vunpack.c.l.b16 %v1270
      %v1279 = vunpack.c.l.b16 %v1271
      %v1280 = vunpack.c.l.b16 %v1272
      %v1281 = vunpack.c.l.b16 %v1273
      %v1282 = vpack.c.b16 %v1279, %v1278
      %v1283 = vpack.c.b16 %v1281, %v1280
      %v1287 = vsel %vm514, %v1268, 0
      %1289 = vmatpush.bf16.msra.mxu0 0
      %1290 = vmatpush.bf16.msra.mxu0 0
      %1291 = vmatpush.bf16.msra.mxu0 0
      %1292 = vmatpush.bf16.msra.mxu0 0
      %1293 = vmatpush.bf16.msra.mxu0 0
      %1294 = vmatpush.bf16.msra.mxu0 0
      %1295 = vmatpush.bf16.msra.mxu0 %v1283
      %1296 = vmatpush.bf16.msra.mxu0 %v1282
      %1297 = vmatmul.bf16.gmra.mxu0 %v519
      %v1298 = vpop.f32.mrf.mxu0
      %v1299 = vadd.f32 0.0, %v1298
      %v1300 = vpop.f32.mrf.mxu0
      %v1301 = vadd.f32 0.0, %v1300
      %1302 = vmatmul.bf16.gmra.mxu0 %v522
      %v1303 = vpop.f32.mrf.mxu0
      %v1304 = vadd.f32 0.0, %v1303
      %v1305 = vpop.f32.mrf.mxu0
      %v1306 = vadd.f32 0.0, %v1305
      %1307 = vmatmul.bf16.gmra.mxu0 %v525
      %v1308 = vpop.f32.mrf.mxu0
      %v1309 = vadd.f32 0.0, %v1308
      %v1310 = vpop.f32.mrf.mxu0
      %v1311 = vadd.f32 0.0, %v1310
      %1312 = vmatmul.bf16.gmra.mxu0 %v528
      %v1313 = vpop.f32.mrf.mxu0
      %v1314 = vadd.f32 0.0, %v1313
      %v1315 = vpop.f32.mrf.mxu0
      %v1316 = vadd.f32 0.0, %v1315
      %1317 = vmatmul.bf16.gmra.mxu0 %v531
      %v1318 = vpop.f32.mrf.mxu0
      %v1319 = vadd.f32 0.0, %v1318
      %v1320 = vpop.f32.mrf.mxu0
      %v1321 = vadd.f32 0.0, %v1320
      %1322 = vmatmul.bf16.gmra.mxu0 %v534
      %v1323 = vpop.f32.mrf.mxu0
      %v1324 = vadd.f32 0.0, %v1323
      %v1325 = vpop.f32.mrf.mxu0
      %v1326 = vadd.f32 0.0, %v1325
      %1327 = vmatmul.bf16.gmra.mxu0 %v537
      %v1328 = vpop.f32.mrf.mxu0
      %v1329 = vadd.f32 0.0, %v1328
      %v1330 = vpop.f32.mrf.mxu0
      %v1331 = vadd.f32 0.0, %v1330
      %1332 = vmatmul.bf16.gmra.mxu0 %v540
      %v1333 = vpop.f32.mrf.mxu0
      %v1334 = vadd.f32 0.0, %v1333
      %v1335 = vpop.f32.mrf.mxu0
      %v1336 = vadd.f32 0.0, %v1335
      %1337 = vmatmul.bf16.gmra.mxu0 %v543
      %v1338 = vpop.f32.mrf.mxu0
      %v1339 = vadd.f32 0.0, %v1338
      %v1340 = vpop.f32.mrf.mxu0
      %v1341 = vadd.f32 0.0, %v1340
      %1342 = vmatmul.bf16.gmra.mxu0 %v546
      %v1343 = vpop.f32.mrf.mxu0
      %v1344 = vadd.f32 0.0, %v1343
      %v1345 = vpop.f32.mrf.mxu0
      %v1346 = vadd.f32 0.0, %v1345
      %1347 = vmatmul.bf16.gmra.mxu0 %v549
      %v1348 = vpop.f32.mrf.mxu0
      %v1349 = vadd.f32 0.0, %v1348
      %v1350 = vpop.f32.mrf.mxu0
      %v1351 = vadd.f32 0.0, %v1350
      %1352 = vmatmul.bf16.gmra.mxu0 %v552
      %v1353 = vpop.f32.mrf.mxu0
      %v1354 = vadd.f32 0.0, %v1353
      %v1355 = vpop.f32.mrf.mxu0
      %v1356 = vadd.f32 0.0, %v1355
      %1357 = vmatmul.bf16.gmra.mxu0 %v555
      %v1358 = vpop.f32.mrf.mxu0
      %v1359 = vadd.f32 0.0, %v1358
      %v1360 = vpop.f32.mrf.mxu0
      %v1361 = vadd.f32 0.0, %v1360
      %1362 = vmatmul.bf16.gmra.mxu0 %v558
      %v1363 = vpop.f32.mrf.mxu0
      %v1364 = vadd.f32 0.0, %v1363
      %v1365 = vpop.f32.mrf.mxu0
      %v1366 = vadd.f32 0.0, %v1365
      %1367 = vmatmul.bf16.gmra.mxu0 %v561
      %v1368 = vpop.f32.mrf.mxu0
      %v1369 = vadd.f32 0.0, %v1368
      %v1370 = vpop.f32.mrf.mxu0
      %v1371 = vadd.f32 0.0, %v1370
      %1372 = vmatmul.bf16.gmra.mxu0 %v1287
      %v1373 = vpop.f32.mrf.mxu0
      %v1374 = vadd.f32 0.0, %v1373
      %v1375 = vpop.f32.mrf.mxu0
      %v1376 = vadd.f32 0.0, %v1375
      %1377 = vdwg.mxu0
      %v1378 = vadd.f32 %v1226, %v1299
      %v1379 = vadd.f32 %v1227, %v1301
      %v1380 = vadd.f32 %v1228, %v1304
      %v1381 = vadd.f32 %v1229, %v1306
      %v1382 = vadd.f32 %v1230, %v1309
      %v1383 = vadd.f32 %v1231, %v1311
      %v1384 = vadd.f32 %v1232, %v1314
      %v1385 = vadd.f32 %v1233, %v1316
      %v1386 = vadd.f32 %v1234, %v1319
      %v1387 = vadd.f32 %v1235, %v1321
      %v1388 = vadd.f32 %v1236, %v1324
      %v1389 = vadd.f32 %v1237, %v1326
      %v1390 = vadd.f32 %v1238, %v1329
      %v1391 = vadd.f32 %v1239, %v1331
      %v1392 = vadd.f32 %v1240, %v1334
      %v1393 = vadd.f32 %v1241, %v1336
      %v1394 = vadd.f32 %v1242, %v1339
      %v1395 = vadd.f32 %v1243, %v1341
      %v1396 = vadd.f32 %v1244, %v1344
      %v1397 = vadd.f32 %v1245, %v1346
      %v1398 = vadd.f32 %v1246, %v1349
      %v1399 = vadd.f32 %v1247, %v1351
      %v1400 = vadd.f32 %v1248, %v1354
      %v1401 = vadd.f32 %v1249, %v1356
      %v1402 = vadd.f32 %v1250, %v1359
      %v1403 = vadd.f32 %v1251, %v1361
      %v1404 = vadd.f32 %v1252, %v1364
      %v1405 = vadd.f32 %v1253, %v1366
      %v1406 = vadd.f32 %v1254, %v1369
      %v1407 = vadd.f32 %v1255, %v1371
      %v1408 = vadd.f32 %v1256, %v1374
      %v1409 = vadd.f32 %v1257, %v1376
      %v1410 = vrot.slane %v294, 2
      %v1411 = vrot.slane %v295, 2
      %v1412 = vsel %vm801, %v1410, %v1411
      %v1413 = vrot.slane %v296, 2
      %v1414 = vsel %vm801, %v1411, %v1413
      %v1417 = vpack.c.bf16 %v1414, %v1412
      %s1418 = scalar_lea.vmem %s1, 80
      %v1419 = vld [vmem:[%s1418] sm:$0xf]
      %v1420 = vld [vmem:[%s1418 + $0x4] sm:$0xf]
      %v1421 = vld [vmem:[%s1418 + $0x8] sm:$0xf]
      %v1422 = vld [vmem:[%s1418 + $0xc] sm:$0xf]
      %v1427 = vunpack.c.l.b16 %v1419
      %v1428 = vunpack.c.l.b16 %v1420
      %v1429 = vunpack.c.l.b16 %v1421
      %v1430 = vunpack.c.l.b16 %v1422
      %v1431 = vpack.c.b16 %v1428, %v1427
      %v1432 = vpack.c.b16 %v1430, %v1429
      %v1436 = vsel %vm514, %v1417, 0
      %1438 = vmatpush.bf16.msra.mxu0 0
      %1439 = vmatpush.bf16.msra.mxu0 0
      %1440 = vmatpush.bf16.msra.mxu0 0
      %1441 = vmatpush.bf16.msra.mxu0 0
      %1442 = vmatpush.bf16.msra.mxu0 0
      %1443 = vmatpush.bf16.msra.mxu0 0
      %1444 = vmatpush.bf16.msra.mxu0 %v1432
      %1445 = vmatpush.bf16.msra.mxu0 %v1431
      %1446 = vmatmul.bf16.gmra.mxu0 %v951
      %v1447 = vpop.f32.mrf.mxu0
      %v1448 = vadd.f32 0.0, %v1447
      %v1449 = vpop.f32.mrf.mxu0
      %v1450 = vadd.f32 0.0, %v1449
      %1451 = vmatmul.bf16.gmra.mxu0 %v954
      %v1452 = vpop.f32.mrf.mxu0
      %v1453 = vadd.f32 0.0, %v1452
      %v1454 = vpop.f32.mrf.mxu0
      %v1455 = vadd.f32 0.0, %v1454
      %1456 = vmatmul.bf16.gmra.mxu0 %v957
      %v1457 = vpop.f32.mrf.mxu0
      %v1458 = vadd.f32 0.0, %v1457
      %v1459 = vpop.f32.mrf.mxu0
      %v1460 = vadd.f32 0.0, %v1459
      %1461 = vmatmul.bf16.gmra.mxu0 %v960
      %v1462 = vpop.f32.mrf.mxu0
      %v1463 = vadd.f32 0.0, %v1462
      %v1464 = vpop.f32.mrf.mxu0
      %v1465 = vadd.f32 0.0, %v1464
      %1466 = vmatmul.bf16.gmra.mxu0 %v963
      %v1467 = vpop.f32.mrf.mxu0
      %v1468 = vadd.f32 0.0, %v1467
      %v1469 = vpop.f32.mrf.mxu0
      %v1470 = vadd.f32 0.0, %v1469
      %1471 = vmatmul.bf16.gmra.mxu0 %v966
      %v1472 = vpop.f32.mrf.mxu0
      %v1473 = vadd.f32 0.0, %v1472
      %v1474 = vpop.f32.mrf.mxu0
      %v1475 = vadd.f32 0.0, %v1474
      %1476 = vmatmul.bf16.gmra.mxu0 %v969
      %v1477 = vpop.f32.mrf.mxu0
      %v1478 = vadd.f32 0.0, %v1477
      %v1479 = vpop.f32.mrf.mxu0
      %v1480 = vadd.f32 0.0, %v1479
      %1481 = vmatmul.bf16.gmra.mxu0 %v972
      %v1482 = vpop.f32.mrf.mxu0
      %v1483 = vadd.f32 0.0, %v1482
      %v1484 = vpop.f32.mrf.mxu0
      %v1485 = vadd.f32 0.0, %v1484
      %1486 = vmatmul.bf16.gmra.mxu0 %v975
      %v1487 = vpop.f32.mrf.mxu0
      %v1488 = vadd.f32 0.0, %v1487
      %v1489 = vpop.f32.mrf.mxu0
      %v1490 = vadd.f32 0.0, %v1489
      %1491 = vmatmul.bf16.gmra.mxu0 %v978
      %v1492 = vpop.f32.mrf.mxu0
      %v1493 = vadd.f32 0.0, %v1492
      %v1494 = vpop.f32.mrf.mxu0
      %v1495 = vadd.f32 0.0, %v1494
      %1496 = vmatmul.bf16.gmra.mxu0 %v981
      %v1497 = vpop.f32.mrf.mxu0
      %v1498 = vadd.f32 0.0, %v1497
      %v1499 = vpop.f32.mrf.mxu0
      %v1500 = vadd.f32 0.0, %v1499
      %1501 = vmatmul.bf16.gmra.mxu0 %v984
      %v1502 = vpop.f32.mrf.mxu0
      %v1503 = vadd.f32 0.0, %v1502
      %v1504 = vpop.f32.mrf.mxu0
      %v1505 = vadd.f32 0.0, %v1504
      %1506 = vmatmul.bf16.gmra.mxu0 %v987
      %v1507 = vpop.f32.mrf.mxu0
      %v1508 = vadd.f32 0.0, %v1507
      %v1509 = vpop.f32.mrf.mxu0
      %v1510 = vadd.f32 0.0, %v1509
      %1511 = vmatmul.bf16.gmra.mxu0 %v990
      %v1512 = vpop.f32.mrf.mxu0
      %v1513 = vadd.f32 0.0, %v1512
      %v1514 = vpop.f32.mrf.mxu0
      %v1515 = vadd.f32 0.0, %v1514
      %1516 = vmatmul.bf16.gmra.mxu0 %v993
      %v1517 = vpop.f32.mrf.mxu0
      %v1518 = vadd.f32 0.0, %v1517
      %v1519 = vpop.f32.mrf.mxu0
      %v1520 = vadd.f32 0.0, %v1519
      %1521 = vmatmul.bf16.gmra.mxu0 %v1436
      %v1522 = vpop.f32.mrf.mxu0
      %v1523 = vadd.f32 0.0, %v1522
      %v1524 = vpop.f32.mrf.mxu0
      %v1525 = vadd.f32 0.0, %v1524
      %1526 = vdwg.mxu0
      %v1527 = vadd.f32 %v1378, %v1448
      %v1528 = vadd.f32 %v1379, %v1450
      %v1529 = vadd.f32 %v1380, %v1453
      %v1530 = vadd.f32 %v1381, %v1455
      %v1531 = vadd.f32 %v1382, %v1458
      %v1532 = vadd.f32 %v1383, %v1460
      %v1533 = vadd.f32 %v1384, %v1463
      %v1534 = vadd.f32 %v1385, %v1465
      %v1535 = vadd.f32 %v1386, %v1468
      %v1536 = vadd.f32 %v1387, %v1470
      %v1537 = vadd.f32 %v1388, %v1473
      %v1538 = vadd.f32 %v1389, %v1475
      %v1539 = vadd.f32 %v1390, %v1478
      %v1540 = vadd.f32 %v1391, %v1480
      %v1541 = vadd.f32 %v1392, %v1483
      %v1542 = vadd.f32 %v1393, %v1485
      %v1543 = vadd.f32 %v1394, %v1488
      %v1544 = vadd.f32 %v1395, %v1490
      %v1545 = vadd.f32 %v1396, %v1493
      %v1546 = vadd.f32 %v1397, %v1495
      %v1547 = vadd.f32 %v1398, %v1498
      %v1548 = vadd.f32 %v1399, %v1500
      %v1549 = vadd.f32 %v1400, %v1503
      %v1550 = vadd.f32 %v1401, %v1505
      %v1551 = vadd.f32 %v1402, %v1508
      %v1552 = vadd.f32 %v1403, %v1510
      %v1553 = vadd.f32 %v1404, %v1513
      %v1554 = vadd.f32 %v1405, %v1515
      %v1555 = vadd.f32 %v1406, %v1518
      %v1556 = vadd.f32 %v1407, %v1520
      %v1557 = vadd.f32 %v1408, %v1523
      %v1558 = vadd.f32 %v1409, %v1525
      %v1559 = vpack.c.bf16 %v298, %v297
      %s1560 = scalar_lea.vmem %s1, 96
      %v1561 = vld [vmem:[%s1560] sm:$0xf]
      %v1562 = vld [vmem:[%s1560 + $0x4] sm:$0xf]
      %v1563 = vld [vmem:[%s1560 + $0x8] sm:$0xf]
      %v1564 = vld [vmem:[%s1560 + $0xc] sm:$0xf]
      %v1569 = vunpack.c.l.b16 %v1561
      %v1570 = vunpack.c.l.b16 %v1562
      %v1571 = vunpack.c.l.b16 %v1563
      %v1572 = vunpack.c.l.b16 %v1564
      %v1573 = vpack.c.b16 %v1570, %v1569
      %v1574 = vpack.c.b16 %v1572, %v1571
      %v1578 = vsel %vm514, %v1559, 0
      %1580 = vmatpush.bf16.msra.mxu0 0
      %1581 = vmatpush.bf16.msra.mxu0 0
      %1582 = vmatpush.bf16.msra.mxu0 0
      %1583 = vmatpush.bf16.msra.mxu0 0
      %1584 = vmatpush.bf16.msra.mxu0 0
      %1585 = vmatpush.bf16.msra.mxu0 0
      %1586 = vmatpush.bf16.msra.mxu0 %v1574
      %1587 = vmatpush.bf16.msra.mxu0 %v1573
      %1588 = vmatmul.bf16.gmra.mxu0 %v671
      %v1589 = vpop.f32.mrf.mxu0
      %v1590 = vadd.f32 0.0, %v1589
      %v1591 = vpop.f32.mrf.mxu0
      %v1592 = vadd.f32 0.0, %v1591
      %1593 = vmatmul.bf16.gmra.mxu0 %v674
      %v1594 = vpop.f32.mrf.mxu0
      %v1595 = vadd.f32 0.0, %v1594
      %v1596 = vpop.f32.mrf.mxu0
      %v1597 = vadd.f32 0.0, %v1596
      %1598 = vmatmul.bf16.gmra.mxu0 %v677
      %v1599 = vpop.f32.mrf.mxu0
      %v1600 = vadd.f32 0.0, %v1599
      %v1601 = vpop.f32.mrf.mxu0
      %v1602 = vadd.f32 0.0, %v1601
      %1603 = vmatmul.bf16.gmra.mxu0 %v680
      %v1604 = vpop.f32.mrf.mxu0
      %v1605 = vadd.f32 0.0, %v1604
      %v1606 = vpop.f32.mrf.mxu0
      %v1607 = vadd.f32 0.0, %v1606
      %1608 = vmatmul.bf16.gmra.mxu0 %v683
      %v1609 = vpop.f32.mrf.mxu0
      %v1610 = vadd.f32 0.0, %v1609
      %v1611 = vpop.f32.mrf.mxu0
      %v1612 = vadd.f32 0.0, %v1611
      %1613 = vmatmul.bf16.gmra.mxu0 %v686
      %v1614 = vpop.f32.mrf.mxu0
      %v1615 = vadd.f32 0.0, %v1614
      %v1616 = vpop.f32.mrf.mxu0
      %v1617 = vadd.f32 0.0, %v1616
      %1618 = vmatmul.bf16.gmra.mxu0 %v689
      %v1619 = vpop.f32.mrf.mxu0
      %v1620 = vadd.f32 0.0, %v1619
      %v1621 = vpop.f32.mrf.mxu0
      %v1622 = vadd.f32 0.0, %v1621
      %1623 = vmatmul.bf16.gmra.mxu0 %v692
      %v1624 = vpop.f32.mrf.mxu0
      %v1625 = vadd.f32 0.0, %v1624
      %v1626 = vpop.f32.mrf.mxu0
      %v1627 = vadd.f32 0.0, %v1626
      %1628 = vmatmul.bf16.gmra.mxu0 %v695
      %v1629 = vpop.f32.mrf.mxu0
      %v1630 = vadd.f32 0.0, %v1629
      %v1631 = vpop.f32.mrf.mxu0
      %v1632 = vadd.f32 0.0, %v1631
      %1633 = vmatmul.bf16.gmra.mxu0 %v698
      %v1634 = vpop.f32.mrf.mxu0
      %v1635 = vadd.f32 0.0, %v1634
      %v1636 = vpop.f32.mrf.mxu0
      %v1637 = vadd.f32 0.0, %v1636
      %1638 = vmatmul.bf16.gmra.mxu0 %v701
      %v1639 = vpop.f32.mrf.mxu0
      %v1640 = vadd.f32 0.0, %v1639
      %v1641 = vpop.f32.mrf.mxu0
      %v1642 = vadd.f32 0.0, %v1641
      %1643 = vmatmul.bf16.gmra.mxu0 %v704
      %v1644 = vpop.f32.mrf.mxu0
      %v1645 = vadd.f32 0.0, %v1644
      %v1646 = vpop.f32.mrf.mxu0
      %v1647 = vadd.f32 0.0, %v1646
      %1648 = vmatmul.bf16.gmra.mxu0 %v707
      %v1649 = vpop.f32.mrf.mxu0
      %v1650 = vadd.f32 0.0, %v1649
      %v1651 = vpop.f32.mrf.mxu0
      %v1652 = vadd.f32 0.0, %v1651
      %1653 = vmatmul.bf16.gmra.mxu0 %v710
      %v1654 = vpop.f32.mrf.mxu0
      %v1655 = vadd.f32 0.0, %v1654
      %v1656 = vpop.f32.mrf.mxu0
      %v1657 = vadd.f32 0.0, %v1656
      %1658 = vmatmul.bf16.gmra.mxu0 %v1135
      %v1659 = vpop.f32.mrf.mxu0
      %v1660 = vadd.f32 0.0, %v1659
      %v1661 = vpop.f32.mrf.mxu0
      %v1662 = vadd.f32 0.0, %v1661
      %1663 = vmatmul.bf16.gmra.mxu0 %v1578
      %v1664 = vpop.f32.mrf.mxu0
      %v1665 = vadd.f32 0.0, %v1664
      %v1666 = vpop.f32.mrf.mxu0
      %v1667 = vadd.f32 0.0, %v1666
      %1668 = vdwg.mxu0
      %v1669 = vadd.f32 %v1527, %v1590
      %v1670 = vadd.f32 %v1528, %v1592
      %v1671 = vadd.f32 %v1529, %v1595
      %v1672 = vadd.f32 %v1530, %v1597
      %v1673 = vadd.f32 %v1531, %v1600
      %v1674 = vadd.f32 %v1532, %v1602
      %v1675 = vadd.f32 %v1533, %v1605
      %v1676 = vadd.f32 %v1534, %v1607
      %v1677 = vadd.f32 %v1535, %v1610
      %v1678 = vadd.f32 %v1536, %v1612
      %v1679 = vadd.f32 %v1537, %v1615
      %v1680 = vadd.f32 %v1538, %v1617
      %v1681 = vadd.f32 %v1539, %v1620
      %v1682 = vadd.f32 %v1540, %v1622
      %v1683 = vadd.f32 %v1541, %v1625
      %v1684 = vadd.f32 %v1542, %v1627
      %v1685 = vadd.f32 %v1543, %v1630
      %v1686 = vadd.f32 %v1544, %v1632
      %v1687 = vadd.f32 %v1545, %v1635
      %v1688 = vadd.f32 %v1546, %v1637
      %v1689 = vadd.f32 %v1547, %v1640
      %v1690 = vadd.f32 %v1548, %v1642
      %v1691 = vadd.f32 %v1549, %v1645
      %v1692 = vadd.f32 %v1550, %v1647
      %v1693 = vadd.f32 %v1551, %v1650
      %v1694 = vadd.f32 %v1552, %v1652
      %v1695 = vadd.f32 %v1553, %v1655
      %v1696 = vadd.f32 %v1554, %v1657
      %v1697 = vadd.f32 %v1555, %v1660
      %v1698 = vadd.f32 %v1556, %v1662
      %v1699 = vadd.f32 %v1557, %v1665
      %v1700 = vadd.f32 %v1558, %v1667
      %v1704 = vrot.slane %v297, 1
      %v1705 = vrot.slane %v298, 1
      %v1706 = vsel %vm368, %v1704, %v1705
      %v1707 = vrot.slane %v299, 1
      %v1708 = vsel %vm368, %v1705, %v1707
      %v1711 = vpack.c.bf16 %v1708, %v1706
      %s1712 = scalar_lea.vmem %s1, 112
      %v1713 = vld [vmem:[%s1712] sm:$0xf]
      %v1714 = vld [vmem:[%s1712 + $0x4] sm:$0xf]
      %v1715 = vld [vmem:[%s1712 + $0x8] sm:$0xf]
      %v1716 = vld [vmem:[%s1712 + $0xc] sm:$0xf]
      %v1721 = vunpack.c.l.b16 %v1713
      %v1722 = vunpack.c.l.b16 %v1714
      %v1723 = vunpack.c.l.b16 %v1715
      %v1724 = vunpack.c.l.b16 %v1716
      %v1725 = vpack.c.b16 %v1722, %v1721
      %v1726 = vpack.c.b16 %v1724, %v1723
      %v1730 = vsel %vm514, %v1711, 0
      %1732 = vmatpush.bf16.msra.mxu0 0
      %1733 = vmatpush.bf16.msra.mxu0 0
      %1734 = vmatpush.bf16.msra.mxu0 0
      %1735 = vmatpush.bf16.msra.mxu0 0
      %1736 = vmatpush.bf16.msra.mxu0 0
      %1737 = vmatpush.bf16.msra.mxu0 0
      %1738 = vmatpush.bf16.msra.mxu0 %v1726
      %1739 = vmatpush.bf16.msra.mxu0 %v1725
      %1740 = vmatmul.bf16.gmra.mxu0 %v522
      %v1741 = vpop.f32.mrf.mxu0
      %v1742 = vadd.f32 0.0, %v1741
      %v1743 = vpop.f32.mrf.mxu0
      %v1744 = vadd.f32 0.0, %v1743
      %1745 = vmatmul.bf16.gmra.mxu0 %v525
      %v1746 = vpop.f32.mrf.mxu0
      %v1747 = vadd.f32 0.0, %v1746
      %v1748 = vpop.f32.mrf.mxu0
      %v1749 = vadd.f32 0.0, %v1748
      %1750 = vmatmul.bf16.gmra.mxu0 %v528
      %v1751 = vpop.f32.mrf.mxu0
      %v1752 = vadd.f32 0.0, %v1751
      %v1753 = vpop.f32.mrf.mxu0
      %v1754 = vadd.f32 0.0, %v1753
      %1755 = vmatmul.bf16.gmra.mxu0 %v531
      %v1756 = vpop.f32.mrf.mxu0
      %v1757 = vadd.f32 0.0, %v1756
      %v1758 = vpop.f32.mrf.mxu0
      %v1759 = vadd.f32 0.0, %v1758
      %1760 = vmatmul.bf16.gmra.mxu0 %v534
      %v1761 = vpop.f32.mrf.mxu0
      %v1762 = vadd.f32 0.0, %v1761
      %v1763 = vpop.f32.mrf.mxu0
      %v1764 = vadd.f32 0.0, %v1763
      %1765 = vmatmul.bf16.gmra.mxu0 %v537
      %v1766 = vpop.f32.mrf.mxu0
      %v1767 = vadd.f32 0.0, %v1766
      %v1768 = vpop.f32.mrf.mxu0
      %v1769 = vadd.f32 0.0, %v1768
      %1770 = vmatmul.bf16.gmra.mxu0 %v540
      %v1771 = vpop.f32.mrf.mxu0
      %v1772 = vadd.f32 0.0, %v1771
      %v1773 = vpop.f32.mrf.mxu0
      %v1774 = vadd.f32 0.0, %v1773
      %1775 = vmatmul.bf16.gmra.mxu0 %v543
      %v1776 = vpop.f32.mrf.mxu0
      %v1777 = vadd.f32 0.0, %v1776
      %v1778 = vpop.f32.mrf.mxu0
      %v1779 = vadd.f32 0.0, %v1778
      %1780 = vmatmul.bf16.gmra.mxu0 %v546
      %v1781 = vpop.f32.mrf.mxu0
      %v1782 = vadd.f32 0.0, %v1781
      %v1783 = vpop.f32.mrf.mxu0
      %v1784 = vadd.f32 0.0, %v1783
      %1785 = vmatmul.bf16.gmra.mxu0 %v549
      %v1786 = vpop.f32.mrf.mxu0
      %v1787 = vadd.f32 0.0, %v1786
      %v1788 = vpop.f32.mrf.mxu0
      %v1789 = vadd.f32 0.0, %v1788
      %1790 = vmatmul.bf16.gmra.mxu0 %v552
      %v1791 = vpop.f32.mrf.mxu0
      %v1792 = vadd.f32 0.0, %v1791
      %v1793 = vpop.f32.mrf.mxu0
      %v1794 = vadd.f32 0.0, %v1793
      %1795 = vmatmul.bf16.gmra.mxu0 %v555
      %v1796 = vpop.f32.mrf.mxu0
      %v1797 = vadd.f32 0.0, %v1796
      %v1798 = vpop.f32.mrf.mxu0
      %v1799 = vadd.f32 0.0, %v1798
      %1800 = vmatmul.bf16.gmra.mxu0 %v558
      %v1801 = vpop.f32.mrf.mxu0
      %v1802 = vadd.f32 0.0, %v1801
      %v1803 = vpop.f32.mrf.mxu0
      %v1804 = vadd.f32 0.0, %v1803
      %1805 = vmatmul.bf16.gmra.mxu0 %v561
      %v1806 = vpop.f32.mrf.mxu0
      %v1807 = vadd.f32 0.0, %v1806
      %v1808 = vpop.f32.mrf.mxu0
      %v1809 = vadd.f32 0.0, %v1808
      %1810 = vmatmul.bf16.gmra.mxu0 %v1287
      %v1811 = vpop.f32.mrf.mxu0
      %v1812 = vadd.f32 0.0, %v1811
      %v1813 = vpop.f32.mrf.mxu0
      %v1814 = vadd.f32 0.0, %v1813
      %1815 = vmatmul.bf16.gmra.mxu0 %v1730
      %v1816 = vpop.f32.mrf.mxu0
      %v1817 = vadd.f32 0.0, %v1816
      %v1818 = vpop.f32.mrf.mxu0
      %v1819 = vadd.f32 0.0, %v1818
      %1820 = vdwg.mxu0
      %v1821 = vadd.f32 %v1669, %v1742
      %v1822 = vadd.f32 %v1670, %v1744
      %v1823 = vadd.f32 %v1671, %v1747
      %v1824 = vadd.f32 %v1672, %v1749
      %v1825 = vadd.f32 %v1673, %v1752
      %v1826 = vadd.f32 %v1674, %v1754
      %v1827 = vadd.f32 %v1675, %v1757
      %v1828 = vadd.f32 %v1676, %v1759
      %v1829 = vadd.f32 %v1677, %v1762
      %v1830 = vadd.f32 %v1678, %v1764
      %v1831 = vadd.f32 %v1679, %v1767
      %v1832 = vadd.f32 %v1680, %v1769
      %v1833 = vadd.f32 %v1681, %v1772
      %v1834 = vadd.f32 %v1682, %v1774
      %v1835 = vadd.f32 %v1683, %v1777
      %v1836 = vadd.f32 %v1684, %v1779
      %v1837 = vadd.f32 %v1685, %v1782
      %v1838 = vadd.f32 %v1686, %v1784
      %v1839 = vadd.f32 %v1687, %v1787
      %v1840 = vadd.f32 %v1688, %v1789
      %v1841 = vadd.f32 %v1689, %v1792
      %v1842 = vadd.f32 %v1690, %v1794
      %v1843 = vadd.f32 %v1691, %v1797
      %v1844 = vadd.f32 %v1692, %v1799
      %v1845 = vadd.f32 %v1693, %v1802
      %v1846 = vadd.f32 %v1694, %v1804
      %v1847 = vadd.f32 %v1695, %v1807
      %v1848 = vadd.f32 %v1696, %v1809
      %v1849 = vadd.f32 %v1697, %v1812
      %v1850 = vadd.f32 %v1698, %v1814
      %v1851 = vadd.f32 %v1699, %v1817
      %v1852 = vadd.f32 %v1700, %v1819
      %v1853 = vrot.slane %v297, 2
      %v1854 = vrot.slane %v298, 2
      %v1855 = vsel %vm801, %v1853, %v1854
      %v1856 = vrot.slane %v299, 2
      %v1857 = vsel %vm801, %v1854, %v1856
      %v1860 = vpack.c.bf16 %v1857, %v1855
      %s1861 = scalar_lea.vmem %s1, 128
      %v1862 = vld [vmem:[%s1861] sm:$0xf]
      %v1863 = vld [vmem:[%s1861 + $0x4] sm:$0xf]
      %v1864 = vld [vmem:[%s1861 + $0x8] sm:$0xf]
      %v1865 = vld [vmem:[%s1861 + $0xc] sm:$0xf]
      %v1870 = vunpack.c.l.b16 %v1862
      %v1871 = vunpack.c.l.b16 %v1863
      %v1872 = vunpack.c.l.b16 %v1864
      %v1873 = vunpack.c.l.b16 %v1865
      %v1874 = vpack.c.b16 %v1871, %v1870
      %v1875 = vpack.c.b16 %v1873, %v1872
      %v1879 = vsel %vm514, %v1860, 0
      %1881 = vmatpush.bf16.msra.mxu0 0
      %1882 = vmatpush.bf16.msra.mxu0 0
      %1883 = vmatpush.bf16.msra.mxu0 0
      %1884 = vmatpush.bf16.msra.mxu0 0
      %1885 = vmatpush.bf16.msra.mxu0 0
      %1886 = vmatpush.bf16.msra.mxu0 0
      %1887 = vmatpush.bf16.msra.mxu0 %v1875
      %1888 = vmatpush.bf16.msra.mxu0 %v1874
      %1889 = vmatmul.bf16.gmra.mxu0 %v954
      %v1890 = vpop.f32.mrf.mxu0
      %v1891 = vadd.f32 0.0, %v1890
      %v1892 = vpop.f32.mrf.mxu0
      %v1893 = vadd.f32 0.0, %v1892
      %1894 = vmatmul.bf16.gmra.mxu0 %v957
      %v1895 = vpop.f32.mrf.mxu0
      %v1896 = vadd.f32 0.0, %v1895
      %v1897 = vpop.f32.mrf.mxu0
      %v1898 = vadd.f32 0.0, %v1897
      %1899 = vmatmul.bf16.gmra.mxu0 %v960
      %v1900 = vpop.f32.mrf.mxu0
      %v1901 = vadd.f32 0.0, %v1900
      %v1902 = vpop.f32.mrf.mxu0
      %v1903 = vadd.f32 0.0, %v1902
      %1904 = vmatmul.bf16.gmra.mxu0 %v963
      %v1905 = vpop.f32.mrf.mxu0
      %v1906 = vadd.f32 0.0, %v1905
      %v1907 = vpop.f32.mrf.mxu0
      %v1908 = vadd.f32 0.0, %v1907
      %1909 = vmatmul.bf16.gmra.mxu0 %v966
      %v1910 = vpop.f32.mrf.mxu0
      %v1911 = vadd.f32 0.0, %v1910
      %v1912 = vpop.f32.mrf.mxu0
      %v1913 = vadd.f32 0.0, %v1912
      %1914 = vmatmul.bf16.gmra.mxu0 %v969
      %v1915 = vpop.f32.mrf.mxu0
      %v1916 = vadd.f32 0.0, %v1915
      %v1917 = vpop.f32.mrf.mxu0
      %v1918 = vadd.f32 0.0, %v1917
      %1919 = vmatmul.bf16.gmra.mxu0 %v972
      %v1920 = vpop.f32.mrf.mxu0
      %v1921 = vadd.f32 0.0, %v1920
      %v1922 = vpop.f32.mrf.mxu0
      %v1923 = vadd.f32 0.0, %v1922
      %1924 = vmatmul.bf16.gmra.mxu0 %v975
      %v1925 = vpop.f32.mrf.mxu0
      %v1926 = vadd.f32 0.0, %v1925
      %v1927 = vpop.f32.mrf.mxu0
      %v1928 = vadd.f32 0.0, %v1927
      %1929 = vmatmul.bf16.gmra.mxu0 %v978
      %v1930 = vpop.f32.mrf.mxu0
      %v1931 = vadd.f32 0.0, %v1930
      %v1932 = vpop.f32.mrf.mxu0
      %v1933 = vadd.f32 0.0, %v1932
      %1934 = vmatmul.bf16.gmra.mxu0 %v981
      %v1935 = vpop.f32.mrf.mxu0
      %v1936 = vadd.f32 0.0, %v1935
      %v1937 = vpop.f32.mrf.mxu0
      %v1938 = vadd.f32 0.0, %v1937
      %1939 = vmatmul.bf16.gmra.mxu0 %v984
      %v1940 = vpop.f32.mrf.mxu0
      %v1941 = vadd.f32 0.0, %v1940
      %v1942 = vpop.f32.mrf.mxu0
      %v1943 = vadd.f32 0.0, %v1942
      %1944 = vmatmul.bf16.gmra.mxu0 %v987
      %v1945 = vpop.f32.mrf.mxu0
      %v1946 = vadd.f32 0.0, %v1945
      %v1947 = vpop.f32.mrf.mxu0
      %v1948 = vadd.f32 0.0, %v1947
      %1949 = vmatmul.bf16.gmra.mxu0 %v990
      %v1950 = vpop.f32.mrf.mxu0
      %v1951 = vadd.f32 0.0, %v1950
      %v1952 = vpop.f32.mrf.mxu0
      %v1953 = vadd.f32 0.0, %v1952
      %1954 = vmatmul.bf16.gmra.mxu0 %v993
      %v1955 = vpop.f32.mrf.mxu0
      %v1956 = vadd.f32 0.0, %v1955
      %v1957 = vpop.f32.mrf.mxu0
      %v1958 = vadd.f32 0.0, %v1957
      %1959 = vmatmul.bf16.gmra.mxu0 %v1436
      %v1960 = vpop.f32.mrf.mxu0
      %v1961 = vadd.f32 0.0, %v1960
      %v1962 = vpop.f32.mrf.mxu0
      %v1963 = vadd.f32 0.0, %v1962
      %1964 = vmatmul.bf16.gmra.mxu0 %v1879
      %v1965 = vpop.f32.mrf.mxu0
      %v1966 = vadd.f32 0.0, %v1965
      %v1967 = vpop.f32.mrf.mxu0
      %v1968 = vadd.f32 0.0, %v1967
      %1969 = vdwg.mxu0
      %v1970 = vadd.f32 %v1821, %v1891
      %v1971 = vadd.f32 %v1822, %v1893
      %v1972 = vadd.f32 %v1823, %v1896
      %v1973 = vadd.f32 %v1824, %v1898
      %v1974 = vadd.f32 %v1825, %v1901
      %v1975 = vadd.f32 %v1826, %v1903
      %v1976 = vadd.f32 %v1827, %v1906
      %v1977 = vadd.f32 %v1828, %v1908
      %v1978 = vadd.f32 %v1829, %v1911
      %v1979 = vadd.f32 %v1830, %v1913
      %v1980 = vadd.f32 %v1831, %v1916
      %v1981 = vadd.f32 %v1832, %v1918
      %v1982 = vadd.f32 %v1833, %v1921
      %v1983 = vadd.f32 %v1834, %v1923
      %v1984 = vadd.f32 %v1835, %v1926
      %v1985 = vadd.f32 %v1836, %v1928
      %v1986 = vadd.f32 %v1837, %v1931
      %v1987 = vadd.f32 %v1838, %v1933
      %v1988 = vadd.f32 %v1839, %v1936
      %v1989 = vadd.f32 %v1840, %v1938
      %v1990 = vadd.f32 %v1841, %v1941
      %v1991 = vadd.f32 %v1842, %v1943
      %v1992 = vadd.f32 %v1843, %v1946
      %v1993 = vadd.f32 %v1844, %v1948
      %v1994 = vadd.f32 %v1845, %v1951
      %v1995 = vadd.f32 %v1846, %v1953
      %v1996 = vadd.f32 %v1847, %v1956
      %v1997 = vadd.f32 %v1848, %v1958
      %v1998 = vadd.f32 %v1849, %v1961
      %v1999 = vadd.f32 %v1850, %v1963
      %v2000 = vadd.f32 %v1851, %v1966
      %v2001 = vadd.f32 %v1852, %v1968
      %v2002 = vld [vmem:[%s2] sm:$0x1]
      %v2004 = vperm.slane %v2002, 0
      %v2006 = vmul.f32 %v1970, %v2004
      %v2007 = vmul.f32 %v1971, %v2004
      %v2008 = vmul.f32 %v1972, %v2004
      %v2009 = vmul.f32 %v1973, %v2004
      %v2010 = vmul.f32 %v1974, %v2004
      %v2011 = vmul.f32 %v1975, %v2004
      %v2012 = vmul.f32 %v1976, %v2004
      %v2013 = vmul.f32 %v1977, %v2004
      %v2014 = vmul.f32 %v1978, %v2004
      %v2015 = vmul.f32 %v1979, %v2004
      %v2016 = vmul.f32 %v1980, %v2004
      %v2017 = vmul.f32 %v1981, %v2004
      %v2018 = vmul.f32 %v1982, %v2004
      %v2019 = vmul.f32 %v1983, %v2004
      %v2020 = vmul.f32 %v1984, %v2004
      %v2021 = vmul.f32 %v1985, %v2004
      %v2022 = vmul.f32 %v1986, %v2004
      %v2023 = vmul.f32 %v1987, %v2004
      %v2024 = vmul.f32 %v1988, %v2004
      %v2025 = vmul.f32 %v1989, %v2004
      %v2026 = vmul.f32 %v1990, %v2004
      %v2027 = vmul.f32 %v1991, %v2004
      %v2028 = vmul.f32 %v1992, %v2004
      %v2029 = vmul.f32 %v1993, %v2004
      %v2030 = vmul.f32 %v1994, %v2004
      %v2031 = vmul.f32 %v1995, %v2004
      %v2032 = vmul.f32 %v1996, %v2004
      %v2033 = vmul.f32 %v1997, %v2004
      %v2034 = vmul.f32 %v1998, %v2004
      %v2035 = vmul.f32 %v1999, %v2004
      %v2036 = vmul.f32 %v2000, %v2004
      %v2037 = vmul.f32 %v2001, %v2004
      %v2038 = vld [vmem:[%s3] sm:$0x1]
      %v2040 = vperm.slane %v2038, 0
      %v2042 = vadd.f32 %v2006, %v2040
      %v2043 = vadd.f32 %v2007, %v2040
      %v2044 = vadd.f32 %v2008, %v2040
      %v2045 = vadd.f32 %v2009, %v2040
      %v2046 = vadd.f32 %v2010, %v2040
      %v2047 = vadd.f32 %v2011, %v2040
      %v2048 = vadd.f32 %v2012, %v2040
      %v2049 = vadd.f32 %v2013, %v2040
      %v2050 = vadd.f32 %v2014, %v2040
      %v2051 = vadd.f32 %v2015, %v2040
      %v2052 = vadd.f32 %v2016, %v2040
      %v2053 = vadd.f32 %v2017, %v2040
      %v2054 = vadd.f32 %v2018, %v2040
      %v2055 = vadd.f32 %v2019, %v2040
      %v2056 = vadd.f32 %v2020, %v2040
      %v2057 = vadd.f32 %v2021, %v2040
      %v2058 = vadd.f32 %v2022, %v2040
      %v2059 = vadd.f32 %v2023, %v2040
      %v2060 = vadd.f32 %v2024, %v2040
      %v2061 = vadd.f32 %v2025, %v2040
      %v2062 = vadd.f32 %v2026, %v2040
      %v2063 = vadd.f32 %v2027, %v2040
      %v2064 = vadd.f32 %v2028, %v2040
      %v2065 = vadd.f32 %v2029, %v2040
      %v2066 = vadd.f32 %v2030, %v2040
      %v2067 = vadd.f32 %v2031, %v2040
      %v2068 = vadd.f32 %v2032, %v2040
      %v2069 = vadd.f32 %v2033, %v2040
      %v2070 = vadd.f32 %v2034, %v2040
      %v2071 = vadd.f32 %v2035, %v2040
      %v2072 = vadd.f32 %v2036, %v2040
      %v2073 = vadd.f32 %v2037, %v2040
      %v2074 = vld [vmem:[%s239] sm:$0xff]
      %v2075 = vld [vmem:[%s239 + $0x8] sm:$0xff]
      %v2076 = vld [vmem:[%s239 + $0x10] sm:$0xff]
      %v2077 = vld [vmem:[%s239 + $0x18] sm:$0xff]
      %v2078 = vld [vmem:[%s239 + $0x20] sm:$0xff]
      %v2079 = vld [vmem:[%s239 + $0x28] sm:$0xff]
      %v2080 = vld [vmem:[%s239 + $0x30] sm:$0xff]
      %v2081 = vld [vmem:[%s239 + $0x38] sm:$0xff]
      %v2082 = vld [vmem:[%s239 + $0x40] sm:$0xff]
      %v2083 = vld [vmem:[%s239 + $0x48] sm:$0xff]
      %v2084 = vld [vmem:[%s239 + $0x50] sm:$0xff]
      %v2085 = vld [vmem:[%s239 + $0x58] sm:$0xff]
      %v2086 = vld [vmem:[%s239 + $0x60] sm:$0xff]
      %v2087 = vld [vmem:[%s239 + $0x68] sm:$0xff]
      %v2088 = vld [vmem:[%s239 + $0x70] sm:$0xff]
      %v2089 = vld [vmem:[%s239 + $0x78] sm:$0xff]
      %v2090 = vld [vmem:[%s239 + $0x80] sm:$0xff]
      %v2091 = vld [vmem:[%s239 + $0x88] sm:$0xff]
      %v2092 = vld [vmem:[%s239 + $0x90] sm:$0xff]
      %v2093 = vld [vmem:[%s239 + $0x98] sm:$0xff]
      %v2094 = vld [vmem:[%s239 + $0xa0] sm:$0xff]
      %v2095 = vld [vmem:[%s239 + $0xa8] sm:$0xff]
      %v2096 = vld [vmem:[%s239 + $0xb0] sm:$0xff]
      %v2097 = vld [vmem:[%s239 + $0xb8] sm:$0xff]
      %v2098 = vld [vmem:[%s239 + $0xc0] sm:$0xff]
      %v2099 = vld [vmem:[%s239 + $0xc8] sm:$0xff]
      %v2100 = vld [vmem:[%s239 + $0xd0] sm:$0xff]
      %v2101 = vld [vmem:[%s239 + $0xd8] sm:$0xff]
      %v2102 = vld [vmem:[%s239 + $0xe0] sm:$0xff]
      %v2103 = vld [vmem:[%s239 + $0xe8] sm:$0xff]
      %v2104 = vld [vmem:[%s239 + $0xf0] sm:$0xff]
      %v2105 = vld [vmem:[%s239 + $0xf8] sm:$0xff]
      %v2106 = vadd.f32 %v2042, %v2074
      %v2107 = vadd.f32 %v2043, %v2075
      %v2108 = vadd.f32 %v2044, %v2076
      %v2109 = vadd.f32 %v2045, %v2077
      %v2110 = vadd.f32 %v2046, %v2078
      %v2111 = vadd.f32 %v2047, %v2079
      %v2112 = vadd.f32 %v2048, %v2080
      %v2113 = vadd.f32 %v2049, %v2081
      %v2114 = vadd.f32 %v2050, %v2082
      %v2115 = vadd.f32 %v2051, %v2083
      %v2116 = vadd.f32 %v2052, %v2084
      %v2117 = vadd.f32 %v2053, %v2085
      %v2118 = vadd.f32 %v2054, %v2086
      %v2119 = vadd.f32 %v2055, %v2087
      %v2120 = vadd.f32 %v2056, %v2088
      %v2121 = vadd.f32 %v2057, %v2089
      %v2122 = vadd.f32 %v2058, %v2090
      %v2123 = vadd.f32 %v2059, %v2091
      %v2124 = vadd.f32 %v2060, %v2092
      %v2125 = vadd.f32 %v2061, %v2093
      %v2126 = vadd.f32 %v2062, %v2094
      %v2127 = vadd.f32 %v2063, %v2095
      %v2128 = vadd.f32 %v2064, %v2096
      %v2129 = vadd.f32 %v2065, %v2097
      %v2130 = vadd.f32 %v2066, %v2098
      %v2131 = vadd.f32 %v2067, %v2099
      %v2132 = vadd.f32 %v2068, %v2100
      %v2133 = vadd.f32 %v2069, %v2101
      %v2134 = vadd.f32 %v2070, %v2102
      %v2135 = vadd.f32 %v2071, %v2103
      %v2136 = vadd.f32 %v2072, %v2104
      %v2137 = vadd.f32 %v2073, %v2105
      %v2138 = vmax.f32 %v2106, 0.0
      %v2139 = vmax.f32 %v2107, 0.0
      %v2140 = vmax.f32 %v2108, 0.0
      %v2141 = vmax.f32 %v2109, 0.0
      %v2142 = vmax.f32 %v2110, 0.0
      %v2143 = vmax.f32 %v2111, 0.0
      %v2144 = vmax.f32 %v2112, 0.0
      %v2145 = vmax.f32 %v2113, 0.0
      %v2146 = vmax.f32 %v2114, 0.0
      %v2147 = vmax.f32 %v2115, 0.0
      %v2148 = vmax.f32 %v2116, 0.0
      %v2149 = vmax.f32 %v2117, 0.0
      %v2150 = vmax.f32 %v2118, 0.0
      %v2151 = vmax.f32 %v2119, 0.0
      %v2152 = vmax.f32 %v2120, 0.0
      %v2153 = vmax.f32 %v2121, 0.0
      %v2154 = vmax.f32 %v2122, 0.0
      %v2155 = vmax.f32 %v2123, 0.0
      %v2156 = vmax.f32 %v2124, 0.0
      %v2157 = vmax.f32 %v2125, 0.0
      %v2158 = vmax.f32 %v2126, 0.0
      %v2159 = vmax.f32 %v2127, 0.0
      %v2160 = vmax.f32 %v2128, 0.0
      %v2161 = vmax.f32 %v2129, 0.0
      %v2162 = vmax.f32 %v2130, 0.0
      %v2163 = vmax.f32 %v2131, 0.0
      %v2164 = vmax.f32 %v2132, 0.0
      %v2165 = vmax.f32 %v2133, 0.0
      %v2166 = vmax.f32 %v2134, 0.0
      %v2167 = vmax.f32 %v2135, 0.0
      %v2168 = vmax.f32 %v2136, 0.0
      %v2169 = vmax.f32 %v2137, 0.0
      %2170 = vst.msk [vmem:[%s244] sm:$0xff] %vm514, %v2138
      %2171 = vst.msk [vmem:[%s244 + $0x8] sm:$0xff] %vm514, %v2139
      %2172 = vst.msk [vmem:[%s244 + $0x10] sm:$0xff] %vm514, %v2140
      %2173 = vst.msk [vmem:[%s244 + $0x18] sm:$0xff] %vm514, %v2141
      %2174 = vst.msk [vmem:[%s244 + $0x20] sm:$0xff] %vm514, %v2142
      %2175 = vst.msk [vmem:[%s244 + $0x28] sm:$0xff] %vm514, %v2143
      %2176 = vst.msk [vmem:[%s244 + $0x30] sm:$0xff] %vm514, %v2144
      %2177 = vst.msk [vmem:[%s244 + $0x38] sm:$0xff] %vm514, %v2145
      %2178 = vst.msk [vmem:[%s244 + $0x40] sm:$0xff] %vm514, %v2146
      %2179 = vst.msk [vmem:[%s244 + $0x48] sm:$0xff] %vm514, %v2147
      %2180 = vst.msk [vmem:[%s244 + $0x50] sm:$0xff] %vm514, %v2148
      %2181 = vst.msk [vmem:[%s244 + $0x58] sm:$0xff] %vm514, %v2149
      %2182 = vst.msk [vmem:[%s244 + $0x60] sm:$0xff] %vm514, %v2150
      %2183 = vst.msk [vmem:[%s244 + $0x68] sm:$0xff] %vm514, %v2151
      %2184 = vst.msk [vmem:[%s244 + $0x70] sm:$0xff] %vm514, %v2152
      %2185 = vst.msk [vmem:[%s244 + $0x78] sm:$0xff] %vm514, %v2153
      %2186 = vst.msk [vmem:[%s244 + $0x80] sm:$0xff] %vm514, %v2154
      %2187 = vst.msk [vmem:[%s244 + $0x88] sm:$0xff] %vm514, %v2155
      %2188 = vst.msk [vmem:[%s244 + $0x90] sm:$0xff] %vm514, %v2156
      %2189 = vst.msk [vmem:[%s244 + $0x98] sm:$0xff] %vm514, %v2157
      %2190 = vst.msk [vmem:[%s244 + $0xa0] sm:$0xff] %vm514, %v2158
      %2191 = vst.msk [vmem:[%s244 + $0xa8] sm:$0xff] %vm514, %v2159
      %2192 = vst.msk [vmem:[%s244 + $0xb0] sm:$0xff] %vm514, %v2160
      %2193 = vst.msk [vmem:[%s244 + $0xb8] sm:$0xff] %vm514, %v2161
      %2194 = vst.msk [vmem:[%s244 + $0xc0] sm:$0xff] %vm514, %v2162
      %2195 = vst.msk [vmem:[%s244 + $0xc8] sm:$0xff] %vm514, %v2163
      %2196 = vst.msk [vmem:[%s244 + $0xd0] sm:$0xff] %vm514, %v2164
      %2197 = vst.msk [vmem:[%s244 + $0xd8] sm:$0xff] %vm514, %v2165
      %2198 = vst.msk [vmem:[%s244 + $0xe0] sm:$0xff] %vm514, %v2166
      %2199 = vst.msk [vmem:[%s244 + $0xe8] sm:$0xff] %vm514, %v2167
      %2200 = vst.msk [vmem:[%s244 + $0xf0] sm:$0xff] %vm514, %v2168
      %2201 = vst.msk [vmem:[%s244 + $0xf8] sm:$0xff] %vm514, %v2169
      %p2202 = scmp.lt.s32.totalorder %s16, 1
      %s2203 = scalar_select %p2202, %s16, 1
      %s2204 = smul.addr %s2203, 32
      %s2205 = smul.addr %s2204, 8
      %s2206 = scalar_lea.vmem %s5, %s2205
      // Predicated region
      $region41: #{_lambda_.14} parent=39 // pred_check
        %p2207 = pneg %p149
      $region42: #{_lambda_.14} parent=39 // pred_check_branch
        %2209 = sbr.rel (%p2207) target = $region44
      $region43: #{_lambda_.14} parent=39 // pred_region
        _
      $region44: #{_lambda_.14} parent=39 // pred_fallthru
        _
    $region40: #{_lambda_.14} parent=5 // pred_fallthru
      _
    %p2210 = scmp.le.s32.totalorder 2, %s11
    // Predicated region
    $region45: #{_lambda_.14} parent=5 // pred_check
      %p2211 = pneg %p2210
    $region46: #{_lambda_.14} parent=5 // pred_check_branch
      %2213 = sbr.rel (%p2211) target = $region48
    $region47: #{_lambda_.14} parent=5 // pred_region
      %s2214 = ssub.s32 %s11, 2
      // Predicated region
      $region49: #{_lambda_.14} parent=47 // pred_check
        %p2215 = pneg %p155
      $region50: #{_lambda_.14} parent=47 // pred_check_branch
        %2217 = sbr.rel (%p2215) target = $region52
      $region51: #{_lambda_.14} parent=47 // pred_region
        %p2218 = scmp.lt.s32.totalorder %s17, 1
        %s2219 = scalar_select %p2218, %s17, 1
        %s2220 = smul.addr %s2219, 32
        %s2221 = smul.addr %s2220, 8
        %s2222 = scalar_lea.vmem %s5, %s2221
      $region52: #{_lambda_.14} parent=47 // pred_fallthru
        _
    $region48: #{_lambda_.14} parent=5 // pred_fallthru
      _
  $region6: #{_lambda_.14} parent=0 // loop_footer
    %s15 = sadd.s32 1, %s11
  $region7: #{_lambda_.14} parent=0 // loop_footer_branch
    %10 = sbr.rel target = $region3
  $region8: #{_lambda_.14} parent=0 // loop_exit
    _

// kernel: _lambda_.19
$region0: #{_lambda_.19}
  #allocation0 [shape = 'u32[]', space=smem, size = 0x4, offset = 0x4, fixed_abs, tag = 'smem constant byte address 0x4 - core index']
  #allocation1 [shape = 'u32[72,128]{1,0:T(1,128)}', space=vmem, size = 0x9000, scoped, tag = 'internal scratch']
  %s0 = inlined_call_operand.vmem [shape: f32[2,64,32], index: 0, kind: input, shape index: {}]
  %s1 = inlined_call_operand.vmem [shape: bf16[32,64], index: 1, kind: input, shape index: {}]
  %s2 = inlined_call_operand.vmem [shape: f32[1,64], index: 2, kind: input, shape index: {}]
  %s3 = inlined_call_operand.vmem [shape: f32[1,64], index: 3, kind: input, shape index: {}]
  %s4 = inlined_call_operand.vmem [shape: f32[2,64,64], index: 4, kind: output, shape index: {}]
  %s5 = sld [smem:[#allocation0]]
  $region49: #{_lambda_.19} parent=0
    _
  %s7 = ssub.s32 1, %s5
  %s8 = scalar_select 0, %s7, %s5
  loop: start=0, step=1, limit=4
  $region2: #{_lambda_.19} parent=0 // loop_pre_header
    _
  $region3: #{_lambda_.19} parent=0 // loop_header
    %s10 = sphi 0, %s14
    %p11 = scmp.ge.s32.totalorder %s10, 4
    %s17 = sphi 0, %s29
    %s18 = sphi 0, %s25
    %s19 = sphi 0, %s17
    %s20 = sphi 0, %s18
    %s21 = sphi 0, %s19
    %s22 = sphi 0, %s20
    %s34 = sphi 0, %s36
    %s37 = sphi 0, %s34
    %s38 = sphi 0, %s37
    %s54 = sphi 0, %s38
    %s58 = sphi 0, %s58
    %s60 = sphi 0, %s58
    %s61 = sphi 0, %s60
    %s75 = sphi 0, %s61
    %s79 = sphi 0, %s79
    %s81 = sphi 0, %s79
    %s82 = sphi 0, %s81
    %s96 = sphi 0, %s82
    %s100 = sphi 0, %s100
    %s102 = sphi 0, %s100
    %s103 = sphi 0, %s102
    %s117 = sphi 0, %s103
    %s125 = sphi 0, %s127
    %s128 = sphi 0, %s125
    %s129 = sphi 0, %s128
    %s145 = sphi 0, %s129
  $region4: #{_lambda_.19} parent=0 // loop_header_branch
    %13 = sbr.rel (%p11) target = $region8
  $region5: #{_lambda_.19} parent=0 // loop_body
    %s15 = ssub.s32 %s10, 1
    %s16 = ssub.s32 %s10, 2
    %s23 = sadd.s32 1, %s18
    %p24 = scmp.ge.s32.totalorder %s23, 1
    %s25 = scalar_select %p24, 0, %s23
    %s26 = sadd.s32 1, %s17
    %s27 = scalar_select %p24, %s26, %s17
    %p28 = scmp.ge.s32.totalorder %s27, 2
    %s29 = scalar_select %p28, 0, %s27
    %s30 = ssub.s32 %s17, %s29
    %s31 = ssub.s32 %s18, %s25
    %s32 = sor.u32 %s30, %s31
    %p33 = scmp.eq.s32.totalorder %s32, 0
    %s35 = sadd.s32 %s34, 1
    %s36 = scalar_select %p33, %s34, %s35
    %p39 = pneg %p33
    %p40 = scmp.eq.s32.totalorder %s10, 1
    %p41 = por %p39, %p40
    %p42 = scmp.ne.s32.totalorder %s34, %s37
    %p43 = scmp.eq.s32.totalorder %s10, 0
    %p44 = por %p42, %p43
    %p45 = scmp.ne.s32.totalorder %s34, %s37
    %p46 = scmp.eq.s32.totalorder %s15, 1
    %p47 = por %p45, %p46
    %p48 = scmp.ne.s32.totalorder %s37, %s38
    %p49 = scmp.eq.s32.totalorder %s15, 0
    %p50 = por %p48, %p49
    %p51 = scmp.ne.s32.totalorder %s37, %s38
    %p52 = scmp.eq.s32.totalorder %s16, 1
    %p53 = por %p51, %p52
    %p55 = scmp.ne.s32.totalorder %s38, %s54
    %p56 = scmp.eq.s32.totalorder %s16, 0
    %p57 = por %p55, %p56
    %s59 = sadd.s32 %s58, 1
    %p62 = scmp.eq.s32.totalorder %s10, 1
    %p63 = scmp.ne.s32.totalorder %s58, %s60
    %p64 = scmp.eq.s32.totalorder %s10, 0
    %p65 = por %p63, %p64
    %p66 = scmp.ne.s32.totalorder %s58, %s60
    %p67 = scmp.eq.s32.totalorder %s15, 1
    %p68 = por %p66, %p67
    %p69 = scmp.ne.s32.totalorder %s60, %s61
    %p70 = scmp.eq.s32.totalorder %s15, 0
    %p71 = por %p69, %p70
    %p72 = scmp.ne.s32.totalorder %s60, %s61
    %p73 = scmp.eq.s32.totalorder %s16, 1
    %p74 = por %p72, %p73
    %p76 = scmp.ne.s32.totalorder %s61, %s75
    %p77 = scmp.eq.s32.totalorder %s16, 0
    %p78 = por %p76, %p77
    %s80 = sadd.s32 %s79, 1
    %p83 = scmp.eq.s32.totalorder %s10, 1
    %p84 = scmp.ne.s32.totalorder %s79, %s81
    %p85 = scmp.eq.s32.totalorder %s10, 0
    %p86 = por %p84, %p85
    %p87 = scmp.ne.s32.totalorder %s79, %s81
    %p88 = scmp.eq.s32.totalorder %s15, 1
    %p89 = por %p87, %p88
    %p90 = scmp.ne.s32.totalorder %s81, %s82
    %p91 = scmp.eq.s32.totalorder %s15, 0
    %p92 = por %p90, %p91
    %p93 = scmp.ne.s32.totalorder %s81, %s82
    %p94 = scmp.eq.s32.totalorder %s16, 1
    %p95 = por %p93, %p94
    %p97 = scmp.ne.s32.totalorder %s82, %s96
    %p98 = scmp.eq.s32.totalorder %s16, 0
    %p99 = por %p97, %p98
    %s101 = sadd.s32 %s100, 1
    %p104 = scmp.eq.s32.totalorder %s10, 1
    %p105 = scmp.ne.s32.totalorder %s100, %s102
    %p106 = scmp.eq.s32.totalorder %s10, 0
    %p107 = por %p105, %p106
    %p108 = scmp.ne.s32.totalorder %s100, %s102
    %p109 = scmp.eq.s32.totalorder %s15, 1
    %p110 = por %p108, %p109
    %p111 = scmp.ne.s32.totalorder %s102, %s103
    %p112 = scmp.eq.s32.totalorder %s15, 0
    %p113 = por %p111, %p112
    %p114 = scmp.ne.s32.totalorder %s102, %s103
    %p115 = scmp.eq.s32.totalorder %s16, 1
    %p116 = por %p114, %p115
    %p118 = scmp.ne.s32.totalorder %s103, %s117
    %p119 = scmp.eq.s32.totalorder %s16, 0
    %p120 = por %p118, %p119
    %s121 = ssub.s32 %s17, %s29
    %s122 = ssub.s32 %s18, %s25
    %s123 = sor.u32 %s121, %s122
    %p124 = scmp.eq.s32.totalorder %s123, 0
    %s126 = sadd.s32 %s125, 1
    %s127 = scalar_select %p124, %s125, %s126
    %p130 = pneg %p124
    %p131 = scmp.eq.s32.totalorder %s10, 1
    %p132 = por %p130, %p131
    %p133 = scmp.ne.s32.totalorder %s125, %s128
    %p134 = scmp.eq.s32.totalorder %s10, 0
    %p135 = por %p133, %p134
    %p136 = scmp.ne.s32.totalorder %s125, %s128
    %p137 = scmp.eq.s32.totalorder %s15, 1
    %p138 = por %p136, %p137
    %p139 = scmp.ne.s32.totalorder %s128, %s129
    %p140 = scmp.eq.s32.totalorder %s15, 0
    %p141 = por %p139, %p140
    %p142 = scmp.ne.s32.totalorder %s128, %s129
    %p143 = scmp.eq.s32.totalorder %s16, 1
    %p144 = por %p142, %p143
    %p146 = scmp.ne.s32.totalorder %s129, %s145
    %p147 = scmp.eq.s32.totalorder %s16, 0
    %p148 = por %p146, %p147
    %p149 = scmp.le.s32.totalorder 1, %s10
    %p150 = scmp.lt.s32.totalorder %s10, 3
    %p151 = pnand %p149, %p150
    %p152 = pneg %p151
    // Predicated region
    $region9: #{_lambda_.19} parent=5 // pred_check
      _
    $region10: #{_lambda_.19} parent=5 // pred_check_branch
      %154 = sbr.rel (%p151) target = $region12
    $region11: #{_lambda_.19} parent=5 // pred_region
      %s155 = ssub.s32 %s10, 1
      // Predicated region
      $region13: #{_lambda_.19} parent=11 // pred_check
        %p156 = pneg %p71
      $region14: #{_lambda_.19} parent=11 // pred_check_branch
        %158 = sbr.rel (%p156) target = $region16
      $region15: #{_lambda_.19} parent=11 // pred_region
        _
      $region16: #{_lambda_.19} parent=11 // pred_fallthru
        _
      // Predicated region
      $region17: #{_lambda_.19} parent=11 // pred_check
        %p159 = pneg %p92
      $region18: #{_lambda_.19} parent=11 // pred_check_branch
        %161 = sbr.rel (%p159) target = $region20
      $region19: #{_lambda_.19} parent=11 // pred_region
        _
      $region20: #{_lambda_.19} parent=11 // pred_fallthru
        _
      // Predicated region
      $region21: #{_lambda_.19} parent=11 // pred_check
        %p162 = pneg %p113
      $region22: #{_lambda_.19} parent=11 // pred_check_branch
        %164 = sbr.rel (%p162) target = $region24
      $region23: #{_lambda_.19} parent=11 // pred_region
        _
      $region24: #{_lambda_.19} parent=11 // pred_fallthru
        _
    $region12: #{_lambda_.19} parent=5 // pred_fallthru
      _
    %p165 = scmp.lt.s32.totalorder %s10, 2
    // Predicated region
    $region25: #{_lambda_.19} parent=5 // pred_check
      %p166 = pneg %p165
    $region26: #{_lambda_.19} parent=5 // pred_check_branch
      %168 = sbr.rel (%p166) target = $region28
    $region27: #{_lambda_.19} parent=5 // pred_region
      // Predicated region
      $region29: #{_lambda_.19} parent=27 // pred_check
        %p169 = pneg %p44
      $region30: #{_lambda_.19} parent=27 // pred_check_branch
        %171 = sbr.rel (%p169) target = $region32
      $region31: #{_lambda_.19} parent=27 // pred_region
        %s172 = smul.u32 8, %s18
        %p173 = scmp.lt.s32.totalorder %s17, 1
        %s174 = scalar_select %p173, %s17, 1
        %p175 = scmp.lt.s32.totalorder %s172, 7
        %s176 = scalar_select %p175, %s172, 7
        %s177 = smul.addr %s174, 8
        %s178 = sadd.s32 %s176, %s177
        %s179 = smul.addr %s178, 8
        %s180 = scalar_lea.vmem %s0, %s179
        %s181 = smul.u32 8, %s18
      $region32: #{_lambda_.19} parent=27 // pred_fallthru
        _
    $region28: #{_lambda_.19} parent=5 // pred_fallthru
      _
    %p182 = scmp.le.s32.totalorder 1, %s10
    %p183 = scmp.lt.s32.totalorder %s10, 3
    %p184 = pnand %p182, %p183
    %p185 = pneg %p184
    // Predicated region
    $region33: #{_lambda_.19} parent=5 // pred_check
      _
    $region34: #{_lambda_.19} parent=5 // pred_check_branch
      %187 = sbr.rel (%p184) target = $region36
    $region35: #{_lambda_.19} parent=5 // pred_region
      %s188 = ssub.s32 %s10, 1
      %s189 = smul.u32 8, %s20
      %p190 = scmp.lt.s32.totalorder %s19, 1
      %s191 = scalar_select %p190, %s19, 1
      %p192 = scmp.lt.s32.totalorder %s189, 7
      %s193 = scalar_select %p192, %s189, 7
      %s194 = smul.addr %s191, 8
      %s195 = sadd.s32 %s193, %s194
      %s196 = smul.addr %s195, 8
      %s197 = scalar_lea.vmem %s0, %s196
      %p198 = pneg %p50
      %p199 = pneg %p47
      %p200 = pneg %p71
      %p201 = pneg %p68
      %p202 = pneg %p92
      %p203 = pneg %p89
      %p204 = pneg %p113
      %p205 = pneg %p110
      %p206 = pneg %p141
      %p207 = pneg %p138
      %s208 = smul.u32 8, %s20
      %p209 = scmp.lt.s32.totalorder %s19, 1
      %s210 = scalar_select %p209, %s19, 1
      %p211 = scmp.lt.s32.totalorder %s208, 7
      %s212 = scalar_select %p211, %s208, 7
      %s213 = smul.addr %s210, 8
      %s214 = sadd.s32 %s212, %s213
      %s215 = smul.addr %s214, 8
      %s216 = scalar_lea.vmem %s4, %s215
      %s217 = smul.u32 8, %s20
      %p218 = scmp.lt.s32.totalorder %s19, 1
      %s219 = scalar_select %p218, %s19, 1
      %p220 = scmp.lt.s32.totalorder %s217, 7
      %s221 = scalar_select %p220, %s217, 7
      %s222 = smul.addr %s219, 8
      %s223 = sadd.s32 %s221, %s222
      %s224 = smul.addr %s223, 8
      %s225 = scalar_lea.vmem %s0, %s224
      %s226 = smul.u32 8, %s20
      %s227 = smul.u32 8, %s20
      %p228 = scmp.lt.s32.totalorder %s19, 1
      %s229 = scalar_select %p228, %s19, 1
      %p230 = scmp.lt.s32.totalorder %s227, 7
      %s231 = scalar_select %p230, %s227, 7
      %s232 = smul.addr %s229, 8
      %s233 = sadd.s32 %s231, %s232
      %s234 = smul.addr %s233, 8
      %s235 = scalar_lea.vmem %s4, %s234
      %s236 = smul.u32 8, %s20
      %v238 = vld [vmem:[%s225] sm:$0xff]
      %v239 = vld [vmem:[%s225 + $0x8] sm:$0xff]
      %v240 = vld [vmem:[%s225 + $0x10] sm:$0xff]
      %v241 = vld [vmem:[%s225 + $0x18] sm:$0xff]
      %v242 = vld [vmem:[%s225 + $0x20] sm:$0xff]
      %v243 = vld [vmem:[%s225 + $0x28] sm:$0xff]
      %v244 = vld [vmem:[%s225 + $0x30] sm:$0xff]
      %v245 = vld [vmem:[%s225 + $0x38] sm:$0xff]
      %v246 = vpack.c.bf16 %v239, %v238
      %v247 = vpack.c.bf16 %v241, %v240
      %v248 = vpack.c.bf16 %v243, %v242
      %v249 = vpack.c.bf16 %v245, %v244
      %v250 = vld [vmem:[%s1] sm:$0xf]
      %v251 = vld [vmem:[%s1 + $0x4] sm:$0xf]
      %v252 = vld [vmem:[%s1 + $0x8] sm:$0xf]
      %v253 = vld [vmem:[%s1 + $0xc] sm:$0xf]
      %v258 = vunpack.c.l.b16 %v250
      %v259 = vunpack.c.l.b16 %v251
      %v260 = vunpack.c.l.b16 %v252
      %v261 = vunpack.c.l.b16 %v253
      %v262 = vpack.c.b16 %v259, %v258
      %v263 = vpack.c.b16 %v261, %v260
      %vm266 = vcmask 261120
      %v268 = vsel %vm266, %v246, 0
      %v271 = vsel %vm266, %v247, 0
      %v274 = vsel %vm266, %v248, 0
      %v277 = vsel %vm266, %v249, 0
      %279 = vmatpush.bf16.msra.mxu0 0
      %280 = vmatpush.bf16.msra.mxu0 0
      %281 = vmatpush.bf16.msra.mxu0 0
      %282 = vmatpush.bf16.msra.mxu0 0
      %283 = vmatpush.bf16.msra.mxu0 0
      %284 = vmatpush.bf16.msra.mxu0 0
      %285 = vmatpush.bf16.msra.mxu0 %v263
      %286 = vmatpush.bf16.msra.mxu0 %v262
      %287 = vmatmul.bf16.gmra.mxu0 %v268
      %v288 = vpop.f32.mrf.mxu0
      %v289 = vadd.f32 0.0, %v288
      %v290 = vpop.f32.mrf.mxu0
      %v291 = vadd.f32 0.0, %v290
      %292 = vmatmul.bf16.gmra.mxu0 %v271
      %v293 = vpop.f32.mrf.mxu0
      %v294 = vadd.f32 0.0, %v293
      %v295 = vpop.f32.mrf.mxu0
      %v296 = vadd.f32 0.0, %v295
      %297 = vmatmul.bf16.gmra.mxu0 %v274
      %v298 = vpop.f32.mrf.mxu0
      %v299 = vadd.f32 0.0, %v298
      %v300 = vpop.f32.mrf.mxu0
      %v301 = vadd.f32 0.0, %v300
      %302 = vmatmul.bf16.gmra.mxu0 %v277
      %v303 = vpop.f32.mrf.mxu0
      %v304 = vadd.f32 0.0, %v303
      %v305 = vpop.f32.mrf.mxu0
      %v306 = vadd.f32 0.0, %v305
      %307 = vdwg.mxu0
      %v308 = vld [vmem:[%s2] sm:$0x1]
      %v310 = vperm.slane %v308, 0
      %v312 = vmul.f32 %v289, %v310
      %v313 = vmul.f32 %v291, %v310
      %v314 = vmul.f32 %v294, %v310
      %v315 = vmul.f32 %v296, %v310
      %v316 = vmul.f32 %v299, %v310
      %v317 = vmul.f32 %v301, %v310
      %v318 = vmul.f32 %v304, %v310
      %v319 = vmul.f32 %v306, %v310
      %v320 = vld [vmem:[%s3] sm:$0x1]
      %v322 = vperm.slane %v320, 0
      %v324 = vadd.f32 %v312, %v322
      %v325 = vadd.f32 %v313, %v322
      %v326 = vadd.f32 %v314, %v322
      %v327 = vadd.f32 %v315, %v322
      %v328 = vadd.f32 %v316, %v322
      %v329 = vadd.f32 %v317, %v322
      %v330 = vadd.f32 %v318, %v322
      %v331 = vadd.f32 %v319, %v322
      %vm332 = vcmask 523264
      %333 = vst.msk [vmem:[%s235] sm:$0xff] %vm332, %v324
      %334 = vst.msk [vmem:[%s235 + $0x8] sm:$0xff] %vm332, %v325
      %335 = vst.msk [vmem:[%s235 + $0x10] sm:$0xff] %vm332, %v326
      %336 = vst.msk [vmem:[%s235 + $0x18] sm:$0xff] %vm332, %v327
      %337 = vst.msk [vmem:[%s235 + $0x20] sm:$0xff] %vm332, %v328
      %338 = vst.msk [vmem:[%s235 + $0x28] sm:$0xff] %vm332, %v329
      %339 = vst.msk [vmem:[%s235 + $0x30] sm:$0xff] %vm332, %v330
      %340 = vst.msk [vmem:[%s235 + $0x38] sm:$0xff] %vm332, %v331
      %s341 = smul.u32 8, %s20
      %p342 = scmp.lt.s32.totalorder %s19, 1
      %s343 = scalar_select %p342, %s19, 1
      %p344 = scmp.lt.s32.totalorder %s341, 7
      %s345 = scalar_select %p344, %s341, 7
      %s346 = smul.addr %s343, 8
      %s347 = sadd.s32 %s345, %s346
      %s348 = smul.addr %s347, 8
      %s349 = scalar_lea.vmem %s4, %s348
      // Predicated region
      $region37: #{_lambda_.19} parent=35 // pred_check
        %p350 = pneg %p138
      $region38: #{_lambda_.19} parent=35 // pred_check_branch
        %352 = sbr.rel (%p350) target = $region40
      $region39: #{_lambda_.19} parent=35 // pred_region
        %s353 = smul.u32 8, %s20
      $region40: #{_lambda_.19} parent=35 // pred_fallthru
        _
    $region36: #{_lambda_.19} parent=5 // pred_fallthru
      _
    %p354 = scmp.le.s32.totalorder 2, %s10
    // Predicated region
    $region41: #{_lambda_.19} parent=5 // pred_check
      %p355 = pneg %p354
    $region42: #{_lambda_.19} parent=5 // pred_check_branch
      %357 = sbr.rel (%p355) target = $region44
    $region43: #{_lambda_.19} parent=5 // pred_region
      %s358 = ssub.s32 %s10, 2
      // Predicated region
      $region45: #{_lambda_.19} parent=43 // pred_check
        %p359 = pneg %p144
      $region46: #{_lambda_.19} parent=43 // pred_check_branch
        %361 = sbr.rel (%p359) target = $region48
      $region47: #{_lambda_.19} parent=43 // pred_region
        %s362 = smul.u32 8, %s22
        %p363 = scmp.lt.s32.totalorder %s21, 1
        %s364 = scalar_select %p363, %s21, 1
        %p365 = scmp.lt.s32.totalorder %s362, 7
        %s366 = scalar_select %p365, %s362, 7
        %s367 = smul.addr %s364, 8
        %s368 = sadd.s32 %s366, %s367
        %s369 = smul.addr %s368, 8
        %s370 = scalar_lea.vmem %s4, %s369
      $region48: #{_lambda_.19} parent=43 // pred_fallthru
        _
    $region44: #{_lambda_.19} parent=5 // pred_fallthru
      _
  $region6: #{_lambda_.19} parent=0 // loop_footer
    %s14 = sadd.s32 1, %s10
  $region7: #{_lambda_.19} parent=0 // loop_footer_branch
    %9 = sbr.rel target = $region3
  $region8: #{_lambda_.19} parent=0 // loop_exit
    _

// kernel: _lambda_.21
$region0: #{_lambda_.21}
  #allocation0 [shape = 'u32[]', space=smem, size = 0x4, offset = 0x4, fixed_abs, tag = 'smem constant byte address 0x4 - core index']
  #allocation1 [shape = 'u32[72,128]{1,0:T(1,128)}', space=vmem, size = 0x9000, scoped, tag = 'internal scratch']
  %s0 = inlined_call_operand.vmem [shape: f32[2,10,10,64], index: 0, kind: input, shape index: {}]
  %s1 = inlined_call_operand.vmem [shape: bf16[9,64,64], index: 1, kind: input, shape index: {}]
  %s2 = inlined_call_operand.vmem [shape: f32[1,64], index: 2, kind: input, shape index: {}]
  %s3 = inlined_call_operand.vmem [shape: f32[1,64], index: 3, kind: input, shape index: {}]
  %s4 = inlined_call_operand.vmem [shape: f32[2,8,8,64], index: 4, kind: output, shape index: {}]
  %s5 = sld [smem:[#allocation0]]
  $region49: #{_lambda_.21} parent=0
    _
  %s7 = ssub.s32 1, %s5
  %s8 = scalar_select 0, %s7, %s5
  loop: start=0, step=1, limit=4
  $region2: #{_lambda_.21} parent=0 // loop_pre_header
    _
  $region3: #{_lambda_.21} parent=0 // loop_header
    %s10 = sphi 0, %s14
    %p11 = scmp.ge.s32.totalorder %s10, 4
    %s20 = sphi 0, %s22
    %s23 = sphi 0, %s20
    %s24 = sphi 0, %s23
    %s40 = sphi 0, %s24
    %s44 = sphi 0, %s44
    %s46 = sphi 0, %s44
    %s47 = sphi 0, %s46
    %s61 = sphi 0, %s47
    %s65 = sphi 0, %s65
    %s67 = sphi 0, %s65
    %s68 = sphi 0, %s67
    %s82 = sphi 0, %s68
    %s86 = sphi 0, %s86
    %s88 = sphi 0, %s86
    %s89 = sphi 0, %s88
    %s103 = sphi 0, %s89
    %s109 = sphi 0, %s111
    %s112 = sphi 0, %s109
    %s113 = sphi 0, %s112
    %s129 = sphi 0, %s113
  $region4: #{_lambda_.21} parent=0 // loop_header_branch
    %13 = sbr.rel (%p11) target = $region8
  $region5: #{_lambda_.21} parent=0 // loop_body
    %s15 = ssub.s32 %s10, 1
    %s16 = ssub.s32 %s10, 2
    %s17 = sadd.s32 %s10, 1
    %s18 = ssub.s32 %s10, %s17
    %p19 = scmp.eq.s32.totalorder %s18, 0
    %s21 = sadd.s32 %s20, 1
    %s22 = scalar_select %p19, %s20, %s21
    %p25 = pneg %p19
    %p26 = scmp.eq.s32.totalorder %s10, 1
    %p27 = por %p25, %p26
    %p28 = scmp.ne.s32.totalorder %s20, %s23
    %p29 = scmp.eq.s32.totalorder %s10, 0
    %p30 = por %p28, %p29
    %p31 = scmp.ne.s32.totalorder %s20, %s23
    %p32 = scmp.eq.s32.totalorder %s15, 1
    %p33 = por %p31, %p32
    %p34 = scmp.ne.s32.totalorder %s23, %s24
    %p35 = scmp.eq.s32.totalorder %s15, 0
    %p36 = por %p34, %p35
    %p37 = scmp.ne.s32.totalorder %s23, %s24
    %p38 = scmp.eq.s32.totalorder %s16, 1
    %p39 = por %p37, %p38
    %p41 = scmp.ne.s32.totalorder %s24, %s40
    %p42 = scmp.eq.s32.totalorder %s16, 0
    %p43 = por %p41, %p42
    %s45 = sadd.s32 %s44, 1
    %p48 = scmp.eq.s32.totalorder %s10, 1
    %p49 = scmp.ne.s32.totalorder %s44, %s46
    %p50 = scmp.eq.s32.totalorder %s10, 0
    %p51 = por %p49, %p50
    %p52 = scmp.ne.s32.totalorder %s44, %s46
    %p53 = scmp.eq.s32.totalorder %s15, 1
    %p54 = por %p52, %p53
    %p55 = scmp.ne.s32.totalorder %s46, %s47
    %p56 = scmp.eq.s32.totalorder %s15, 0
    %p57 = por %p55, %p56
    %p58 = scmp.ne.s32.totalorder %s46, %s47
    %p59 = scmp.eq.s32.totalorder %s16, 1
    %p60 = por %p58, %p59
    %p62 = scmp.ne.s32.totalorder %s47, %s61
    %p63 = scmp.eq.s32.totalorder %s16, 0
    %p64 = por %p62, %p63
    %s66 = sadd.s32 %s65, 1
    %p69 = scmp.eq.s32.totalorder %s10, 1
    %p70 = scmp.ne.s32.totalorder %s65, %s67
    %p71 = scmp.eq.s32.totalorder %s10, 0
    %p72 = por %p70, %p71
    %p73 = scmp.ne.s32.totalorder %s65, %s67
    %p74 = scmp.eq.s32.totalorder %s15, 1
    %p75 = por %p73, %p74
    %p76 = scmp.ne.s32.totalorder %s67, %s68
    %p77 = scmp.eq.s32.totalorder %s15, 0
    %p78 = por %p76, %p77
    %p79 = scmp.ne.s32.totalorder %s67, %s68
    %p80 = scmp.eq.s32.totalorder %s16, 1
    %p81 = por %p79, %p80
    %p83 = scmp.ne.s32.totalorder %s68, %s82
    %p84 = scmp.eq.s32.totalorder %s16, 0
    %p85 = por %p83, %p84
    %s87 = sadd.s32 %s86, 1
    %p90 = scmp.eq.s32.totalorder %s10, 1
    %p91 = scmp.ne.s32.totalorder %s86, %s88
    %p92 = scmp.eq.s32.totalorder %s10, 0
    %p93 = por %p91, %p92
    %p94 = scmp.ne.s32.totalorder %s86, %s88
    %p95 = scmp.eq.s32.totalorder %s15, 1
    %p96 = por %p94, %p95
    %p97 = scmp.ne.s32.totalorder %s88, %s89
    %p98 = scmp.eq.s32.totalorder %s15, 0
    %p99 = por %p97, %p98
    %p100 = scmp.ne.s32.totalorder %s88, %s89
    %p101 = scmp.eq.s32.totalorder %s16, 1
    %p102 = por %p100, %p101
    %p104 = scmp.ne.s32.totalorder %s89, %s103
    %p105 = scmp.eq.s32.totalorder %s16, 0
    %p106 = por %p104, %p105
    %s107 = ssub.s32 %s10, %s17
    %p108 = scmp.eq.s32.totalorder %s107, 0
    %s110 = sadd.s32 %s109, 1
    %s111 = scalar_select %p108, %s109, %s110
    %p114 = pneg %p108
    %p115 = scmp.eq.s32.totalorder %s10, 1
    %p116 = por %p114, %p115
    %p117 = scmp.ne.s32.totalorder %s109, %s112
    %p118 = scmp.eq.s32.totalorder %s10, 0
    %p119 = por %p117, %p118
    %p120 = scmp.ne.s32.totalorder %s109, %s112
    %p121 = scmp.eq.s32.totalorder %s15, 1
    %p122 = por %p120, %p121
    %p123 = scmp.ne.s32.totalorder %s112, %s113
    %p124 = scmp.eq.s32.totalorder %s15, 0
    %p125 = por %p123, %p124
    %p126 = scmp.ne.s32.totalorder %s112, %s113
    %p127 = scmp.eq.s32.totalorder %s16, 1
    %p128 = por %p126, %p127
    %p130 = scmp.ne.s32.totalorder %s113, %s129
    %p131 = scmp.eq.s32.totalorder %s16, 0
    %p132 = por %p130, %p131
    %p133 = scmp.le.s32.totalorder 1, %s10
    %p134 = scmp.lt.s32.totalorder %s10, 3
    %p135 = pnand %p133, %p134
    %p136 = pneg %p135
    // Predicated region
    $region9: #{_lambda_.21} parent=5 // pred_check
      _
    $region10: #{_lambda_.21} parent=5 // pred_check_branch
      %138 = sbr.rel (%p135) target = $region12
    $region11: #{_lambda_.21} parent=5 // pred_region
      %s139 = ssub.s32 %s10, 1
      // Predicated region
      $region13: #{_lambda_.21} parent=11 // pred_check
        %p140 = pneg %p57
      $region14: #{_lambda_.21} parent=11 // pred_check_branch
        %142 = sbr.rel (%p140) target = $region16
      $region15: #{_lambda_.21} parent=11 // pred_region
        _
      $region16: #{_lambda_.21} parent=11 // pred_fallthru
        _
      // Predicated region
      $region17: #{_lambda_.21} parent=11 // pred_check
        %p143 = pneg %p78
      $region18: #{_lambda_.21} parent=11 // pred_check_branch
        %145 = sbr.rel (%p143) target = $region20
      $region19: #{_lambda_.21} parent=11 // pred_region
        _
      $region20: #{_lambda_.21} parent=11 // pred_fallthru
        _
      // Predicated region
      $region21: #{_lambda_.21} parent=11 // pred_check
        %p146 = pneg %p99
      $region22: #{_lambda_.21} parent=11 // pred_check_branch
        %148 = sbr.rel (%p146) target = $region24
      $region23: #{_lambda_.21} parent=11 // pred_region
        _
      $region24: #{_lambda_.21} parent=11 // pred_fallthru
        _
    $region12: #{_lambda_.21} parent=5 // pred_fallthru
      _
    %p149 = scmp.lt.s32.totalorder %s10, 2
    // Predicated region
    $region25: #{_lambda_.21} parent=5 // pred_check
      %p150 = pneg %p149
    $region26: #{_lambda_.21} parent=5 // pred_check_branch
      %152 = sbr.rel (%p150) target = $region28
    $region27: #{_lambda_.21} parent=5 // pred_region
      // Predicated region
      $region29: #{_lambda_.21} parent=27 // pred_check
        %p153 = pneg %p30
      $region30: #{_lambda_.21} parent=27 // pred_check_branch
        %155 = sbr.rel (%p153) target = $region32
      $region31: #{_lambda_.21} parent=27 // pred_region
        %p156 = scmp.lt.s32.totalorder %s10, 1
        %s157 = scalar_select %p156, %s10, 1
        %s158 = smul.addr %s157, 20
        %s159 = smul.addr %s158, 8
        %s160 = scalar_lea.vmem %s0, %s159
      $region32: #{_lambda_.21} parent=27 // pred_fallthru
        _
    $region28: #{_lambda_.21} parent=5 // pred_fallthru
      _
    %p161 = scmp.le.s32.totalorder 1, %s10
    %p162 = scmp.lt.s32.totalorder %s10, 3
    %p163 = pnand %p161, %p162
    %p164 = pneg %p163
    // Predicated region
    $region33: #{_lambda_.21} parent=5 // pred_check
      _
    $region34: #{_lambda_.21} parent=5 // pred_check_branch
      %166 = sbr.rel (%p163) target = $region36
    $region35: #{_lambda_.21} parent=5 // pred_region
      %s167 = ssub.s32 %s10, 1
      %p168 = scmp.lt.s32.totalorder %s15, 1
      %s169 = scalar_select %p168, %s15, 1
      %s170 = smul.addr %s169, 20
      %s171 = smul.addr %s170, 8
      %s172 = scalar_lea.vmem %s0, %s171
      %p173 = pneg %p36
      %p174 = pneg %p33
      %p175 = pneg %p57
      %p176 = pneg %p54
      %p177 = pneg %p78
      %p178 = pneg %p75
      %p179 = pneg %p99
      %p180 = pneg %p96
      %p181 = pneg %p125
      %p182 = pneg %p122
      %p183 = scmp.lt.s32.totalorder %s15, 1
      %s184 = scalar_select %p183, %s15, 1
      %s185 = smul.addr %s184, 8
      %s186 = smul.addr %s185, 8
      %s187 = scalar_lea.vmem %s4, %s186
      %p188 = scmp.lt.s32.totalorder %s15, 1
      %s189 = scalar_select %p188, %s15, 1
      %s190 = smul.addr %s189, 20
      %s191 = smul.addr %s190, 8
      %s192 = scalar_lea.vmem %s0, %s191
      %p193 = scmp.lt.s32.totalorder %s15, 1
      %s194 = scalar_select %p193, %s15, 1
      %s195 = smul.addr %s194, 8
      %s196 = smul.addr %s195, 8
      %s197 = scalar_lea.vmem %s4, %s196
      %v199 = vld [vmem:[%s192] sm:$0xff]
      %v200 = vld [vmem:[%s192 + $0x8] sm:$0x3]
      %v201 = vld [vmem:[%s192 + $0x10] sm:$0xff]
      %v202 = vld [vmem:[%s192 + $0x18] sm:$0x3]
      %v203 = vld [vmem:[%s192 + $0x20] sm:$0xff]
      %v204 = vld [vmem:[%s192 + $0x28] sm:$0x3]
      %v205 = vld [vmem:[%s192 + $0x30] sm:$0xff]
      %v206 = vld [vmem:[%s192 + $0x38] sm:$0x3]
      %v207 = vld [vmem:[%s192 + $0x40] sm:$0xff]
      %v208 = vld [vmem:[%s192 + $0x48] sm:$0x3]
      %v209 = vld [vmem:[%s192 + $0x50] sm:$0xff]
      %v210 = vld [vmem:[%s192 + $0x58] sm:$0x3]
      %v211 = vld [vmem:[%s192 + $0x60] sm:$0xff]
      %v212 = vld [vmem:[%s192 + $0x68] sm:$0x3]
      %v213 = vld [vmem:[%s192 + $0x70] sm:$0xff]
      %v214 = vld [vmem:[%s192 + $0x78] sm:$0x3]
      %v215 = vld [vmem:[%s192 + $0x80] sm:$0xff]
      %v216 = vld [vmem:[%s192 + $0x88] sm:$0x3]
      %v217 = vld [vmem:[%s192 + $0x90] sm:$0xff]
      %v218 = vld [vmem:[%s192 + $0x98] sm:$0x3]
      %v219 = vpack.c.bf16 %v201, %v199
      %v220 = vpack.c.bf16 %v205, %v203
      %v221 = vpack.c.bf16 %v209, %v207
      %v222 = vpack.c.bf16 %v213, %v211
      %v223 = vld [vmem:[%s1] sm:$0xf]
      %v224 = vld [vmem:[%s1 + $0x4] sm:$0xf]
      %v225 = vld [vmem:[%s1 + $0x8] sm:$0xf]
      %v226 = vld [vmem:[%s1 + $0xc] sm:$0xf]
      %v227 = vld [vmem:[%s1 + $0x10] sm:$0xf]
      %v228 = vld [vmem:[%s1 + $0x14] sm:$0xf]
      %v229 = vld [vmem:[%s1 + $0x18] sm:$0xf]
      %v230 = vld [vmem:[%s1 + $0x1c] sm:$0xf]
      %vm247 = vcmask 1046528
      %v248 = vrot.slane %v199, 1
      %v249 = vrot.slane %v200, 1
      %v250 = vsel %vm247, %v248, %v249
      %v251 = vrot.slane %v201, 1
      %v252 = vrot.slane %v202, 1
      %v253 = vsel %vm247, %v251, %v252
      %v254 = vrot.slane %v203, 1
      %v255 = vrot.slane %v204, 1
      %v256 = vsel %vm247, %v254, %v255
      %v257 = vrot.slane %v205, 1
      %v258 = vrot.slane %v206, 1
      %v259 = vsel %vm247, %v257, %v258
      %v260 = vrot.slane %v207, 1
      %v261 = vrot.slane %v208, 1
      %v262 = vsel %vm247, %v260, %v261
      %v263 = vrot.slane %v209, 1
      %v264 = vrot.slane %v210, 1
      %v265 = vsel %vm247, %v263, %v264
      %v266 = vrot.slane %v211, 1
      %v267 = vrot.slane %v212, 1
      %v268 = vsel %vm247, %v266, %v267
      %v269 = vrot.slane %v213, 1
      %v270 = vrot.slane %v214, 1
      %v271 = vsel %vm247, %v269, %v270
      %v280 = vpack.c.bf16 %v253, %v250
      %v281 = vpack.c.bf16 %v259, %v256
      %v282 = vpack.c.bf16 %v265, %v262
      %v283 = vpack.c.bf16 %v271, %v268
      %s284 = scalar_lea.vmem %s1, 32
      %v285 = vld [vmem:[%s284] sm:$0xf]
      %v286 = vld [vmem:[%s284 + $0x4] sm:$0xf]
      %v287 = vld [vmem:[%s284 + $0x8] sm:$0xf]
      %v288 = vld [vmem:[%s284 + $0xc] sm:$0xf]
      %v289 = vld [vmem:[%s284 + $0x10] sm:$0xf]
      %v290 = vld [vmem:[%s284 + $0x14] sm:$0xf]
      %v291 = vld [vmem:[%s284 + $0x18] sm:$0xf]
      %v292 = vld [vmem:[%s284 + $0x1c] sm:$0xf]
      %v301 = vunpack.c.l.b16 %v285
      %v302 = vunpack.c.l.b16 %v286
      %v303 = vunpack.c.l.b16 %v287
      %v304 = vunpack.c.l.b16 %v288
      %v305 = vunpack.c.l.b16 %v289
      %v306 = vunpack.c.l.b16 %v290
      %v307 = vunpack.c.l.b16 %v291
      %v308 = vunpack.c.l.b16 %v292
      %v309 = vpack.c.b16 %v302, %v301
      %v310 = vpack.c.b16 %v304, %v303
      %v311 = vpack.c.b16 %v306, %v305
      %v312 = vpack.c.b16 %v308, %v307
      %vm317 = vcmask 523264
      %v319 = vsel %vm317, %v280, 0
      %v322 = vsel %vm317, %v281, 0
      %v325 = vsel %vm317, %v282, 0
      %v328 = vsel %vm317, %v283, 0
      %330 = vmatpush.bf16.msra.mxu0 0
      %331 = vmatpush.bf16.msra.mxu0 0
      %332 = vmatpush.bf16.msra.mxu0 0
      %333 = vmatpush.bf16.msra.mxu0 0
      %334 = vmatpush.bf16.msra.mxu0 %v312
      %335 = vmatpush.bf16.msra.mxu0 %v311
      %336 = vmatpush.bf16.msra.mxu0 %v310
      %337 = vmatpush.bf16.msra.mxu0 %v309
      %338 = vmatmul.bf16.gmra.mxu0 %v319
      %v339 = vpop.f32.mrf.mxu0
      %v340 = vadd.f32 0.0, %v339
      %v341 = vpop.f32.mrf.mxu0
      %v342 = vadd.f32 0.0, %v341
      %343 = vmatmul.bf16.gmra.mxu0 %v322
      %v344 = vpop.f32.mrf.mxu0
      %v345 = vadd.f32 0.0, %v344
      %v346 = vpop.f32.mrf.mxu0
      %v347 = vadd.f32 0.0, %v346
      %348 = vmatmul.bf16.gmra.mxu0 %v325
      %v349 = vpop.f32.mrf.mxu0
      %v350 = vadd.f32 0.0, %v349
      %v351 = vpop.f32.mrf.mxu0
      %v352 = vadd.f32 0.0, %v351
      %353 = vmatmul.bf16.gmra.mxu0 %v328
      %v354 = vpop.f32.mrf.mxu0
      %v355 = vadd.f32 0.0, %v354
      %v356 = vpop.f32.mrf.mxu0
      %v357 = vadd.f32 0.0, %v356
      %358 = vdwg.mxu0
      %v367 = vunpack.c.l.b16 %v223
      %v368 = vunpack.c.l.b16 %v224
      %v369 = vunpack.c.l.b16 %v225
      %v370 = vunpack.c.l.b16 %v226
      %v371 = vunpack.c.l.b16 %v227
      %v372 = vunpack.c.l.b16 %v228
      %v373 = vunpack.c.l.b16 %v229
      %v374 = vunpack.c.l.b16 %v230
      %v375 = vpack.c.b16 %v368, %v367
      %v376 = vpack.c.b16 %v370, %v369
      %v377 = vpack.c.b16 %v372, %v371
      %v378 = vpack.c.b16 %v374, %v373
      %v384 = vsel %vm317, %v219, 0
      %v387 = vsel %vm317, %v220, 0
      %v390 = vsel %vm317, %v221, 0
      %v393 = vsel %vm317, %v222, 0
      %395 = vmatpush.bf16.msra.mxu0 0
      %396 = vmatpush.bf16.msra.mxu0 0
      %397 = vmatpush.bf16.msra.mxu0 0
      %398 = vmatpush.bf16.msra.mxu0 0
      %399 = vmatpush.bf16.msra.mxu0 %v378
      %400 = vmatpush.bf16.msra.mxu0 %v377
      %401 = vmatpush.bf16.msra.mxu0 %v376
      %402 = vmatpush.bf16.msra.mxu0 %v375
      %403 = vmatmul.bf16.gmra.mxu0 %v384
      %v404 = vpop.f32.mrf.mxu0
      %v405 = vadd.f32 %v340, %v404
      %v406 = vpop.f32.mrf.mxu0
      %v407 = vadd.f32 %v342, %v406
      %408 = vmatmul.bf16.gmra.mxu0 %v387
      %v409 = vpop.f32.mrf.mxu0
      %v410 = vadd.f32 %v345, %v409
      %v411 = vpop.f32.mrf.mxu0
      %v412 = vadd.f32 %v347, %v411
      %413 = vmatmul.bf16.gmra.mxu0 %v390
      %v414 = vpop.f32.mrf.mxu0
      %v415 = vadd.f32 %v350, %v414
      %v416 = vpop.f32.mrf.mxu0
      %v417 = vadd.f32 %v352, %v416
      %418 = vmatmul.bf16.gmra.mxu0 %v393
      %v419 = vpop.f32.mrf.mxu0
      %v420 = vadd.f32 %v355, %v419
      %v421 = vpop.f32.mrf.mxu0
      %v422 = vadd.f32 %v357, %v421
      %423 = vdwg.mxu0
      %vm424 = vcmask 1045504
      %v425 = vrot.slane %v199, 2
      %v426 = vrot.slane %v200, 2
      %v427 = vsel %vm424, %v425, %v426
      %v428 = vrot.slane %v201, 2
      %v429 = vrot.slane %v202, 2
      %v430 = vsel %vm424, %v428, %v429
      %v431 = vrot.slane %v203, 2
      %v432 = vrot.slane %v204, 2
      %v433 = vsel %vm424, %v431, %v432
      %v434 = vrot.slane %v205, 2
      %v435 = vrot.slane %v206, 2
      %v436 = vsel %vm424, %v434, %v435
      %v437 = vrot.slane %v207, 2
      %v438 = vrot.slane %v208, 2
      %v439 = vsel %vm424, %v437, %v438
      %v440 = vrot.slane %v209, 2
      %v441 = vrot.slane %v210, 2
      %v442 = vsel %vm424, %v440, %v441
      %v443 = vrot.slane %v211, 2
      %v444 = vrot.slane %v212, 2
      %v445 = vsel %vm424, %v443, %v444
      %v446 = vrot.slane %v213, 2
      %v447 = vrot.slane %v214, 2
      %v448 = vsel %vm424, %v446, %v447
      %v457 = vpack.c.bf16 %v430, %v427
      %v458 = vpack.c.bf16 %v436, %v433
      %v459 = vpack.c.bf16 %v442, %v439
      %v460 = vpack.c.bf16 %v448, %v445
      %s461 = scalar_lea.vmem %s1, 64
      %v462 = vld [vmem:[%s461] sm:$0xf]
      %v463 = vld [vmem:[%s461 + $0x4] sm:$0xf]
      %v464 = vld [vmem:[%s461 + $0x8] sm:$0xf]
      %v465 = vld [vmem:[%s461 + $0xc] sm:$0xf]
      %v466 = vld [vmem:[%s461 + $0x10] sm:$0xf]
      %v467 = vld [vmem:[%s461 + $0x14] sm:$0xf]
      %v468 = vld [vmem:[%s461 + $0x18] sm:$0xf]
      %v469 = vld [vmem:[%s461 + $0x1c] sm:$0xf]
      %v478 = vunpack.c.l.b16 %v462
      %v479 = vunpack.c.l.b16 %v463
      %v480 = vunpack.c.l.b16 %v464
      %v481 = vunpack.c.l.b16 %v465
      %v482 = vunpack.c.l.b16 %v466
      %v483 = vunpack.c.l.b16 %v467
      %v484 = vunpack.c.l.b16 %v468
      %v485 = vunpack.c.l.b16 %v469
      %v486 = vpack.c.b16 %v479, %v478
      %v487 = vpack.c.b16 %v481, %v480
      %v488 = vpack.c.b16 %v483, %v482
      %v489 = vpack.c.b16 %v485, %v484
      %v495 = vsel %vm317, %v457, 0
      %v498 = vsel %vm317, %v458, 0
      %v501 = vsel %vm317, %v459, 0
      %v504 = vsel %vm317, %v460, 0
      %506 = vmatpush.bf16.msra.mxu0 0
      %507 = vmatpush.bf16.msra.mxu0 0
      %508 = vmatpush.bf16.msra.mxu0 0
      %509 = vmatpush.bf16.msra.mxu0 0
      %510 = vmatpush.bf16.msra.mxu0 %v489
      %511 = vmatpush.bf16.msra.mxu0 %v488
      %512 = vmatpush.bf16.msra.mxu0 %v487
      %513 = vmatpush.bf16.msra.mxu0 %v486
      %514 = vmatmul.bf16.gmra.mxu0 %v495
      %v515 = vpop.f32.mrf.mxu0
      %v516 = vadd.f32 0.0, %v515
      %v517 = vpop.f32.mrf.mxu0
      %v518 = vadd.f32 0.0, %v517
      %519 = vmatmul.bf16.gmra.mxu0 %v498
      %v520 = vpop.f32.mrf.mxu0
      %v521 = vadd.f32 0.0, %v520
      %v522 = vpop.f32.mrf.mxu0
      %v523 = vadd.f32 0.0, %v522
      %524 = vmatmul.bf16.gmra.mxu0 %v501
      %v525 = vpop.f32.mrf.mxu0
      %v526 = vadd.f32 0.0, %v525
      %v527 = vpop.f32.mrf.mxu0
      %v528 = vadd.f32 0.0, %v527
      %529 = vmatmul.bf16.gmra.mxu0 %v504
      %v530 = vpop.f32.mrf.mxu0
      %v531 = vadd.f32 0.0, %v530
      %v532 = vpop.f32.mrf.mxu0
      %v533 = vadd.f32 0.0, %v532
      %534 = vdwg.mxu0
      %v535 = vadd.f32 %v405, %v516
      %v536 = vadd.f32 %v407, %v518
      %v537 = vadd.f32 %v410, %v521
      %v538 = vadd.f32 %v412, %v523
      %v539 = vadd.f32 %v415, %v526
      %v540 = vadd.f32 %v417, %v528
      %v541 = vadd.f32 %v420, %v531
      %v542 = vadd.f32 %v422, %v533
      %v543 = vpack.c.bf16 %v203, %v201
      %v544 = vpack.c.bf16 %v207, %v205
      %v545 = vpack.c.bf16 %v211, %v209
      %v546 = vpack.c.bf16 %v215, %v213
      %s547 = scalar_lea.vmem %s1, 96
      %v548 = vld [vmem:[%s547] sm:$0xf]
      %v549 = vld [vmem:[%s547 + $0x4] sm:$0xf]
      %v550 = vld [vmem:[%s547 + $0x8] sm:$0xf]
      %v551 = vld [vmem:[%s547 + $0xc] sm:$0xf]
      %v552 = vld [vmem:[%s547 + $0x10] sm:$0xf]
      %v553 = vld [vmem:[%s547 + $0x14] sm:$0xf]
      %v554 = vld [vmem:[%s547 + $0x18] sm:$0xf]
      %v555 = vld [vmem:[%s547 + $0x1c] sm:$0xf]
      %v564 = vunpack.c.l.b16 %v548
      %v565 = vunpack.c.l.b16 %v549
      %v566 = vunpack.c.l.b16 %v550
      %v567 = vunpack.c.l.b16 %v551
      %v568 = vunpack.c.l.b16 %v552
      %v569 = vunpack.c.l.b16 %v553
      %v570 = vunpack.c.l.b16 %v554
      %v571 = vunpack.c.l.b16 %v555
      %v572 = vpack.c.b16 %v565, %v564
      %v573 = vpack.c.b16 %v567, %v566
      %v574 = vpack.c.b16 %v569, %v568
      %v575 = vpack.c.b16 %v571, %v570
      %v581 = vsel %vm317, %v543, 0
      %v584 = vsel %vm317, %v544, 0
      %v587 = vsel %vm317, %v545, 0
      %v590 = vsel %vm317, %v546, 0
      %592 = vmatpush.bf16.msra.mxu0 0
      %593 = vmatpush.bf16.msra.mxu0 0
      %594 = vmatpush.bf16.msra.mxu0 0
      %595 = vmatpush.bf16.msra.mxu0 0
      %596 = vmatpush.bf16.msra.mxu0 %v575
      %597 = vmatpush.bf16.msra.mxu0 %v574
      %598 = vmatpush.bf16.msra.mxu0 %v573
      %599 = vmatpush.bf16.msra.mxu0 %v572
      %600 = vmatmul.bf16.gmra.mxu0 %v581
      %v601 = vpop.f32.mrf.mxu0
      %v602 = vadd.f32 0.0, %v601
      %v603 = vpop.f32.mrf.mxu0
      %v604 = vadd.f32 0.0, %v603
      %605 = vmatmul.bf16.gmra.mxu0 %v584
      %v606 = vpop.f32.mrf.mxu0
      %v607 = vadd.f32 0.0, %v606
      %v608 = vpop.f32.mrf.mxu0
      %v609 = vadd.f32 0.0, %v608
      %610 = vmatmul.bf16.gmra.mxu0 %v587
      %v611 = vpop.f32.mrf.mxu0
      %v612 = vadd.f32 0.0, %v611
      %v613 = vpop.f32.mrf.mxu0
      %v614 = vadd.f32 0.0, %v613
      %615 = vmatmul.bf16.gmra.mxu0 %v590
      %v616 = vpop.f32.mrf.mxu0
      %v617 = vadd.f32 0.0, %v616
      %v618 = vpop.f32.mrf.mxu0
      %v619 = vadd.f32 0.0, %v618
      %620 = vdwg.mxu0
      %v621 = vadd.f32 %v535, %v602
      %v622 = vadd.f32 %v536, %v604
      %v623 = vadd.f32 %v537, %v607
      %v624 = vadd.f32 %v538, %v609
      %v625 = vadd.f32 %v539, %v612
      %v626 = vadd.f32 %v540, %v614
      %v627 = vadd.f32 %v541, %v617
      %v628 = vadd.f32 %v542, %v619
      %v631 = vrot.slane %v215, 1
      %v632 = vrot.slane %v216, 1
      %v633 = vsel %vm247, %v631, %v632
      %v635 = vpack.c.bf16 %v256, %v253
      %v636 = vpack.c.bf16 %v262, %v259
      %v637 = vpack.c.bf16 %v268, %v265
      %v638 = vpack.c.bf16 %v633, %v271
      %s639 = scalar_lea.vmem %s1, 128
      %v640 = vld [vmem:[%s639] sm:$0xf]
      %v641 = vld [vmem:[%s639 + $0x4] sm:$0xf]
      %v642 = vld [vmem:[%s639 + $0x8] sm:$0xf]
      %v643 = vld [vmem:[%s639 + $0xc] sm:$0xf]
      %v644 = vld [vmem:[%s639 + $0x10] sm:$0xf]
      %v645 = vld [vmem:[%s639 + $0x14] sm:$0xf]
      %v646 = vld [vmem:[%s639 + $0x18] sm:$0xf]
      %v647 = vld [vmem:[%s639 + $0x1c] sm:$0xf]
      %v656 = vunpack.c.l.b16 %v640
      %v657 = vunpack.c.l.b16 %v641
      %v658 = vunpack.c.l.b16 %v642
      %v659 = vunpack.c.l.b16 %v643
      %v660 = vunpack.c.l.b16 %v644
      %v661 = vunpack.c.l.b16 %v645
      %v662 = vunpack.c.l.b16 %v646
      %v663 = vunpack.c.l.b16 %v647
      %v664 = vpack.c.b16 %v657, %v656
      %v665 = vpack.c.b16 %v659, %v658
      %v666 = vpack.c.b16 %v661, %v660
      %v667 = vpack.c.b16 %v663, %v662
      %v673 = vsel %vm317, %v635, 0
      %v676 = vsel %vm317, %v636, 0
      %v679 = vsel %vm317, %v637, 0
      %v682 = vsel %vm317, %v638, 0
      %684 = vmatpush.bf16.msra.mxu0 0
      %685 = vmatpush.bf16.msra.mxu0 0
      %686 = vmatpush.bf16.msra.mxu0 0
      %687 = vmatpush.bf16.msra.mxu0 0
      %688 = vmatpush.bf16.msra.mxu0 %v667
      %689 = vmatpush.bf16.msra.mxu0 %v666
      %690 = vmatpush.bf16.msra.mxu0 %v665
      %691 = vmatpush.bf16.msra.mxu0 %v664
      %692 = vmatmul.bf16.gmra.mxu0 %v673
      %v693 = vpop.f32.mrf.mxu0
      %v694 = vadd.f32 0.0, %v693
      %v695 = vpop.f32.mrf.mxu0
      %v696 = vadd.f32 0.0, %v695
      %697 = vmatmul.bf16.gmra.mxu0 %v676
      %v698 = vpop.f32.mrf.mxu0
      %v699 = vadd.f32 0.0, %v698
      %v700 = vpop.f32.mrf.mxu0
      %v701 = vadd.f32 0.0, %v700
      %702 = vmatmul.bf16.gmra.mxu0 %v679
      %v703 = vpop.f32.mrf.mxu0
      %v704 = vadd.f32 0.0, %v703
      %v705 = vpop.f32.mrf.mxu0
      %v706 = vadd.f32 0.0, %v705
      %707 = vmatmul.bf16.gmra.mxu0 %v682
      %v708 = vpop.f32.mrf.mxu0
      %v709 = vadd.f32 0.0, %v708
      %v710 = vpop.f32.mrf.mxu0
      %v711 = vadd.f32 0.0, %v710
      %712 = vdwg.mxu0
      %v713 = vadd.f32 %v621, %v694
      %v714 = vadd.f32 %v622, %v696
      %v715 = vadd.f32 %v623, %v699
      %v716 = vadd.f32 %v624, %v701
      %v717 = vadd.f32 %v625, %v704
      %v718 = vadd.f32 %v626, %v706
      %v719 = vadd.f32 %v627, %v709
      %v720 = vadd.f32 %v628, %v711
      %v721 = vrot.slane %v215, 2
      %v722 = vrot.slane %v216, 2
      %v723 = vsel %vm424, %v721, %v722
      %v725 = vpack.c.bf16 %v433, %v430
      %v726 = vpack.c.bf16 %v439, %v436
      %v727 = vpack.c.bf16 %v445, %v442
      %v728 = vpack.c.bf16 %v723, %v448
      %s729 = scalar_lea.vmem %s1, 160
      %v730 = vld [vmem:[%s729] sm:$0xf]
      %v731 = vld [vmem:[%s729 + $0x4] sm:$0xf]
      %v732 = vld [vmem:[%s729 + $0x8] sm:$0xf]
      %v733 = vld [vmem:[%s729 + $0xc] sm:$0xf]
      %v734 = vld [vmem:[%s729 + $0x10] sm:$0xf]
      %v735 = vld [vmem:[%s729 + $0x14] sm:$0xf]
      %v736 = vld [vmem:[%s729 + $0x18] sm:$0xf]
      %v737 = vld [vmem:[%s729 + $0x1c] sm:$0xf]
      %v746 = vunpack.c.l.b16 %v730
      %v747 = vunpack.c.l.b16 %v731
      %v748 = vunpack.c.l.b16 %v732
      %v749 = vunpack.c.l.b16 %v733
      %v750 = vunpack.c.l.b16 %v734
      %v751 = vunpack.c.l.b16 %v735
      %v752 = vunpack.c.l.b16 %v736
      %v753 = vunpack.c.l.b16 %v737
      %v754 = vpack.c.b16 %v747, %v746
      %v755 = vpack.c.b16 %v749, %v748
      %v756 = vpack.c.b16 %v751, %v750
      %v757 = vpack.c.b16 %v753, %v752
      %v763 = vsel %vm317, %v725, 0
      %v766 = vsel %vm317, %v726, 0
      %v769 = vsel %vm317, %v727, 0
      %v772 = vsel %vm317, %v728, 0
      %774 = vmatpush.bf16.msra.mxu0 0
      %775 = vmatpush.bf16.msra.mxu0 0
      %776 = vmatpush.bf16.msra.mxu0 0
      %777 = vmatpush.bf16.msra.mxu0 0
      %778 = vmatpush.bf16.msra.mxu0 %v757
      %779 = vmatpush.bf16.msra.mxu0 %v756
      %780 = vmatpush.bf16.msra.mxu0 %v755
      %781 = vmatpush.bf16.msra.mxu0 %v754
      %782 = vmatmul.bf16.gmra.mxu0 %v763
      %v783 = vpop.f32.mrf.mxu0
      %v784 = vadd.f32 0.0, %v783
      %v785 = vpop.f32.mrf.mxu0
      %v786 = vadd.f32 0.0, %v785
      %787 = vmatmul.bf16.gmra.mxu0 %v766
      %v788 = vpop.f32.mrf.mxu0
      %v789 = vadd.f32 0.0, %v788
      %v790 = vpop.f32.mrf.mxu0
      %v791 = vadd.f32 0.0, %v790
      %792 = vmatmul.bf16.gmra.mxu0 %v769
      %v793 = vpop.f32.mrf.mxu0
      %v794 = vadd.f32 0.0, %v793
      %v795 = vpop.f32.mrf.mxu0
      %v796 = vadd.f32 0.0, %v795
      %797 = vmatmul.bf16.gmra.mxu0 %v772
      %v798 = vpop.f32.mrf.mxu0
      %v799 = vadd.f32 0.0, %v798
      %v800 = vpop.f32.mrf.mxu0
      %v801 = vadd.f32 0.0, %v800
      %802 = vdwg.mxu0
      %v803 = vadd.f32 %v713, %v784
      %v804 = vadd.f32 %v714, %v786
      %v805 = vadd.f32 %v715, %v789
      %v806 = vadd.f32 %v716, %v791
      %v807 = vadd.f32 %v717, %v794
      %v808 = vadd.f32 %v718, %v796
      %v809 = vadd.f32 %v719, %v799
      %v810 = vadd.f32 %v720, %v801
      %v811 = vpack.c.bf16 %v217, %v215
      %s812 = scalar_lea.vmem %s1, 192
      %v813 = vld [vmem:[%s812] sm:$0xf]
      %v814 = vld [vmem:[%s812 + $0x4] sm:$0xf]
      %v815 = vld [vmem:[%s812 + $0x8] sm:$0xf]
      %v816 = vld [vmem:[%s812 + $0xc] sm:$0xf]
      %v817 = vld [vmem:[%s812 + $0x10] sm:$0xf]
      %v818 = vld [vmem:[%s812 + $0x14] sm:$0xf]
      %v819 = vld [vmem:[%s812 + $0x18] sm:$0xf]
      %v820 = vld [vmem:[%s812 + $0x1c] sm:$0xf]
      %v829 = vunpack.c.l.b16 %v813
      %v830 = vunpack.c.l.b16 %v814
      %v831 = vunpack.c.l.b16 %v815
      %v832 = vunpack.c.l.b16 %v816
      %v833 = vunpack.c.l.b16 %v817
      %v834 = vunpack.c.l.b16 %v818
      %v835 = vunpack.c.l.b16 %v819
      %v836 = vunpack.c.l.b16 %v820
      %v837 = vpack.c.b16 %v830, %v829
      %v838 = vpack.c.b16 %v832, %v831
      %v839 = vpack.c.b16 %v834, %v833
      %v840 = vpack.c.b16 %v836, %v835
      %v846 = vsel %vm317, %v811, 0
      %848 = vmatpush.bf16.msra.mxu0 0
      %849 = vmatpush.bf16.msra.mxu0 0
      %850 = vmatpush.bf16.msra.mxu0 0
      %851 = vmatpush.bf16.msra.mxu0 0
      %852 = vmatpush.bf16.msra.mxu0 %v840
      %853 = vmatpush.bf16.msra.mxu0 %v839
      %854 = vmatpush.bf16.msra.mxu0 %v838
      %855 = vmatpush.bf16.msra.mxu0 %v837
      %856 = vmatmul.bf16.gmra.mxu0 %v387
      %v857 = vpop.f32.mrf.mxu0
      %v858 = vadd.f32 0.0, %v857
      %v859 = vpop.f32.mrf.mxu0
      %v860 = vadd.f32 0.0, %v859
      %861 = vmatmul.bf16.gmra.mxu0 %v390
      %v862 = vpop.f32.mrf.mxu0
      %v863 = vadd.f32 0.0, %v862
      %v864 = vpop.f32.mrf.mxu0
      %v865 = vadd.f32 0.0, %v864
      %866 = vmatmul.bf16.gmra.mxu0 %v393
      %v867 = vpop.f32.mrf.mxu0
      %v868 = vadd.f32 0.0, %v867
      %v869 = vpop.f32.mrf.mxu0
      %v870 = vadd.f32 0.0, %v869
      %871 = vmatmul.bf16.gmra.mxu0 %v846
      %v872 = vpop.f32.mrf.mxu0
      %v873 = vadd.f32 0.0, %v872
      %v874 = vpop.f32.mrf.mxu0
      %v875 = vadd.f32 0.0, %v874
      %876 = vdwg.mxu0
      %v877 = vadd.f32 %v803, %v858
      %v878 = vadd.f32 %v804, %v860
      %v879 = vadd.f32 %v805, %v863
      %v880 = vadd.f32 %v806, %v865
      %v881 = vadd.f32 %v807, %v868
      %v882 = vadd.f32 %v808, %v870
      %v883 = vadd.f32 %v809, %v873
      %v884 = vadd.f32 %v810, %v875
      %v887 = vrot.slane %v217, 1
      %v888 = vrot.slane %v218, 1
      %v889 = vsel %vm247, %v887, %v888
      %v891 = vpack.c.bf16 %v889, %v633
      %s892 = scalar_lea.vmem %s1, 224
      %v893 = vld [vmem:[%s892] sm:$0xf]
      %v894 = vld [vmem:[%s892 + $0x4] sm:$0xf]
      %v895 = vld [vmem:[%s892 + $0x8] sm:$0xf]
      %v896 = vld [vmem:[%s892 + $0xc] sm:$0xf]
      %v897 = vld [vmem:[%s892 + $0x10] sm:$0xf]
      %v898 = vld [vmem:[%s892 + $0x14] sm:$0xf]
      %v899 = vld [vmem:[%s892 + $0x18] sm:$0xf]
      %v900 = vld [vmem:[%s892 + $0x1c] sm:$0xf]
      %v909 = vunpack.c.l.b16 %v893
      %v910 = vunpack.c.l.b16 %v894
      %v911 = vunpack.c.l.b16 %v895
      %v912 = vunpack.c.l.b16 %v896
      %v913 = vunpack.c.l.b16 %v897
      %v914 = vunpack.c.l.b16 %v898
      %v915 = vunpack.c.l.b16 %v899
      %v916 = vunpack.c.l.b16 %v900
      %v917 = vpack.c.b16 %v910, %v909
      %v918 = vpack.c.b16 %v912, %v911
      %v919 = vpack.c.b16 %v914, %v913
      %v920 = vpack.c.b16 %v916, %v915
      %v926 = vsel %vm317, %v891, 0
      %928 = vmatpush.bf16.msra.mxu0 0
      %929 = vmatpush.bf16.msra.mxu0 0
      %930 = vmatpush.bf16.msra.mxu0 0
      %931 = vmatpush.bf16.msra.mxu0 0
      %932 = vmatpush.bf16.msra.mxu0 %v920
      %933 = vmatpush.bf16.msra.mxu0 %v919
      %934 = vmatpush.bf16.msra.mxu0 %v918
      %935 = vmatpush.bf16.msra.mxu0 %v917
      %936 = vmatmul.bf16.gmra.mxu0 %v322
      %v937 = vpop.f32.mrf.mxu0
      %v938 = vadd.f32 0.0, %v937
      %v939 = vpop.f32.mrf.mxu0
      %v940 = vadd.f32 0.0, %v939
      %941 = vmatmul.bf16.gmra.mxu0 %v325
      %v942 = vpop.f32.mrf.mxu0
      %v943 = vadd.f32 0.0, %v942
      %v944 = vpop.f32.mrf.mxu0
      %v945 = vadd.f32 0.0, %v944
      %946 = vmatmul.bf16.gmra.mxu0 %v328
      %v947 = vpop.f32.mrf.mxu0
      %v948 = vadd.f32 0.0, %v947
      %v949 = vpop.f32.mrf.mxu0
      %v950 = vadd.f32 0.0, %v949
      %951 = vmatmul.bf16.gmra.mxu0 %v926
      %v952 = vpop.f32.mrf.mxu0
      %v953 = vadd.f32 0.0, %v952
      %v954 = vpop.f32.mrf.mxu0
      %v955 = vadd.f32 0.0, %v954
      %956 = vdwg.mxu0
      %v957 = vadd.f32 %v877, %v938
      %v958 = vadd.f32 %v878, %v940
      %v959 = vadd.f32 %v879, %v943
      %v960 = vadd.f32 %v880, %v945
      %v961 = vadd.f32 %v881, %v948
      %v962 = vadd.f32 %v882, %v950
      %v963 = vadd.f32 %v883, %v953
      %v964 = vadd.f32 %v884, %v955
      %v965 = vrot.slane %v217, 2
      %v966 = vrot.slane %v218, 2
      %v967 = vsel %vm424, %v965, %v966
      %v969 = vpack.c.bf16 %v967, %v723
      %s970 = scalar_lea.vmem %s1, 256
      %v971 = vld [vmem:[%s970] sm:$0xf]
      %v972 = vld [vmem:[%s970 + $0x4] sm:$0xf]
      %v973 = vld [vmem:[%s970 + $0x8] sm:$0xf]
      %v974 = vld [vmem:[%s970 + $0xc] sm:$0xf]
      %v975 = vld [vmem:[%s970 + $0x10] sm:$0xf]
      %v976 = vld [vmem:[%s970 + $0x14] sm:$0xf]
      %v977 = vld [vmem:[%s970 + $0x18] sm:$0xf]
      %v978 = vld [vmem:[%s970 + $0x1c] sm:$0xf]
      %v987 = vunpack.c.l.b16 %v971
      %v988 = vunpack.c.l.b16 %v972
      %v989 = vunpack.c.l.b16 %v973
      %v990 = vunpack.c.l.b16 %v974
      %v991 = vunpack.c.l.b16 %v975
      %v992 = vunpack.c.l.b16 %v976
      %v993 = vunpack.c.l.b16 %v977
      %v994 = vunpack.c.l.b16 %v978
      %v995 = vpack.c.b16 %v988, %v987
      %v996 = vpack.c.b16 %v990, %v989
      %v997 = vpack.c.b16 %v992, %v991
      %v998 = vpack.c.b16 %v994, %v993
      %v1004 = vsel %vm317, %v969, 0
      %1006 = vmatpush.bf16.msra.mxu0 0
      %1007 = vmatpush.bf16.msra.mxu0 0
      %1008 = vmatpush.bf16.msra.mxu0 0
      %1009 = vmatpush.bf16.msra.mxu0 0
      %1010 = vmatpush.bf16.msra.mxu0 %v998
      %1011 = vmatpush.bf16.msra.mxu0 %v997
      %1012 = vmatpush.bf16.msra.mxu0 %v996
      %1013 = vmatpush.bf16.msra.mxu0 %v995
      %1014 = vmatmul.bf16.gmra.mxu0 %v498
      %v1015 = vpop.f32.mrf.mxu0
      %v1016 = vadd.f32 0.0, %v1015
      %v1017 = vpop.f32.mrf.mxu0
      %v1018 = vadd.f32 0.0, %v1017
      %1019 = vmatmul.bf16.gmra.mxu0 %v501
      %v1020 = vpop.f32.mrf.mxu0
      %v1021 = vadd.f32 0.0, %v1020
      %v1022 = vpop.f32.mrf.mxu0
      %v1023 = vadd.f32 0.0, %v1022
      %1024 = vmatmul.bf16.gmra.mxu0 %v504
      %v1025 = vpop.f32.mrf.mxu0
      %v1026 = vadd.f32 0.0, %v1025
      %v1027 = vpop.f32.mrf.mxu0
      %v1028 = vadd.f32 0.0, %v1027
      %1029 = vmatmul.bf16.gmra.mxu0 %v1004
      %v1030 = vpop.f32.mrf.mxu0
      %v1031 = vadd.f32 0.0, %v1030
      %v1032 = vpop.f32.mrf.mxu0
      %v1033 = vadd.f32 0.0, %v1032
      %1034 = vdwg.mxu0
      %v1035 = vadd.f32 %v957, %v1016
      %v1036 = vadd.f32 %v958, %v1018
      %v1037 = vadd.f32 %v959, %v1021
      %v1038 = vadd.f32 %v960, %v1023
      %v1039 = vadd.f32 %v961, %v1026
      %v1040 = vadd.f32 %v962, %v1028
      %v1041 = vadd.f32 %v963, %v1031
      %v1042 = vadd.f32 %v964, %v1033
      %v1043 = vld [vmem:[%s2] sm:$0x1]
      %v1045 = vperm.slane %v1043, 0
      %v1047 = vmul.f32 %v1035, %v1045
      %v1048 = vmul.f32 %v1036, %v1045
      %v1049 = vmul.f32 %v1037, %v1045
      %v1050 = vmul.f32 %v1038, %v1045
      %v1051 = vmul.f32 %v1039, %v1045
      %v1052 = vmul.f32 %v1040, %v1045
      %v1053 = vmul.f32 %v1041, %v1045
      %v1054 = vmul.f32 %v1042, %v1045
      %v1055 = vld [vmem:[%s3] sm:$0x1]
      %v1057 = vperm.slane %v1055, 0
      %v1059 = vadd.f32 %v1047, %v1057
      %v1060 = vadd.f32 %v1048, %v1057
      %v1061 = vadd.f32 %v1049, %v1057
      %v1062 = vadd.f32 %v1050, %v1057
      %v1063 = vadd.f32 %v1051, %v1057
      %v1064 = vadd.f32 %v1052, %v1057
      %v1065 = vadd.f32 %v1053, %v1057
      %v1066 = vadd.f32 %v1054, %v1057
      %v1067 = vmax.f32 %v1059, 0.0
      %v1068 = vmax.f32 %v1060, 0.0
      %v1069 = vmax.f32 %v1061, 0.0
      %v1070 = vmax.f32 %v1062, 0.0
      %v1071 = vmax.f32 %v1063, 0.0
      %v1072 = vmax.f32 %v1064, 0.0
      %v1073 = vmax.f32 %v1065, 0.0
      %v1074 = vmax.f32 %v1066, 0.0
      %1075 = vst.msk [vmem:[%s197] sm:$0xff] %vm317, %v1067
      %1076 = vst.msk [vmem:[%s197 + $0x8] sm:$0xff] %vm317, %v1068
      %1077 = vst.msk [vmem:[%s197 + $0x10] sm:$0xff] %vm317, %v1069
      %1078 = vst.msk [vmem:[%s197 + $0x18] sm:$0xff] %vm317, %v1070
      %1079 = vst.msk [vmem:[%s197 + $0x20] sm:$0xff] %vm317, %v1071
      %1080 = vst.msk [vmem:[%s197 + $0x28] sm:$0xff] %vm317, %v1072
      %1081 = vst.msk [vmem:[%s197 + $0x30] sm:$0xff] %vm317, %v1073
      %1082 = vst.msk [vmem:[%s197 + $0x38] sm:$0xff] %vm317, %v1074
      %p1083 = scmp.lt.s32.totalorder %s15, 1
      %s1084 = scalar_select %p1083, %s15, 1
      %s1085 = smul.addr %s1084, 8
      %s1086 = smul.addr %s1085, 8
      %s1087 = scalar_lea.vmem %s4, %s1086
      // Predicated region
      $region37: #{_lambda_.21} parent=35 // pred_check
        %p1088 = pneg %p122
      $region38: #{_lambda_.21} parent=35 // pred_check_branch
        %1090 = sbr.rel (%p1088) target = $region40
      $region39: #{_lambda_.21} parent=35 // pred_region
        _
      $region40: #{_lambda_.21} parent=35 // pred_fallthru
        _
    $region36: #{_lambda_.21} parent=5 // pred_fallthru
      _
    %p1091 = scmp.le.s32.totalorder 2, %s10
    // Predicated region
    $region41: #{_lambda_.21} parent=5 // pred_check
      %p1092 = pneg %p1091
    $region42: #{_lambda_.21} parent=5 // pred_check_branch
      %1094 = sbr.rel (%p1092) target = $region44
    $region43: #{_lambda_.21} parent=5 // pred_region
      %s1095 = ssub.s32 %s10, 2
      // Predicated region
      $region45: #{_lambda_.21} parent=43 // pred_check
        %p1096 = pneg %p128
      $region46: #{_lambda_.21} parent=43 // pred_check_branch
        %1098 = sbr.rel (%p1096) target = $region48
      $region47: #{_lambda_.21} parent=43 // pred_region
        %p1099 = scmp.lt.s32.totalorder %s16, 1
        %s1100 = scalar_select %p1099, %s16, 1
        %s1101 = smul.addr %s1100, 8
        %s1102 = smul.addr %s1101, 8
        %s1103 = scalar_lea.vmem %s4, %s1102
      $region48: #{_lambda_.21} parent=43 // pred_fallthru
        _
    $region44: #{_lambda_.21} parent=5 // pred_fallthru
      _
  $region6: #{_lambda_.21} parent=0 // loop_footer
    %s14 = sadd.s32 1, %s10
  $region7: #{_lambda_.21} parent=0 // loop_footer_branch
    %9 = sbr.rel target = $region3
  $region8: #{_lambda_.21} parent=0 // loop_exit
    _

// kernel: _lambda_.20
$region0: #{_lambda_.20}
  #allocation0 [shape = 'u32[]', space=smem, size = 0x4, offset = 0x4, fixed_abs, tag = 'smem constant byte address 0x4 - core index']
  #allocation1 [shape = 'u32[72,128]{1,0:T(1,128)}', space=vmem, size = 0x9000, scoped, tag = 'internal scratch']
  %s0 = inlined_call_operand.vmem [shape: f32[2,10,10,64], index: 0, kind: input, shape index: {}]
  %s1 = inlined_call_operand.vmem [shape: bf16[9,64,64], index: 1, kind: input, shape index: {}]
  %s2 = inlined_call_operand.vmem [shape: f32[1,64], index: 2, kind: input, shape index: {}]
  %s3 = inlined_call_operand.vmem [shape: f32[1,64], index: 3, kind: input, shape index: {}]
  %s4 = inlined_call_operand.vmem [shape: f32[2,8,8,64], index: 4, kind: input, shape index: {}]
  %s5 = inlined_call_operand.vmem [shape: f32[2,8,8,64], index: 5, kind: output, shape index: {}]
  %s6 = sld [smem:[#allocation0]]
  $region53: #{_lambda_.20} parent=0
    _
  %s8 = ssub.s32 1, %s6
  %s9 = scalar_select 0, %s8, %s6
  loop: start=0, step=1, limit=4
  $region2: #{_lambda_.20} parent=0 // loop_pre_header
    _
  $region3: #{_lambda_.20} parent=0 // loop_header
    %s11 = sphi 0, %s15
    %p12 = scmp.ge.s32.totalorder %s11, 4
    %s21 = sphi 0, %s23
    %s24 = sphi 0, %s21
    %s25 = sphi 0, %s24
    %s41 = sphi 0, %s25
    %s45 = sphi 0, %s45
    %s47 = sphi 0, %s45
    %s48 = sphi 0, %s47
    %s62 = sphi 0, %s48
    %s66 = sphi 0, %s66
    %s68 = sphi 0, %s66
    %s69 = sphi 0, %s68
    %s83 = sphi 0, %s69
    %s87 = sphi 0, %s87
    %s89 = sphi 0, %s87
    %s90 = sphi 0, %s89
    %s104 = sphi 0, %s90
    %s110 = sphi 0, %s112
    %s113 = sphi 0, %s110
    %s114 = sphi 0, %s113
    %s130 = sphi 0, %s114
    %s136 = sphi 0, %s138
    %s139 = sphi 0, %s136
    %s140 = sphi 0, %s139
    %s156 = sphi 0, %s140
  $region4: #{_lambda_.20} parent=0 // loop_header_branch
    %14 = sbr.rel (%p12) target = $region8
  $region5: #{_lambda_.20} parent=0 // loop_body
    %s16 = ssub.s32 %s11, 1
    %s17 = ssub.s32 %s11, 2
    %s18 = sadd.s32 %s11, 1
    %s19 = ssub.s32 %s11, %s18
    %p20 = scmp.eq.s32.totalorder %s19, 0
    %s22 = sadd.s32 %s21, 1
    %s23 = scalar_select %p20, %s21, %s22
    %p26 = pneg %p20
    %p27 = scmp.eq.s32.totalorder %s11, 1
    %p28 = por %p26, %p27
    %p29 = scmp.ne.s32.totalorder %s21, %s24
    %p30 = scmp.eq.s32.totalorder %s11, 0
    %p31 = por %p29, %p30
    %p32 = scmp.ne.s32.totalorder %s21, %s24
    %p33 = scmp.eq.s32.totalorder %s16, 1
    %p34 = por %p32, %p33
    %p35 = scmp.ne.s32.totalorder %s24, %s25
    %p36 = scmp.eq.s32.totalorder %s16, 0
    %p37 = por %p35, %p36
    %p38 = scmp.ne.s32.totalorder %s24, %s25
    %p39 = scmp.eq.s32.totalorder %s17, 1
    %p40 = por %p38, %p39
    %p42 = scmp.ne.s32.totalorder %s25, %s41
    %p43 = scmp.eq.s32.totalorder %s17, 0
    %p44 = por %p42, %p43
    %s46 = sadd.s32 %s45, 1
    %p49 = scmp.eq.s32.totalorder %s11, 1
    %p50 = scmp.ne.s32.totalorder %s45, %s47
    %p51 = scmp.eq.s32.totalorder %s11, 0
    %p52 = por %p50, %p51
    %p53 = scmp.ne.s32.totalorder %s45, %s47
    %p54 = scmp.eq.s32.totalorder %s16, 1
    %p55 = por %p53, %p54
    %p56 = scmp.ne.s32.totalorder %s47, %s48
    %p57 = scmp.eq.s32.totalorder %s16, 0
    %p58 = por %p56, %p57
    %p59 = scmp.ne.s32.totalorder %s47, %s48
    %p60 = scmp.eq.s32.totalorder %s17, 1
    %p61 = por %p59, %p60
    %p63 = scmp.ne.s32.totalorder %s48, %s62
    %p64 = scmp.eq.s32.totalorder %s17, 0
    %p65 = por %p63, %p64
    %s67 = sadd.s32 %s66, 1
    %p70 = scmp.eq.s32.totalorder %s11, 1
    %p71 = scmp.ne.s32.totalorder %s66, %s68
    %p72 = scmp.eq.s32.totalorder %s11, 0
    %p73 = por %p71, %p72
    %p74 = scmp.ne.s32.totalorder %s66, %s68
    %p75 = scmp.eq.s32.totalorder %s16, 1
    %p76 = por %p74, %p75
    %p77 = scmp.ne.s32.totalorder %s68, %s69
    %p78 = scmp.eq.s32.totalorder %s16, 0
    %p79 = por %p77, %p78
    %p80 = scmp.ne.s32.totalorder %s68, %s69
    %p81 = scmp.eq.s32.totalorder %s17, 1
    %p82 = por %p80, %p81
    %p84 = scmp.ne.s32.totalorder %s69, %s83
    %p85 = scmp.eq.s32.totalorder %s17, 0
    %p86 = por %p84, %p85
    %s88 = sadd.s32 %s87, 1
    %p91 = scmp.eq.s32.totalorder %s11, 1
    %p92 = scmp.ne.s32.totalorder %s87, %s89
    %p93 = scmp.eq.s32.totalorder %s11, 0
    %p94 = por %p92, %p93
    %p95 = scmp.ne.s32.totalorder %s87, %s89
    %p96 = scmp.eq.s32.totalorder %s16, 1
    %p97 = por %p95, %p96
    %p98 = scmp.ne.s32.totalorder %s89, %s90
    %p99 = scmp.eq.s32.totalorder %s16, 0
    %p100 = por %p98, %p99
    %p101 = scmp.ne.s32.totalorder %s89, %s90
    %p102 = scmp.eq.s32.totalorder %s17, 1
    %p103 = por %p101, %p102
    %p105 = scmp.ne.s32.totalorder %s90, %s104
    %p106 = scmp.eq.s32.totalorder %s17, 0
    %p107 = por %p105, %p106
    %s108 = ssub.s32 %s11, %s18
    %p109 = scmp.eq.s32.totalorder %s108, 0
    %s111 = sadd.s32 %s110, 1
    %s112 = scalar_select %p109, %s110, %s111
    %p115 = pneg %p109
    %p116 = scmp.eq.s32.totalorder %s11, 1
    %p117 = por %p115, %p116
    %p118 = scmp.ne.s32.totalorder %s110, %s113
    %p119 = scmp.eq.s32.totalorder %s11, 0
    %p120 = por %p118, %p119
    %p121 = scmp.ne.s32.totalorder %s110, %s113
    %p122 = scmp.eq.s32.totalorder %s16, 1
    %p123 = por %p121, %p122
    %p124 = scmp.ne.s32.totalorder %s113, %s114
    %p125 = scmp.eq.s32.totalorder %s16, 0
    %p126 = por %p124, %p125
    %p127 = scmp.ne.s32.totalorder %s113, %s114
    %p128 = scmp.eq.s32.totalorder %s17, 1
    %p129 = por %p127, %p128
    %p131 = scmp.ne.s32.totalorder %s114, %s130
    %p132 = scmp.eq.s32.totalorder %s17, 0
    %p133 = por %p131, %p132
    %s134 = ssub.s32 %s11, %s18
    %p135 = scmp.eq.s32.totalorder %s134, 0
    %s137 = sadd.s32 %s136, 1
    %s138 = scalar_select %p135, %s136, %s137
    %p141 = pneg %p135
    %p142 = scmp.eq.s32.totalorder %s11, 1
    %p143 = por %p141, %p142
    %p144 = scmp.ne.s32.totalorder %s136, %s139
    %p145 = scmp.eq.s32.totalorder %s11, 0
    %p146 = por %p144, %p145
    %p147 = scmp.ne.s32.totalorder %s136, %s139
    %p148 = scmp.eq.s32.totalorder %s16, 1
    %p149 = por %p147, %p148
    %p150 = scmp.ne.s32.totalorder %s139, %s140
    %p151 = scmp.eq.s32.totalorder %s16, 0
    %p152 = por %p150, %p151
    %p153 = scmp.ne.s32.totalorder %s139, %s140
    %p154 = scmp.eq.s32.totalorder %s17, 1
    %p155 = por %p153, %p154
    %p157 = scmp.ne.s32.totalorder %s140, %s156
    %p158 = scmp.eq.s32.totalorder %s17, 0
    %p159 = por %p157, %p158
    %p160 = scmp.le.s32.totalorder 1, %s11
    %p161 = scmp.lt.s32.totalorder %s11, 3
    %p162 = pnand %p160, %p161
    %p163 = pneg %p162
    // Predicated region
    $region9: #{_lambda_.20} parent=5 // pred_check
      _
    $region10: #{_lambda_.20} parent=5 // pred_check_branch
      %165 = sbr.rel (%p162) target = $region12
    $region11: #{_lambda_.20} parent=5 // pred_region
      %s166 = ssub.s32 %s11, 1
      // Predicated region
      $region13: #{_lambda_.20} parent=11 // pred_check
        %p167 = pneg %p58
      $region14: #{_lambda_.20} parent=11 // pred_check_branch
        %169 = sbr.rel (%p167) target = $region16
      $region15: #{_lambda_.20} parent=11 // pred_region
        _
      $region16: #{_lambda_.20} parent=11 // pred_fallthru
        _
      // Predicated region
      $region17: #{_lambda_.20} parent=11 // pred_check
        %p170 = pneg %p79
      $region18: #{_lambda_.20} parent=11 // pred_check_branch
        %172 = sbr.rel (%p170) target = $region20
      $region19: #{_lambda_.20} parent=11 // pred_region
        _
      $region20: #{_lambda_.20} parent=11 // pred_fallthru
        _
      // Predicated region
      $region21: #{_lambda_.20} parent=11 // pred_check
        %p173 = pneg %p100
      $region22: #{_lambda_.20} parent=11 // pred_check_branch
        %175 = sbr.rel (%p173) target = $region24
      $region23: #{_lambda_.20} parent=11 // pred_region
        _
      $region24: #{_lambda_.20} parent=11 // pred_fallthru
        _
    $region12: #{_lambda_.20} parent=5 // pred_fallthru
      _
    %p176 = scmp.lt.s32.totalorder %s11, 2
    // Predicated region
    $region25: #{_lambda_.20} parent=5 // pred_check
      %p177 = pneg %p176
    $region26: #{_lambda_.20} parent=5 // pred_check_branch
      %179 = sbr.rel (%p177) target = $region28
    $region27: #{_lambda_.20} parent=5 // pred_region
      // Predicated region
      $region29: #{_lambda_.20} parent=27 // pred_check
        %p180 = pneg %p31
      $region30: #{_lambda_.20} parent=27 // pred_check_branch
        %182 = sbr.rel (%p180) target = $region32
      $region31: #{_lambda_.20} parent=27 // pred_region
        %p183 = scmp.lt.s32.totalorder %s11, 1
        %s184 = scalar_select %p183, %s11, 1
        %s185 = smul.addr %s184, 20
        %s186 = smul.addr %s185, 8
        %s187 = scalar_lea.vmem %s0, %s186
      $region32: #{_lambda_.20} parent=27 // pred_fallthru
        _
      // Predicated region
      $region33: #{_lambda_.20} parent=27 // pred_check
        %p188 = pneg %p120
      $region34: #{_lambda_.20} parent=27 // pred_check_branch
        %190 = sbr.rel (%p188) target = $region36
      $region35: #{_lambda_.20} parent=27 // pred_region
        %p191 = scmp.lt.s32.totalorder %s11, 1
        %s192 = scalar_select %p191, %s11, 1
        %s193 = smul.addr %s192, 8
        %s194 = smul.addr %s193, 8
        %s195 = scalar_lea.vmem %s4, %s194
      $region36: #{_lambda_.20} parent=27 // pred_fallthru
        _
    $region28: #{_lambda_.20} parent=5 // pred_fallthru
      _
    %p196 = scmp.le.s32.totalorder 1, %s11
    %p197 = scmp.lt.s32.totalorder %s11, 3
    %p198 = pnand %p196, %p197
    %p199 = pneg %p198
    // Predicated region
    $region37: #{_lambda_.20} parent=5 // pred_check
      _
    $region38: #{_lambda_.20} parent=5 // pred_check_branch
      %201 = sbr.rel (%p198) target = $region40
    $region39: #{_lambda_.20} parent=5 // pred_region
      %s202 = ssub.s32 %s11, 1
      %p203 = scmp.lt.s32.totalorder %s16, 1
      %s204 = scalar_select %p203, %s16, 1
      %s205 = smul.addr %s204, 20
      %s206 = smul.addr %s205, 8
      %s207 = scalar_lea.vmem %s0, %s206
      %p208 = pneg %p37
      %p209 = pneg %p34
      %p210 = pneg %p58
      %p211 = pneg %p55
      %p212 = pneg %p79
      %p213 = pneg %p76
      %p214 = pneg %p100
      %p215 = pneg %p97
      %p216 = scmp.lt.s32.totalorder %s16, 1
      %s217 = scalar_select %p216, %s16, 1
      %s218 = smul.addr %s217, 8
      %s219 = smul.addr %s218, 8
      %s220 = scalar_lea.vmem %s4, %s219
      %p221 = pneg %p126
      %p222 = pneg %p123
      %p223 = pneg %p152
      %p224 = pneg %p149
      %p225 = scmp.lt.s32.totalorder %s16, 1
      %s226 = scalar_select %p225, %s16, 1
      %s227 = smul.addr %s226, 8
      %s228 = smul.addr %s227, 8
      %s229 = scalar_lea.vmem %s5, %s228
      %p230 = scmp.lt.s32.totalorder %s16, 1
      %s231 = scalar_select %p230, %s16, 1
      %s232 = smul.addr %s231, 20
      %s233 = smul.addr %s232, 8
      %s234 = scalar_lea.vmem %s0, %s233
      %p235 = scmp.lt.s32.totalorder %s16, 1
      %s236 = scalar_select %p235, %s16, 1
      %s237 = smul.addr %s236, 8
      %s238 = smul.addr %s237, 8
      %s239 = scalar_lea.vmem %s4, %s238
      %p240 = scmp.lt.s32.totalorder %s16, 1
      %s241 = scalar_select %p240, %s16, 1
      %s242 = smul.addr %s241, 8
      %s243 = smul.addr %s242, 8
      %s244 = scalar_lea.vmem %s5, %s243
      %v246 = vld [vmem:[%s234] sm:$0xff]
      %v247 = vld [vmem:[%s234 + $0x8] sm:$0x3]
      %v248 = vld [vmem:[%s234 + $0x10] sm:$0xff]
      %v249 = vld [vmem:[%s234 + $0x18] sm:$0x3]
      %v250 = vld [vmem:[%s234 + $0x20] sm:$0xff]
      %v251 = vld [vmem:[%s234 + $0x28] sm:$0x3]
      %v252 = vld [vmem:[%s234 + $0x30] sm:$0xff]
      %v253 = vld [vmem:[%s234 + $0x38] sm:$0x3]
      %v254 = vld [vmem:[%s234 + $0x40] sm:$0xff]
      %v255 = vld [vmem:[%s234 + $0x48] sm:$0x3]
      %v256 = vld [vmem:[%s234 + $0x50] sm:$0xff]
      %v257 = vld [vmem:[%s234 + $0x58] sm:$0x3]
      %v258 = vld [vmem:[%s234 + $0x60] sm:$0xff]
      %v259 = vld [vmem:[%s234 + $0x68] sm:$0x3]
      %v260 = vld [vmem:[%s234 + $0x70] sm:$0xff]
      %v261 = vld [vmem:[%s234 + $0x78] sm:$0x3]
      %v262 = vld [vmem:[%s234 + $0x80] sm:$0xff]
      %v263 = vld [vmem:[%s234 + $0x88] sm:$0x3]
      %v264 = vld [vmem:[%s234 + $0x90] sm:$0xff]
      %v265 = vld [vmem:[%s234 + $0x98] sm:$0x3]
      %v266 = vpack.c.bf16 %v248, %v246
      %v267 = vpack.c.bf16 %v252, %v250
      %v268 = vpack.c.bf16 %v256, %v254
      %v269 = vpack.c.bf16 %v260, %v258
      %v270 = vld [vmem:[%s1] sm:$0xf]
      %v271 = vld [vmem:[%s1 + $0x4] sm:$0xf]
      %v272 = vld [vmem:[%s1 + $0x8] sm:$0xf]
      %v273 = vld [vmem:[%s1 + $0xc] sm:$0xf]
      %v274 = vld [vmem:[%s1 + $0x10] sm:$0xf]
      %v275 = vld [vmem:[%s1 + $0x14] sm:$0xf]
      %v276 = vld [vmem:[%s1 + $0x18] sm:$0xf]
      %v277 = vld [vmem:[%s1 + $0x1c] sm:$0xf]
      %vm294 = vcmask 1046528
      %v295 = vrot.slane %v246, 1
      %v296 = vrot.slane %v247, 1
      %v297 = vsel %vm294, %v295, %v296
      %v298 = vrot.slane %v248, 1
      %v299 = vrot.slane %v249, 1
      %v300 = vsel %vm294, %v298, %v299
      %v301 = vrot.slane %v250, 1
      %v302 = vrot.slane %v251, 1
      %v303 = vsel %vm294, %v301, %v302
      %v304 = vrot.slane %v252, 1
      %v305 = vrot.slane %v253, 1
      %v306 = vsel %vm294, %v304, %v305
      %v307 = vrot.slane %v254, 1
      %v308 = vrot.slane %v255, 1
      %v309 = vsel %vm294, %v307, %v308
      %v310 = vrot.slane %v256, 1
      %v311 = vrot.slane %v257, 1
      %v312 = vsel %vm294, %v310, %v311
      %v313 = vrot.slane %v258, 1
      %v314 = vrot.slane %v259, 1
      %v315 = vsel %vm294, %v313, %v314
      %v316 = vrot.slane %v260, 1
      %v317 = vrot.slane %v261, 1
      %v318 = vsel %vm294, %v316, %v317
      %v327 = vpack.c.bf16 %v300, %v297
      %v328 = vpack.c.bf16 %v306, %v303
      %v329 = vpack.c.bf16 %v312, %v309
      %v330 = vpack.c.bf16 %v318, %v315
      %s331 = scalar_lea.vmem %s1, 32
      %v332 = vld [vmem:[%s331] sm:$0xf]
      %v333 = vld [vmem:[%s331 + $0x4] sm:$0xf]
      %v334 = vld [vmem:[%s331 + $0x8] sm:$0xf]
      %v335 = vld [vmem:[%s331 + $0xc] sm:$0xf]
      %v336 = vld [vmem:[%s331 + $0x10] sm:$0xf]
      %v337 = vld [vmem:[%s331 + $0x14] sm:$0xf]
      %v338 = vld [vmem:[%s331 + $0x18] sm:$0xf]
      %v339 = vld [vmem:[%s331 + $0x1c] sm:$0xf]
      %v348 = vunpack.c.l.b16 %v332
      %v349 = vunpack.c.l.b16 %v333
      %v350 = vunpack.c.l.b16 %v334
      %v351 = vunpack.c.l.b16 %v335
      %v352 = vunpack.c.l.b16 %v336
      %v353 = vunpack.c.l.b16 %v337
      %v354 = vunpack.c.l.b16 %v338
      %v355 = vunpack.c.l.b16 %v339
      %v356 = vpack.c.b16 %v349, %v348
      %v357 = vpack.c.b16 %v351, %v350
      %v358 = vpack.c.b16 %v353, %v352
      %v359 = vpack.c.b16 %v355, %v354
      %vm364 = vcmask 523264
      %v366 = vsel %vm364, %v327, 0
      %v369 = vsel %vm364, %v328, 0
      %v372 = vsel %vm364, %v329, 0
      %v375 = vsel %vm364, %v330, 0
      %377 = vmatpush.bf16.msra.mxu0 0
      %378 = vmatpush.bf16.msra.mxu0 0
      %379 = vmatpush.bf16.msra.mxu0 0
      %380 = vmatpush.bf16.msra.mxu0 0
      %381 = vmatpush.bf16.msra.mxu0 %v359
      %382 = vmatpush.bf16.msra.mxu0 %v358
      %383 = vmatpush.bf16.msra.mxu0 %v357
      %384 = vmatpush.bf16.msra.mxu0 %v356
      %385 = vmatmul.bf16.gmra.mxu0 %v366
      %v386 = vpop.f32.mrf.mxu0
      %v387 = vadd.f32 0.0, %v386
      %v388 = vpop.f32.mrf.mxu0
      %v389 = vadd.f32 0.0, %v388
      %390 = vmatmul.bf16.gmra.mxu0 %v369
      %v391 = vpop.f32.mrf.mxu0
      %v392 = vadd.f32 0.0, %v391
      %v393 = vpop.f32.mrf.mxu0
      %v394 = vadd.f32 0.0, %v393
      %395 = vmatmul.bf16.gmra.mxu0 %v372
      %v396 = vpop.f32.mrf.mxu0
      %v397 = vadd.f32 0.0, %v396
      %v398 = vpop.f32.mrf.mxu0
      %v399 = vadd.f32 0.0, %v398
      %400 = vmatmul.bf16.gmra.mxu0 %v375
      %v401 = vpop.f32.mrf.mxu0
      %v402 = vadd.f32 0.0, %v401
      %v403 = vpop.f32.mrf.mxu0
      %v404 = vadd.f32 0.0, %v403
      %405 = vdwg.mxu0
      %v414 = vunpack.c.l.b16 %v270
      %v415 = vunpack.c.l.b16 %v271
      %v416 = vunpack.c.l.b16 %v272
      %v417 = vunpack.c.l.b16 %v273
      %v418 = vunpack.c.l.b16 %v274
      %v419 = vunpack.c.l.b16 %v275
      %v420 = vunpack.c.l.b16 %v276
      %v421 = vunpack.c.l.b16 %v277
      %v422 = vpack.c.b16 %v415, %v414
      %v423 = vpack.c.b16 %v417, %v416
      %v424 = vpack.c.b16 %v419, %v418
      %v425 = vpack.c.b16 %v421, %v420
      %v431 = vsel %vm364, %v266, 0
      %v434 = vsel %vm364, %v267, 0
      %v437 = vsel %vm364, %v268, 0
      %v440 = vsel %vm364, %v269, 0
      %442 = vmatpush.bf16.msra.mxu0 0
      %443 = vmatpush.bf16.msra.mxu0 0
      %444 = vmatpush.bf16.msra.mxu0 0
      %445 = vmatpush.bf16.msra.mxu0 0
      %446 = vmatpush.bf16.msra.mxu0 %v425
      %447 = vmatpush.bf16.msra.mxu0 %v424
      %448 = vmatpush.bf16.msra.mxu0 %v423
      %449 = vmatpush.bf16.msra.mxu0 %v422
      %450 = vmatmul.bf16.gmra.mxu0 %v431
      %v451 = vpop.f32.mrf.mxu0
      %v452 = vadd.f32 %v387, %v451
      %v453 = vpop.f32.mrf.mxu0
      %v454 = vadd.f32 %v389, %v453
      %455 = vmatmul.bf16.gmra.mxu0 %v434
      %v456 = vpop.f32.mrf.mxu0
      %v457 = vadd.f32 %v392, %v456
      %v458 = vpop.f32.mrf.mxu0
      %v459 = vadd.f32 %v394, %v458
      %460 = vmatmul.bf16.gmra.mxu0 %v437
      %v461 = vpop.f32.mrf.mxu0
      %v462 = vadd.f32 %v397, %v461
      %v463 = vpop.f32.mrf.mxu0
      %v464 = vadd.f32 %v399, %v463
      %465 = vmatmul.bf16.gmra.mxu0 %v440
      %v466 = vpop.f32.mrf.mxu0
      %v467 = vadd.f32 %v402, %v466
      %v468 = vpop.f32.mrf.mxu0
      %v469 = vadd.f32 %v404, %v468
      %470 = vdwg.mxu0
      %vm471 = vcmask 1045504
      %v472 = vrot.slane %v246, 2
      %v473 = vrot.slane %v247, 2
      %v474 = vsel %vm471, %v472, %v473
      %v475 = vrot.slane %v248, 2
      %v476 = vrot.slane %v249, 2
      %v477 = vsel %vm471, %v475, %v476
      %v478 = vrot.slane %v250, 2
      %v479 = vrot.slane %v251, 2
      %v480 = vsel %vm471, %v478, %v479
      %v481 = vrot.slane %v252, 2
      %v482 = vrot.slane %v253, 2
      %v483 = vsel %vm471, %v481, %v482
      %v484 = vrot.slane %v254, 2
      %v485 = vrot.slane %v255, 2
      %v486 = vsel %vm471, %v484, %v485
      %v487 = vrot.slane %v256, 2
      %v488 = vrot.slane %v257, 2
      %v489 = vsel %vm471, %v487, %v488
      %v490 = vrot.slane %v258, 2
      %v491 = vrot.slane %v259, 2
      %v492 = vsel %vm471, %v490, %v491
      %v493 = vrot.slane %v260, 2
      %v494 = vrot.slane %v261, 2
      %v495 = vsel %vm471, %v493, %v494
      %v504 = vpack.c.bf16 %v477, %v474
      %v505 = vpack.c.bf16 %v483, %v480
      %v506 = vpack.c.bf16 %v489, %v486
      %v507 = vpack.c.bf16 %v495, %v492
      %s508 = scalar_lea.vmem %s1, 64
      %v509 = vld [vmem:[%s508] sm:$0xf]
      %v510 = vld [vmem:[%s508 + $0x4] sm:$0xf]
      %v511 = vld [vmem:[%s508 + $0x8] sm:$0xf]
      %v512 = vld [vmem:[%s508 + $0xc] sm:$0xf]
      %v513 = vld [vmem:[%s508 + $0x10] sm:$0xf]
      %v514 = vld [vmem:[%s508 + $0x14] sm:$0xf]
      %v515 = vld [vmem:[%s508 + $0x18] sm:$0xf]
      %v516 = vld [vmem:[%s508 + $0x1c] sm:$0xf]
      %v525 = vunpack.c.l.b16 %v509
      %v526 = vunpack.c.l.b16 %v510
      %v527 = vunpack.c.l.b16 %v511
      %v528 = vunpack.c.l.b16 %v512
      %v529 = vunpack.c.l.b16 %v513
      %v530 = vunpack.c.l.b16 %v514
      %v531 = vunpack.c.l.b16 %v515
      %v532 = vunpack.c.l.b16 %v516
      %v533 = vpack.c.b16 %v526, %v525
      %v534 = vpack.c.b16 %v528, %v527
      %v535 = vpack.c.b16 %v530, %v529
      %v536 = vpack.c.b16 %v532, %v531
      %v542 = vsel %vm364, %v504, 0
      %v545 = vsel %vm364, %v505, 0
      %v548 = vsel %vm364, %v506, 0
      %v551 = vsel %vm364, %v507, 0
      %553 = vmatpush.bf16.msra.mxu0 0
      %554 = vmatpush.bf16.msra.mxu0 0
      %555 = vmatpush.bf16.msra.mxu0 0
      %556 = vmatpush.bf16.msra.mxu0 0
      %557 = vmatpush.bf16.msra.mxu0 %v536
      %558 = vmatpush.bf16.msra.mxu0 %v535
      %559 = vmatpush.bf16.msra.mxu0 %v534
      %560 = vmatpush.bf16.msra.mxu0 %v533
      %561 = vmatmul.bf16.gmra.mxu0 %v542
      %v562 = vpop.f32.mrf.mxu0
      %v563 = vadd.f32 0.0, %v562
      %v564 = vpop.f32.mrf.mxu0
      %v565 = vadd.f32 0.0, %v564
      %566 = vmatmul.bf16.gmra.mxu0 %v545
      %v567 = vpop.f32.mrf.mxu0
      %v568 = vadd.f32 0.0, %v567
      %v569 = vpop.f32.mrf.mxu0
      %v570 = vadd.f32 0.0, %v569
      %571 = vmatmul.bf16.gmra.mxu0 %v548
      %v572 = vpop.f32.mrf.mxu0
      %v573 = vadd.f32 0.0, %v572
      %v574 = vpop.f32.mrf.mxu0
      %v575 = vadd.f32 0.0, %v574
      %576 = vmatmul.bf16.gmra.mxu0 %v551
      %v577 = vpop.f32.mrf.mxu0
      %v578 = vadd.f32 0.0, %v577
      %v579 = vpop.f32.mrf.mxu0
      %v580 = vadd.f32 0.0, %v579
      %581 = vdwg.mxu0
      %v582 = vadd.f32 %v452, %v563
      %v583 = vadd.f32 %v454, %v565
      %v584 = vadd.f32 %v457, %v568
      %v585 = vadd.f32 %v459, %v570
      %v586 = vadd.f32 %v462, %v573
      %v587 = vadd.f32 %v464, %v575
      %v588 = vadd.f32 %v467, %v578
      %v589 = vadd.f32 %v469, %v580
      %v590 = vpack.c.bf16 %v250, %v248
      %v591 = vpack.c.bf16 %v254, %v252
      %v592 = vpack.c.bf16 %v258, %v256
      %v593 = vpack.c.bf16 %v262, %v260
      %s594 = scalar_lea.vmem %s1, 96
      %v595 = vld [vmem:[%s594] sm:$0xf]
      %v596 = vld [vmem:[%s594 + $0x4] sm:$0xf]
      %v597 = vld [vmem:[%s594 + $0x8] sm:$0xf]
      %v598 = vld [vmem:[%s594 + $0xc] sm:$0xf]
      %v599 = vld [vmem:[%s594 + $0x10] sm:$0xf]
      %v600 = vld [vmem:[%s594 + $0x14] sm:$0xf]
      %v601 = vld [vmem:[%s594 + $0x18] sm:$0xf]
      %v602 = vld [vmem:[%s594 + $0x1c] sm:$0xf]
      %v611 = vunpack.c.l.b16 %v595
      %v612 = vunpack.c.l.b16 %v596
      %v613 = vunpack.c.l.b16 %v597
      %v614 = vunpack.c.l.b16 %v598
      %v615 = vunpack.c.l.b16 %v599
      %v616 = vunpack.c.l.b16 %v600
      %v617 = vunpack.c.l.b16 %v601
      %v618 = vunpack.c.l.b16 %v602
      %v619 = vpack.c.b16 %v612, %v611
      %v620 = vpack.c.b16 %v614, %v613
      %v621 = vpack.c.b16 %v616, %v615
      %v622 = vpack.c.b16 %v618, %v617
      %v628 = vsel %vm364, %v590, 0
      %v631 = vsel %vm364, %v591, 0
      %v634 = vsel %vm364, %v592, 0
      %v637 = vsel %vm364, %v593, 0
      %639 = vmatpush.bf16.msra.mxu0 0
      %640 = vmatpush.bf16.msra.mxu0 0
      %641 = vmatpush.bf16.msra.mxu0 0
      %642 = vmatpush.bf16.msra.mxu0 0
      %643 = vmatpush.bf16.msra.mxu0 %v622
      %644 = vmatpush.bf16.msra.mxu0 %v621
      %645 = vmatpush.bf16.msra.mxu0 %v620
      %646 = vmatpush.bf16.msra.mxu0 %v619
      %647 = vmatmul.bf16.gmra.mxu0 %v628
      %v648 = vpop.f32.mrf.mxu0
      %v649 = vadd.f32 0.0, %v648
      %v650 = vpop.f32.mrf.mxu0
      %v651 = vadd.f32 0.0, %v650
      %652 = vmatmul.bf16.gmra.mxu0 %v631
      %v653 = vpop.f32.mrf.mxu0
      %v654 = vadd.f32 0.0, %v653
      %v655 = vpop.f32.mrf.mxu0
      %v656 = vadd.f32 0.0, %v655
      %657 = vmatmul.bf16.gmra.mxu0 %v634
      %v658 = vpop.f32.mrf.mxu0
      %v659 = vadd.f32 0.0, %v658
      %v660 = vpop.f32.mrf.mxu0
      %v661 = vadd.f32 0.0, %v660
      %662 = vmatmul.bf16.gmra.mxu0 %v637
      %v663 = vpop.f32.mrf.mxu0
      %v664 = vadd.f32 0.0, %v663
      %v665 = vpop.f32.mrf.mxu0
      %v666 = vadd.f32 0.0, %v665
      %667 = vdwg.mxu0
      %v668 = vadd.f32 %v582, %v649
      %v669 = vadd.f32 %v583, %v651
      %v670 = vadd.f32 %v584, %v654
      %v671 = vadd.f32 %v585, %v656
      %v672 = vadd.f32 %v586, %v659
      %v673 = vadd.f32 %v587, %v661
      %v674 = vadd.f32 %v588, %v664
      %v675 = vadd.f32 %v589, %v666
      %v678 = vrot.slane %v262, 1
      %v679 = vrot.slane %v263, 1
      %v680 = vsel %vm294, %v678, %v679
      %v682 = vpack.c.bf16 %v303, %v300
      %v683 = vpack.c.bf16 %v309, %v306
      %v684 = vpack.c.bf16 %v315, %v312
      %v685 = vpack.c.bf16 %v680, %v318
      %s686 = scalar_lea.vmem %s1, 128
      %v687 = vld [vmem:[%s686] sm:$0xf]
      %v688 = vld [vmem:[%s686 + $0x4] sm:$0xf]
      %v689 = vld [vmem:[%s686 + $0x8] sm:$0xf]
      %v690 = vld [vmem:[%s686 + $0xc] sm:$0xf]
      %v691 = vld [vmem:[%s686 + $0x10] sm:$0xf]
      %v692 = vld [vmem:[%s686 + $0x14] sm:$0xf]
      %v693 = vld [vmem:[%s686 + $0x18] sm:$0xf]
      %v694 = vld [vmem:[%s686 + $0x1c] sm:$0xf]
      %v703 = vunpack.c.l.b16 %v687
      %v704 = vunpack.c.l.b16 %v688
      %v705 = vunpack.c.l.b16 %v689
      %v706 = vunpack.c.l.b16 %v690
      %v707 = vunpack.c.l.b16 %v691
      %v708 = vunpack.c.l.b16 %v692
      %v709 = vunpack.c.l.b16 %v693
      %v710 = vunpack.c.l.b16 %v694
      %v711 = vpack.c.b16 %v704, %v703
      %v712 = vpack.c.b16 %v706, %v705
      %v713 = vpack.c.b16 %v708, %v707
      %v714 = vpack.c.b16 %v710, %v709
      %v720 = vsel %vm364, %v682, 0
      %v723 = vsel %vm364, %v683, 0
      %v726 = vsel %vm364, %v684, 0
      %v729 = vsel %vm364, %v685, 0
      %731 = vmatpush.bf16.msra.mxu0 0
      %732 = vmatpush.bf16.msra.mxu0 0
      %733 = vmatpush.bf16.msra.mxu0 0
      %734 = vmatpush.bf16.msra.mxu0 0
      %735 = vmatpush.bf16.msra.mxu0 %v714
      %736 = vmatpush.bf16.msra.mxu0 %v713
      %737 = vmatpush.bf16.msra.mxu0 %v712
      %738 = vmatpush.bf16.msra.mxu0 %v711
      %739 = vmatmul.bf16.gmra.mxu0 %v720
      %v740 = vpop.f32.mrf.mxu0
      %v741 = vadd.f32 0.0, %v740
      %v742 = vpop.f32.mrf.mxu0
      %v743 = vadd.f32 0.0, %v742
      %744 = vmatmul.bf16.gmra.mxu0 %v723
      %v745 = vpop.f32.mrf.mxu0
      %v746 = vadd.f32 0.0, %v745
      %v747 = vpop.f32.mrf.mxu0
      %v748 = vadd.f32 0.0, %v747
      %749 = vmatmul.bf16.gmra.mxu0 %v726
      %v750 = vpop.f32.mrf.mxu0
      %v751 = vadd.f32 0.0, %v750
      %v752 = vpop.f32.mrf.mxu0
      %v753 = vadd.f32 0.0, %v752
      %754 = vmatmul.bf16.gmra.mxu0 %v729
      %v755 = vpop.f32.mrf.mxu0
      %v756 = vadd.f32 0.0, %v755
      %v757 = vpop.f32.mrf.mxu0
      %v758 = vadd.f32 0.0, %v757
      %759 = vdwg.mxu0
      %v760 = vadd.f32 %v668, %v741
      %v761 = vadd.f32 %v669, %v743
      %v762 = vadd.f32 %v670, %v746
      %v763 = vadd.f32 %v671, %v748
      %v764 = vadd.f32 %v672, %v751
      %v765 = vadd.f32 %v673, %v753
      %v766 = vadd.f32 %v674, %v756
      %v767 = vadd.f32 %v675, %v758
      %v768 = vrot.slane %v262, 2
      %v769 = vrot.slane %v263, 2
      %v770 = vsel %vm471, %v768, %v769
      %v772 = vpack.c.bf16 %v480, %v477
      %v773 = vpack.c.bf16 %v486, %v483
      %v774 = vpack.c.bf16 %v492, %v489
      %v775 = vpack.c.bf16 %v770, %v495
      %s776 = scalar_lea.vmem %s1, 160
      %v777 = vld [vmem:[%s776] sm:$0xf]
      %v778 = vld [vmem:[%s776 + $0x4] sm:$0xf]
      %v779 = vld [vmem:[%s776 + $0x8] sm:$0xf]
      %v780 = vld [vmem:[%s776 + $0xc] sm:$0xf]
      %v781 = vld [vmem:[%s776 + $0x10] sm:$0xf]
      %v782 = vld [vmem:[%s776 + $0x14] sm:$0xf]
      %v783 = vld [vmem:[%s776 + $0x18] sm:$0xf]
      %v784 = vld [vmem:[%s776 + $0x1c] sm:$0xf]
      %v793 = vunpack.c.l.b16 %v777
      %v794 = vunpack.c.l.b16 %v778
      %v795 = vunpack.c.l.b16 %v779
      %v796 = vunpack.c.l.b16 %v780
      %v797 = vunpack.c.l.b16 %v781
      %v798 = vunpack.c.l.b16 %v782
      %v799 = vunpack.c.l.b16 %v783
      %v800 = vunpack.c.l.b16 %v784
      %v801 = vpack.c.b16 %v794, %v793
      %v802 = vpack.c.b16 %v796, %v795
      %v803 = vpack.c.b16 %v798, %v797
      %v804 = vpack.c.b16 %v800, %v799
      %v810 = vsel %vm364, %v772, 0
      %v813 = vsel %vm364, %v773, 0
      %v816 = vsel %vm364, %v774, 0
      %v819 = vsel %vm364, %v775, 0
      %821 = vmatpush.bf16.msra.mxu0 0
      %822 = vmatpush.bf16.msra.mxu0 0
      %823 = vmatpush.bf16.msra.mxu0 0
      %824 = vmatpush.bf16.msra.mxu0 0
      %825 = vmatpush.bf16.msra.mxu0 %v804
      %826 = vmatpush.bf16.msra.mxu0 %v803
      %827 = vmatpush.bf16.msra.mxu0 %v802
      %828 = vmatpush.bf16.msra.mxu0 %v801
      %829 = vmatmul.bf16.gmra.mxu0 %v810
      %v830 = vpop.f32.mrf.mxu0
      %v831 = vadd.f32 0.0, %v830
      %v832 = vpop.f32.mrf.mxu0
      %v833 = vadd.f32 0.0, %v832
      %834 = vmatmul.bf16.gmra.mxu0 %v813
      %v835 = vpop.f32.mrf.mxu0
      %v836 = vadd.f32 0.0, %v835
      %v837 = vpop.f32.mrf.mxu0
      %v838 = vadd.f32 0.0, %v837
      %839 = vmatmul.bf16.gmra.mxu0 %v816
      %v840 = vpop.f32.mrf.mxu0
      %v841 = vadd.f32 0.0, %v840
      %v842 = vpop.f32.mrf.mxu0
      %v843 = vadd.f32 0.0, %v842
      %844 = vmatmul.bf16.gmra.mxu0 %v819
      %v845 = vpop.f32.mrf.mxu0
      %v846 = vadd.f32 0.0, %v845
      %v847 = vpop.f32.mrf.mxu0
      %v848 = vadd.f32 0.0, %v847
      %849 = vdwg.mxu0
      %v850 = vadd.f32 %v760, %v831
      %v851 = vadd.f32 %v761, %v833
      %v852 = vadd.f32 %v762, %v836
      %v853 = vadd.f32 %v763, %v838
      %v854 = vadd.f32 %v764, %v841
      %v855 = vadd.f32 %v765, %v843
      %v856 = vadd.f32 %v766, %v846
      %v857 = vadd.f32 %v767, %v848
      %v858 = vpack.c.bf16 %v264, %v262
      %s859 = scalar_lea.vmem %s1, 192
      %v860 = vld [vmem:[%s859] sm:$0xf]
      %v861 = vld [vmem:[%s859 + $0x4] sm:$0xf]
      %v862 = vld [vmem:[%s859 + $0x8] sm:$0xf]
      %v863 = vld [vmem:[%s859 + $0xc] sm:$0xf]
      %v864 = vld [vmem:[%s859 + $0x10] sm:$0xf]
      %v865 = vld [vmem:[%s859 + $0x14] sm:$0xf]
      %v866 = vld [vmem:[%s859 + $0x18] sm:$0xf]
      %v867 = vld [vmem:[%s859 + $0x1c] sm:$0xf]
      %v876 = vunpack.c.l.b16 %v860
      %v877 = vunpack.c.l.b16 %v861
      %v878 = vunpack.c.l.b16 %v862
      %v879 = vunpack.c.l.b16 %v863
      %v880 = vunpack.c.l.b16 %v864
      %v881 = vunpack.c.l.b16 %v865
      %v882 = vunpack.c.l.b16 %v866
      %v883 = vunpack.c.l.b16 %v867
      %v884 = vpack.c.b16 %v877, %v876
      %v885 = vpack.c.b16 %v879, %v878
      %v886 = vpack.c.b16 %v881, %v880
      %v887 = vpack.c.b16 %v883, %v882
      %v893 = vsel %vm364, %v858, 0
      %895 = vmatpush.bf16.msra.mxu0 0
      %896 = vmatpush.bf16.msra.mxu0 0
      %897 = vmatpush.bf16.msra.mxu0 0
      %898 = vmatpush.bf16.msra.mxu0 0
      %899 = vmatpush.bf16.msra.mxu0 %v887
      %900 = vmatpush.bf16.msra.mxu0 %v886
      %901 = vmatpush.bf16.msra.mxu0 %v885
      %902 = vmatpush.bf16.msra.mxu0 %v884
      %903 = vmatmul.bf16.gmra.mxu0 %v434
      %v904 = vpop.f32.mrf.mxu0
      %v905 = vadd.f32 0.0, %v904
      %v906 = vpop.f32.mrf.mxu0
      %v907 = vadd.f32 0.0, %v906
      %908 = vmatmul.bf16.gmra.mxu0 %v437
      %v909 = vpop.f32.mrf.mxu0
      %v910 = vadd.f32 0.0, %v909
      %v911 = vpop.f32.mrf.mxu0
      %v912 = vadd.f32 0.0, %v911
      %913 = vmatmul.bf16.gmra.mxu0 %v440
      %v914 = vpop.f32.mrf.mxu0
      %v915 = vadd.f32 0.0, %v914
      %v916 = vpop.f32.mrf.mxu0
      %v917 = vadd.f32 0.0, %v916
      %918 = vmatmul.bf16.gmra.mxu0 %v893
      %v919 = vpop.f32.mrf.mxu0
      %v920 = vadd.f32 0.0, %v919
      %v921 = vpop.f32.mrf.mxu0
      %v922 = vadd.f32 0.0, %v921
      %923 = vdwg.mxu0
      %v924 = vadd.f32 %v850, %v905
      %v925 = vadd.f32 %v851, %v907
      %v926 = vadd.f32 %v852, %v910
      %v927 = vadd.f32 %v853, %v912
      %v928 = vadd.f32 %v854, %v915
      %v929 = vadd.f32 %v855, %v917
      %v930 = vadd.f32 %v856, %v920
      %v931 = vadd.f32 %v857, %v922
      %v934 = vrot.slane %v264, 1
      %v935 = vrot.slane %v265, 1
      %v936 = vsel %vm294, %v934, %v935
      %v938 = vpack.c.bf16 %v936, %v680
      %s939 = scalar_lea.vmem %s1, 224
      %v940 = vld [vmem:[%s939] sm:$0xf]
      %v941 = vld [vmem:[%s939 + $0x4] sm:$0xf]
      %v942 = vld [vmem:[%s939 + $0x8] sm:$0xf]
      %v943 = vld [vmem:[%s939 + $0xc] sm:$0xf]
      %v944 = vld [vmem:[%s939 + $0x10] sm:$0xf]
      %v945 = vld [vmem:[%s939 + $0x14] sm:$0xf]
      %v946 = vld [vmem:[%s939 + $0x18] sm:$0xf]
      %v947 = vld [vmem:[%s939 + $0x1c] sm:$0xf]
      %v956 = vunpack.c.l.b16 %v940
      %v957 = vunpack.c.l.b16 %v941
      %v958 = vunpack.c.l.b16 %v942
      %v959 = vunpack.c.l.b16 %v943
      %v960 = vunpack.c.l.b16 %v944
      %v961 = vunpack.c.l.b16 %v945
      %v962 = vunpack.c.l.b16 %v946
      %v963 = vunpack.c.l.b16 %v947
      %v964 = vpack.c.b16 %v957, %v956
      %v965 = vpack.c.b16 %v959, %v958
      %v966 = vpack.c.b16 %v961, %v960
      %v967 = vpack.c.b16 %v963, %v962
      %v973 = vsel %vm364, %v938, 0
      %975 = vmatpush.bf16.msra.mxu0 0
      %976 = vmatpush.bf16.msra.mxu0 0
      %977 = vmatpush.bf16.msra.mxu0 0
      %978 = vmatpush.bf16.msra.mxu0 0
      %979 = vmatpush.bf16.msra.mxu0 %v967
      %980 = vmatpush.bf16.msra.mxu0 %v966
      %981 = vmatpush.bf16.msra.mxu0 %v965
      %982 = vmatpush.bf16.msra.mxu0 %v964
      %983 = vmatmul.bf16.gmra.mxu0 %v369
      %v984 = vpop.f32.mrf.mxu0
      %v985 = vadd.f32 0.0, %v984
      %v986 = vpop.f32.mrf.mxu0
      %v987 = vadd.f32 0.0, %v986
      %988 = vmatmul.bf16.gmra.mxu0 %v372
      %v989 = vpop.f32.mrf.mxu0
      %v990 = vadd.f32 0.0, %v989
      %v991 = vpop.f32.mrf.mxu0
      %v992 = vadd.f32 0.0, %v991
      %993 = vmatmul.bf16.gmra.mxu0 %v375
      %v994 = vpop.f32.mrf.mxu0
      %v995 = vadd.f32 0.0, %v994
      %v996 = vpop.f32.mrf.mxu0
      %v997 = vadd.f32 0.0, %v996
      %998 = vmatmul.bf16.gmra.mxu0 %v973
      %v999 = vpop.f32.mrf.mxu0
      %v1000 = vadd.f32 0.0, %v999
      %v1001 = vpop.f32.mrf.mxu0
      %v1002 = vadd.f32 0.0, %v1001
      %1003 = vdwg.mxu0
      %v1004 = vadd.f32 %v924, %v985
      %v1005 = vadd.f32 %v925, %v987
      %v1006 = vadd.f32 %v926, %v990
      %v1007 = vadd.f32 %v927, %v992
      %v1008 = vadd.f32 %v928, %v995
      %v1009 = vadd.f32 %v929, %v997
      %v1010 = vadd.f32 %v930, %v1000
      %v1011 = vadd.f32 %v931, %v1002
      %v1012 = vrot.slane %v264, 2
      %v1013 = vrot.slane %v265, 2
      %v1014 = vsel %vm471, %v1012, %v1013
      %v1016 = vpack.c.bf16 %v1014, %v770
      %s1017 = scalar_lea.vmem %s1, 256
      %v1018 = vld [vmem:[%s1017] sm:$0xf]
      %v1019 = vld [vmem:[%s1017 + $0x4] sm:$0xf]
      %v1020 = vld [vmem:[%s1017 + $0x8] sm:$0xf]
      %v1021 = vld [vmem:[%s1017 + $0xc] sm:$0xf]
      %v1022 = vld [vmem:[%s1017 + $0x10] sm:$0xf]
      %v1023 = vld [vmem:[%s1017 + $0x14] sm:$0xf]
      %v1024 = vld [vmem:[%s1017 + $0x18] sm:$0xf]
      %v1025 = vld [vmem:[%s1017 + $0x1c] sm:$0xf]
      %v1034 = vunpack.c.l.b16 %v1018
      %v1035 = vunpack.c.l.b16 %v1019
      %v1036 = vunpack.c.l.b16 %v1020
      %v1037 = vunpack.c.l.b16 %v1021
      %v1038 = vunpack.c.l.b16 %v1022
      %v1039 = vunpack.c.l.b16 %v1023
      %v1040 = vunpack.c.l.b16 %v1024
      %v1041 = vunpack.c.l.b16 %v1025
      %v1042 = vpack.c.b16 %v1035, %v1034
      %v1043 = vpack.c.b16 %v1037, %v1036
      %v1044 = vpack.c.b16 %v1039, %v1038
      %v1045 = vpack.c.b16 %v1041, %v1040
      %v1051 = vsel %vm364, %v1016, 0
      %1053 = vmatpush.bf16.msra.mxu0 0
      %1054 = vmatpush.bf16.msra.mxu0 0
      %1055 = vmatpush.bf16.msra.mxu0 0
      %1056 = vmatpush.bf16.msra.mxu0 0
      %1057 = vmatpush.bf16.msra.mxu0 %v1045
      %1058 = vmatpush.bf16.msra.mxu0 %v1044
      %1059 = vmatpush.bf16.msra.mxu0 %v1043
      %1060 = vmatpush.bf16.msra.mxu0 %v1042
      %1061 = vmatmul.bf16.gmra.mxu0 %v545
      %v1062 = vpop.f32.mrf.mxu0
      %v1063 = vadd.f32 0.0, %v1062
      %v1064 = vpop.f32.mrf.mxu0
      %v1065 = vadd.f32 0.0, %v1064
      %1066 = vmatmul.bf16.gmra.mxu0 %v548
      %v1067 = vpop.f32.mrf.mxu0
      %v1068 = vadd.f32 0.0, %v1067
      %v1069 = vpop.f32.mrf.mxu0
      %v1070 = vadd.f32 0.0, %v1069
      %1071 = vmatmul.bf16.gmra.mxu0 %v551
      %v1072 = vpop.f32.mrf.mxu0
      %v1073 = vadd.f32 0.0, %v1072
      %v1074 = vpop.f32.mrf.mxu0
      %v1075 = vadd.f32 0.0, %v1074
      %1076 = vmatmul.bf16.gmra.mxu0 %v1051
      %v1077 = vpop.f32.mrf.mxu0
      %v1078 = vadd.f32 0.0, %v1077
      %v1079 = vpop.f32.mrf.mxu0
      %v1080 = vadd.f32 0.0, %v1079
      %1081 = vdwg.mxu0
      %v1082 = vadd.f32 %v1004, %v1063
      %v1083 = vadd.f32 %v1005, %v1065
      %v1084 = vadd.f32 %v1006, %v1068
      %v1085 = vadd.f32 %v1007, %v1070
      %v1086 = vadd.f32 %v1008, %v1073
      %v1087 = vadd.f32 %v1009, %v1075
      %v1088 = vadd.f32 %v1010, %v1078
      %v1089 = vadd.f32 %v1011, %v1080
      %v1090 = vld [vmem:[%s2] sm:$0x1]
      %v1092 = vperm.slane %v1090, 0
      %v1094 = vmul.f32 %v1082, %v1092
      %v1095 = vmul.f32 %v1083, %v1092
      %v1096 = vmul.f32 %v1084, %v1092
      %v1097 = vmul.f32 %v1085, %v1092
      %v1098 = vmul.f32 %v1086, %v1092
      %v1099 = vmul.f32 %v1087, %v1092
      %v1100 = vmul.f32 %v1088, %v1092
      %v1101 = vmul.f32 %v1089, %v1092
      %v1102 = vld [vmem:[%s3] sm:$0x1]
      %v1104 = vperm.slane %v1102, 0
      %v1106 = vadd.f32 %v1094, %v1104
      %v1107 = vadd.f32 %v1095, %v1104
      %v1108 = vadd.f32 %v1096, %v1104
      %v1109 = vadd.f32 %v1097, %v1104
      %v1110 = vadd.f32 %v1098, %v1104
      %v1111 = vadd.f32 %v1099, %v1104
      %v1112 = vadd.f32 %v1100, %v1104
      %v1113 = vadd.f32 %v1101, %v1104
      %v1114 = vld [vmem:[%s239] sm:$0xff]
      %v1115 = vld [vmem:[%s239 + $0x8] sm:$0xff]
      %v1116 = vld [vmem:[%s239 + $0x10] sm:$0xff]
      %v1117 = vld [vmem:[%s239 + $0x18] sm:$0xff]
      %v1118 = vld [vmem:[%s239 + $0x20] sm:$0xff]
      %v1119 = vld [vmem:[%s239 + $0x28] sm:$0xff]
      %v1120 = vld [vmem:[%s239 + $0x30] sm:$0xff]
      %v1121 = vld [vmem:[%s239 + $0x38] sm:$0xff]
      %v1122 = vadd.f32 %v1106, %v1114
      %v1123 = vadd.f32 %v1107, %v1115
      %v1124 = vadd.f32 %v1108, %v1116
      %v1125 = vadd.f32 %v1109, %v1117
      %v1126 = vadd.f32 %v1110, %v1118
      %v1127 = vadd.f32 %v1111, %v1119
      %v1128 = vadd.f32 %v1112, %v1120
      %v1129 = vadd.f32 %v1113, %v1121
      %v1130 = vmax.f32 %v1122, 0.0
      %v1131 = vmax.f32 %v1123, 0.0
      %v1132 = vmax.f32 %v1124, 0.0
      %v1133 = vmax.f32 %v1125, 0.0
      %v1134 = vmax.f32 %v1126, 0.0
      %v1135 = vmax.f32 %v1127, 0.0
      %v1136 = vmax.f32 %v1128, 0.0
      %v1137 = vmax.f32 %v1129, 0.0
      %1138 = vst.msk [vmem:[%s244] sm:$0xff] %vm364, %v1130
      %1139 = vst.msk [vmem:[%s244 + $0x8] sm:$0xff] %vm364, %v1131
      %1140 = vst.msk [vmem:[%s244 + $0x10] sm:$0xff] %vm364, %v1132
      %1141 = vst.msk [vmem:[%s244 + $0x18] sm:$0xff] %vm364, %v1133
      %1142 = vst.msk [vmem:[%s244 + $0x20] sm:$0xff] %vm364, %v1134
      %1143 = vst.msk [vmem:[%s244 + $0x28] sm:$0xff] %vm364, %v1135
      %1144 = vst.msk [vmem:[%s244 + $0x30] sm:$0xff] %vm364, %v1136
      %1145 = vst.msk [vmem:[%s244 + $0x38] sm:$0xff] %vm364, %v1137
      %p1146 = scmp.lt.s32.totalorder %s16, 1
      %s1147 = scalar_select %p1146, %s16, 1
      %s1148 = smul.addr %s1147, 8
      %s1149 = smul.addr %s1148, 8
      %s1150 = scalar_lea.vmem %s5, %s1149
      // Predicated region
      $region41: #{_lambda_.20} parent=39 // pred_check
        %p1151 = pneg %p149
      $region42: #{_lambda_.20} parent=39 // pred_check_branch
        %1153 = sbr.rel (%p1151) target = $region44
      $region43: #{_lambda_.20} parent=39 // pred_region
        _
      $region44: #{_lambda_.20} parent=39 // pred_fallthru
        _
    $region40: #{_lambda_.20} parent=5 // pred_fallthru
      _
    %p1154 = scmp.le.s32.totalorder 2, %s11
    // Predicated region
    $region45: #{_lambda_.20} parent=5 // pred_check
      %p1155 = pneg %p1154
    $region46: #{_lambda_.20} parent=5 // pred_check_branch
      %1157 = sbr.rel (%p1155) target = $region48
    $region47: #{_lambda_.20} parent=5 // pred_region
      %s1158 = ssub.s32 %s11, 2
      // Predicated region
      $region49: #{_lambda_.20} parent=47 // pred_check
        %p1159 = pneg %p155
      $region50: #{_lambda_.20} parent=47 // pred_check_branch
        %1161 = sbr.rel (%p1159) target = $region52
      $region51: #{_lambda_.20} parent=47 // pred_region
        %p1162 = scmp.lt.s32.totalorder %s17, 1
        %s1163 = scalar_select %p1162, %s17, 1
        %s1164 = smul.addr %s1163, 8
        %s1165 = smul.addr %s1164, 8
        %s1166 = scalar_lea.vmem %s5, %s1165
      $region52: #{_lambda_.20} parent=47 // pred_fallthru
        _
    $region48: #{_lambda_.20} parent=5 // pred_fallthru
      _
  $region6: #{_lambda_.20} parent=0 // loop_footer
    %s15 = sadd.s32 1, %s11
  $region7: #{_lambda_.20} parent=0 // loop_footer_branch
    %10 = sbr.rel target = $region3
  $region8: #{_lambda_.20} parent=0 // loop_exit
    _

// kernel: _lambda_.23
$region0: #{_lambda_.23}
  #allocation0 [shape = 'u32[]', space=smem, size = 0x4, offset = 0x4, fixed_abs, tag = 'smem constant byte address 0x4 - core index']
  #allocation1 [shape = 'u32[72,128]{1,0:T(1,128)}', space=vmem, size = 0x9000, scoped, tag = 'internal scratch']
  %s0 = inlined_call_operand.vmem [shape: f32[2,64,64], index: 0, kind: input, shape index: {}]
  %s1 = inlined_call_operand.vmem [shape: bf16[64,256], index: 1, kind: input, shape index: {}]
  %s2 = inlined_call_operand.vmem [shape: f32[1,256], index: 2, kind: input, shape index: {}]
  %s3 = inlined_call_operand.vmem [shape: f32[1,256], index: 3, kind: input, shape index: {}]
  %s4 = inlined_call_operand.vmem [shape: f32[2,64,256], index: 4, kind: output, shape index: {}]
  %s5 = sld [smem:[#allocation0]]
  $region49: #{_lambda_.23} parent=0
    _
  %s7 = ssub.s32 1, %s5
  %s8 = scalar_select 0, %s7, %s5
  loop: start=0, step=1, limit=4
  $region2: #{_lambda_.23} parent=0 // loop_pre_header
    _
  $region3: #{_lambda_.23} parent=0 // loop_header
    %s10 = sphi 0, %s14
    %p11 = scmp.ge.s32.totalorder %s10, 4
    %s17 = sphi 0, %s29
    %s18 = sphi 0, %s25
    %s19 = sphi 0, %s17
    %s20 = sphi 0, %s18
    %s21 = sphi 0, %s19
    %s22 = sphi 0, %s20
    %s34 = sphi 0, %s36
    %s37 = sphi 0, %s34
    %s38 = sphi 0, %s37
    %s54 = sphi 0, %s38
    %s58 = sphi 0, %s58
    %s60 = sphi 0, %s58
    %s61 = sphi 0, %s60
    %s75 = sphi 0, %s61
    %s79 = sphi 0, %s79
    %s81 = sphi 0, %s79
    %s82 = sphi 0, %s81
    %s96 = sphi 0, %s82
    %s100 = sphi 0, %s100
    %s102 = sphi 0, %s100
    %s103 = sphi 0, %s102
    %s117 = sphi 0, %s103
    %s125 = sphi 0, %s127
    %s128 = sphi 0, %s125
    %s129 = sphi 0, %s128
    %s145 = sphi 0, %s129
  $region4: #{_lambda_.23} parent=0 // loop_header_branch
    %13 = sbr.rel (%p11) target = $region8
  $region5: #{_lambda_.23} parent=0 // loop_body
    %s15 = ssub.s32 %s10, 1
    %s16 = ssub.s32 %s10, 2
    %s23 = sadd.s32 1, %s18
    %p24 = scmp.ge.s32.totalorder %s23, 1
    %s25 = scalar_select %p24, 0, %s23
    %s26 = sadd.s32 1, %s17
    %s27 = scalar_select %p24, %s26, %s17
    %p28 = scmp.ge.s32.totalorder %s27, 2
    %s29 = scalar_select %p28, 0, %s27
    %s30 = ssub.s32 %s17, %s29
    %s31 = ssub.s32 %s18, %s25
    %s32 = sor.u32 %s30, %s31
    %p33 = scmp.eq.s32.totalorder %s32, 0
    %s35 = sadd.s32 %s34, 1
    %s36 = scalar_select %p33, %s34, %s35
    %p39 = pneg %p33
    %p40 = scmp.eq.s32.totalorder %s10, 1
    %p41 = por %p39, %p40
    %p42 = scmp.ne.s32.totalorder %s34, %s37
    %p43 = scmp.eq.s32.totalorder %s10, 0
    %p44 = por %p42, %p43
    %p45 = scmp.ne.s32.totalorder %s34, %s37
    %p46 = scmp.eq.s32.totalorder %s15, 1
    %p47 = por %p45, %p46
    %p48 = scmp.ne.s32.totalorder %s37, %s38
    %p49 = scmp.eq.s32.totalorder %s15, 0
    %p50 = por %p48, %p49
    %p51 = scmp.ne.s32.totalorder %s37, %s38
    %p52 = scmp.eq.s32.totalorder %s16, 1
    %p53 = por %p51, %p52
    %p55 = scmp.ne.s32.totalorder %s38, %s54
    %p56 = scmp.eq.s32.totalorder %s16, 0
    %p57 = por %p55, %p56
    %s59 = sadd.s32 %s58, 1
    %p62 = scmp.eq.s32.totalorder %s10, 1
    %p63 = scmp.ne.s32.totalorder %s58, %s60
    %p64 = scmp.eq.s32.totalorder %s10, 0
    %p65 = por %p63, %p64
    %p66 = scmp.ne.s32.totalorder %s58, %s60
    %p67 = scmp.eq.s32.totalorder %s15, 1
    %p68 = por %p66, %p67
    %p69 = scmp.ne.s32.totalorder %s60, %s61
    %p70 = scmp.eq.s32.totalorder %s15, 0
    %p71 = por %p69, %p70
    %p72 = scmp.ne.s32.totalorder %s60, %s61
    %p73 = scmp.eq.s32.totalorder %s16, 1
    %p74 = por %p72, %p73
    %p76 = scmp.ne.s32.totalorder %s61, %s75
    %p77 = scmp.eq.s32.totalorder %s16, 0
    %p78 = por %p76, %p77
    %s80 = sadd.s32 %s79, 1
    %p83 = scmp.eq.s32.totalorder %s10, 1
    %p84 = scmp.ne.s32.totalorder %s79, %s81
    %p85 = scmp.eq.s32.totalorder %s10, 0
    %p86 = por %p84, %p85
    %p87 = scmp.ne.s32.totalorder %s79, %s81
    %p88 = scmp.eq.s32.totalorder %s15, 1
    %p89 = por %p87, %p88
    %p90 = scmp.ne.s32.totalorder %s81, %s82
    %p91 = scmp.eq.s32.totalorder %s15, 0
    %p92 = por %p90, %p91
    %p93 = scmp.ne.s32.totalorder %s81, %s82
    %p94 = scmp.eq.s32.totalorder %s16, 1
    %p95 = por %p93, %p94
    %p97 = scmp.ne.s32.totalorder %s82, %s96
    %p98 = scmp.eq.s32.totalorder %s16, 0
    %p99 = por %p97, %p98
    %s101 = sadd.s32 %s100, 1
    %p104 = scmp.eq.s32.totalorder %s10, 1
    %p105 = scmp.ne.s32.totalorder %s100, %s102
    %p106 = scmp.eq.s32.totalorder %s10, 0
    %p107 = por %p105, %p106
    %p108 = scmp.ne.s32.totalorder %s100, %s102
    %p109 = scmp.eq.s32.totalorder %s15, 1
    %p110 = por %p108, %p109
    %p111 = scmp.ne.s32.totalorder %s102, %s103
    %p112 = scmp.eq.s32.totalorder %s15, 0
    %p113 = por %p111, %p112
    %p114 = scmp.ne.s32.totalorder %s102, %s103
    %p115 = scmp.eq.s32.totalorder %s16, 1
    %p116 = por %p114, %p115
    %p118 = scmp.ne.s32.totalorder %s103, %s117
    %p119 = scmp.eq.s32.totalorder %s16, 0
    %p120 = por %p118, %p119
    %s121 = ssub.s32 %s17, %s29
    %s122 = ssub.s32 %s18, %s25
    %s123 = sor.u32 %s121, %s122
    %p124 = scmp.eq.s32.totalorder %s123, 0
    %s126 = sadd.s32 %s125, 1
    %s127 = scalar_select %p124, %s125, %s126
    %p130 = pneg %p124
    %p131 = scmp.eq.s32.totalorder %s10, 1
    %p132 = por %p130, %p131
    %p133 = scmp.ne.s32.totalorder %s125, %s128
    %p134 = scmp.eq.s32.totalorder %s10, 0
    %p135 = por %p133, %p134
    %p136 = scmp.ne.s32.totalorder %s125, %s128
    %p137 = scmp.eq.s32.totalorder %s15, 1
    %p138 = por %p136, %p137
    %p139 = scmp.ne.s32.totalorder %s128, %s129
    %p140 = scmp.eq.s32.totalorder %s15, 0
    %p141 = por %p139, %p140
    %p142 = scmp.ne.s32.totalorder %s128, %s129
    %p143 = scmp.eq.s32.totalorder %s16, 1
    %p144 = por %p142, %p143
    %p146 = scmp.ne.s32.totalorder %s129, %s145
    %p147 = scmp.eq.s32.totalorder %s16, 0
    %p148 = por %p146, %p147
    %p149 = scmp.le.s32.totalorder 1, %s10
    %p150 = scmp.lt.s32.totalorder %s10, 3
    %p151 = pnand %p149, %p150
    %p152 = pneg %p151
    // Predicated region
    $region9: #{_lambda_.23} parent=5 // pred_check
      _
    $region10: #{_lambda_.23} parent=5 // pred_check_branch
      %154 = sbr.rel (%p151) target = $region12
    $region11: #{_lambda_.23} parent=5 // pred_region
      %s155 = ssub.s32 %s10, 1
      // Predicated region
      $region13: #{_lambda_.23} parent=11 // pred_check
        %p156 = pneg %p71
      $region14: #{_lambda_.23} parent=11 // pred_check_branch
        %158 = sbr.rel (%p156) target = $region16
      $region15: #{_lambda_.23} parent=11 // pred_region
        _
      $region16: #{_lambda_.23} parent=11 // pred_fallthru
        _
      // Predicated region
      $region17: #{_lambda_.23} parent=11 // pred_check
        %p159 = pneg %p92
      $region18: #{_lambda_.23} parent=11 // pred_check_branch
        %161 = sbr.rel (%p159) target = $region20
      $region19: #{_lambda_.23} parent=11 // pred_region
        _
      $region20: #{_lambda_.23} parent=11 // pred_fallthru
        _
      // Predicated region
      $region21: #{_lambda_.23} parent=11 // pred_check
        %p162 = pneg %p113
      $region22: #{_lambda_.23} parent=11 // pred_check_branch
        %164 = sbr.rel (%p162) target = $region24
      $region23: #{_lambda_.23} parent=11 // pred_region
        _
      $region24: #{_lambda_.23} parent=11 // pred_fallthru
        _
    $region12: #{_lambda_.23} parent=5 // pred_fallthru
      _
    %p165 = scmp.lt.s32.totalorder %s10, 2
    // Predicated region
    $region25: #{_lambda_.23} parent=5 // pred_check
      %p166 = pneg %p165
    $region26: #{_lambda_.23} parent=5 // pred_check_branch
      %168 = sbr.rel (%p166) target = $region28
    $region27: #{_lambda_.23} parent=5 // pred_region
      // Predicated region
      $region29: #{_lambda_.23} parent=27 // pred_check
        %p169 = pneg %p44
      $region30: #{_lambda_.23} parent=27 // pred_check_branch
        %171 = sbr.rel (%p169) target = $region32
      $region31: #{_lambda_.23} parent=27 // pred_region
        %s172 = smul.u32 8, %s18
        %p173 = scmp.lt.s32.totalorder %s17, 1
        %s174 = scalar_select %p173, %s17, 1
        %p175 = scmp.lt.s32.totalorder %s172, 7
        %s176 = scalar_select %p175, %s172, 7
        %s177 = smul.addr %s174, 8
        %s178 = sadd.s32 %s176, %s177
        %s179 = smul.addr %s178, 8
        %s180 = scalar_lea.vmem %s0, %s179
        %s181 = smul.u32 8, %s18
      $region32: #{_lambda_.23} parent=27 // pred_fallthru
        _
    $region28: #{_lambda_.23} parent=5 // pred_fallthru
      _
    %p182 = scmp.le.s32.totalorder 1, %s10
    %p183 = scmp.lt.s32.totalorder %s10, 3
    %p184 = pnand %p182, %p183
    %p185 = pneg %p184
    // Predicated region
    $region33: #{_lambda_.23} parent=5 // pred_check
      _
    $region34: #{_lambda_.23} parent=5 // pred_check_branch
      %187 = sbr.rel (%p184) target = $region36
    $region35: #{_lambda_.23} parent=5 // pred_region
      %s188 = ssub.s32 %s10, 1
      %s189 = smul.u32 8, %s20
      %p190 = scmp.lt.s32.totalorder %s19, 1
      %s191 = scalar_select %p190, %s19, 1
      %p192 = scmp.lt.s32.totalorder %s189, 7
      %s193 = scalar_select %p192, %s189, 7
      %s194 = smul.addr %s191, 8
      %s195 = sadd.s32 %s193, %s194
      %s196 = smul.addr %s195, 8
      %s197 = scalar_lea.vmem %s0, %s196
      %p198 = pneg %p50
      %p199 = pneg %p47
      %p200 = pneg %p71
      %p201 = pneg %p68
      %p202 = pneg %p92
      %p203 = pneg %p89
      %p204 = pneg %p113
      %p205 = pneg %p110
      %p206 = pneg %p141
      %p207 = pneg %p138
      %s208 = smul.u32 8, %s20
      %p209 = scmp.lt.s32.totalorder %s19, 1
      %s210 = scalar_select %p209, %s19, 1
      %p211 = scmp.lt.s32.totalorder %s208, 7
      %s212 = scalar_select %p211, %s208, 7
      %s213 = smul.addr %s212, 2
      %s214 = smul.addr %s210, 16
      %s215 = sadd.s32 %s213, %s214
      %s216 = smul.addr %s215, 8
      %s217 = scalar_lea.vmem %s4, %s216
      %s218 = smul.u32 8, %s20
      %p219 = scmp.lt.s32.totalorder %s19, 1
      %s220 = scalar_select %p219, %s19, 1
      %p221 = scmp.lt.s32.totalorder %s218, 7
      %s222 = scalar_select %p221, %s218, 7
      %s223 = smul.addr %s220, 8
      %s224 = sadd.s32 %s222, %s223
      %s225 = smul.addr %s224, 8
      %s226 = scalar_lea.vmem %s0, %s225
      %s227 = smul.u32 8, %s20
      %s228 = smul.u32 8, %s20
      %p229 = scmp.lt.s32.totalorder %s19, 1
      %s230 = scalar_select %p229, %s19, 1
      %p231 = scmp.lt.s32.totalorder %s228, 7
      %s232 = scalar_select %p231, %s228, 7
      %s233 = smul.addr %s232, 2
      %s234 = smul.addr %s230, 16
      %s235 = sadd.s32 %s233, %s234
      %s236 = smul.addr %s235, 8
      %s237 = scalar_lea.vmem %s4, %s236
      %s238 = smul.u32 8, %s20
      %v240 = vld [vmem:[%s226] sm:$0xff]
      %v241 = vld [vmem:[%s226 + $0x8] sm:$0xff]
      %v242 = vld [vmem:[%s226 + $0x10] sm:$0xff]
      %v243 = vld [vmem:[%s226 + $0x18] sm:$0xff]
      %v244 = vld [vmem:[%s226 + $0x20] sm:$0xff]
      %v245 = vld [vmem:[%s226 + $0x28] sm:$0xff]
      %v246 = vld [vmem:[%s226 + $0x30] sm:$0xff]
      %v247 = vld [vmem:[%s226 + $0x38] sm:$0xff]
      %v248 = vpack.c.bf16 %v241, %v240
      %v249 = vpack.c.bf16 %v243, %v242
      %v250 = vpack.c.bf16 %v245, %v244
      %v251 = vpack.c.bf16 %v247, %v246
      %v252 = vld [vmem:[%s1] sm:$0xff]
      %v253 = vld [vmem:[%s1 + $0x8] sm:$0xff]
      %v254 = vld [vmem:[%s1 + $0x10] sm:$0xff]
      %v255 = vld [vmem:[%s1 + $0x18] sm:$0xff]
      %v256 = vld [vmem:[%s1 + $0x20] sm:$0xff]
      %v257 = vld [vmem:[%s1 + $0x28] sm:$0xff]
      %v258 = vld [vmem:[%s1 + $0x30] sm:$0xff]
      %v259 = vld [vmem:[%s1 + $0x38] sm:$0xff]
      %v268 = vunpack.c.l.b16 %v252
      %v269 = vunpack.c.h.b16 %v252
      %v270 = vunpack.c.l.b16 %v253
      %v271 = vunpack.c.h.b16 %v253
      %v272 = vunpack.c.l.b16 %v254
      %v273 = vunpack.c.h.b16 %v254
      %v274 = vunpack.c.l.b16 %v255
      %v275 = vunpack.c.h.b16 %v255
      %v276 = vunpack.c.l.b16 %v256
      %v277 = vunpack.c.h.b16 %v256
      %v278 = vunpack.c.l.b16 %v257
      %v279 = vunpack.c.h.b16 %v257
      %v280 = vunpack.c.l.b16 %v258
      %v281 = vunpack.c.h.b16 %v258
      %v282 = vunpack.c.l.b16 %v259
      %v283 = vunpack.c.h.b16 %v259
      %v284 = vpack.c.b16 %v270, %v268
      %v285 = vpack.c.b16 %v271, %v269
      %v286 = vpack.c.b16 %v274, %v272
      %v287 = vpack.c.b16 %v275, %v273
      %v288 = vpack.c.b16 %v278, %v276
      %v289 = vpack.c.b16 %v279, %v277
      %v290 = vpack.c.b16 %v282, %v280
      %v291 = vpack.c.b16 %v283, %v281
      %vm300 = vcmask 523264
      %v302 = vsel %vm300, %v248, 0
      %v305 = vsel %vm300, %v249, 0
      %v308 = vsel %vm300, %v250, 0
      %v311 = vsel %vm300, %v251, 0
      %313 = vmatpush.bf16.msra.mxu0 0
      %314 = vmatpush.bf16.msra.mxu0 0
      %315 = vmatpush.bf16.msra.mxu0 0
      %316 = vmatpush.bf16.msra.mxu0 0
      %317 = vmatpush.bf16.msra.mxu0 %v290
      %318 = vmatpush.bf16.msra.mxu0 %v288
      %319 = vmatpush.bf16.msra.mxu0 %v286
      %320 = vmatpush.bf16.msra.mxu0 %v284
      %321 = vmatmul.bf16.gmra.mxu0 %v302
      %v322 = vpop.f32.mrf.mxu0
      %v323 = vadd.f32 0.0, %v322
      %v324 = vpop.f32.mrf.mxu0
      %v325 = vadd.f32 0.0, %v324
      %326 = vmatmul.bf16.gmra.mxu0 %v305
      %v327 = vpop.f32.mrf.mxu0
      %v328 = vadd.f32 0.0, %v327
      %v329 = vpop.f32.mrf.mxu0
      %v330 = vadd.f32 0.0, %v329
      %331 = vmatmul.bf16.gmra.mxu0 %v308
      %v332 = vpop.f32.mrf.mxu0
      %v333 = vadd.f32 0.0, %v332
      %v334 = vpop.f32.mrf.mxu0
      %v335 = vadd.f32 0.0, %v334
      %336 = vmatmul.bf16.gmra.mxu0 %v311
      %v337 = vpop.f32.mrf.mxu0
      %v338 = vadd.f32 0.0, %v337
      %v339 = vpop.f32.mrf.mxu0
      %v340 = vadd.f32 0.0, %v339
      %341 = vdwg.mxu0
      %342 = vmatpush.bf16.msra.mxu0 0
      %343 = vmatpush.bf16.msra.mxu0 0
      %344 = vmatpush.bf16.msra.mxu0 0
      %345 = vmatpush.bf16.msra.mxu0 0
      %346 = vmatpush.bf16.msra.mxu0 %v291
      %347 = vmatpush.bf16.msra.mxu0 %v289
      %348 = vmatpush.bf16.msra.mxu0 %v287
      %349 = vmatpush.bf16.msra.mxu0 %v285
      %350 = vmatmul.bf16.gmra.mxu0 %v302
      %v351 = vpop.f32.mrf.mxu0
      %v352 = vadd.f32 0.0, %v351
      %v353 = vpop.f32.mrf.mxu0
      %v354 = vadd.f32 0.0, %v353
      %355 = vmatmul.bf16.gmra.mxu0 %v305
      %v356 = vpop.f32.mrf.mxu0
      %v357 = vadd.f32 0.0, %v356
      %v358 = vpop.f32.mrf.mxu0
      %v359 = vadd.f32 0.0, %v358
      %360 = vmatmul.bf16.gmra.mxu0 %v308
      %v361 = vpop.f32.mrf.mxu0
      %v362 = vadd.f32 0.0, %v361
      %v363 = vpop.f32.mrf.mxu0
      %v364 = vadd.f32 0.0, %v363
      %365 = vmatmul.bf16.gmra.mxu0 %v311
      %v366 = vpop.f32.mrf.mxu0
      %v367 = vadd.f32 0.0, %v366
      %v368 = vpop.f32.mrf.mxu0
      %v369 = vadd.f32 0.0, %v368
      %370 = vdwg.mxu0
      %v371 = vld [vmem:[%s2] sm:$0x3]
      %v373 = vperm.slane %v371, 0
      %v374 = vperm.slane %v371, 1
      %v377 = vmul.f32 %v323, %v373
      %v378 = vmul.f32 %v352, %v374
      %v379 = vmul.f32 %v325, %v373
      %v380 = vmul.f32 %v354, %v374
      %v381 = vmul.f32 %v328, %v373
      %v382 = vmul.f32 %v357, %v374
      %v383 = vmul.f32 %v330, %v373
      %v384 = vmul.f32 %v359, %v374
      %v385 = vmul.f32 %v333, %v373
      %v386 = vmul.f32 %v362, %v374
      %v387 = vmul.f32 %v335, %v373
      %v388 = vmul.f32 %v364, %v374
      %v389 = vmul.f32 %v338, %v373
      %v390 = vmul.f32 %v367, %v374
      %v391 = vmul.f32 %v340, %v373
      %v392 = vmul.f32 %v369, %v374
      %v393 = vld [vmem:[%s3] sm:$0x3]
      %v395 = vperm.slane %v393, 0
      %v396 = vperm.slane %v393, 1
      %v399 = vadd.f32 %v377, %v395
      %v400 = vadd.f32 %v378, %v396
      %v401 = vadd.f32 %v379, %v395
      %v402 = vadd.f32 %v380, %v396
      %v403 = vadd.f32 %v381, %v395
      %v404 = vadd.f32 %v382, %v396
      %v405 = vadd.f32 %v383, %v395
      %v406 = vadd.f32 %v384, %v396
      %v407 = vadd.f32 %v385, %v395
      %v408 = vadd.f32 %v386, %v396
      %v409 = vadd.f32 %v387, %v395
      %v410 = vadd.f32 %v388, %v396
      %v411 = vadd.f32 %v389, %v395
      %v412 = vadd.f32 %v390, %v396
      %v413 = vadd.f32 %v391, %v395
      %v414 = vadd.f32 %v392, %v396
      %v415 = vmax.f32 %v399, 0.0
      %v416 = vmax.f32 %v400, 0.0
      %v417 = vmax.f32 %v401, 0.0
      %v418 = vmax.f32 %v402, 0.0
      %v419 = vmax.f32 %v403, 0.0
      %v420 = vmax.f32 %v404, 0.0
      %v421 = vmax.f32 %v405, 0.0
      %v422 = vmax.f32 %v406, 0.0
      %v423 = vmax.f32 %v407, 0.0
      %v424 = vmax.f32 %v408, 0.0
      %v425 = vmax.f32 %v409, 0.0
      %v426 = vmax.f32 %v410, 0.0
      %v427 = vmax.f32 %v411, 0.0
      %v428 = vmax.f32 %v412, 0.0
      %v429 = vmax.f32 %v413, 0.0
      %v430 = vmax.f32 %v414, 0.0
      %431 = vst [vmem:[%s237] sm:$0xff] %v415
      %432 = vst [vmem:[%s237 + $0x8] sm:$0xff] %v416
      %433 = vst [vmem:[%s237 + $0x10] sm:$0xff] %v417
      %434 = vst [vmem:[%s237 + $0x18] sm:$0xff] %v418
      %435 = vst [vmem:[%s237 + $0x20] sm:$0xff] %v419
      %436 = vst [vmem:[%s237 + $0x28] sm:$0xff] %v420
      %437 = vst [vmem:[%s237 + $0x30] sm:$0xff] %v421
      %438 = vst [vmem:[%s237 + $0x38] sm:$0xff] %v422
      %439 = vst [vmem:[%s237 + $0x40] sm:$0xff] %v423
      %440 = vst [vmem:[%s237 + $0x48] sm:$0xff] %v424
      %441 = vst [vmem:[%s237 + $0x50] sm:$0xff] %v425
      %442 = vst [vmem:[%s237 + $0x58] sm:$0xff] %v426
      %443 = vst [vmem:[%s237 + $0x60] sm:$0xff] %v427
      %444 = vst [vmem:[%s237 + $0x68] sm:$0xff] %v428
      %445 = vst [vmem:[%s237 + $0x70] sm:$0xff] %v429
      %446 = vst [vmem:[%s237 + $0x78] sm:$0xff] %v430
      %s447 = smul.u32 8, %s20
      %p448 = scmp.lt.s32.totalorder %s19, 1
      %s449 = scalar_select %p448, %s19, 1
      %p450 = scmp.lt.s32.totalorder %s447, 7
      %s451 = scalar_select %p450, %s447, 7
      %s452 = smul.addr %s451, 2
      %s453 = smul.addr %s449, 16
      %s454 = sadd.s32 %s452, %s453
      %s455 = smul.addr %s454, 8
      %s456 = scalar_lea.vmem %s4, %s455
      // Predicated region
      $region37: #{_lambda_.23} parent=35 // pred_check
        %p457 = pneg %p138
      $region38: #{_lambda_.23} parent=35 // pred_check_branch
        %459 = sbr.rel (%p457) target = $region40
      $region39: #{_lambda_.23} parent=35 // pred_region
        %s460 = smul.u32 8, %s20
      $region40: #{_lambda_.23} parent=35 // pred_fallthru
        _
    $region36: #{_lambda_.23} parent=5 // pred_fallthru
      _
    %p461 = scmp.le.s32.totalorder 2, %s10
    // Predicated region
    $region41: #{_lambda_.23} parent=5 // pred_check
      %p462 = pneg %p461
    $region42: #{_lambda_.23} parent=5 // pred_check_branch
      %464 = sbr.rel (%p462) target = $region44
    $region43: #{_lambda_.23} parent=5 // pred_region
      %s465 = ssub.s32 %s10, 2
      // Predicated region
      $region45: #{_lambda_.23} parent=43 // pred_check
        %p466 = pneg %p144
      $region46: #{_lambda_.23} parent=43 // pred_check_branch
        %468 = sbr.rel (%p466) target = $region48
      $region47: #{_lambda_.23} parent=43 // pred_region
        %s469 = smul.u32 8, %s22
        %p470 = scmp.lt.s32.totalorder %s21, 1
        %s471 = scalar_select %p470, %s21, 1
        %p472 = scmp.lt.s32.totalorder %s469, 7
        %s473 = scalar_select %p472, %s469, 7
        %s474 = smul.addr %s473, 2
        %s475 = smul.addr %s471, 16
        %s476 = sadd.s32 %s474, %s475
        %s477 = smul.addr %s476, 8
        %s478 = scalar_lea.vmem %s4, %s477
      $region48: #{_lambda_.23} parent=43 // pred_fallthru
        _
    $region44: #{_lambda_.23} parent=5 // pred_fallthru
      _
  $region6: #{_lambda_.23} parent=0 // loop_footer
    %s14 = sadd.s32 1, %s10
  $region7: #{_lambda_.23} parent=0 // loop_footer_branch
    %9 = sbr.rel target = $region3
  $region8: #{_lambda_.23} parent=0 // loop_exit
    _

// kernel: _lambda_.17
$region0: #{_lambda_.17}
  #allocation0 [shape = 'u32[]', space=smem, size = 0x4, offset = 0x4, fixed_abs, tag = 'smem constant byte address 0x4 - core index']
  #allocation1 [shape = 'u32[72,128]{1,0:T(1,128)}', space=vmem, size = 0x9000, scoped, tag = 'internal scratch']
  %s0 = inlined_call_operand.vmem [shape: f32[2,256,32], index: 0, kind: input, shape index: {}]
  %s1 = inlined_call_operand.vmem [shape: bf16[32,64], index: 1, kind: input, shape index: {}]
  %s2 = inlined_call_operand.vmem [shape: f32[1,64], index: 2, kind: input, shape index: {}]
  %s3 = inlined_call_operand.vmem [shape: f32[1,64], index: 3, kind: input, shape index: {}]
  %s4 = inlined_call_operand.vmem [shape: f32[2,256,64], index: 4, kind: output, shape index: {}]
  %s5 = sld [smem:[#allocation0]]
  $region49: #{_lambda_.17} parent=0
    _
  %s7 = ssub.s32 1, %s5
  %s8 = scalar_select 0, %s7, %s5
  loop: start=0, step=1, limit=4
  $region2: #{_lambda_.17} parent=0 // loop_pre_header
    _
  $region3: #{_lambda_.17} parent=0 // loop_header
    %s10 = sphi 0, %s14
    %p11 = scmp.ge.s32.totalorder %s10, 4
    %s17 = sphi 0, %s29
    %s18 = sphi 0, %s25
    %s19 = sphi 0, %s17
    %s20 = sphi 0, %s18
    %s21 = sphi 0, %s19
    %s22 = sphi 0, %s20
    %s34 = sphi 0, %s36
    %s37 = sphi 0, %s34
    %s38 = sphi 0, %s37
    %s54 = sphi 0, %s38
    %s58 = sphi 0, %s58
    %s60 = sphi 0, %s58
    %s61 = sphi 0, %s60
    %s75 = sphi 0, %s61
    %s79 = sphi 0, %s79
    %s81 = sphi 0, %s79
    %s82 = sphi 0, %s81
    %s96 = sphi 0, %s82
    %s100 = sphi 0, %s100
    %s102 = sphi 0, %s100
    %s103 = sphi 0, %s102
    %s117 = sphi 0, %s103
    %s125 = sphi 0, %s127
    %s128 = sphi 0, %s125
    %s129 = sphi 0, %s128
    %s145 = sphi 0, %s129
  $region4: #{_lambda_.17} parent=0 // loop_header_branch
    %13 = sbr.rel (%p11) target = $region8
  $region5: #{_lambda_.17} parent=0 // loop_body
    %s15 = ssub.s32 %s10, 1
    %s16 = ssub.s32 %s10, 2
    %s23 = sadd.s32 1, %s18
    %p24 = scmp.ge.s32.totalorder %s23, 1
    %s25 = scalar_select %p24, 0, %s23
    %s26 = sadd.s32 1, %s17
    %s27 = scalar_select %p24, %s26, %s17
    %p28 = scmp.ge.s32.totalorder %s27, 2
    %s29 = scalar_select %p28, 0, %s27
    %s30 = ssub.s32 %s17, %s29
    %s31 = ssub.s32 %s18, %s25
    %s32 = sor.u32 %s30, %s31
    %p33 = scmp.eq.s32.totalorder %s32, 0
    %s35 = sadd.s32 %s34, 1
    %s36 = scalar_select %p33, %s34, %s35
    %p39 = pneg %p33
    %p40 = scmp.eq.s32.totalorder %s10, 1
    %p41 = por %p39, %p40
    %p42 = scmp.ne.s32.totalorder %s34, %s37
    %p43 = scmp.eq.s32.totalorder %s10, 0
    %p44 = por %p42, %p43
    %p45 = scmp.ne.s32.totalorder %s34, %s37
    %p46 = scmp.eq.s32.totalorder %s15, 1
    %p47 = por %p45, %p46
    %p48 = scmp.ne.s32.totalorder %s37, %s38
    %p49 = scmp.eq.s32.totalorder %s15, 0
    %p50 = por %p48, %p49
    %p51 = scmp.ne.s32.totalorder %s37, %s38
    %p52 = scmp.eq.s32.totalorder %s16, 1
    %p53 = por %p51, %p52
    %p55 = scmp.ne.s32.totalorder %s38, %s54
    %p56 = scmp.eq.s32.totalorder %s16, 0
    %p57 = por %p55, %p56
    %s59 = sadd.s32 %s58, 1
    %p62 = scmp.eq.s32.totalorder %s10, 1
    %p63 = scmp.ne.s32.totalorder %s58, %s60
    %p64 = scmp.eq.s32.totalorder %s10, 0
    %p65 = por %p63, %p64
    %p66 = scmp.ne.s32.totalorder %s58, %s60
    %p67 = scmp.eq.s32.totalorder %s15, 1
    %p68 = por %p66, %p67
    %p69 = scmp.ne.s32.totalorder %s60, %s61
    %p70 = scmp.eq.s32.totalorder %s15, 0
    %p71 = por %p69, %p70
    %p72 = scmp.ne.s32.totalorder %s60, %s61
    %p73 = scmp.eq.s32.totalorder %s16, 1
    %p74 = por %p72, %p73
    %p76 = scmp.ne.s32.totalorder %s61, %s75
    %p77 = scmp.eq.s32.totalorder %s16, 0
    %p78 = por %p76, %p77
    %s80 = sadd.s32 %s79, 1
    %p83 = scmp.eq.s32.totalorder %s10, 1
    %p84 = scmp.ne.s32.totalorder %s79, %s81
    %p85 = scmp.eq.s32.totalorder %s10, 0
    %p86 = por %p84, %p85
    %p87 = scmp.ne.s32.totalorder %s79, %s81
    %p88 = scmp.eq.s32.totalorder %s15, 1
    %p89 = por %p87, %p88
    %p90 = scmp.ne.s32.totalorder %s81, %s82
    %p91 = scmp.eq.s32.totalorder %s15, 0
    %p92 = por %p90, %p91
    %p93 = scmp.ne.s32.totalorder %s81, %s82
    %p94 = scmp.eq.s32.totalorder %s16, 1
    %p95 = por %p93, %p94
    %p97 = scmp.ne.s32.totalorder %s82, %s96
    %p98 = scmp.eq.s32.totalorder %s16, 0
    %p99 = por %p97, %p98
    %s101 = sadd.s32 %s100, 1
    %p104 = scmp.eq.s32.totalorder %s10, 1
    %p105 = scmp.ne.s32.totalorder %s100, %s102
    %p106 = scmp.eq.s32.totalorder %s10, 0
    %p107 = por %p105, %p106
    %p108 = scmp.ne.s32.totalorder %s100, %s102
    %p109 = scmp.eq.s32.totalorder %s15, 1
    %p110 = por %p108, %p109
    %p111 = scmp.ne.s32.totalorder %s102, %s103
    %p112 = scmp.eq.s32.totalorder %s15, 0
    %p113 = por %p111, %p112
    %p114 = scmp.ne.s32.totalorder %s102, %s103
    %p115 = scmp.eq.s32.totalorder %s16, 1
    %p116 = por %p114, %p115
    %p118 = scmp.ne.s32.totalorder %s103, %s117
    %p119 = scmp.eq.s32.totalorder %s16, 0
    %p120 = por %p118, %p119
    %s121 = ssub.s32 %s17, %s29
    %s122 = ssub.s32 %s18, %s25
    %s123 = sor.u32 %s121, %s122
    %p124 = scmp.eq.s32.totalorder %s123, 0
    %s126 = sadd.s32 %s125, 1
    %s127 = scalar_select %p124, %s125, %s126
    %p130 = pneg %p124
    %p131 = scmp.eq.s32.totalorder %s10, 1
    %p132 = por %p130, %p131
    %p133 = scmp.ne.s32.totalorder %s125, %s128
    %p134 = scmp.eq.s32.totalorder %s10, 0
    %p135 = por %p133, %p134
    %p136 = scmp.ne.s32.totalorder %s125, %s128
    %p137 = scmp.eq.s32.totalorder %s15, 1
    %p138 = por %p136, %p137
    %p139 = scmp.ne.s32.totalorder %s128, %s129
    %p140 = scmp.eq.s32.totalorder %s15, 0
    %p141 = por %p139, %p140
    %p142 = scmp.ne.s32.totalorder %s128, %s129
    %p143 = scmp.eq.s32.totalorder %s16, 1
    %p144 = por %p142, %p143
    %p146 = scmp.ne.s32.totalorder %s129, %s145
    %p147 = scmp.eq.s32.totalorder %s16, 0
    %p148 = por %p146, %p147
    %p149 = scmp.le.s32.totalorder 1, %s10
    %p150 = scmp.lt.s32.totalorder %s10, 3
    %p151 = pnand %p149, %p150
    %p152 = pneg %p151
    // Predicated region
    $region9: #{_lambda_.17} parent=5 // pred_check
      _
    $region10: #{_lambda_.17} parent=5 // pred_check_branch
      %154 = sbr.rel (%p151) target = $region12
    $region11: #{_lambda_.17} parent=5 // pred_region
      %s155 = ssub.s32 %s10, 1
      // Predicated region
      $region13: #{_lambda_.17} parent=11 // pred_check
        %p156 = pneg %p71
      $region14: #{_lambda_.17} parent=11 // pred_check_branch
        %158 = sbr.rel (%p156) target = $region16
      $region15: #{_lambda_.17} parent=11 // pred_region
        _
      $region16: #{_lambda_.17} parent=11 // pred_fallthru
        _
      // Predicated region
      $region17: #{_lambda_.17} parent=11 // pred_check
        %p159 = pneg %p92
      $region18: #{_lambda_.17} parent=11 // pred_check_branch
        %161 = sbr.rel (%p159) target = $region20
      $region19: #{_lambda_.17} parent=11 // pred_region
        _
      $region20: #{_lambda_.17} parent=11 // pred_fallthru
        _
      // Predicated region
      $region21: #{_lambda_.17} parent=11 // pred_check
        %p162 = pneg %p113
      $region22: #{_lambda_.17} parent=11 // pred_check_branch
        %164 = sbr.rel (%p162) target = $region24
      $region23: #{_lambda_.17} parent=11 // pred_region
        _
      $region24: #{_lambda_.17} parent=11 // pred_fallthru
        _
    $region12: #{_lambda_.17} parent=5 // pred_fallthru
      _
    %p165 = scmp.lt.s32.totalorder %s10, 2
    // Predicated region
    $region25: #{_lambda_.17} parent=5 // pred_check
      %p166 = pneg %p165
    $region26: #{_lambda_.17} parent=5 // pred_check_branch
      %168 = sbr.rel (%p166) target = $region28
    $region27: #{_lambda_.17} parent=5 // pred_region
      // Predicated region
      $region29: #{_lambda_.17} parent=27 // pred_check
        %p169 = pneg %p44
      $region30: #{_lambda_.17} parent=27 // pred_check_branch
        %171 = sbr.rel (%p169) target = $region32
      $region31: #{_lambda_.17} parent=27 // pred_region
        %s172 = smul.u32 32, %s18
        %p173 = scmp.lt.s32.totalorder %s17, 1
        %s174 = scalar_select %p173, %s17, 1
        %p175 = scmp.lt.s32.totalorder %s172, 31
        %s176 = scalar_select %p175, %s172, 31
        %s177 = smul.addr %s174, 32
        %s178 = sadd.s32 %s176, %s177
        %s179 = smul.addr %s178, 8
        %s180 = scalar_lea.vmem %s0, %s179
        %s181 = smul.u32 32, %s18
      $region32: #{_lambda_.17} parent=27 // pred_fallthru
        _
    $region28: #{_lambda_.17} parent=5 // pred_fallthru
      _
    %p182 = scmp.le.s32.totalorder 1, %s10
    %p183 = scmp.lt.s32.totalorder %s10, 3
    %p184 = pnand %p182, %p183
    %p185 = pneg %p184
    // Predicated region
    $region33: #{_lambda_.17} parent=5 // pred_check
      _
    $region34: #{_lambda_.17} parent=5 // pred_check_branch
      %187 = sbr.rel (%p184) target = $region36
    $region35: #{_lambda_.17} parent=5 // pred_region
      %s188 = ssub.s32 %s10, 1
      %s189 = smul.u32 32, %s20
      %p190 = scmp.lt.s32.totalorder %s19, 1
      %s191 = scalar_select %p190, %s19, 1
      %p192 = scmp.lt.s32.totalorder %s189, 31
      %s193 = scalar_select %p192, %s189, 31
      %s194 = smul.addr %s191, 32
      %s195 = sadd.s32 %s193, %s194
      %s196 = smul.addr %s195, 8
      %s197 = scalar_lea.vmem %s0, %s196
      %p198 = pneg %p50
      %p199 = pneg %p47
      %p200 = pneg %p71
      %p201 = pneg %p68
      %p202 = pneg %p92
      %p203 = pneg %p89
      %p204 = pneg %p113
      %p205 = pneg %p110
      %p206 = pneg %p141
      %p207 = pneg %p138
      %s208 = smul.u32 32, %s20
      %p209 = scmp.lt.s32.totalorder %s19, 1
      %s210 = scalar_select %p209, %s19, 1
      %p211 = scmp.lt.s32.totalorder %s208, 31
      %s212 = scalar_select %p211, %s208, 31
      %s213 = smul.addr %s210, 32
      %s214 = sadd.s32 %s212, %s213
      %s215 = smul.addr %s214, 8
      %s216 = scalar_lea.vmem %s4, %s215
      %s217 = smul.u32 32, %s20
      %p218 = scmp.lt.s32.totalorder %s19, 1
      %s219 = scalar_select %p218, %s19, 1
      %p220 = scmp.lt.s32.totalorder %s217, 31
      %s221 = scalar_select %p220, %s217, 31
      %s222 = smul.addr %s219, 32
      %s223 = sadd.s32 %s221, %s222
      %s224 = smul.addr %s223, 8
      %s225 = scalar_lea.vmem %s0, %s224
      %s226 = smul.u32 32, %s20
      %s227 = smul.u32 32, %s20
      %p228 = scmp.lt.s32.totalorder %s19, 1
      %s229 = scalar_select %p228, %s19, 1
      %p230 = scmp.lt.s32.totalorder %s227, 31
      %s231 = scalar_select %p230, %s227, 31
      %s232 = smul.addr %s229, 32
      %s233 = sadd.s32 %s231, %s232
      %s234 = smul.addr %s233, 8
      %s235 = scalar_lea.vmem %s4, %s234
      %s236 = smul.u32 32, %s20
      %v238 = vld [vmem:[%s225] sm:$0xff]
      %v239 = vld [vmem:[%s225 + $0x8] sm:$0xff]
      %v240 = vld [vmem:[%s225 + $0x10] sm:$0xff]
      %v241 = vld [vmem:[%s225 + $0x18] sm:$0xff]
      %v242 = vld [vmem:[%s225 + $0x20] sm:$0xff]
      %v243 = vld [vmem:[%s225 + $0x28] sm:$0xff]
      %v244 = vld [vmem:[%s225 + $0x30] sm:$0xff]
      %v245 = vld [vmem:[%s225 + $0x38] sm:$0xff]
      %v246 = vld [vmem:[%s225 + $0x40] sm:$0xff]
      %v247 = vld [vmem:[%s225 + $0x48] sm:$0xff]
      %v248 = vld [vmem:[%s225 + $0x50] sm:$0xff]
      %v249 = vld [vmem:[%s225 + $0x58] sm:$0xff]
      %v250 = vld [vmem:[%s225 + $0x60] sm:$0xff]
      %v251 = vld [vmem:[%s225 + $0x68] sm:$0xff]
      %v252 = vld [vmem:[%s225 + $0x70] sm:$0xff]
      %v253 = vld [vmem:[%s225 + $0x78] sm:$0xff]
      %v254 = vld [vmem:[%s225 + $0x80] sm:$0xff]
      %v255 = vld [vmem:[%s225 + $0x88] sm:$0xff]
      %v256 = vld [vmem:[%s225 + $0x90] sm:$0xff]
      %v257 = vld [vmem:[%s225 + $0x98] sm:$0xff]
      %v258 = vld [vmem:[%s225 + $0xa0] sm:$0xff]
      %v259 = vld [vmem:[%s225 + $0xa8] sm:$0xff]
      %v260 = vld [vmem:[%s225 + $0xb0] sm:$0xff]
      %v261 = vld [vmem:[%s225 + $0xb8] sm:$0xff]
      %v262 = vld [vmem:[%s225 + $0xc0] sm:$0xff]
      %v263 = vld [vmem:[%s225 + $0xc8] sm:$0xff]
      %v264 = vld [vmem:[%s225 + $0xd0] sm:$0xff]
      %v265 = vld [vmem:[%s225 + $0xd8] sm:$0xff]
      %v266 = vld [vmem:[%s225 + $0xe0] sm:$0xff]
      %v267 = vld [vmem:[%s225 + $0xe8] sm:$0xff]
      %v268 = vld [vmem:[%s225 + $0xf0] sm:$0xff]
      %v269 = vld [vmem:[%s225 + $0xf8] sm:$0xff]
      %v270 = vpack.c.bf16 %v239, %v238
      %v271 = vpack.c.bf16 %v241, %v240
      %v272 = vpack.c.bf16 %v243, %v242
      %v273 = vpack.c.bf16 %v245, %v244
      %v274 = vpack.c.bf16 %v247, %v246
      %v275 = vpack.c.bf16 %v249, %v248
      %v276 = vpack.c.bf16 %v251, %v250
      %v277 = vpack.c.bf16 %v253, %v252
      %v278 = vpack.c.bf16 %v255, %v254
      %v279 = vpack.c.bf16 %v257, %v256
      %v280 = vpack.c.bf16 %v259, %v258
      %v281 = vpack.c.bf16 %v261, %v260
      %v282 = vpack.c.bf16 %v263, %v262
      %v283 = vpack.c.bf16 %v265, %v264
      %v284 = vpack.c.bf16 %v267, %v266
      %v285 = vpack.c.bf16 %v269, %v268
      %v286 = vld [vmem:[%s1] sm:$0xf]
      %v287 = vld [vmem:[%s1 + $0x4] sm:$0xf]
      %v288 = vld [vmem:[%s1 + $0x8] sm:$0xf]
      %v289 = vld [vmem:[%s1 + $0xc] sm:$0xf]
      %v294 = vunpack.c.l.b16 %v286
      %v295 = vunpack.c.l.b16 %v287
      %v296 = vunpack.c.l.b16 %v288
      %v297 = vunpack.c.l.b16 %v289
      %v298 = vpack.c.b16 %v295, %v294
      %v299 = vpack.c.b16 %v297, %v296
      %vm302 = vcmask 261120
      %v304 = vsel %vm302, %v270, 0
      %v307 = vsel %vm302, %v271, 0
      %v310 = vsel %vm302, %v272, 0
      %v313 = vsel %vm302, %v273, 0
      %v316 = vsel %vm302, %v274, 0
      %v319 = vsel %vm302, %v275, 0
      %v322 = vsel %vm302, %v276, 0
      %v325 = vsel %vm302, %v277, 0
      %v328 = vsel %vm302, %v278, 0
      %v331 = vsel %vm302, %v279, 0
      %v334 = vsel %vm302, %v280, 0
      %v337 = vsel %vm302, %v281, 0
      %v340 = vsel %vm302, %v282, 0
      %v343 = vsel %vm302, %v283, 0
      %v346 = vsel %vm302, %v284, 0
      %v349 = vsel %vm302, %v285, 0
      %351 = vmatpush.bf16.msra.mxu0 0
      %352 = vmatpush.bf16.msra.mxu0 0
      %353 = vmatpush.bf16.msra.mxu0 0
      %354 = vmatpush.bf16.msra.mxu0 0
      %355 = vmatpush.bf16.msra.mxu0 0
      %356 = vmatpush.bf16.msra.mxu0 0
      %357 = vmatpush.bf16.msra.mxu0 %v299
      %358 = vmatpush.bf16.msra.mxu0 %v298
      %359 = vmatmul.bf16.gmra.mxu0 %v304
      %v360 = vpop.f32.mrf.mxu0
      %v361 = vadd.f32 0.0, %v360
      %v362 = vpop.f32.mrf.mxu0
      %v363 = vadd.f32 0.0, %v362
      %364 = vmatmul.bf16.gmra.mxu0 %v307
      %v365 = vpop.f32.mrf.mxu0
      %v366 = vadd.f32 0.0, %v365
      %v367 = vpop.f32.mrf.mxu0
      %v368 = vadd.f32 0.0, %v367
      %369 = vmatmul.bf16.gmra.mxu0 %v310
      %v370 = vpop.f32.mrf.mxu0
      %v371 = vadd.f32 0.0, %v370
      %v372 = vpop.f32.mrf.mxu0
      %v373 = vadd.f32 0.0, %v372
      %374 = vmatmul.bf16.gmra.mxu0 %v313
      %v375 = vpop.f32.mrf.mxu0
      %v376 = vadd.f32 0.0, %v375
      %v377 = vpop.f32.mrf.mxu0
      %v378 = vadd.f32 0.0, %v377
      %379 = vmatmul.bf16.gmra.mxu0 %v316
      %v380 = vpop.f32.mrf.mxu0
      %v381 = vadd.f32 0.0, %v380
      %v382 = vpop.f32.mrf.mxu0
      %v383 = vadd.f32 0.0, %v382
      %384 = vmatmul.bf16.gmra.mxu0 %v319
      %v385 = vpop.f32.mrf.mxu0
      %v386 = vadd.f32 0.0, %v385
      %v387 = vpop.f32.mrf.mxu0
      %v388 = vadd.f32 0.0, %v387
      %389 = vmatmul.bf16.gmra.mxu0 %v322
      %v390 = vpop.f32.mrf.mxu0
      %v391 = vadd.f32 0.0, %v390
      %v392 = vpop.f32.mrf.mxu0
      %v393 = vadd.f32 0.0, %v392
      %394 = vmatmul.bf16.gmra.mxu0 %v325
      %v395 = vpop.f32.mrf.mxu0
      %v396 = vadd.f32 0.0, %v395
      %v397 = vpop.f32.mrf.mxu0
      %v398 = vadd.f32 0.0, %v397
      %399 = vmatmul.bf16.gmra.mxu0 %v328
      %v400 = vpop.f32.mrf.mxu0
      %v401 = vadd.f32 0.0, %v400
      %v402 = vpop.f32.mrf.mxu0
      %v403 = vadd.f32 0.0, %v402
      %404 = vmatmul.bf16.gmra.mxu0 %v331
      %v405 = vpop.f32.mrf.mxu0
      %v406 = vadd.f32 0.0, %v405
      %v407 = vpop.f32.mrf.mxu0
      %v408 = vadd.f32 0.0, %v407
      %409 = vmatmul.bf16.gmra.mxu0 %v334
      %v410 = vpop.f32.mrf.mxu0
      %v411 = vadd.f32 0.0, %v410
      %v412 = vpop.f32.mrf.mxu0
      %v413 = vadd.f32 0.0, %v412
      %414 = vmatmul.bf16.gmra.mxu0 %v337
      %v415 = vpop.f32.mrf.mxu0
      %v416 = vadd.f32 0.0, %v415
      %v417 = vpop.f32.mrf.mxu0
      %v418 = vadd.f32 0.0, %v417
      %419 = vmatmul.bf16.gmra.mxu0 %v340
      %v420 = vpop.f32.mrf.mxu0
      %v421 = vadd.f32 0.0, %v420
      %v422 = vpop.f32.mrf.mxu0
      %v423 = vadd.f32 0.0, %v422
      %424 = vmatmul.bf16.gmra.mxu0 %v343
      %v425 = vpop.f32.mrf.mxu0
      %v426 = vadd.f32 0.0, %v425
      %v427 = vpop.f32.mrf.mxu0
      %v428 = vadd.f32 0.0, %v427
      %429 = vmatmul.bf16.gmra.mxu0 %v346
      %v430 = vpop.f32.mrf.mxu0
      %v431 = vadd.f32 0.0, %v430
      %v432 = vpop.f32.mrf.mxu0
      %v433 = vadd.f32 0.0, %v432
      %434 = vmatmul.bf16.gmra.mxu0 %v349
      %v435 = vpop.f32.mrf.mxu0
      %v436 = vadd.f32 0.0, %v435
      %v437 = vpop.f32.mrf.mxu0
      %v438 = vadd.f32 0.0, %v437
      %439 = vdwg.mxu0
      %v440 = vld [vmem:[%s2] sm:$0x1]
      %v442 = vperm.slane %v440, 0
      %v444 = vmul.f32 %v361, %v442
      %v445 = vmul.f32 %v363, %v442
      %v446 = vmul.f32 %v366, %v442
      %v447 = vmul.f32 %v368, %v442
      %v448 = vmul.f32 %v371, %v442
      %v449 = vmul.f32 %v373, %v442
      %v450 = vmul.f32 %v376, %v442
      %v451 = vmul.f32 %v378, %v442
      %v452 = vmul.f32 %v381, %v442
      %v453 = vmul.f32 %v383, %v442
      %v454 = vmul.f32 %v386, %v442
      %v455 = vmul.f32 %v388, %v442
      %v456 = vmul.f32 %v391, %v442
      %v457 = vmul.f32 %v393, %v442
      %v458 = vmul.f32 %v396, %v442
      %v459 = vmul.f32 %v398, %v442
      %v460 = vmul.f32 %v401, %v442
      %v461 = vmul.f32 %v403, %v442
      %v462 = vmul.f32 %v406, %v442
      %v463 = vmul.f32 %v408, %v442
      %v464 = vmul.f32 %v411, %v442
      %v465 = vmul.f32 %v413, %v442
      %v466 = vmul.f32 %v416, %v442
      %v467 = vmul.f32 %v418, %v442
      %v468 = vmul.f32 %v421, %v442
      %v469 = vmul.f32 %v423, %v442
      %v470 = vmul.f32 %v426, %v442
      %v471 = vmul.f32 %v428, %v442
      %v472 = vmul.f32 %v431, %v442
      %v473 = vmul.f32 %v433, %v442
      %v474 = vmul.f32 %v436, %v442
      %v475 = vmul.f32 %v438, %v442
      %v476 = vld [vmem:[%s3] sm:$0x1]
      %v478 = vperm.slane %v476, 0
      %v480 = vadd.f32 %v444, %v478
      %v481 = vadd.f32 %v445, %v478
      %v482 = vadd.f32 %v446, %v478
      %v483 = vadd.f32 %v447, %v478
      %v484 = vadd.f32 %v448, %v478
      %v485 = vadd.f32 %v449, %v478
      %v486 = vadd.f32 %v450, %v478
      %v487 = vadd.f32 %v451, %v478
      %v488 = vadd.f32 %v452, %v478
      %v489 = vadd.f32 %v453, %v478
      %v490 = vadd.f32 %v454, %v478
      %v491 = vadd.f32 %v455, %v478
      %v492 = vadd.f32 %v456, %v478
      %v493 = vadd.f32 %v457, %v478
      %v494 = vadd.f32 %v458, %v478
      %v495 = vadd.f32 %v459, %v478
      %v496 = vadd.f32 %v460, %v478
      %v497 = vadd.f32 %v461, %v478
      %v498 = vadd.f32 %v462, %v478
      %v499 = vadd.f32 %v463, %v478
      %v500 = vadd.f32 %v464, %v478
      %v501 = vadd.f32 %v465, %v478
      %v502 = vadd.f32 %v466, %v478
      %v503 = vadd.f32 %v467, %v478
      %v504 = vadd.f32 %v468, %v478
      %v505 = vadd.f32 %v469, %v478
      %v506 = vadd.f32 %v470, %v478
      %v507 = vadd.f32 %v471, %v478
      %v508 = vadd.f32 %v472, %v478
      %v509 = vadd.f32 %v473, %v478
      %v510 = vadd.f32 %v474, %v478
      %v511 = vadd.f32 %v475, %v478
      %v512 = vmax.f32 %v480, 0.0
      %v513 = vmax.f32 %v481, 0.0
      %v514 = vmax.f32 %v482, 0.0
      %v515 = vmax.f32 %v483, 0.0
      %v516 = vmax.f32 %v484, 0.0
      %v517 = vmax.f32 %v485, 0.0
      %v518 = vmax.f32 %v486, 0.0
      %v519 = vmax.f32 %v487, 0.0
      %v520 = vmax.f32 %v488, 0.0
      %v521 = vmax.f32 %v489, 0.0
      %v522 = vmax.f32 %v490, 0.0
      %v523 = vmax.f32 %v491, 0.0
      %v524 = vmax.f32 %v492, 0.0
      %v525 = vmax.f32 %v493, 0.0
      %v526 = vmax.f32 %v494, 0.0
      %v527 = vmax.f32 %v495, 0.0
      %v528 = vmax.f32 %v496, 0.0
      %v529 = vmax.f32 %v497, 0.0
      %v530 = vmax.f32 %v498, 0.0
      %v531 = vmax.f32 %v499, 0.0
      %v532 = vmax.f32 %v500, 0.0
      %v533 = vmax.f32 %v501, 0.0
      %v534 = vmax.f32 %v502, 0.0
      %v535 = vmax.f32 %v503, 0.0
      %v536 = vmax.f32 %v504, 0.0
      %v537 = vmax.f32 %v505, 0.0
      %v538 = vmax.f32 %v506, 0.0
      %v539 = vmax.f32 %v507, 0.0
      %v540 = vmax.f32 %v508, 0.0
      %v541 = vmax.f32 %v509, 0.0
      %v542 = vmax.f32 %v510, 0.0
      %v543 = vmax.f32 %v511, 0.0
      %vm544 = vcmask 523264
      %545 = vst.msk [vmem:[%s235] sm:$0xff] %vm544, %v512
      %546 = vst.msk [vmem:[%s235 + $0x8] sm:$0xff] %vm544, %v513
      %547 = vst.msk [vmem:[%s235 + $0x10] sm:$0xff] %vm544, %v514
      %548 = vst.msk [vmem:[%s235 + $0x18] sm:$0xff] %vm544, %v515
      %549 = vst.msk [vmem:[%s235 + $0x20] sm:$0xff] %vm544, %v516
      %550 = vst.msk [vmem:[%s235 + $0x28] sm:$0xff] %vm544, %v517
      %551 = vst.msk [vmem:[%s235 + $0x30] sm:$0xff] %vm544, %v518
      %552 = vst.msk [vmem:[%s235 + $0x38] sm:$0xff] %vm544, %v519
      %553 = vst.msk [vmem:[%s235 + $0x40] sm:$0xff] %vm544, %v520
      %554 = vst.msk [vmem:[%s235 + $0x48] sm:$0xff] %vm544, %v521
      %555 = vst.msk [vmem:[%s235 + $0x50] sm:$0xff] %vm544, %v522
      %556 = vst.msk [vmem:[%s235 + $0x58] sm:$0xff] %vm544, %v523
      %557 = vst.msk [vmem:[%s235 + $0x60] sm:$0xff] %vm544, %v524
      %558 = vst.msk [vmem:[%s235 + $0x68] sm:$0xff] %vm544, %v525
      %559 = vst.msk [vmem:[%s235 + $0x70] sm:$0xff] %vm544, %v526
      %560 = vst.msk [vmem:[%s235 + $0x78] sm:$0xff] %vm544, %v527
      %561 = vst.msk [vmem:[%s235 + $0x80] sm:$0xff] %vm544, %v528
      %562 = vst.msk [vmem:[%s235 + $0x88] sm:$0xff] %vm544, %v529
      %563 = vst.msk [vmem:[%s235 + $0x90] sm:$0xff] %vm544, %v530
      %564 = vst.msk [vmem:[%s235 + $0x98] sm:$0xff] %vm544, %v531
      %565 = vst.msk [vmem:[%s235 + $0xa0] sm:$0xff] %vm544, %v532
      %566 = vst.msk [vmem:[%s235 + $0xa8] sm:$0xff] %vm544, %v533
      %567 = vst.msk [vmem:[%s235 + $0xb0] sm:$0xff] %vm544, %v534
      %568 = vst.msk [vmem:[%s235 + $0xb8] sm:$0xff] %vm544, %v535
      %569 = vst.msk [vmem:[%s235 + $0xc0] sm:$0xff] %vm544, %v536
      %570 = vst.msk [vmem:[%s235 + $0xc8] sm:$0xff] %vm544, %v537
      %571 = vst.msk [vmem:[%s235 + $0xd0] sm:$0xff] %vm544, %v538
      %572 = vst.msk [vmem:[%s235 + $0xd8] sm:$0xff] %vm544, %v539
      %573 = vst.msk [vmem:[%s235 + $0xe0] sm:$0xff] %vm544, %v540
      %574 = vst.msk [vmem:[%s235 + $0xe8] sm:$0xff] %vm544, %v541
      %575 = vst.msk [vmem:[%s235 + $0xf0] sm:$0xff] %vm544, %v542
      %576 = vst.msk [vmem:[%s235 + $0xf8] sm:$0xff] %vm544, %v543
      %s577 = smul.u32 32, %s20
      %p578 = scmp.lt.s32.totalorder %s19, 1
      %s579 = scalar_select %p578, %s19, 1
      %p580 = scmp.lt.s32.totalorder %s577, 31
      %s581 = scalar_select %p580, %s577, 31
      %s582 = smul.addr %s579, 32
      %s583 = sadd.s32 %s581, %s582
      %s584 = smul.addr %s583, 8
      %s585 = scalar_lea.vmem %s4, %s584
      // Predicated region
      $region37: #{_lambda_.17} parent=35 // pred_check
        %p586 = pneg %p138
      $region38: #{_lambda_.17} parent=35 // pred_check_branch
        %588 = sbr.rel (%p586) target = $region40
      $region39: #{_lambda_.17} parent=35 // pred_region
        %s589 = smul.u32 32, %s20
      $region40: #{_lambda_.17} parent=35 // pred_fallthru
        _
    $region36: #{_lambda_.17} parent=5 // pred_fallthru
      _
    %p590 = scmp.le.s32.totalorder 2, %s10
    // Predicated region
    $region41: #{_lambda_.17} parent=5 // pred_check
      %p591 = pneg %p590
    $region42: #{_lambda_.17} parent=5 // pred_check_branch
      %593 = sbr.rel (%p591) target = $region44
    $region43: #{_lambda_.17} parent=5 // pred_region
      %s594 = ssub.s32 %s10, 2
      // Predicated region
      $region45: #{_lambda_.17} parent=43 // pred_check
        %p595 = pneg %p144
      $region46: #{_lambda_.17} parent=43 // pred_check_branch
        %597 = sbr.rel (%p595) target = $region48
      $region47: #{_lambda_.17} parent=43 // pred_region
        %s598 = smul.u32 32, %s22
        %p599 = scmp.lt.s32.totalorder %s21, 1
        %s600 = scalar_select %p599, %s21, 1
        %p601 = scmp.lt.s32.totalorder %s598, 31
        %s602 = scalar_select %p601, %s598, 31
        %s603 = smul.addr %s600, 32
        %s604 = sadd.s32 %s602, %s603
        %s605 = smul.addr %s604, 8
        %s606 = scalar_lea.vmem %s4, %s605
      $region48: #{_lambda_.17} parent=43 // pred_fallthru
        _
    $region44: #{_lambda_.17} parent=5 // pred_fallthru
      _
  $region6: #{_lambda_.17} parent=0 // loop_footer
    %s14 = sadd.s32 1, %s10
  $region7: #{_lambda_.17} parent=0 // loop_footer_branch
    %9 = sbr.rel target = $region3
  $region8: #{_lambda_.17} parent=0 // loop_exit
    _

</llo_original>
